<compile_context>
chip_gen: v7x
topology: tpu7x:2x2x1
jax: 0.10.0
libtpu: 0.0.40
codegen_flags: <defaults>
</compile_context>

<pallas_src>
import functools
import math

import numpy as np
import jax
import jax.numpy as jnp
from jax import lax
from jax.experimental import pallas as pl
from jax.experimental.pallas import tpu as pltpu


# ----------------------------------------------------------------------------
# In-kernel helpers
# ----------------------------------------------------------------------------

def _bf16(x):
    return x.astype(jnp.bfloat16)


def _layernorm(z, g, b, eps):
    mu = jnp.mean(z, axis=-1, keepdims=True)
    var = jnp.mean(jnp.square(z - mu), axis=-1, keepdims=True)
    return (z - mu) * lax.rsqrt(var + eps) * g + b


def _attention(q_b, k_b, v_b, bias, wo, bo, *, h, d_k, d_v, scale):
    """Multi-head scaled-dot-product attention core.

    q_b/k_b/v_b are bf16 (rows, h*d) matrices (casts hoisted out of the head loop).
    Head outputs are concatenated once and projected with a single matmul instead of
    a serial per-head accumulation chain.
    """
    heads = []
    for hd in range(h):
        qh = q_b[:, hd * d_k:(hd + 1) * d_k]
        kh = k_b[:, hd * d_k:(hd + 1) * d_k]
        vh = v_b[:, hd * d_v:(hd + 1) * d_v]
        s = lax.dot_general(qh, kh, (((1,), (1,)), ((), ())),
                            preferred_element_type=jnp.float32)
        s = s * scale + bias                              # additive mask (-1e30) in VMEM
        m = jnp.max(s, axis=-1, keepdims=True)
        p = jnp.exp(s - m)
        att = p / jnp.sum(p, axis=-1, keepdims=True)      # exact softmax normalization
        heads.append(jnp.dot(_bf16(att), vh, preferred_element_type=jnp.float32))
    o = jnp.concatenate(heads, axis=-1)                   # (rows, h*d_v)
    return jnp.dot(_bf16(o), wo, preferred_element_type=jnp.float32) + bo


# ----------------------------------------------------------------------------
# Fused decoder-stack kernel: N_dec x (self-MHA + cross-MHA + FFN) + vocab head
# ----------------------------------------------------------------------------

def _decoder_stack_kernel(*refs, treedef, n_act, n_layers, h, d_k, d_v, vocab, eps):
    x_ref, enc_ref, pos_ref, sbias_ref, ebias_ref, mask_ref = refs[:n_act]
    o_ref = refs[-1]
    W = jax.tree_util.tree_unflatten(treedef, refs[n_act:-1])

    scale = 1.0 / math.sqrt(d_k)

    x = x_ref[0]                          # (S, D)  f32 token embeddings
    enc = enc_ref[0]                      # (Ne, D) f32 encoder memory
    pos = pos_ref[0]                      # (Ne, D) f32 positional features
    self_bias = sbias_ref[0]              # (S, S)  additive causal+pad mask
    enc_bias = ebias_ref[0]               # (1, Ne) additive encoder key mask
    mask = mask_ref[0]                    # (S, 1)  query pad mask

    # Cross-attention keys/values are layer-invariant: hoist the add and bf16 packs.
    # TODO(synk): MultiHeadAttentionWithGoc source is not provided; keys are truncated to
    # the value length (99): keys = encoder_output + pos, values = encoder_output, and
    # `aligns` is unused -> standard MHA.
    k_in_b = _bf16(enc + pos)
    v_in_b = _bf16(enc)

    for l in range(n_layers):
        LW = jax.tree_util.tree_map(lambda r: r[l], W["layers"])

        # ---- self-attention (fused QKV projection) + MHA-internal residual/LN ----
        sp = LW["self_att"]
        qkv = jnp.dot(_bf16(x), sp["wqkv"], preferred_element_type=jnp.float32) + sp["bqkv"]
        qkv_b = _bf16(qkv)                                      # single pack, sliced below
        o = _attention(qkv_b[:, :h * d_k],
                       qkv_b[:, h * d_k:2 * h * d_k],
                       qkv_b[:, 2 * h * d_k:],
                       self_bias, sp["wo"], sp["bo"],
                       h=h, d_k=d_k, d_v=d_v, scale=scale)
        sa = _layernorm(x + o, sp["ln_g"], sp["ln_b"], eps)      # MHA internal LN
        sa = _layernorm(x + sa, LW["ln1_g"], LW["ln1_b"], eps) * mask   # lnorm1 + *mask_pad

        # ---- encoder cross-attention + MHA-internal residual/LN ----
        ep = LW["enc_att"]
        q = jnp.dot(_bf16(sa), ep["wq"], preferred_element_type=jnp.float32) + ep["bq"]
        k = jnp.dot(k_in_b, ep["wk"], preferred_element_type=jnp.float32) + ep["bk"]
        v = jnp.dot(v_in_b, ep["wv"], preferred_element_type=jnp.float32) + ep["bv"]
        o = _attention(_bf16(q), _bf16(k), _bf16(v), enc_bias, ep["wo"], ep["bo"],
                       h=h, d_k=d_k, d_v=d_v, scale=scale)
        ea = _layernorm(sa + o, ep["ln_g"], ep["ln_b"], eps)     # MHA internal LN
        ea = _layernorm(sa + ea, LW["ln2_g"], LW["ln2_b"], eps) * mask  # lnorm2 + *mask_pad

        # ---- position-wise feed-forward (+ residual/LN + mask) ----
        fp = LW["pwff"]
        hid = jnp.dot(_bf16(ea), fp["w1"], preferred_element_type=jnp.float32) + fp["b1"]
        hid = jnp.maximum(hid, 0.0)
        y = jnp.dot(_bf16(hid), fp["w2"], preferred_element_type=jnp.float32) + fp["b2"]
        x = _layernorm(ea + y, fp["ln_g"], fp["ln_b"], eps) * mask

    # ---- vocab projection (bias-free) + log_softmax, lane-dense padded output ----
    logits = jnp.dot(_bf16(x), W["fc_w"][...], preferred_element_type=jnp.float32)  # (S, Vp)
    col = lax.broadcasted_iota(jnp.int32, logits.shape, 1)
    logits = jnp.where(col < vocab, logits, -1e30)               # mask pad columns
    m = jnp.max(logits, axis=-1, keepdims=True)
    lse = m + jnp.log(jnp.sum(jnp.exp(logits - m), axis=-1, keepdims=True))
    o_ref[0] = logits - lse


def _const_index(b, *, ndim):
    return (0,) * ndim


def decoder_stack_fused(weights, x0, enc, pos, self_bias, enc_bias, mask_pad, *, cfg):
    """One pallas_call for the whole decoder stack + vocab head, gridded over batch."""
    B, S, D = x0.shape
    Ne = enc.shape[1]
    Vp = weights["fc_w"].shape[1]
    leaves, treedef = jax.tree_util.tree_flatten(weights)

    act_args = [x0, enc, pos, self_bias, enc_bias, mask_pad]
    act_specs = [
        pl.BlockSpec((1, S, D), lambda b: (b, 0, 0)),
        pl.BlockSpec((1, Ne, D), lambda b: (b, 0, 0)),
        pl.BlockSpec((1, Ne, D), lambda b: (b, 0, 0)),
        pl.BlockSpec((1, S, S), lambda b: (b, 0, 0)),
        pl.BlockSpec((1, 1, Ne), lambda b: (b, 0, 0)),
        pl.BlockSpec((1, S, 1), lambda b: (b, 0, 0)),
    ]
    # Weights: full-array blocks whose block index never changes across the batch grid
    # (fetched once, kept resident).  TODO(synk): if the model is scaled up, switch these
    # to pipeline_mode=pl.Buffered(1) and re-check the VMEM budget (v7x: 64 MiB physical).
    w_specs = [pl.BlockSpec(w.shape, functools.partial(_const_index, ndim=w.ndim))
               for w in leaves]

    kernel = functools.partial(
        _decoder_stack_kernel, treedef=treedef, n_act=len(act_args),
        n_layers=cfg["N_dec"], h=cfg["h"], d_k=cfg["d_k"], d_v=cfg["d_v"],
        vocab=cfg["vocab_size"], eps=1e-5)

    return pl.pallas_call(
        kernel,
        out_shape=jax.ShapeDtypeStruct((B, S, Vp), jnp.float32),
        grid=(B,),
        in_specs=act_specs + w_specs,
        out_specs=pl.BlockSpec((1, S, Vp), lambda b: (b, 0, 0)),
        compiler_params=pltpu.CompilerParams(
            dimension_semantics=("parallel",),          # 2 blocks -> both v7x TensorCores
            vmem_limit_bytes=32 * 1024 * 1024),
    )(*act_args, *leaves)


# ----------------------------------------------------------------------------
# Parameter initialization (deterministic, synthetic) + one-time packing
# ----------------------------------------------------------------------------

def sinusoid_encoding_table(n_pos, d_model, padding_idx=None):
    pos = np.arange(n_pos, dtype=np.float64)[:, None]
    dim = np.arange(d_model, dtype=np.float64)[None, :]
    angle = pos / np.power(10000.0, 2.0 * np.floor(dim / 2.0) / d_model)
    table = np.zeros((n_pos, d_model), dtype=np.float32)
    table[:, 0::2] = np.sin(angle[:, 0::2])
    table[:, 1::2] = np.cos(angle[:, 1::2])
    if padding_idx is not None:
        table[padding_idx] = 0.0
    return jnp.asarray(table)


def init_linear_params(key, fan_in, fan_out):
    k1, k2 = jax.random.split(key)
    bound = 1.0 / math.sqrt(fan_in)
    w = jax.random.uniform(k1, (fan_in, fan_out), jnp.float32, -bound, bound)
    b = jax.random.uniform(k2, (fan_out,), jnp.float32, -bound, bound)
    return w, b


def init_mha_params(key, d_model, d_k, d_v, h):
    ks = jax.random.split(key, 4)
    wq, bq = init_linear_params(ks[0], d_model, h * d_k)
    wk, bk = init_linear_params(ks[1], d_model, h * d_k)
    wv, bv = init_linear_params(ks[2], d_model, h * d_v)
    wo, bo = init_linear_params(ks[3], h * d_v, d_model)
    return dict(wq=wq, bq=bq, wk=wk, bk=bk, wv=wv, bv=bv, wo=wo, bo=bo,
                ln_g=jnp.ones((d_model,), jnp.float32),
                ln_b=jnp.zeros((d_model,), jnp.float32))


def init_pwff_params(key, d_model, d_ff):
    k1, k2 = jax.random.split(key)
    w1, b1 = init_linear_params(k1, d_model, d_ff)
    w2, b2 = init_linear_params(k2, d_ff, d_model)
    return dict(w1=w1, b1=b1, w2=w2, b2=b2,
                ln_g=jnp.ones((d_model,), jnp.float32),
                ln_b=jnp.zeros((d_model,), jnp.float32))


def init_decoder_layer_params(key, cfg):
    d_model, d_k, d_v, h, d_ff = (cfg["d_model"], cfg["d_k"], cfg["d_v"],
                                  cfg["h"], cfg["d_ff"])
    ks = jax.random.split(key, 3)
    return dict(
        self_att=init_mha_params(ks[0], d_model, d_k, d_v, h),
        enc_att=init_mha_params(ks[1], d_model, d_k, d_v, h),
        ln1_g=jnp.ones((d_model,), jnp.float32),
        ln1_b=jnp.zeros((d_model,), jnp.float32),
        ln2_g=jnp.ones((d_model,), jnp.float32),
        ln2_b=jnp.zeros((d_model,), jnp.float32),
        pwff=init_pwff_params(ks[2], cfg["d_model"], cfg["d_ff"]),
    )


def init_params(key, cfg):
    d_model = cfg["d_model"]
    ks = jax.random.split(key, 4 + cfg["N_dec"])
    word_emb = jax.random.normal(ks[0], (cfg["vocab_size"], d_model), jnp.float32)
    word_emb = word_emb.at[cfg["padding_idx"]].set(0.0)
    pos_emb = sinusoid_encoding_table(cfg["max_len"] + 1, d_model, padding_idx=0)
    fc_w, _ = init_linear_params(ks[1], d_model, cfg["vocab_size"])  # no bias
    visual_ca = dict(
        mha=init_mha_params(ks[2], d_model, cfg["d_k"], cfg["d_v"], cfg["h"]),
        pwff=init_pwff_params(ks[3], d_model, cfg["d_ff"]),
    )
    layers = [init_decoder_layer_params(ks[4 + i], cfg) for i in range(cfg["N_dec"])]
    return dict(word_emb=word_emb, pos_emb=pos_emb, fc_w=fc_w,
                visual_CA=visual_ca, layers=layers)


def pack_params(params, cfg):
    """One-time preprocessing (outside jit): bf16 casts, fused self-attn q|k|v weight,
    (1,D)-shaped biases/LN params, layer stacking, 128-lane padded vocab weight."""
    bf16 = jnp.bfloat16

    def self_mha(p):
        return dict(
            wqkv=jnp.concatenate([p["wq"], p["wk"], p["wv"]], axis=1).astype(bf16),
            bqkv=jnp.concatenate([p["bq"], p["bk"], p["bv"]])[None, :],
            wo=p["wo"].astype(bf16), bo=p["bo"][None, :],
            ln_g=p["ln_g"][None, :], ln_b=p["ln_b"][None, :])

    def cross_mha(p):
        return dict(
            wq=p["wq"].astype(bf16), bq=p["bq"][None, :],
            wk=p["wk"].astype(bf16), bk=p["bk"][None, :],
            wv=p["wv"].astype(bf16), bv=p["bv"][None, :],
            wo=p["wo"].astype(bf16), bo=p["bo"][None, :],
            ln_g=p["ln_g"][None, :], ln_b=p["ln_b"][None, :])

    def pwff(p):
        return dict(w1=p["w1"].astype(bf16), b1=p["b1"][None, :],
                    w2=p["w2"].astype(bf16), b2=p["b2"][None, :],
                    ln_g=p["ln_g"][None, :], ln_b=p["ln_b"][None, :])

    per_layer = []
    for lp in params["layers"]:
        per_layer.append(dict(
            self_att=self_mha(lp["self_att"]),
            enc_att=cross_mha(lp["enc_att"]),
            ln1_g=lp["ln1_g"][None, :], ln1_b=lp["ln1_b"][None, :],
            ln2_g=lp["ln2_g"][None, :], ln2_b=lp["ln2_b"][None, :],
            pwff=pwff(lp["pwff"])))
    stacked = jax.tree_util.tree_map(lambda *xs: jnp.stack(xs, 0), *per_layer)

    D = cfg["d_model"]
    vocab = cfg["vocab_size"]
    Vp = pl.cdiv(vocab, 128) * 128                      # lane-dense vocab width
    fc_w_pad = jnp.zeros((D, Vp), bf16).at[:, :vocab].set(params["fc_w"].astype(bf16))

    # TODO(synk): VisualCrossAtt source is not provided.  With the synthesized
    # MultiHeadAttentionWithGoc (cross-attention keys truncated to the 99 encoder
    # positions), the region features it would produce (new_visual[:, 99:]) never reach
    # the decoder output, so that dead branch is omitted from the fused kernel (its
    # parameters are still initialised for structural parity with the reference module).
    return dict(word_emb=params["word_emb"], pos_emb=params["pos_emb"],
                kernel_weights=dict(layers=stacked, fc_w=fc_w_pad))


# ----------------------------------------------------------------------------
# Forward pass (eval mode: dropout = identity, non-stateful / non-beam path)
# ----------------------------------------------------------------------------

def make_forward(cfg):
    pad_idx = cfg["padding_idx"]

    def forward(packed, tokens, encoder_output, mask_encoder, pos, aligns):
        # `aligns` is unused (see TODO on MultiHeadAttentionWithGoc).  The beam-expansion
        # branch is skipped (encoder_output.shape[0] == pos.shape[0]) and dropout is
        # identity (eval mode).
        B, S = tokens.shape
        mask_queries = (tokens != pad_idx).astype(jnp.float32)[..., None]         # (B,S,1)
        tri = jnp.triu(jnp.ones((S, S), jnp.int32), k=1)[None]                    # (1,S,S)
        padk = (tokens == pad_idx).astype(jnp.int32)[:, None, :]                  # (B,1,S)
        self_bias = jnp.where((tri + padk) > 0, -1e30, 0.0).astype(jnp.float32)   # (B,S,S)
        enc_bias = jnp.where(mask_encoder[:, 0], -1e30, 0.0).astype(jnp.float32)  # (B,1,Ne)

        seq = jnp.broadcast_to(jnp.arange(1, S + 1, dtype=jnp.int32)[None, :], (B, S))
        seq = jnp.where(tokens == pad_idx, 0, seq)
        x0 = packed["word_emb"][tokens] + packed["pos_emb"][seq]                  # (B,S,D)

        # Whole N_dec-layer decoder stack + vocab head in ONE pallas_call.
        # Returns lane-dense (B, S, 128) log-probs; the first vocab_size columns equal
        # log_softmax(fc(out)) exactly (pad columns carry ~-1e30 and exp to 0).
        return decoder_stack_fused(packed["kernel_weights"], x0, encoder_output, pos,
                                   self_bias, enc_bias, mask_queries, cfg=cfg)

    return forward


# ----------------------------------------------------------------------------
# Main
# ----------------------------------------------------------------------------

if __name__ == "__main__":
    cfg = dict(vocab_size=40, max_len=20, N_dec=2, padding_idx=0,
               d_model=64, d_k=16, d_v=16, h=4, d_ff=128)
    B, S = 2, 8
    N_ENC = 99  # DLCT encoder memory: 49 grid + 50 region features (hard-coded in forward)

    raw_params = init_params(jax.random.PRNGKey(0), cfg)
    packed = pack_params(raw_params, cfg)               # one-time weight preprocessing

    kt, ke, kp = jax.random.split(jax.random.PRNGKey(1), 3)
    tokens = jax.random.randint(kt, (B, S), 1, cfg["vocab_size"], dtype=jnp.int32)
    tokens = tokens.at[1, 6:].set(cfg["padding_idx"])   # some padding in batch 1
    encoder_output = jax.random.normal(ke, (B, N_ENC, cfg["d_model"]), jnp.float32)
    pos = 0.1 * jax.random.normal(kp, (B, N_ENC, cfg["d_model"]), jnp.float32)
    mask_encoder = jnp.zeros((B, 1, 1, N_ENC), jnp.bool_).at[1, 0, 0, 90:].set(True)
    aligns = jnp.zeros((B, S, N_ENC), jnp.float32)      # placeholder (unused, see TODO)

    forward = jax.jit(make_forward(cfg))
    out_padded = forward(packed, tokens, encoder_output, mask_encoder, pos, aligns)
    out_padded = jax.block_until_ready(out_padded)

    assert out_padded.shape == (B, S, 128), out_padded.shape
    out = out_padded[..., :cfg["vocab_size"]]           # consumer-side slice of padded output
    assert out.shape == (B, S, cfg["vocab_size"]), out.shape
    assert bool(jnp.all(jnp.isfinite(out)))
    # log-softmax rows should sum to ~1 after exp
    assert bool(jnp.allclose(jnp.sum(jnp.exp(out), axis=-1), 1.0, atol=1e-4))
    print("KERNEL_OK")
</pallas_src>

<mosaic_0001>
module attributes {stable_mosaic.version = 11 : i64} {
  func.func @_decoder_stack_kernel(%arg0: i32, %arg1: memref<1x8x64xf32, #tpu.memory_space<vmem>>, %arg2: memref<1x99x64xf32, #tpu.memory_space<vmem>>, %arg3: memref<1x99x64xf32, #tpu.memory_space<vmem>>, %arg4: memref<1x8x8xf32, #tpu.memory_space<vmem>>, %arg5: memref<1x1x99xf32, #tpu.memory_space<vmem>>, %arg6: memref<1x8x1xf32, #tpu.memory_space<vmem>>, %arg7: memref<64x128xbf16, #tpu.memory_space<vmem>>, %arg8: memref<2x1x64xf32, #tpu.memory_space<vmem>>, %arg9: memref<2x1x64xf32, #tpu.memory_space<vmem>>, %arg10: memref<2x1x64xf32, #tpu.memory_space<vmem>>, %arg11: memref<2x1x64xf32, #tpu.memory_space<vmem>>, %arg12: memref<2x1x64xf32, #tpu.memory_space<vmem>>, %arg13: memref<2x1x64xf32, #tpu.memory_space<vmem>>, %arg14: memref<2x64x64xbf16, #tpu.memory_space<vmem>>, %arg15: memref<2x64x64xbf16, #tpu.memory_space<vmem>>, %arg16: memref<2x64x64xbf16, #tpu.memory_space<vmem>>, %arg17: memref<2x64x64xbf16, #tpu.memory_space<vmem>>, %arg18: memref<2x1x64xf32, #tpu.memory_space<vmem>>, %arg19: memref<2x1x64xf32, #tpu.memory_space<vmem>>, %arg20: memref<2x1x64xf32, #tpu.memory_space<vmem>>, %arg21: memref<2x1x64xf32, #tpu.memory_space<vmem>>, %arg22: memref<2x1x128xf32, #tpu.memory_space<vmem>>, %arg23: memref<2x1x64xf32, #tpu.memory_space<vmem>>, %arg24: memref<2x1x64xf32, #tpu.memory_space<vmem>>, %arg25: memref<2x1x64xf32, #tpu.memory_space<vmem>>, %arg26: memref<2x64x128xbf16, #tpu.memory_space<vmem>>, %arg27: memref<2x128x64xbf16, #tpu.memory_space<vmem>>, %arg28: memref<2x1x64xf32, #tpu.memory_space<vmem>>, %arg29: memref<2x1x192xf32, #tpu.memory_space<vmem>>, %arg30: memref<2x1x64xf32, #tpu.memory_space<vmem>>, %arg31: memref<2x1x64xf32, #tpu.memory_space<vmem>>, %arg32: memref<2x64x64xbf16, #tpu.memory_space<vmem>>, %arg33: memref<2x64x192xbf16, #tpu.memory_space<vmem>>, %arg34: memref<1x8x128xf32, #tpu.memory_space<vmem>>) attributes {dimension_semantics = [#tpu.dimension_semantics<parallel>], iteration_bounds = array<i64: 2>, scalar_prefetch = 0 : i64, scratch_operands = 0 : i64, tpu.core_type = #tpu.core_type<tc>, window_params = [{transform_indices = @transform_0, window_bounds = array<i64: 1, 8, 64>}, {transform_indices = @transform_1, window_bounds = array<i64: 1, 99, 64>}, {transform_indices = @transform_2, window_bounds = array<i64: 1, 99, 64>}, {transform_indices = @transform_3, window_bounds = array<i64: 1, 8, 8>}, {transform_indices = @transform_4, window_bounds = array<i64: 1, 1, 99>}, {transform_indices = @transform_5, window_bounds = array<i64: 1, 8, 1>}, {pipeline_mode = #tpu.pipeline_mode<synchronous>, transform_indices = @transform_6, window_bounds = array<i64: 64, 128>}, {pipeline_mode = #tpu.pipeline_mode<synchronous>, transform_indices = @transform_7, window_bounds = array<i64: 2, 1, 64>}, {pipeline_mode = #tpu.pipeline_mode<synchronous>, transform_indices = @transform_8, window_bounds = array<i64: 2, 1, 64>}, {pipeline_mode = #tpu.pipeline_mode<synchronous>, transform_indices = @transform_9, window_bounds = array<i64: 2, 1, 64>}, {pipeline_mode = #tpu.pipeline_mode<synchronous>, transform_indices = @transform_10, window_bounds = array<i64: 2, 1, 64>}, {pipeline_mode = #tpu.pipeline_mode<synchronous>, transform_indices = @transform_11, window_bounds = array<i64: 2, 1, 64>}, {pipeline_mode = #tpu.pipeline_mode<synchronous>, transform_indices = @transform_12, window_bounds = array<i64: 2, 1, 64>}, {pipeline_mode = #tpu.pipeline_mode<synchronous>, transform_indices = @transform_13, window_bounds = array<i64: 2, 64, 64>}, {pipeline_mode = #tpu.pipeline_mode<synchronous>, transform_indices = @transform_14, window_bounds = array<i64: 2, 64, 64>}, {pipeline_mode = #tpu.pipeline_mode<synchronous>, transform_indices = @transform_15, window_bounds = array<i64: 2, 64, 64>}, {pipeline_mode = #tpu.pipeline_mode<synchronous>, transform_indices = @transform_16, window_bounds = array<i64: 2, 64, 64>}, {pipeline_mode = #tpu.pipeline_mode<synchronous>, transform_indices = @transform_17, window_bounds = array<i64: 2, 1, 64>}, {pipeline_mode = #tpu.pipeline_mode<synchronous>, transform_indices = @transform_18, window_bounds = array<i64: 2, 1, 64>}, {pipeline_mode = #tpu.pipeline_mode<synchronous>, transform_indices = @transform_19, window_bounds = array<i64: 2, 1, 64>}, {pipeline_mode = #tpu.pipeline_mode<synchronous>, transform_indices = @transform_20, window_bounds = array<i64: 2, 1, 64>}, {pipeline_mode = #tpu.pipeline_mode<synchronous>, transform_indices = @transform_21, window_bounds = array<i64: 2, 1, 128>}, {pipeline_mode = #tpu.pipeline_mode<synchronous>, transform_indices = @transform_22, window_bounds = array<i64: 2, 1, 64>}, {pipeline_mode = #tpu.pipeline_mode<synchronous>, transform_indices = @transform_23, window_bounds = array<i64: 2, 1, 64>}, {pipeline_mode = #tpu.pipeline_mode<synchronous>, transform_indices = @transform_24, window_bounds = array<i64: 2, 1, 64>}, {pipeline_mode = #tpu.pipeline_mode<synchronous>, transform_indices = @transform_25, window_bounds = array<i64: 2, 64, 128>}, {pipeline_mode = #tpu.pipeline_mode<synchronous>, transform_indices = @transform_26, window_bounds = array<i64: 2, 128, 64>}, {pipeline_mode = #tpu.pipeline_mode<synchronous>, transform_indices = @transform_27, window_bounds = array<i64: 2, 1, 64>}, {pipeline_mode = #tpu.pipeline_mode<synchronous>, transform_indices = @transform_28, window_bounds = array<i64: 2, 1, 192>}, {pipeline_mode = #tpu.pipeline_mode<synchronous>, transform_indices = @transform_29, window_bounds = array<i64: 2, 1, 64>}, {pipeline_mode = #tpu.pipeline_mode<synchronous>, transform_indices = @transform_30, window_bounds = array<i64: 2, 1, 64>}, {pipeline_mode = #tpu.pipeline_mode<synchronous>, transform_indices = @transform_31, window_bounds = array<i64: 2, 64, 64>}, {pipeline_mode = #tpu.pipeline_mode<synchronous>, transform_indices = @transform_32, window_bounds = array<i64: 2, 64, 192>}, {transform_indices = @transform_33, window_bounds = array<i64: 1, 8, 128>}]} {
    %c0 = arith.constant 0 : index
    %c0_0 = arith.constant 0 : index
    %c0_1 = arith.constant 0 : index
    %0 = vector.load %arg1[%c0, %c0_0, %c0_1] : memref<1x8x64xf32, #tpu.memory_space<vmem>>, vector<1x8x64xf32>
    %1 = vector.shape_cast %0 : vector<1x8x64xf32> to vector<8x64xf32>
    %c0_2 = arith.constant 0 : index
    %c0_3 = arith.constant 0 : index
    %c0_4 = arith.constant 0 : index
    %2 = vector.load %arg2[%c0_2, %c0_3, %c0_4] : memref<1x99x64xf32, #tpu.memory_space<vmem>>, vector<1x99x64xf32>
    %3 = vector.shape_cast %2 : vector<1x99x64xf32> to vector<99x64xf32>
    %c0_5 = arith.constant 0 : index
    %c0_6 = arith.constant 0 : index
    %c0_7 = arith.constant 0 : index
    %4 = vector.load %arg3[%c0_5, %c0_6, %c0_7] : memref<1x99x64xf32, #tpu.memory_space<vmem>>, vector<1x99x64xf32>
    %5 = vector.shape_cast %4 : vector<1x99x64xf32> to vector<99x64xf32>
    %c0_8 = arith.constant 0 : index
    %c0_9 = arith.constant 0 : index
    %c0_10 = arith.constant 0 : index
    %6 = vector.load %arg4[%c0_8, %c0_9, %c0_10] : memref<1x8x8xf32, #tpu.memory_space<vmem>>, vector<1x8x8xf32>
    %7 = vector.shape_cast %6 : vector<1x8x8xf32> to vector<8x8xf32>
    %c0_11 = arith.constant 0 : index
    %c0_12 = arith.constant 0 : index
    %c0_13 = arith.constant 0 : index
    %8 = vector.load %arg5[%c0_11, %c0_12, %c0_13] : memref<1x1x99xf32, #tpu.memory_space<vmem>>, vector<1x1x99xf32>
    %9 = vector.shape_cast %8 : vector<1x1x99xf32> to vector<1x99xf32>
    %c0_14 = arith.constant 0 : index
    %c0_15 = arith.constant 0 : index
    %c0_16 = arith.constant 0 : index
    %10 = vector.load %arg6[%c0_14, %c0_15, %c0_16] : memref<1x8x1xf32, #tpu.memory_space<vmem>>, vector<1x8x1xf32>
    %11 = vector.shape_cast %10 : vector<1x8x1xf32> to vector<8x1xf32>
    %12 = arith.addf %3, %5 : vector<99x64xf32>
    %13 = arith.truncf %12 : vector<99x64xf32> to vector<99x64xbf16>
    %14 = arith.truncf %3 : vector<99x64xf32> to vector<99x64xbf16>
    %c0_17 = arith.constant 0 : index
    %c0_18 = arith.constant 0 : index
    %c0_19 = arith.constant 0 : index
    %15 = vector.load %arg8[%c0_17, %c0_18, %c0_19] : memref<2x1x64xf32, #tpu.memory_space<vmem>>, vector<1x1x64xf32>
    %16 = vector.shape_cast %15 : vector<1x1x64xf32> to vector<1x64xf32>
    %c0_20 = arith.constant 0 : index
    %c0_21 = arith.constant 0 : index
    %c0_22 = arith.constant 0 : index
    %17 = vector.load %arg9[%c0_20, %c0_21, %c0_22] : memref<2x1x64xf32, #tpu.memory_space<vmem>>, vector<1x1x64xf32>
    %18 = vector.shape_cast %17 : vector<1x1x64xf32> to vector<1x64xf32>
    %c0_23 = arith.constant 0 : index
    %c0_24 = arith.constant 0 : index
    %c0_25 = arith.constant 0 : index
    %19 = vector.load %arg10[%c0_23, %c0_24, %c0_25] : memref<2x1x64xf32, #tpu.memory_space<vmem>>, vector<1x1x64xf32>
    %20 = vector.shape_cast %19 : vector<1x1x64xf32> to vector<1x64xf32>
    %c0_26 = arith.constant 0 : index
    %c0_27 = arith.constant 0 : index
    %c0_28 = arith.constant 0 : index
    %21 = vector.load %arg11[%c0_26, %c0_27, %c0_28] : memref<2x1x64xf32, #tpu.memory_space<vmem>>, vector<1x1x64xf32>
    %22 = vector.shape_cast %21 : vector<1x1x64xf32> to vector<1x64xf32>
    %c0_29 = arith.constant 0 : index
    %c0_30 = arith.constant 0 : index
    %c0_31 = arith.constant 0 : index
    %23 = vector.load %arg12[%c0_29, %c0_30, %c0_31] : memref<2x1x64xf32, #tpu.memory_space<vmem>>, vector<1x1x64xf32>
    %24 = vector.shape_cast %23 : vector<1x1x64xf32> to vector<1x64xf32>
    %c0_32 = arith.constant 0 : index
    %c0_33 = arith.constant 0 : index
    %c0_34 = arith.constant 0 : index
    %25 = vector.load %arg13[%c0_32, %c0_33, %c0_34] : memref<2x1x64xf32, #tpu.memory_space<vmem>>, vector<1x1x64xf32>
    %26 = vector.shape_cast %25 : vector<1x1x64xf32> to vector<1x64xf32>
    %c0_35 = arith.constant 0 : index
    %c0_36 = arith.constant 0 : index
    %c0_37 = arith.constant 0 : index
    %27 = vector.load %arg14[%c0_35, %c0_36, %c0_37] : memref<2x64x64xbf16, #tpu.memory_space<vmem>>, vector<1x64x64xbf16>
    %28 = vector.shape_cast %27 : vector<1x64x64xbf16> to vector<64x64xbf16>
    %c0_38 = arith.constant 0 : index
    %c0_39 = arith.constant 0 : index
    %c0_40 = arith.constant 0 : index
    %29 = vector.load %arg15[%c0_38, %c0_39, %c0_40] : memref<2x64x64xbf16, #tpu.memory_space<vmem>>, vector<1x64x64xbf16>
    %30 = vector.shape_cast %29 : vector<1x64x64xbf16> to vector<64x64xbf16>
    %c0_41 = arith.constant 0 : index
    %c0_42 = arith.constant 0 : index
    %c0_43 = arith.constant 0 : index
    %31 = vector.load %arg16[%c0_41, %c0_42, %c0_43] : memref<2x64x64xbf16, #tpu.memory_space<vmem>>, vector<1x64x64xbf16>
    %32 = vector.shape_cast %31 : vector<1x64x64xbf16> to vector<64x64xbf16>
    %c0_44 = arith.constant 0 : index
    %c0_45 = arith.constant 0 : index
    %c0_46 = arith.constant 0 : index
    %33 = vector.load %arg17[%c0_44, %c0_45, %c0_46] : memref<2x64x64xbf16, #tpu.memory_space<vmem>>, vector<1x64x64xbf16>
    %34 = vector.shape_cast %33 : vector<1x64x64xbf16> to vector<64x64xbf16>
    %c0_47 = arith.constant 0 : index
    %c0_48 = arith.constant 0 : index
    %c0_49 = arith.constant 0 : index
    %35 = vector.load %arg18[%c0_47, %c0_48, %c0_49] : memref<2x1x64xf32, #tpu.memory_space<vmem>>, vector<1x1x64xf32>
    %36 = vector.shape_cast %35 : vector<1x1x64xf32> to vector<1x64xf32>
    %c0_50 = arith.constant 0 : index
    %c0_51 = arith.constant 0 : index
    %c0_52 = arith.constant 0 : index
    %37 = vector.load %arg19[%c0_50, %c0_51, %c0_52] : memref<2x1x64xf32, #tpu.memory_space<vmem>>, vector<1x1x64xf32>
    %38 = vector.shape_cast %37 : vector<1x1x64xf32> to vector<1x64xf32>
    %c0_53 = arith.constant 0 : index
    %c0_54 = arith.constant 0 : index
    %c0_55 = arith.constant 0 : index
    %39 = vector.load %arg20[%c0_53, %c0_54, %c0_55] : memref<2x1x64xf32, #tpu.memory_space<vmem>>, vector<1x1x64xf32>
    %40 = vector.shape_cast %39 : vector<1x1x64xf32> to vector<1x64xf32>
    %c0_56 = arith.constant 0 : index
    %c0_57 = arith.constant 0 : index
    %c0_58 = arith.constant 0 : index
    %41 = vector.load %arg21[%c0_56, %c0_57, %c0_58] : memref<2x1x64xf32, #tpu.memory_space<vmem>>, vector<1x1x64xf32>
    %42 = vector.shape_cast %41 : vector<1x1x64xf32> to vector<1x64xf32>
    %c0_59 = arith.constant 0 : index
    %c0_60 = arith.constant 0 : index
    %c0_61 = arith.constant 0 : index
    %43 = vector.load %arg22[%c0_59, %c0_60, %c0_61] : memref<2x1x128xf32, #tpu.memory_space<vmem>>, vector<1x1x128xf32>
    %44 = vector.shape_cast %43 : vector<1x1x128xf32> to vector<1x128xf32>
    %c0_62 = arith.constant 0 : index
    %c0_63 = arith.constant 0 : index
    %c0_64 = arith.constant 0 : index
    %45 = vector.load %arg23[%c0_62, %c0_63, %c0_64] : memref<2x1x64xf32, #tpu.memory_space<vmem>>, vector<1x1x64xf32>
    %46 = vector.shape_cast %45 : vector<1x1x64xf32> to vector<1x64xf32>
    %c0_65 = arith.constant 0 : index
    %c0_66 = arith.constant 0 : index
    %c0_67 = arith.constant 0 : index
    %47 = vector.load %arg24[%c0_65, %c0_66, %c0_67] : memref<2x1x64xf32, #tpu.memory_space<vmem>>, vector<1x1x64xf32>
    %48 = vector.shape_cast %47 : vector<1x1x64xf32> to vector<1x64xf32>
    %c0_68 = arith.constant 0 : index
    %c0_69 = arith.constant 0 : index
    %c0_70 = arith.constant 0 : index
    %49 = vector.load %arg25[%c0_68, %c0_69, %c0_70] : memref<2x1x64xf32, #tpu.memory_space<vmem>>, vector<1x1x64xf32>
    %50 = vector.shape_cast %49 : vector<1x1x64xf32> to vector<1x64xf32>
    %c0_71 = arith.constant 0 : index
    %c0_72 = arith.constant 0 : index
    %c0_73 = arith.constant 0 : index
    %51 = vector.load %arg26[%c0_71, %c0_72, %c0_73] : memref<2x64x128xbf16, #tpu.memory_space<vmem>>, vector<1x64x128xbf16>
    %52 = vector.shape_cast %51 : vector<1x64x128xbf16> to vector<64x128xbf16>
    %c0_74 = arith.constant 0 : index
    %c0_75 = arith.constant 0 : index
    %c0_76 = arith.constant 0 : index
    %53 = vector.load %arg27[%c0_74, %c0_75, %c0_76] : memref<2x128x64xbf16, #tpu.memory_space<vmem>>, vector<1x128x64xbf16>
    %54 = vector.shape_cast %53 : vector<1x128x64xbf16> to vector<128x64xbf16>
    %c0_77 = arith.constant 0 : index
    %c0_78 = arith.constant 0 : index
    %c0_79 = arith.constant 0 : index
    %55 = vector.load %arg28[%c0_77, %c0_78, %c0_79] : memref<2x1x64xf32, #tpu.memory_space<vmem>>, vector<1x1x64xf32>
    %56 = vector.shape_cast %55 : vector<1x1x64xf32> to vector<1x64xf32>
    %c0_80 = arith.constant 0 : index
    %c0_81 = arith.constant 0 : index
    %c0_82 = arith.constant 0 : index
    %57 = vector.load %arg29[%c0_80, %c0_81, %c0_82] : memref<2x1x192xf32, #tpu.memory_space<vmem>>, vector<1x1x192xf32>
    %58 = vector.shape_cast %57 : vector<1x1x192xf32> to vector<1x192xf32>
    %c0_83 = arith.constant 0 : index
    %c0_84 = arith.constant 0 : index
    %c0_85 = arith.constant 0 : index
    %59 = vector.load %arg30[%c0_83, %c0_84, %c0_85] : memref<2x1x64xf32, #tpu.memory_space<vmem>>, vector<1x1x64xf32>
    %60 = vector.shape_cast %59 : vector<1x1x64xf32> to vector<1x64xf32>
    %c0_86 = arith.constant 0 : index
    %c0_87 = arith.constant 0 : index
    %c0_88 = arith.constant 0 : index
    %61 = vector.load %arg31[%c0_86, %c0_87, %c0_88] : memref<2x1x64xf32, #tpu.memory_space<vmem>>, vector<1x1x64xf32>
    %62 = vector.shape_cast %61 : vector<1x1x64xf32> to vector<1x64xf32>
    %c0_89 = arith.constant 0 : index
    %c0_90 = arith.constant 0 : index
    %c0_91 = arith.constant 0 : index
    %63 = vector.load %arg32[%c0_89, %c0_90, %c0_91] : memref<2x64x64xbf16, #tpu.memory_space<vmem>>, vector<1x64x64xbf16>
    %64 = vector.shape_cast %63 : vector<1x64x64xbf16> to vector<64x64xbf16>
    %c0_92 = arith.constant 0 : index
    %c0_93 = arith.constant 0 : index
    %c0_94 = arith.constant 0 : index
    %65 = vector.load %arg33[%c0_92, %c0_93, %c0_94] : memref<2x64x192xbf16, #tpu.memory_space<vmem>>, vector<1x64x192xbf16>
    %66 = vector.shape_cast %65 : vector<1x64x192xbf16> to vector<64x192xbf16>
    %67 = arith.truncf %1 : vector<8x64xf32> to vector<8x64xbf16>
    %cst = arith.constant dense<0.000000e+00> : vector<8x192xf32>
    %68 = tpu.matmul %67, %66, %cst {dimension_numbers = #tpu.dot_dimension_numbers<[1], [0], [0], [1], [0, 0, 1, 1], [], []>} : vector<8x64xbf16>, vector<64x192xbf16>, vector<8x192xf32> -> vector<8x192xf32>
    %69 = vector.broadcast %58 : vector<1x192xf32> to vector<8x192xf32>
    %70 = arith.addf %68, %69 : vector<8x192xf32>
    %71 = arith.truncf %70 : vector<8x192xf32> to vector<8x192xbf16>
    %72 = vector.extract_strided_slice %71 {offsets = [0, 0], sizes = [8, 64], strides = [1, 1]} : vector<8x192xbf16> to vector<8x64xbf16>
    %73 = vector.extract_strided_slice %71 {offsets = [0, 64], sizes = [8, 64], strides = [1, 1]} : vector<8x192xbf16> to vector<8x64xbf16>
    %74 = vector.extract_strided_slice %71 {offsets = [0, 128], sizes = [8, 64], strides = [1, 1]} : vector<8x192xbf16> to vector<8x64xbf16>
    %75 = vector.extract_strided_slice %72 {offsets = [0, 0], sizes = [8, 16], strides = [1, 1]} : vector<8x64xbf16> to vector<8x16xbf16>
    %76 = vector.extract_strided_slice %73 {offsets = [0, 0], sizes = [8, 16], strides = [1, 1]} : vector<8x64xbf16> to vector<8x16xbf16>
    %77 = vector.extract_strided_slice %74 {offsets = [0, 0], sizes = [8, 16], strides = [1, 1]} : vector<8x64xbf16> to vector<8x16xbf16>
    %cst_95 = arith.constant dense<0.000000e+00> : vector<8x8xf32>
    %78 = tpu.matmul %75, %76, %cst_95 {dimension_numbers = #tpu.dot_dimension_numbers<[1], [1], [0], [0], [0, 0, 1, 0], [], []>} : vector<8x16xbf16>, vector<8x16xbf16>, vector<8x8xf32> -> vector<8x8xf32>
    %cst_96 = arith.constant 2.500000e-01 : f32
    %79 = vector.broadcast %cst_96 : f32 to vector<8x8xf32>
    %80 = arith.mulf %78, %79 : vector<8x8xf32>
    %81 = arith.addf %80, %7 : vector<8x8xf32>
    %cst_97 = arith.constant dense<0xFF800000> : vector<8xf32>
    %82 = vector.multi_reduction <maximumf>, %81, %cst_97 [1] : vector<8x8xf32> to vector<8xf32>
    %83 = vector.shape_cast %82 : vector<8xf32> to vector<8x1xf32>
    %84 = vector.broadcast %83 : vector<8x1xf32> to vector<8x8xf32>
    %85 = arith.subf %81, %84 : vector<8x8xf32>
    %86 = math.exp %85 : vector<8x8xf32>
    %cst_98 = arith.constant dense<0.000000e+00> : vector<8xf32>
    %87 = vector.multi_reduction <add>, %86, %cst_98 [1] : vector<8x8xf32> to vector<8xf32>
    %88 = vector.shape_cast %87 : vector<8xf32> to vector<8x1xf32>
    %89 = vector.broadcast %88 : vector<8x1xf32> to vector<8x8xf32>
    %90 = arith.divf %86, %89 : vector<8x8xf32>
    %91 = arith.truncf %90 : vector<8x8xf32> to vector<8x8xbf16>
    %cst_99 = arith.constant dense<0.000000e+00> : vector<8x16xf32>
    %92 = tpu.matmul %91, %77, %cst_99 {dimension_numbers = #tpu.dot_dimension_numbers<[1], [0], [0], [1], [0, 0, 1, 1], [], []>} : vector<8x8xbf16>, vector<8x16xbf16>, vector<8x16xf32> -> vector<8x16xf32>
    %93 = vector.extract_strided_slice %72 {offsets = [0, 16], sizes = [8, 16], strides = [1, 1]} : vector<8x64xbf16> to vector<8x16xbf16>
    %94 = vector.extract_strided_slice %73 {offsets = [0, 16], sizes = [8, 16], strides = [1, 1]} : vector<8x64xbf16> to vector<8x16xbf16>
    %95 = vector.extract_strided_slice %74 {offsets = [0, 16], sizes = [8, 16], strides = [1, 1]} : vector<8x64xbf16> to vector<8x16xbf16>
    %cst_100 = arith.constant dense<0.000000e+00> : vector<8x8xf32>
    %96 = tpu.matmul %93, %94, %cst_100 {dimension_numbers = #tpu.dot_dimension_numbers<[1], [1], [0], [0], [0, 0, 1, 0], [], []>} : vector<8x16xbf16>, vector<8x16xbf16>, vector<8x8xf32> -> vector<8x8xf32>
    %cst_101 = arith.constant 2.500000e-01 : f32
    %97 = vector.broadcast %cst_101 : f32 to vector<8x8xf32>
    %98 = arith.mulf %96, %97 : vector<8x8xf32>
    %99 = arith.addf %98, %7 : vector<8x8xf32>
    %cst_102 = arith.constant dense<0xFF800000> : vector<8xf32>
    %100 = vector.multi_reduction <maximumf>, %99, %cst_102 [1] : vector<8x8xf32> to vector<8xf32>
    %101 = vector.shape_cast %100 : vector<8xf32> to vector<8x1xf32>
    %102 = vector.broadcast %101 : vector<8x1xf32> to vector<8x8xf32>
    %103 = arith.subf %99, %102 : vector<8x8xf32>
    %104 = math.exp %103 : vector<8x8xf32>
    %cst_103 = arith.constant dense<0.000000e+00> : vector<8xf32>
    %105 = vector.multi_reduction <add>, %104, %cst_103 [1] : vector<8x8xf32> to vector<8xf32>
    %106 = vector.shape_cast %105 : vector<8xf32> to vector<8x1xf32>
    %107 = vector.broadcast %106 : vector<8x1xf32> to vector<8x8xf32>
    %108 = arith.divf %104, %107 : vector<8x8xf32>
    %109 = arith.truncf %108 : vector<8x8xf32> to vector<8x8xbf16>
    %cst_104 = arith.constant dense<0.000000e+00> : vector<8x16xf32>
    %110 = tpu.matmul %109, %95, %cst_104 {dimension_numbers = #tpu.dot_dimension_numbers<[1], [0], [0], [1], [0, 0, 1, 1], [], []>} : vector<8x8xbf16>, vector<8x16xbf16>, vector<8x16xf32> -> vector<8x16xf32>
    %111 = vector.extract_strided_slice %72 {offsets = [0, 32], sizes = [8, 16], strides = [1, 1]} : vector<8x64xbf16> to vector<8x16xbf16>
    %112 = vector.extract_strided_slice %73 {offsets = [0, 32], sizes = [8, 16], strides = [1, 1]} : vector<8x64xbf16> to vector<8x16xbf16>
    %113 = vector.extract_strided_slice %74 {offsets = [0, 32], sizes = [8, 16], strides = [1, 1]} : vector<8x64xbf16> to vector<8x16xbf16>
    %cst_105 = arith.constant dense<0.000000e+00> : vector<8x8xf32>
    %114 = tpu.matmul %111, %112, %cst_105 {dimension_numbers = #tpu.dot_dimension_numbers<[1], [1], [0], [0], [0, 0, 1, 0], [], []>} : vector<8x16xbf16>, vector<8x16xbf16>, vector<8x8xf32> -> vector<8x8xf32>
    %cst_106 = arith.constant 2.500000e-01 : f32
    %115 = vector.broadcast %cst_106 : f32 to vector<8x8xf32>
    %116 = arith.mulf %114, %115 : vector<8x8xf32>
    %117 = arith.addf %116, %7 : vector<8x8xf32>
    %cst_107 = arith.constant dense<0xFF800000> : vector<8xf32>
    %118 = vector.multi_reduction <maximumf>, %117, %cst_107 [1] : vector<8x8xf32> to vector<8xf32>
    %119 = vector.shape_cast %118 : vector<8xf32> to vector<8x1xf32>
    %120 = vector.broadcast %119 : vector<8x1xf32> to vector<8x8xf32>
    %121 = arith.subf %117, %120 : vector<8x8xf32>
    %122 = math.exp %121 : vector<8x8xf32>
    %cst_108 = arith.constant dense<0.000000e+00> : vector<8xf32>
    %123 = vector.multi_reduction <add>, %122, %cst_108 [1] : vector<8x8xf32> to vector<8xf32>
    %124 = vector.shape_cast %123 : vector<8xf32> to vector<8x1xf32>
    %125 = vector.broadcast %124 : vector<8x1xf32> to vector<8x8xf32>
    %126 = arith.divf %122, %125 : vector<8x8xf32>
    %127 = arith.truncf %126 : vector<8x8xf32> to vector<8x8xbf16>
    %cst_109 = arith.constant dense<0.000000e+00> : vector<8x16xf32>
    %128 = tpu.matmul %127, %113, %cst_109 {dimension_numbers = #tpu.dot_dimension_numbers<[1], [0], [0], [1], [0, 0, 1, 1], [], []>} : vector<8x8xbf16>, vector<8x16xbf16>, vector<8x16xf32> -> vector<8x16xf32>
    %129 = vector.extract_strided_slice %72 {offsets = [0, 48], sizes = [8, 16], strides = [1, 1]} : vector<8x64xbf16> to vector<8x16xbf16>
    %130 = vector.extract_strided_slice %73 {offsets = [0, 48], sizes = [8, 16], strides = [1, 1]} : vector<8x64xbf16> to vector<8x16xbf16>
    %131 = vector.extract_strided_slice %74 {offsets = [0, 48], sizes = [8, 16], strides = [1, 1]} : vector<8x64xbf16> to vector<8x16xbf16>
    %cst_110 = arith.constant dense<0.000000e+00> : vector<8x8xf32>
    %132 = tpu.matmul %129, %130, %cst_110 {dimension_numbers = #tpu.dot_dimension_numbers<[1], [1], [0], [0], [0, 0, 1, 0], [], []>} : vector<8x16xbf16>, vector<8x16xbf16>, vector<8x8xf32> -> vector<8x8xf32>
    %cst_111 = arith.constant 2.500000e-01 : f32
    %133 = vector.broadcast %cst_111 : f32 to vector<8x8xf32>
    %134 = arith.mulf %132, %133 : vector<8x8xf32>
    %135 = arith.addf %134, %7 : vector<8x8xf32>
    %cst_112 = arith.constant dense<0xFF800000> : vector<8xf32>
    %136 = vector.multi_reduction <maximumf>, %135, %cst_112 [1] : vector<8x8xf32> to vector<8xf32>
    %137 = vector.shape_cast %136 : vector<8xf32> to vector<8x1xf32>
    %138 = vector.broadcast %137 : vector<8x1xf32> to vector<8x8xf32>
    %139 = arith.subf %135, %138 : vector<8x8xf32>
    %140 = math.exp %139 : vector<8x8xf32>
    %cst_113 = arith.constant dense<0.000000e+00> : vector<8xf32>
    %141 = vector.multi_reduction <add>, %140, %cst_113 [1] : vector<8x8xf32> to vector<8xf32>
    %142 = vector.shape_cast %141 : vector<8xf32> to vector<8x1xf32>
    %143 = vector.broadcast %142 : vector<8x1xf32> to vector<8x8xf32>
    %144 = arith.divf %140, %143 : vector<8x8xf32>
    %145 = arith.truncf %144 : vector<8x8xf32> to vector<8x8xbf16>
    %cst_114 = arith.constant dense<0.000000e+00> : vector<8x16xf32>
    %146 = tpu.matmul %145, %131, %cst_114 {dimension_numbers = #tpu.dot_dimension_numbers<[1], [0], [0], [1], [0, 0, 1, 1], [], []>} : vector<8x8xbf16>, vector<8x16xbf16>, vector<8x16xf32> -> vector<8x16xf32>
    %147 = tpu.concatenate %92, %110, %128, %146 in 1 : vector<8x16xf32>, vector<8x16xf32>, vector<8x16xf32>, vector<8x16xf32> -> vector<8x64xf32>
    %148 = arith.truncf %147 : vector<8x64xf32> to vector<8x64xbf16>
    %cst_115 = arith.constant dense<0.000000e+00> : vector<8x64xf32>
    %149 = tpu.matmul %148, %64, %cst_115 {dimension_numbers = #tpu.dot_dimension_numbers<[1], [0], [0], [1], [0, 0, 1, 1], [], []>} : vector<8x64xbf16>, vector<64x64xbf16>, vector<8x64xf32> -> vector<8x64xf32>
    %150 = vector.broadcast %56 : vector<1x64xf32> to vector<8x64xf32>
    %151 = arith.addf %149, %150 : vector<8x64xf32>
    %152 = arith.addf %1, %151 : vector<8x64xf32>
    %cst_116 = arith.constant dense<0.000000e+00> : vector<8xf32>
    %153 = vector.multi_reduction <add>, %152, %cst_116 [1] : vector<8x64xf32> to vector<8xf32>
    %154 = vector.shape_cast %153 : vector<8xf32> to vector<8x1xf32>
    %cst_117 = arith.constant 6.400000e+01 : f32
    %155 = vector.broadcast %cst_117 : f32 to vector<8x1xf32>
    %156 = arith.divf %154, %155 : vector<8x1xf32>
    %157 = vector.broadcast %156 : vector<8x1xf32> to vector<8x64xf32>
    %158 = arith.subf %152, %157 : vector<8x64xf32>
    %159 = arith.mulf %158, %158 : vector<8x64xf32>
    %cst_118 = arith.constant dense<0.000000e+00> : vector<8xf32>
    %160 = vector.multi_reduction <add>, %159, %cst_118 [1] : vector<8x64xf32> to vector<8xf32>
    %161 = vector.shape_cast %160 : vector<8xf32> to vector<8x1xf32>
    %cst_119 = arith.constant 6.400000e+01 : f32
    %162 = vector.broadcast %cst_119 : f32 to vector<8x1xf32>
    %163 = arith.divf %161, %162 : vector<8x1xf32>
    %164 = vector.broadcast %156 : vector<8x1xf32> to vector<8x64xf32>
    %165 = arith.subf %152, %164 : vector<8x64xf32>
    %cst_120 = arith.constant 9.99999974E-6 : f32
    %166 = vector.broadcast %cst_120 : f32 to vector<8x1xf32>
    %167 = arith.addf %163, %166 : vector<8x1xf32>
    %168 = math.rsqrt %167 : vector<8x1xf32>
    %169 = vector.broadcast %168 : vector<8x1xf32> to vector<8x64xf32>
    %170 = arith.mulf %165, %169 : vector<8x64xf32>
    %171 = vector.broadcast %62 : vector<1x64xf32> to vector<8x64xf32>
    %172 = arith.mulf %170, %171 : vector<8x64xf32>
    %173 = vector.broadcast %60 : vector<1x64xf32> to vector<8x64xf32>
    %174 = arith.addf %172, %173 : vector<8x64xf32>
    %175 = arith.addf %1, %174 : vector<8x64xf32>
    %cst_121 = arith.constant dense<0.000000e+00> : vector<8xf32>
    %176 = vector.multi_reduction <add>, %175, %cst_121 [1] : vector<8x64xf32> to vector<8xf32>
    %177 = vector.shape_cast %176 : vector<8xf32> to vector<8x1xf32>
    %cst_122 = arith.constant 6.400000e+01 : f32
    %178 = vector.broadcast %cst_122 : f32 to vector<8x1xf32>
    %179 = arith.divf %177, %178 : vector<8x1xf32>
    %180 = vector.broadcast %179 : vector<8x1xf32> to vector<8x64xf32>
    %181 = arith.subf %175, %180 : vector<8x64xf32>
    %182 = arith.mulf %181, %181 : vector<8x64xf32>
    %cst_123 = arith.constant dense<0.000000e+00> : vector<8xf32>
    %183 = vector.multi_reduction <add>, %182, %cst_123 [1] : vector<8x64xf32> to vector<8xf32>
    %184 = vector.shape_cast %183 : vector<8xf32> to vector<8x1xf32>
    %cst_124 = arith.constant 6.400000e+01 : f32
    %185 = vector.broadcast %cst_124 : f32 to vector<8x1xf32>
    %186 = arith.divf %184, %185 : vector<8x1xf32>
    %187 = vector.broadcast %179 : vector<8x1xf32> to vector<8x64xf32>
    %188 = arith.subf %175, %187 : vector<8x64xf32>
    %cst_125 = arith.constant 9.99999974E-6 : f32
    %189 = vector.broadcast %cst_125 : f32 to vector<8x1xf32>
    %190 = arith.addf %186, %189 : vector<8x1xf32>
    %191 = math.rsqrt %190 : vector<8x1xf32>
    %192 = vector.broadcast %191 : vector<8x1xf32> to vector<8x64xf32>
    %193 = arith.mulf %188, %192 : vector<8x64xf32>
    %194 = vector.broadcast %38 : vector<1x64xf32> to vector<8x64xf32>
    %195 = arith.mulf %193, %194 : vector<8x64xf32>
    %196 = vector.broadcast %36 : vector<1x64xf32> to vector<8x64xf32>
    %197 = arith.addf %195, %196 : vector<8x64xf32>
    %198 = vector.broadcast %11 : vector<8x1xf32> to vector<8x64xf32>
    %199 = arith.mulf %197, %198 : vector<8x64xf32>
    %200 = arith.truncf %199 : vector<8x64xf32> to vector<8x64xbf16>
    %cst_126 = arith.constant dense<0.000000e+00> : vector<8x64xf32>
    %201 = tpu.matmul %200, %32, %cst_126 {dimension_numbers = #tpu.dot_dimension_numbers<[1], [0], [0], [1], [0, 0, 1, 1], [], []>} : vector<8x64xbf16>, vector<64x64xbf16>, vector<8x64xf32> -> vector<8x64xf32>
    %202 = vector.broadcast %20 : vector<1x64xf32> to vector<8x64xf32>
    %203 = arith.addf %201, %202 : vector<8x64xf32>
    %cst_127 = arith.constant dense<0.000000e+00> : vector<99x64xf32>
    %204 = tpu.matmul %13, %28, %cst_127 {dimension_numbers = #tpu.dot_dimension_numbers<[1], [0], [0], [1], [0, 0, 1, 1], [], []>} : vector<99x64xbf16>, vector<64x64xbf16>, vector<99x64xf32> -> vector<99x64xf32>
    %205 = vector.broadcast %16 : vector<1x64xf32> to vector<99x64xf32>
    %206 = arith.addf %204, %205 : vector<99x64xf32>
    %cst_128 = arith.constant dense<0.000000e+00> : vector<99x64xf32>
    %207 = tpu.matmul %14, %34, %cst_128 {dimension_numbers = #tpu.dot_dimension_numbers<[1], [0], [0], [1], [0, 0, 1, 1], [], []>} : vector<99x64xbf16>, vector<64x64xbf16>, vector<99x64xf32> -> vector<99x64xf32>
    %208 = vector.broadcast %22 : vector<1x64xf32> to vector<99x64xf32>
    %209 = arith.addf %207, %208 : vector<99x64xf32>
    %210 = arith.truncf %203 : vector<8x64xf32> to vector<8x64xbf16>
    %211 = arith.truncf %206 : vector<99x64xf32> to vector<99x64xbf16>
    %212 = arith.truncf %209 : vector<99x64xf32> to vector<99x64xbf16>
    %213 = vector.extract_strided_slice %210 {offsets = [0, 0], sizes = [8, 16], strides = [1, 1]} : vector<8x64xbf16> to vector<8x16xbf16>
    %214 = vector.extract_strided_slice %211 {offsets = [0, 0], sizes = [99, 16], strides = [1, 1]} : vector<99x64xbf16> to vector<99x16xbf16>
    %215 = vector.extract_strided_slice %212 {offsets = [0, 0], sizes = [99, 16], strides = [1, 1]} : vector<99x64xbf16> to vector<99x16xbf16>
    %cst_129 = arith.constant dense<0.000000e+00> : vector<8x99xf32>
    %216 = tpu.matmul %213, %214, %cst_129 {dimension_numbers = #tpu.dot_dimension_numbers<[1], [1], [0], [0], [0, 0, 1, 0], [], []>} : vector<8x16xbf16>, vector<99x16xbf16>, vector<8x99xf32> -> vector<8x99xf32>
    %cst_130 = arith.constant 2.500000e-01 : f32
    %217 = vector.broadcast %cst_130 : f32 to vector<8x99xf32>
    %218 = arith.mulf %216, %217 : vector<8x99xf32>
    %219 = vector.broadcast %9 : vector<1x99xf32> to vector<8x99xf32>
    %220 = arith.addf %218, %219 : vector<8x99xf32>
    %cst_131 = arith.constant dense<0xFF800000> : vector<8xf32>
    %221 = vector.multi_reduction <maximumf>, %220, %cst_131 [1] : vector<8x99xf32> to vector<8xf32>
    %222 = vector.shape_cast %221 : vector<8xf32> to vector<8x1xf32>
    %223 = vector.broadcast %222 : vector<8x1xf32> to vector<8x99xf32>
    %224 = arith.subf %220, %223 : vector<8x99xf32>
    %225 = math.exp %224 : vector<8x99xf32>
    %cst_132 = arith.constant dense<0.000000e+00> : vector<8xf32>
    %226 = vector.multi_reduction <add>, %225, %cst_132 [1] : vector<8x99xf32> to vector<8xf32>
    %227 = vector.shape_cast %226 : vector<8xf32> to vector<8x1xf32>
    %228 = vector.broadcast %227 : vector<8x1xf32> to vector<8x99xf32>
    %229 = arith.divf %225, %228 : vector<8x99xf32>
    %230 = arith.truncf %229 : vector<8x99xf32> to vector<8x99xbf16>
    %cst_133 = arith.constant dense<0.000000e+00> : vector<8x16xf32>
    %231 = tpu.matmul %230, %215, %cst_133 {dimension_numbers = #tpu.dot_dimension_numbers<[1], [0], [0], [1], [0, 0, 1, 1], [], []>} : vector<8x99xbf16>, vector<99x16xbf16>, vector<8x16xf32> -> vector<8x16xf32>
    %232 = vector.extract_strided_slice %210 {offsets = [0, 16], sizes = [8, 16], strides = [1, 1]} : vector<8x64xbf16> to vector<8x16xbf16>
    %233 = vector.extract_strided_slice %211 {offsets = [0, 16], sizes = [99, 16], strides = [1, 1]} : vector<99x64xbf16> to vector<99x16xbf16>
    %234 = vector.extract_strided_slice %212 {offsets = [0, 16], sizes = [99, 16], strides = [1, 1]} : vector<99x64xbf16> to vector<99x16xbf16>
    %cst_134 = arith.constant dense<0.000000e+00> : vector<8x99xf32>
    %235 = tpu.matmul %232, %233, %cst_134 {dimension_numbers = #tpu.dot_dimension_numbers<[1], [1], [0], [0], [0, 0, 1, 0], [], []>} : vector<8x16xbf16>, vector<99x16xbf16>, vector<8x99xf32> -> vector<8x99xf32>
    %cst_135 = arith.constant 2.500000e-01 : f32
    %236 = vector.broadcast %cst_135 : f32 to vector<8x99xf32>
    %237 = arith.mulf %235, %236 : vector<8x99xf32>
    %238 = vector.broadcast %9 : vector<1x99xf32> to vector<8x99xf32>
    %239 = arith.addf %237, %238 : vector<8x99xf32>
    %cst_136 = arith.constant dense<0xFF800000> : vector<8xf32>
    %240 = vector.multi_reduction <maximumf>, %239, %cst_136 [1] : vector<8x99xf32> to vector<8xf32>
    %241 = vector.shape_cast %240 : vector<8xf32> to vector<8x1xf32>
    %242 = vector.broadcast %241 : vector<8x1xf32> to vector<8x99xf32>
    %243 = arith.subf %239, %242 : vector<8x99xf32>
    %244 = math.exp %243 : vector<8x99xf32>
    %cst_137 = arith.constant dense<0.000000e+00> : vector<8xf32>
    %245 = vector.multi_reduction <add>, %244, %cst_137 [1] : vector<8x99xf32> to vector<8xf32>
    %246 = vector.shape_cast %245 : vector<8xf32> to vector<8x1xf32>
    %247 = vector.broadcast %246 : vector<8x1xf32> to vector<8x99xf32>
    %248 = arith.divf %244, %247 : vector<8x99xf32>
    %249 = arith.truncf %248 : vector<8x99xf32> to vector<8x99xbf16>
    %cst_138 = arith.constant dense<0.000000e+00> : vector<8x16xf32>
    %250 = tpu.matmul %249, %234, %cst_138 {dimension_numbers = #tpu.dot_dimension_numbers<[1], [0], [0], [1], [0, 0, 1, 1], [], []>} : vector<8x99xbf16>, vector<99x16xbf16>, vector<8x16xf32> -> vector<8x16xf32>
    %251 = vector.extract_strided_slice %210 {offsets = [0, 32], sizes = [8, 16], strides = [1, 1]} : vector<8x64xbf16> to vector<8x16xbf16>
    %252 = vector.extract_strided_slice %211 {offsets = [0, 32], sizes = [99, 16], strides = [1, 1]} : vector<99x64xbf16> to vector<99x16xbf16>
    %253 = vector.extract_strided_slice %212 {offsets = [0, 32], sizes = [99, 16], strides = [1, 1]} : vector<99x64xbf16> to vector<99x16xbf16>
    %cst_139 = arith.constant dense<0.000000e+00> : vector<8x99xf32>
    %254 = tpu.matmul %251, %252, %cst_139 {dimension_numbers = #tpu.dot_dimension_numbers<[1], [1], [0], [0], [0, 0, 1, 0], [], []>} : vector<8x16xbf16>, vector<99x16xbf16>, vector<8x99xf32> -> vector<8x99xf32>
    %cst_140 = arith.constant 2.500000e-01 : f32
    %255 = vector.broadcast %cst_140 : f32 to vector<8x99xf32>
    %256 = arith.mulf %254, %255 : vector<8x99xf32>
    %257 = vector.broadcast %9 : vector<1x99xf32> to vector<8x99xf32>
    %258 = arith.addf %256, %257 : vector<8x99xf32>
    %cst_141 = arith.constant dense<0xFF800000> : vector<8xf32>
    %259 = vector.multi_reduction <maximumf>, %258, %cst_141 [1] : vector<8x99xf32> to vector<8xf32>
    %260 = vector.shape_cast %259 : vector<8xf32> to vector<8x1xf32>
    %261 = vector.broadcast %260 : vector<8x1xf32> to vector<8x99xf32>
    %262 = arith.subf %258, %261 : vector<8x99xf32>
    %263 = math.exp %262 : vector<8x99xf32>
    %cst_142 = arith.constant dense<0.000000e+00> : vector<8xf32>
    %264 = vector.multi_reduction <add>, %263, %cst_142 [1] : vector<8x99xf32> to vector<8xf32>
    %265 = vector.shape_cast %264 : vector<8xf32> to vector<8x1xf32>
    %266 = vector.broadcast %265 : vector<8x1xf32> to vector<8x99xf32>
    %267 = arith.divf %263, %266 : vector<8x99xf32>
    %268 = arith.truncf %267 : vector<8x99xf32> to vector<8x99xbf16>
    %cst_143 = arith.constant dense<0.000000e+00> : vector<8x16xf32>
    %269 = tpu.matmul %268, %253, %cst_143 {dimension_numbers = #tpu.dot_dimension_numbers<[1], [0], [0], [1], [0, 0, 1, 1], [], []>} : vector<8x99xbf16>, vector<99x16xbf16>, vector<8x16xf32> -> vector<8x16xf32>
    %270 = vector.extract_strided_slice %210 {offsets = [0, 48], sizes = [8, 16], strides = [1, 1]} : vector<8x64xbf16> to vector<8x16xbf16>
    %271 = vector.extract_strided_slice %211 {offsets = [0, 48], sizes = [99, 16], strides = [1, 1]} : vector<99x64xbf16> to vector<99x16xbf16>
    %272 = vector.extract_strided_slice %212 {offsets = [0, 48], sizes = [99, 16], strides = [1, 1]} : vector<99x64xbf16> to vector<99x16xbf16>
    %cst_144 = arith.constant dense<0.000000e+00> : vector<8x99xf32>
    %273 = tpu.matmul %270, %271, %cst_144 {dimension_numbers = #tpu.dot_dimension_numbers<[1], [1], [0], [0], [0, 0, 1, 0], [], []>} : vector<8x16xbf16>, vector<99x16xbf16>, vector<8x99xf32> -> vector<8x99xf32>
    %cst_145 = arith.constant 2.500000e-01 : f32
    %274 = vector.broadcast %cst_145 : f32 to vector<8x99xf32>
    %275 = arith.mulf %273, %274 : vector<8x99xf32>
    %276 = vector.broadcast %9 : vector<1x99xf32> to vector<8x99xf32>
    %277 = arith.addf %275, %276 : vector<8x99xf32>
    %cst_146 = arith.constant dense<0xFF800000> : vector<8xf32>
    %278 = vector.multi_reduction <maximumf>, %277, %cst_146 [1] : vector<8x99xf32> to vector<8xf32>
    %279 = vector.shape_cast %278 : vector<8xf32> to vector<8x1xf32>
    %280 = vector.broadcast %279 : vector<8x1xf32> to vector<8x99xf32>
    %281 = arith.subf %277, %280 : vector<8x99xf32>
    %282 = math.exp %281 : vector<8x99xf32>
    %cst_147 = arith.constant dense<0.000000e+00> : vector<8xf32>
    %283 = vector.multi_reduction <add>, %282, %cst_147 [1] : vector<8x99xf32> to vector<8xf32>
    %284 = vector.shape_cast %283 : vector<8xf32> to vector<8x1xf32>
    %285 = vector.broadcast %284 : vector<8x1xf32> to vector<8x99xf32>
    %286 = arith.divf %282, %285 : vector<8x99xf32>
    %287 = arith.truncf %286 : vector<8x99xf32> to vector<8x99xbf16>
    %cst_148 = arith.constant dense<0.000000e+00> : vector<8x16xf32>
    %288 = tpu.matmul %287, %272, %cst_148 {dimension_numbers = #tpu.dot_dimension_numbers<[1], [0], [0], [1], [0, 0, 1, 1], [], []>} : vector<8x99xbf16>, vector<99x16xbf16>, vector<8x16xf32> -> vector<8x16xf32>
    %289 = tpu.concatenate %231, %250, %269, %288 in 1 : vector<8x16xf32>, vector<8x16xf32>, vector<8x16xf32>, vector<8x16xf32> -> vector<8x64xf32>
    %290 = arith.truncf %289 : vector<8x64xf32> to vector<8x64xbf16>
    %cst_149 = arith.constant dense<0.000000e+00> : vector<8x64xf32>
    %291 = tpu.matmul %290, %30, %cst_149 {dimension_numbers = #tpu.dot_dimension_numbers<[1], [0], [0], [1], [0, 0, 1, 1], [], []>} : vector<8x64xbf16>, vector<64x64xbf16>, vector<8x64xf32> -> vector<8x64xf32>
    %292 = vector.broadcast %18 : vector<1x64xf32> to vector<8x64xf32>
    %293 = arith.addf %291, %292 : vector<8x64xf32>
    %294 = arith.addf %199, %293 : vector<8x64xf32>
    %cst_150 = arith.constant dense<0.000000e+00> : vector<8xf32>
    %295 = vector.multi_reduction <add>, %294, %cst_150 [1] : vector<8x64xf32> to vector<8xf32>
    %296 = vector.shape_cast %295 : vector<8xf32> to vector<8x1xf32>
    %cst_151 = arith.constant 6.400000e+01 : f32
    %297 = vector.broadcast %cst_151 : f32 to vector<8x1xf32>
    %298 = arith.divf %296, %297 : vector<8x1xf32>
    %299 = vector.broadcast %298 : vector<8x1xf32> to vector<8x64xf32>
    %300 = arith.subf %294, %299 : vector<8x64xf32>
    %301 = arith.mulf %300, %300 : vector<8x64xf32>
    %cst_152 = arith.constant dense<0.000000e+00> : vector<8xf32>
    %302 = vector.multi_reduction <add>, %301, %cst_152 [1] : vector<8x64xf32> to vector<8xf32>
    %303 = vector.shape_cast %302 : vector<8xf32> to vector<8x1xf32>
    %cst_153 = arith.constant 6.400000e+01 : f32
    %304 = vector.broadcast %cst_153 : f32 to vector<8x1xf32>
    %305 = arith.divf %303, %304 : vector<8x1xf32>
    %306 = vector.broadcast %298 : vector<8x1xf32> to vector<8x64xf32>
    %307 = arith.subf %294, %306 : vector<8x64xf32>
    %cst_154 = arith.constant 9.99999974E-6 : f32
    %308 = vector.broadcast %cst_154 : f32 to vector<8x1xf32>
    %309 = arith.addf %305, %308 : vector<8x1xf32>
    %310 = math.rsqrt %309 : vector<8x1xf32>
    %311 = vector.broadcast %310 : vector<8x1xf32> to vector<8x64xf32>
    %312 = arith.mulf %307, %311 : vector<8x64xf32>
    %313 = vector.broadcast %26 : vector<1x64xf32> to vector<8x64xf32>
    %314 = arith.mulf %312, %313 : vector<8x64xf32>
    %315 = vector.broadcast %24 : vector<1x64xf32> to vector<8x64xf32>
    %316 = arith.addf %314, %315 : vector<8x64xf32>
    %317 = arith.addf %199, %316 : vector<8x64xf32>
    %cst_155 = arith.constant dense<0.000000e+00> : vector<8xf32>
    %318 = vector.multi_reduction <add>, %317, %cst_155 [1] : vector<8x64xf32> to vector<8xf32>
    %319 = vector.shape_cast %318 : vector<8xf32> to vector<8x1xf32>
    %cst_156 = arith.constant 6.400000e+01 : f32
    %320 = vector.broadcast %cst_156 : f32 to vector<8x1xf32>
    %321 = arith.divf %319, %320 : vector<8x1xf32>
    %322 = vector.broadcast %321 : vector<8x1xf32> to vector<8x64xf32>
    %323 = arith.subf %317, %322 : vector<8x64xf32>
    %324 = arith.mulf %323, %323 : vector<8x64xf32>
    %cst_157 = arith.constant dense<0.000000e+00> : vector<8xf32>
    %325 = vector.multi_reduction <add>, %324, %cst_157 [1] : vector<8x64xf32> to vector<8xf32>
    %326 = vector.shape_cast %325 : vector<8xf32> to vector<8x1xf32>
    %cst_158 = arith.constant 6.400000e+01 : f32
    %327 = vector.broadcast %cst_158 : f32 to vector<8x1xf32>
    %328 = arith.divf %326, %327 : vector<8x1xf32>
    %329 = vector.broadcast %321 : vector<8x1xf32> to vector<8x64xf32>
    %330 = arith.subf %317, %329 : vector<8x64xf32>
    %cst_159 = arith.constant 9.99999974E-6 : f32
    %331 = vector.broadcast %cst_159 : f32 to vector<8x1xf32>
    %332 = arith.addf %328, %331 : vector<8x1xf32>
    %333 = math.rsqrt %332 : vector<8x1xf32>
    %334 = vector.broadcast %333 : vector<8x1xf32> to vector<8x64xf32>
    %335 = arith.mulf %330, %334 : vector<8x64xf32>
    %336 = vector.broadcast %42 : vector<1x64xf32> to vector<8x64xf32>
    %337 = arith.mulf %335, %336 : vector<8x64xf32>
    %338 = vector.broadcast %40 : vector<1x64xf32> to vector<8x64xf32>
    %339 = arith.addf %337, %338 : vector<8x64xf32>
    %340 = vector.broadcast %11 : vector<8x1xf32> to vector<8x64xf32>
    %341 = arith.mulf %339, %340 : vector<8x64xf32>
    %342 = arith.truncf %341 : vector<8x64xf32> to vector<8x64xbf16>
    %cst_160 = arith.constant dense<0.000000e+00> : vector<8x128xf32>
    %343 = tpu.matmul %342, %52, %cst_160 {dimension_numbers = #tpu.dot_dimension_numbers<[1], [0], [0], [1], [0, 0, 1, 1], [], []>} : vector<8x64xbf16>, vector<64x128xbf16>, vector<8x128xf32> -> vector<8x128xf32>
    %344 = vector.broadcast %44 : vector<1x128xf32> to vector<8x128xf32>
    %345 = arith.addf %343, %344 : vector<8x128xf32>
    %cst_161 = arith.constant 0.000000e+00 : f32
    %346 = vector.broadcast %cst_161 : f32 to vector<8x128xf32>
    %347 = arith.maximumf %345, %346 : vector<8x128xf32>
    %348 = arith.truncf %347 : vector<8x128xf32> to vector<8x128xbf16>
    %cst_162 = arith.constant dense<0.000000e+00> : vector<8x64xf32>
    %349 = tpu.matmul %348, %54, %cst_162 {dimension_numbers = #tpu.dot_dimension_numbers<[1], [0], [0], [1], [0, 0, 1, 1], [], []>} : vector<8x128xbf16>, vector<128x64xbf16>, vector<8x64xf32> -> vector<8x64xf32>
    %350 = vector.broadcast %46 : vector<1x64xf32> to vector<8x64xf32>
    %351 = arith.addf %349, %350 : vector<8x64xf32>
    %352 = arith.addf %341, %351 : vector<8x64xf32>
    %cst_163 = arith.constant dense<0.000000e+00> : vector<8xf32>
    %353 = vector.multi_reduction <add>, %352, %cst_163 [1] : vector<8x64xf32> to vector<8xf32>
    %354 = vector.shape_cast %353 : vector<8xf32> to vector<8x1xf32>
    %cst_164 = arith.constant 6.400000e+01 : f32
    %355 = vector.broadcast %cst_164 : f32 to vector<8x1xf32>
    %356 = arith.divf %354, %355 : vector<8x1xf32>
    %357 = vector.broadcast %356 : vector<8x1xf32> to vector<8x64xf32>
    %358 = arith.subf %352, %357 : vector<8x64xf32>
    %359 = arith.mulf %358, %358 : vector<8x64xf32>
    %cst_165 = arith.constant dense<0.000000e+00> : vector<8xf32>
    %360 = vector.multi_reduction <add>, %359, %cst_165 [1] : vector<8x64xf32> to vector<8xf32>
    %361 = vector.shape_cast %360 : vector<8xf32> to vector<8x1xf32>
    %cst_166 = arith.constant 6.400000e+01 : f32
    %362 = vector.broadcast %cst_166 : f32 to vector<8x1xf32>
    %363 = arith.divf %361, %362 : vector<8x1xf32>
    %364 = vector.broadcast %356 : vector<8x1xf32> to vector<8x64xf32>
    %365 = arith.subf %352, %364 : vector<8x64xf32>
    %cst_167 = arith.constant 9.99999974E-6 : f32
    %366 = vector.broadcast %cst_167 : f32 to vector<8x1xf32>
    %367 = arith.addf %363, %366 : vector<8x1xf32>
    %368 = math.rsqrt %367 : vector<8x1xf32>
    %369 = vector.broadcast %368 : vector<8x1xf32> to vector<8x64xf32>
    %370 = arith.mulf %365, %369 : vector<8x64xf32>
    %371 = vector.broadcast %50 : vector<1x64xf32> to vector<8x64xf32>
    %372 = arith.mulf %370, %371 : vector<8x64xf32>
    %373 = vector.broadcast %48 : vector<1x64xf32> to vector<8x64xf32>
    %374 = arith.addf %372, %373 : vector<8x64xf32>
    %375 = vector.broadcast %11 : vector<8x1xf32> to vector<8x64xf32>
    %376 = arith.mulf %374, %375 : vector<8x64xf32>
    %c1 = arith.constant 1 : index
    %c0_168 = arith.constant 0 : index
    %c0_169 = arith.constant 0 : index
    %377 = vector.load %arg8[%c1, %c0_168, %c0_169] : memref<2x1x64xf32, #tpu.memory_space<vmem>>, vector<1x1x64xf32>
    %378 = vector.shape_cast %377 : vector<1x1x64xf32> to vector<1x64xf32>
    %c1_170 = arith.constant 1 : index
    %c0_171 = arith.constant 0 : index
    %c0_172 = arith.constant 0 : index
    %379 = vector.load %arg9[%c1_170, %c0_171, %c0_172] : memref<2x1x64xf32, #tpu.memory_space<vmem>>, vector<1x1x64xf32>
    %380 = vector.shape_cast %379 : vector<1x1x64xf32> to vector<1x64xf32>
    %c1_173 = arith.constant 1 : index
    %c0_174 = arith.constant 0 : index
    %c0_175 = arith.constant 0 : index
    %381 = vector.load %arg10[%c1_173, %c0_174, %c0_175] : memref<2x1x64xf32, #tpu.memory_space<vmem>>, vector<1x1x64xf32>
    %382 = vector.shape_cast %381 : vector<1x1x64xf32> to vector<1x64xf32>
    %c1_176 = arith.constant 1 : index
    %c0_177 = arith.constant 0 : index
    %c0_178 = arith.constant 0 : index
    %383 = vector.load %arg11[%c1_176, %c0_177, %c0_178] : memref<2x1x64xf32, #tpu.memory_space<vmem>>, vector<1x1x64xf32>
    %384 = vector.shape_cast %383 : vector<1x1x64xf32> to vector<1x64xf32>
    %c1_179 = arith.constant 1 : index
    %c0_180 = arith.constant 0 : index
    %c0_181 = arith.constant 0 : index
    %385 = vector.load %arg12[%c1_179, %c0_180, %c0_181] : memref<2x1x64xf32, #tpu.memory_space<vmem>>, vector<1x1x64xf32>
    %386 = vector.shape_cast %385 : vector<1x1x64xf32> to vector<1x64xf32>
    %c1_182 = arith.constant 1 : index
    %c0_183 = arith.constant 0 : index
    %c0_184 = arith.constant 0 : index
    %387 = vector.load %arg13[%c1_182, %c0_183, %c0_184] : memref<2x1x64xf32, #tpu.memory_space<vmem>>, vector<1x1x64xf32>
    %388 = vector.shape_cast %387 : vector<1x1x64xf32> to vector<1x64xf32>
    %c1_185 = arith.constant 1 : index
    %c0_186 = arith.constant 0 : index
    %c0_187 = arith.constant 0 : index
    %389 = vector.load %arg14[%c1_185, %c0_186, %c0_187] : memref<2x64x64xbf16, #tpu.memory_space<vmem>>, vector<1x64x64xbf16>
    %390 = vector.shape_cast %389 : vector<1x64x64xbf16> to vector<64x64xbf16>
    %c1_188 = arith.constant 1 : index
    %c0_189 = arith.constant 0 : index
    %c0_190 = arith.constant 0 : index
    %391 = vector.load %arg15[%c1_188, %c0_189, %c0_190] : memref<2x64x64xbf16, #tpu.memory_space<vmem>>, vector<1x64x64xbf16>
    %392 = vector.shape_cast %391 : vector<1x64x64xbf16> to vector<64x64xbf16>
    %c1_191 = arith.constant 1 : index
    %c0_192 = arith.constant 0 : index
    %c0_193 = arith.constant 0 : index
    %393 = vector.load %arg16[%c1_191, %c0_192, %c0_193] : memref<2x64x64xbf16, #tpu.memory_space<vmem>>, vector<1x64x64xbf16>
    %394 = vector.shape_cast %393 : vector<1x64x64xbf16> to vector<64x64xbf16>
    %c1_194 = arith.constant 1 : index
    %c0_195 = arith.constant 0 : index
    %c0_196 = arith.constant 0 : index
    %395 = vector.load %arg17[%c1_194, %c0_195, %c0_196] : memref<2x64x64xbf16, #tpu.memory_space<vmem>>, vector<1x64x64xbf16>
    %396 = vector.shape_cast %395 : vector<1x64x64xbf16> to vector<64x64xbf16>
    %c1_197 = arith.constant 1 : index
    %c0_198 = arith.constant 0 : index
    %c0_199 = arith.constant 0 : index
    %397 = vector.load %arg18[%c1_197, %c0_198, %c0_199] : memref<2x1x64xf32, #tpu.memory_space<vmem>>, vector<1x1x64xf32>
    %398 = vector.shape_cast %397 : vector<1x1x64xf32> to vector<1x64xf32>
    %c1_200 = arith.constant 1 : index
    %c0_201 = arith.constant 0 : index
    %c0_202 = arith.constant 0 : index
    %399 = vector.load %arg19[%c1_200, %c0_201, %c0_202] : memref<2x1x64xf32, #tpu.memory_space<vmem>>, vector<1x1x64xf32>
    %400 = vector.shape_cast %399 : vector<1x1x64xf32> to vector<1x64xf32>
    %c1_203 = arith.constant 1 : index
    %c0_204 = arith.constant 0 : index
    %c0_205 = arith.constant 0 : index
    %401 = vector.load %arg20[%c1_203, %c0_204, %c0_205] : memref<2x1x64xf32, #tpu.memory_space<vmem>>, vector<1x1x64xf32>
    %402 = vector.shape_cast %401 : vector<1x1x64xf32> to vector<1x64xf32>
    %c1_206 = arith.constant 1 : index
    %c0_207 = arith.constant 0 : index
    %c0_208 = arith.constant 0 : index
    %403 = vector.load %arg21[%c1_206, %c0_207, %c0_208] : memref<2x1x64xf32, #tpu.memory_space<vmem>>, vector<1x1x64xf32>
    %404 = vector.shape_cast %403 : vector<1x1x64xf32> to vector<1x64xf32>
    %c1_209 = arith.constant 1 : index
    %c0_210 = arith.constant 0 : index
    %c0_211 = arith.constant 0 : index
    %405 = vector.load %arg22[%c1_209, %c0_210, %c0_211] : memref<2x1x128xf32, #tpu.memory_space<vmem>>, vector<1x1x128xf32>
    %406 = vector.shape_cast %405 : vector<1x1x128xf32> to vector<1x128xf32>
    %c1_212 = arith.constant 1 : index
    %c0_213 = arith.constant 0 : index
    %c0_214 = arith.constant 0 : index
    %407 = vector.load %arg23[%c1_212, %c0_213, %c0_214] : memref<2x1x64xf32, #tpu.memory_space<vmem>>, vector<1x1x64xf32>
    %408 = vector.shape_cast %407 : vector<1x1x64xf32> to vector<1x64xf32>
    %c1_215 = arith.constant 1 : index
    %c0_216 = arith.constant 0 : index
    %c0_217 = arith.constant 0 : index
    %409 = vector.load %arg24[%c1_215, %c0_216, %c0_217] : memref<2x1x64xf32, #tpu.memory_space<vmem>>, vector<1x1x64xf32>
    %410 = vector.shape_cast %409 : vector<1x1x64xf32> to vector<1x64xf32>
    %c1_218 = arith.constant 1 : index
    %c0_219 = arith.constant 0 : index
    %c0_220 = arith.constant 0 : index
    %411 = vector.load %arg25[%c1_218, %c0_219, %c0_220] : memref<2x1x64xf32, #tpu.memory_space<vmem>>, vector<1x1x64xf32>
    %412 = vector.shape_cast %411 : vector<1x1x64xf32> to vector<1x64xf32>
    %c1_221 = arith.constant 1 : index
    %c0_222 = arith.constant 0 : index
    %c0_223 = arith.constant 0 : index
    %413 = vector.load %arg26[%c1_221, %c0_222, %c0_223] : memref<2x64x128xbf16, #tpu.memory_space<vmem>>, vector<1x64x128xbf16>
    %414 = vector.shape_cast %413 : vector<1x64x128xbf16> to vector<64x128xbf16>
    %c1_224 = arith.constant 1 : index
    %c0_225 = arith.constant 0 : index
    %c0_226 = arith.constant 0 : index
    %415 = vector.load %arg27[%c1_224, %c0_225, %c0_226] : memref<2x128x64xbf16, #tpu.memory_space<vmem>>, vector<1x128x64xbf16>
    %416 = vector.shape_cast %415 : vector<1x128x64xbf16> to vector<128x64xbf16>
    %c1_227 = arith.constant 1 : index
    %c0_228 = arith.constant 0 : index
    %c0_229 = arith.constant 0 : index
    %417 = vector.load %arg28[%c1_227, %c0_228, %c0_229] : memref<2x1x64xf32, #tpu.memory_space<vmem>>, vector<1x1x64xf32>
    %418 = vector.shape_cast %417 : vector<1x1x64xf32> to vector<1x64xf32>
    %c1_230 = arith.constant 1 : index
    %c0_231 = arith.constant 0 : index
    %c0_232 = arith.constant 0 : index
    %419 = vector.load %arg29[%c1_230, %c0_231, %c0_232] : memref<2x1x192xf32, #tpu.memory_space<vmem>>, vector<1x1x192xf32>
    %420 = vector.shape_cast %419 : vector<1x1x192xf32> to vector<1x192xf32>
    %c1_233 = arith.constant 1 : index
    %c0_234 = arith.constant 0 : index
    %c0_235 = arith.constant 0 : index
    %421 = vector.load %arg30[%c1_233, %c0_234, %c0_235] : memref<2x1x64xf32, #tpu.memory_space<vmem>>, vector<1x1x64xf32>
    %422 = vector.shape_cast %421 : vector<1x1x64xf32> to vector<1x64xf32>
    %c1_236 = arith.constant 1 : index
    %c0_237 = arith.constant 0 : index
    %c0_238 = arith.constant 0 : index
    %423 = vector.load %arg31[%c1_236, %c0_237, %c0_238] : memref<2x1x64xf32, #tpu.memory_space<vmem>>, vector<1x1x64xf32>
    %424 = vector.shape_cast %423 : vector<1x1x64xf32> to vector<1x64xf32>
    %c1_239 = arith.constant 1 : index
    %c0_240 = arith.constant 0 : index
    %c0_241 = arith.constant 0 : index
    %425 = vector.load %arg32[%c1_239, %c0_240, %c0_241] : memref<2x64x64xbf16, #tpu.memory_space<vmem>>, vector<1x64x64xbf16>
    %426 = vector.shape_cast %425 : vector<1x64x64xbf16> to vector<64x64xbf16>
    %c1_242 = arith.constant 1 : index
    %c0_243 = arith.constant 0 : index
    %c0_244 = arith.constant 0 : index
    %427 = vector.load %arg33[%c1_242, %c0_243, %c0_244] : memref<2x64x192xbf16, #tpu.memory_space<vmem>>, vector<1x64x192xbf16>
    %428 = vector.shape_cast %427 : vector<1x64x192xbf16> to vector<64x192xbf16>
    %429 = arith.truncf %376 : vector<8x64xf32> to vector<8x64xbf16>
    %cst_245 = arith.constant dense<0.000000e+00> : vector<8x192xf32>
    %430 = tpu.matmul %429, %428, %cst_245 {dimension_numbers = #tpu.dot_dimension_numbers<[1], [0], [0], [1], [0, 0, 1, 1], [], []>} : vector<8x64xbf16>, vector<64x192xbf16>, vector<8x192xf32> -> vector<8x192xf32>
    %431 = vector.broadcast %420 : vector<1x192xf32> to vector<8x192xf32>
    %432 = arith.addf %430, %431 : vector<8x192xf32>
    %433 = arith.truncf %432 : vector<8x192xf32> to vector<8x192xbf16>
    %434 = vector.extract_strided_slice %433 {offsets = [0, 0], sizes = [8, 64], strides = [1, 1]} : vector<8x192xbf16> to vector<8x64xbf16>
    %435 = vector.extract_strided_slice %433 {offsets = [0, 64], sizes = [8, 64], strides = [1, 1]} : vector<8x192xbf16> to vector<8x64xbf16>
    %436 = vector.extract_strided_slice %433 {offsets = [0, 128], sizes = [8, 64], strides = [1, 1]} : vector<8x192xbf16> to vector<8x64xbf16>
    %437 = vector.extract_strided_slice %434 {offsets = [0, 0], sizes = [8, 16], strides = [1, 1]} : vector<8x64xbf16> to vector<8x16xbf16>
    %438 = vector.extract_strided_slice %435 {offsets = [0, 0], sizes = [8, 16], strides = [1, 1]} : vector<8x64xbf16> to vector<8x16xbf16>
    %439 = vector.extract_strided_slice %436 {offsets = [0, 0], sizes = [8, 16], strides = [1, 1]} : vector<8x64xbf16> to vector<8x16xbf16>
    %cst_246 = arith.constant dense<0.000000e+00> : vector<8x8xf32>
    %440 = tpu.matmul %437, %438, %cst_246 {dimension_numbers = #tpu.dot_dimension_numbers<[1], [1], [0], [0], [0, 0, 1, 0], [], []>} : vector<8x16xbf16>, vector<8x16xbf16>, vector<8x8xf32> -> vector<8x8xf32>
    %cst_247 = arith.constant 2.500000e-01 : f32
    %441 = vector.broadcast %cst_247 : f32 to vector<8x8xf32>
    %442 = arith.mulf %440, %441 : vector<8x8xf32>
    %443 = arith.addf %442, %7 : vector<8x8xf32>
    %cst_248 = arith.constant dense<0xFF800000> : vector<8xf32>
    %444 = vector.multi_reduction <maximumf>, %443, %cst_248 [1] : vector<8x8xf32> to vector<8xf32>
    %445 = vector.shape_cast %444 : vector<8xf32> to vector<8x1xf32>
    %446 = vector.broadcast %445 : vector<8x1xf32> to vector<8x8xf32>
    %447 = arith.subf %443, %446 : vector<8x8xf32>
    %448 = math.exp %447 : vector<8x8xf32>
    %cst_249 = arith.constant dense<0.000000e+00> : vector<8xf32>
    %449 = vector.multi_reduction <add>, %448, %cst_249 [1] : vector<8x8xf32> to vector<8xf32>
    %450 = vector.shape_cast %449 : vector<8xf32> to vector<8x1xf32>
    %451 = vector.broadcast %450 : vector<8x1xf32> to vector<8x8xf32>
    %452 = arith.divf %448, %451 : vector<8x8xf32>
    %453 = arith.truncf %452 : vector<8x8xf32> to vector<8x8xbf16>
    %cst_250 = arith.constant dense<0.000000e+00> : vector<8x16xf32>
    %454 = tpu.matmul %453, %439, %cst_250 {dimension_numbers = #tpu.dot_dimension_numbers<[1], [0], [0], [1], [0, 0, 1, 1], [], []>} : vector<8x8xbf16>, vector<8x16xbf16>, vector<8x16xf32> -> vector<8x16xf32>
    %455 = vector.extract_strided_slice %434 {offsets = [0, 16], sizes = [8, 16], strides = [1, 1]} : vector<8x64xbf16> to vector<8x16xbf16>
    %456 = vector.extract_strided_slice %435 {offsets = [0, 16], sizes = [8, 16], strides = [1, 1]} : vector<8x64xbf16> to vector<8x16xbf16>
    %457 = vector.extract_strided_slice %436 {offsets = [0, 16], sizes = [8, 16], strides = [1, 1]} : vector<8x64xbf16> to vector<8x16xbf16>
    %cst_251 = arith.constant dense<0.000000e+00> : vector<8x8xf32>
    %458 = tpu.matmul %455, %456, %cst_251 {dimension_numbers = #tpu.dot_dimension_numbers<[1], [1], [0], [0], [0, 0, 1, 0], [], []>} : vector<8x16xbf16>, vector<8x16xbf16>, vector<8x8xf32> -> vector<8x8xf32>
    %cst_252 = arith.constant 2.500000e-01 : f32
    %459 = vector.broadcast %cst_252 : f32 to vector<8x8xf32>
    %460 = arith.mulf %458, %459 : vector<8x8xf32>
    %461 = arith.addf %460, %7 : vector<8x8xf32>
    %cst_253 = arith.constant dense<0xFF800000> : vector<8xf32>
    %462 = vector.multi_reduction <maximumf>, %461, %cst_253 [1] : vector<8x8xf32> to vector<8xf32>
    %463 = vector.shape_cast %462 : vector<8xf32> to vector<8x1xf32>
    %464 = vector.broadcast %463 : vector<8x1xf32> to vector<8x8xf32>
    %465 = arith.subf %461, %464 : vector<8x8xf32>
    %466 = math.exp %465 : vector<8x8xf32>
    %cst_254 = arith.constant dense<0.000000e+00> : vector<8xf32>
    %467 = vector.multi_reduction <add>, %466, %cst_254 [1] : vector<8x8xf32> to vector<8xf32>
    %468 = vector.shape_cast %467 : vector<8xf32> to vector<8x1xf32>
    %469 = vector.broadcast %468 : vector<8x1xf32> to vector<8x8xf32>
    %470 = arith.divf %466, %469 : vector<8x8xf32>
    %471 = arith.truncf %470 : vector<8x8xf32> to vector<8x8xbf16>
    %cst_255 = arith.constant dense<0.000000e+00> : vector<8x16xf32>
    %472 = tpu.matmul %471, %457, %cst_255 {dimension_numbers = #tpu.dot_dimension_numbers<[1], [0], [0], [1], [0, 0, 1, 1], [], []>} : vector<8x8xbf16>, vector<8x16xbf16>, vector<8x16xf32> -> vector<8x16xf32>
    %473 = vector.extract_strided_slice %434 {offsets = [0, 32], sizes = [8, 16], strides = [1, 1]} : vector<8x64xbf16> to vector<8x16xbf16>
    %474 = vector.extract_strided_slice %435 {offsets = [0, 32], sizes = [8, 16], strides = [1, 1]} : vector<8x64xbf16> to vector<8x16xbf16>
    %475 = vector.extract_strided_slice %436 {offsets = [0, 32], sizes = [8, 16], strides = [1, 1]} : vector<8x64xbf16> to vector<8x16xbf16>
    %cst_256 = arith.constant dense<0.000000e+00> : vector<8x8xf32>
    %476 = tpu.matmul %473, %474, %cst_256 {dimension_numbers = #tpu.dot_dimension_numbers<[1], [1], [0], [0], [0, 0, 1, 0], [], []>} : vector<8x16xbf16>, vector<8x16xbf16>, vector<8x8xf32> -> vector<8x8xf32>
    %cst_257 = arith.constant 2.500000e-01 : f32
    %477 = vector.broadcast %cst_257 : f32 to vector<8x8xf32>
    %478 = arith.mulf %476, %477 : vector<8x8xf32>
    %479 = arith.addf %478, %7 : vector<8x8xf32>
    %cst_258 = arith.constant dense<0xFF800000> : vector<8xf32>
    %480 = vector.multi_reduction <maximumf>, %479, %cst_258 [1] : vector<8x8xf32> to vector<8xf32>
    %481 = vector.shape_cast %480 : vector<8xf32> to vector<8x1xf32>
    %482 = vector.broadcast %481 : vector<8x1xf32> to vector<8x8xf32>
    %483 = arith.subf %479, %482 : vector<8x8xf32>
    %484 = math.exp %483 : vector<8x8xf32>
    %cst_259 = arith.constant dense<0.000000e+00> : vector<8xf32>
    %485 = vector.multi_reduction <add>, %484, %cst_259 [1] : vector<8x8xf32> to vector<8xf32>
    %486 = vector.shape_cast %485 : vector<8xf32> to vector<8x1xf32>
    %487 = vector.broadcast %486 : vector<8x1xf32> to vector<8x8xf32>
    %488 = arith.divf %484, %487 : vector<8x8xf32>
    %489 = arith.truncf %488 : vector<8x8xf32> to vector<8x8xbf16>
    %cst_260 = arith.constant dense<0.000000e+00> : vector<8x16xf32>
    %490 = tpu.matmul %489, %475, %cst_260 {dimension_numbers = #tpu.dot_dimension_numbers<[1], [0], [0], [1], [0, 0, 1, 1], [], []>} : vector<8x8xbf16>, vector<8x16xbf16>, vector<8x16xf32> -> vector<8x16xf32>
    %491 = vector.extract_strided_slice %434 {offsets = [0, 48], sizes = [8, 16], strides = [1, 1]} : vector<8x64xbf16> to vector<8x16xbf16>
    %492 = vector.extract_strided_slice %435 {offsets = [0, 48], sizes = [8, 16], strides = [1, 1]} : vector<8x64xbf16> to vector<8x16xbf16>
    %493 = vector.extract_strided_slice %436 {offsets = [0, 48], sizes = [8, 16], strides = [1, 1]} : vector<8x64xbf16> to vector<8x16xbf16>
    %cst_261 = arith.constant dense<0.000000e+00> : vector<8x8xf32>
    %494 = tpu.matmul %491, %492, %cst_261 {dimension_numbers = #tpu.dot_dimension_numbers<[1], [1], [0], [0], [0, 0, 1, 0], [], []>} : vector<8x16xbf16>, vector<8x16xbf16>, vector<8x8xf32> -> vector<8x8xf32>
    %cst_262 = arith.constant 2.500000e-01 : f32
    %495 = vector.broadcast %cst_262 : f32 to vector<8x8xf32>
    %496 = arith.mulf %494, %495 : vector<8x8xf32>
    %497 = arith.addf %496, %7 : vector<8x8xf32>
    %cst_263 = arith.constant dense<0xFF800000> : vector<8xf32>
    %498 = vector.multi_reduction <maximumf>, %497, %cst_263 [1] : vector<8x8xf32> to vector<8xf32>
    %499 = vector.shape_cast %498 : vector<8xf32> to vector<8x1xf32>
    %500 = vector.broadcast %499 : vector<8x1xf32> to vector<8x8xf32>
    %501 = arith.subf %497, %500 : vector<8x8xf32>
    %502 = math.exp %501 : vector<8x8xf32>
    %cst_264 = arith.constant dense<0.000000e+00> : vector<8xf32>
    %503 = vector.multi_reduction <add>, %502, %cst_264 [1] : vector<8x8xf32> to vector<8xf32>
    %504 = vector.shape_cast %503 : vector<8xf32> to vector<8x1xf32>
    %505 = vector.broadcast %504 : vector<8x1xf32> to vector<8x8xf32>
    %506 = arith.divf %502, %505 : vector<8x8xf32>
    %507 = arith.truncf %506 : vector<8x8xf32> to vector<8x8xbf16>
    %cst_265 = arith.constant dense<0.000000e+00> : vector<8x16xf32>
    %508 = tpu.matmul %507, %493, %cst_265 {dimension_numbers = #tpu.dot_dimension_numbers<[1], [0], [0], [1], [0, 0, 1, 1], [], []>} : vector<8x8xbf16>, vector<8x16xbf16>, vector<8x16xf32> -> vector<8x16xf32>
    %509 = tpu.concatenate %454, %472, %490, %508 in 1 : vector<8x16xf32>, vector<8x16xf32>, vector<8x16xf32>, vector<8x16xf32> -> vector<8x64xf32>
    %510 = arith.truncf %509 : vector<8x64xf32> to vector<8x64xbf16>
    %cst_266 = arith.constant dense<0.000000e+00> : vector<8x64xf32>
    %511 = tpu.matmul %510, %426, %cst_266 {dimension_numbers = #tpu.dot_dimension_numbers<[1], [0], [0], [1], [0, 0, 1, 1], [], []>} : vector<8x64xbf16>, vector<64x64xbf16>, vector<8x64xf32> -> vector<8x64xf32>
    %512 = vector.broadcast %418 : vector<1x64xf32> to vector<8x64xf32>
    %513 = arith.addf %511, %512 : vector<8x64xf32>
    %514 = arith.addf %376, %513 : vector<8x64xf32>
    %cst_267 = arith.constant dense<0.000000e+00> : vector<8xf32>
    %515 = vector.multi_reduction <add>, %514, %cst_267 [1] : vector<8x64xf32> to vector<8xf32>
    %516 = vector.shape_cast %515 : vector<8xf32> to vector<8x1xf32>
    %cst_268 = arith.constant 6.400000e+01 : f32
    %517 = vector.broadcast %cst_268 : f32 to vector<8x1xf32>
    %518 = arith.divf %516, %517 : vector<8x1xf32>
    %519 = vector.broadcast %518 : vector<8x1xf32> to vector<8x64xf32>
    %520 = arith.subf %514, %519 : vector<8x64xf32>
    %521 = arith.mulf %520, %520 : vector<8x64xf32>
    %cst_269 = arith.constant dense<0.000000e+00> : vector<8xf32>
    %522 = vector.multi_reduction <add>, %521, %cst_269 [1] : vector<8x64xf32> to vector<8xf32>
    %523 = vector.shape_cast %522 : vector<8xf32> to vector<8x1xf32>
    %cst_270 = arith.constant 6.400000e+01 : f32
    %524 = vector.broadcast %cst_270 : f32 to vector<8x1xf32>
    %525 = arith.divf %523, %524 : vector<8x1xf32>
    %526 = vector.broadcast %518 : vector<8x1xf32> to vector<8x64xf32>
    %527 = arith.subf %514, %526 : vector<8x64xf32>
    %cst_271 = arith.constant 9.99999974E-6 : f32
    %528 = vector.broadcast %cst_271 : f32 to vector<8x1xf32>
    %529 = arith.addf %525, %528 : vector<8x1xf32>
    %530 = math.rsqrt %529 : vector<8x1xf32>
    %531 = vector.broadcast %530 : vector<8x1xf32> to vector<8x64xf32>
    %532 = arith.mulf %527, %531 : vector<8x64xf32>
    %533 = vector.broadcast %424 : vector<1x64xf32> to vector<8x64xf32>
    %534 = arith.mulf %532, %533 : vector<8x64xf32>
    %535 = vector.broadcast %422 : vector<1x64xf32> to vector<8x64xf32>
    %536 = arith.addf %534, %535 : vector<8x64xf32>
    %537 = arith.addf %376, %536 : vector<8x64xf32>
    %cst_272 = arith.constant dense<0.000000e+00> : vector<8xf32>
    %538 = vector.multi_reduction <add>, %537, %cst_272 [1] : vector<8x64xf32> to vector<8xf32>
    %539 = vector.shape_cast %538 : vector<8xf32> to vector<8x1xf32>
    %cst_273 = arith.constant 6.400000e+01 : f32
    %540 = vector.broadcast %cst_273 : f32 to vector<8x1xf32>
    %541 = arith.divf %539, %540 : vector<8x1xf32>
    %542 = vector.broadcast %541 : vector<8x1xf32> to vector<8x64xf32>
    %543 = arith.subf %537, %542 : vector<8x64xf32>
    %544 = arith.mulf %543, %543 : vector<8x64xf32>
    %cst_274 = arith.constant dense<0.000000e+00> : vector<8xf32>
    %545 = vector.multi_reduction <add>, %544, %cst_274 [1] : vector<8x64xf32> to vector<8xf32>
    %546 = vector.shape_cast %545 : vector<8xf32> to vector<8x1xf32>
    %cst_275 = arith.constant 6.400000e+01 : f32
    %547 = vector.broadcast %cst_275 : f32 to vector<8x1xf32>
    %548 = arith.divf %546, %547 : vector<8x1xf32>
    %549 = vector.broadcast %541 : vector<8x1xf32> to vector<8x64xf32>
    %550 = arith.subf %537, %549 : vector<8x64xf32>
    %cst_276 = arith.constant 9.99999974E-6 : f32
    %551 = vector.broadcast %cst_276 : f32 to vector<8x1xf32>
    %552 = arith.addf %548, %551 : vector<8x1xf32>
    %553 = math.rsqrt %552 : vector<8x1xf32>
    %554 = vector.broadcast %553 : vector<8x1xf32> to vector<8x64xf32>
    %555 = arith.mulf %550, %554 : vector<8x64xf32>
    %556 = vector.broadcast %400 : vector<1x64xf32> to vector<8x64xf32>
    %557 = arith.mulf %555, %556 : vector<8x64xf32>
    %558 = vector.broadcast %398 : vector<1x64xf32> to vector<8x64xf32>
    %559 = arith.addf %557, %558 : vector<8x64xf32>
    %560 = vector.broadcast %11 : vector<8x1xf32> to vector<8x64xf32>
    %561 = arith.mulf %559, %560 : vector<8x64xf32>
    %562 = arith.truncf %561 : vector<8x64xf32> to vector<8x64xbf16>
    %cst_277 = arith.constant dense<0.000000e+00> : vector<8x64xf32>
    %563 = tpu.matmul %562, %394, %cst_277 {dimension_numbers = #tpu.dot_dimension_numbers<[1], [0], [0], [1], [0, 0, 1, 1], [], []>} : vector<8x64xbf16>, vector<64x64xbf16>, vector<8x64xf32> -> vector<8x64xf32>
    %564 = vector.broadcast %382 : vector<1x64xf32> to vector<8x64xf32>
    %565 = arith.addf %563, %564 : vector<8x64xf32>
    %cst_278 = arith.constant dense<0.000000e+00> : vector<99x64xf32>
    %566 = tpu.matmul %13, %390, %cst_278 {dimension_numbers = #tpu.dot_dimension_numbers<[1], [0], [0], [1], [0, 0, 1, 1], [], []>} : vector<99x64xbf16>, vector<64x64xbf16>, vector<99x64xf32> -> vector<99x64xf32>
    %567 = vector.broadcast %378 : vector<1x64xf32> to vector<99x64xf32>
    %568 = arith.addf %566, %567 : vector<99x64xf32>
    %cst_279 = arith.constant dense<0.000000e+00> : vector<99x64xf32>
    %569 = tpu.matmul %14, %396, %cst_279 {dimension_numbers = #tpu.dot_dimension_numbers<[1], [0], [0], [1], [0, 0, 1, 1], [], []>} : vector<99x64xbf16>, vector<64x64xbf16>, vector<99x64xf32> -> vector<99x64xf32>
    %570 = vector.broadcast %384 : vector<1x64xf32> to vector<99x64xf32>
    %571 = arith.addf %569, %570 : vector<99x64xf32>
    %572 = arith.truncf %565 : vector<8x64xf32> to vector<8x64xbf16>
    %573 = arith.truncf %568 : vector<99x64xf32> to vector<99x64xbf16>
    %574 = arith.truncf %571 : vector<99x64xf32> to vector<99x64xbf16>
    %575 = vector.extract_strided_slice %572 {offsets = [0, 0], sizes = [8, 16], strides = [1, 1]} : vector<8x64xbf16> to vector<8x16xbf16>
    %576 = vector.extract_strided_slice %573 {offsets = [0, 0], sizes = [99, 16], strides = [1, 1]} : vector<99x64xbf16> to vector<99x16xbf16>
    %577 = vector.extract_strided_slice %574 {offsets = [0, 0], sizes = [99, 16], strides = [1, 1]} : vector<99x64xbf16> to vector<99x16xbf16>
    %cst_280 = arith.constant dense<0.000000e+00> : vector<8x99xf32>
    %578 = tpu.matmul %575, %576, %cst_280 {dimension_numbers = #tpu.dot_dimension_numbers<[1], [1], [0], [0], [0, 0, 1, 0], [], []>} : vector<8x16xbf16>, vector<99x16xbf16>, vector<8x99xf32> -> vector<8x99xf32>
    %cst_281 = arith.constant 2.500000e-01 : f32
    %579 = vector.broadcast %cst_281 : f32 to vector<8x99xf32>
    %580 = arith.mulf %578, %579 : vector<8x99xf32>
    %581 = vector.broadcast %9 : vector<1x99xf32> to vector<8x99xf32>
    %582 = arith.addf %580, %581 : vector<8x99xf32>
    %cst_282 = arith.constant dense<0xFF800000> : vector<8xf32>
    %583 = vector.multi_reduction <maximumf>, %582, %cst_282 [1] : vector<8x99xf32> to vector<8xf32>
    %584 = vector.shape_cast %583 : vector<8xf32> to vector<8x1xf32>
    %585 = vector.broadcast %584 : vector<8x1xf32> to vector<8x99xf32>
    %586 = arith.subf %582, %585 : vector<8x99xf32>
    %587 = math.exp %586 : vector<8x99xf32>
    %cst_283 = arith.constant dense<0.000000e+00> : vector<8xf32>
    %588 = vector.multi_reduction <add>, %587, %cst_283 [1] : vector<8x99xf32> to vector<8xf32>
    %589 = vector.shape_cast %588 : vector<8xf32> to vector<8x1xf32>
    %590 = vector.broadcast %589 : vector<8x1xf32> to vector<8x99xf32>
    %591 = arith.divf %587, %590 : vector<8x99xf32>
    %592 = arith.truncf %591 : vector<8x99xf32> to vector<8x99xbf16>
    %cst_284 = arith.constant dense<0.000000e+00> : vector<8x16xf32>
    %593 = tpu.matmul %592, %577, %cst_284 {dimension_numbers = #tpu.dot_dimension_numbers<[1], [0], [0], [1], [0, 0, 1, 1], [], []>} : vector<8x99xbf16>, vector<99x16xbf16>, vector<8x16xf32> -> vector<8x16xf32>
    %594 = vector.extract_strided_slice %572 {offsets = [0, 16], sizes = [8, 16], strides = [1, 1]} : vector<8x64xbf16> to vector<8x16xbf16>
    %595 = vector.extract_strided_slice %573 {offsets = [0, 16], sizes = [99, 16], strides = [1, 1]} : vector<99x64xbf16> to vector<99x16xbf16>
    %596 = vector.extract_strided_slice %574 {offsets = [0, 16], sizes = [99, 16], strides = [1, 1]} : vector<99x64xbf16> to vector<99x16xbf16>
    %cst_285 = arith.constant dense<0.000000e+00> : vector<8x99xf32>
    %597 = tpu.matmul %594, %595, %cst_285 {dimension_numbers = #tpu.dot_dimension_numbers<[1], [1], [0], [0], [0, 0, 1, 0], [], []>} : vector<8x16xbf16>, vector<99x16xbf16>, vector<8x99xf32> -> vector<8x99xf32>
    %cst_286 = arith.constant 2.500000e-01 : f32
    %598 = vector.broadcast %cst_286 : f32 to vector<8x99xf32>
    %599 = arith.mulf %597, %598 : vector<8x99xf32>
    %600 = vector.broadcast %9 : vector<1x99xf32> to vector<8x99xf32>
    %601 = arith.addf %599, %600 : vector<8x99xf32>
    %cst_287 = arith.constant dense<0xFF800000> : vector<8xf32>
    %602 = vector.multi_reduction <maximumf>, %601, %cst_287 [1] : vector<8x99xf32> to vector<8xf32>
    %603 = vector.shape_cast %602 : vector<8xf32> to vector<8x1xf32>
    %604 = vector.broadcast %603 : vector<8x1xf32> to vector<8x99xf32>
    %605 = arith.subf %601, %604 : vector<8x99xf32>
    %606 = math.exp %605 : vector<8x99xf32>
    %cst_288 = arith.constant dense<0.000000e+00> : vector<8xf32>
    %607 = vector.multi_reduction <add>, %606, %cst_288 [1] : vector<8x99xf32> to vector<8xf32>
    %608 = vector.shape_cast %607 : vector<8xf32> to vector<8x1xf32>
    %609 = vector.broadcast %608 : vector<8x1xf32> to vector<8x99xf32>
    %610 = arith.divf %606, %609 : vector<8x99xf32>
    %611 = arith.truncf %610 : vector<8x99xf32> to vector<8x99xbf16>
    %cst_289 = arith.constant dense<0.000000e+00> : vector<8x16xf32>
    %612 = tpu.matmul %611, %596, %cst_289 {dimension_numbers = #tpu.dot_dimension_numbers<[1], [0], [0], [1], [0, 0, 1, 1], [], []>} : vector<8x99xbf16>, vector<99x16xbf16>, vector<8x16xf32> -> vector<8x16xf32>
    %613 = vector.extract_strided_slice %572 {offsets = [0, 32], sizes = [8, 16], strides = [1, 1]} : vector<8x64xbf16> to vector<8x16xbf16>
    %614 = vector.extract_strided_slice %573 {offsets = [0, 32], sizes = [99, 16], strides = [1, 1]} : vector<99x64xbf16> to vector<99x16xbf16>
    %615 = vector.extract_strided_slice %574 {offsets = [0, 32], sizes = [99, 16], strides = [1, 1]} : vector<99x64xbf16> to vector<99x16xbf16>
    %cst_290 = arith.constant dense<0.000000e+00> : vector<8x99xf32>
    %616 = tpu.matmul %613, %614, %cst_290 {dimension_numbers = #tpu.dot_dimension_numbers<[1], [1], [0], [0], [0, 0, 1, 0], [], []>} : vector<8x16xbf16>, vector<99x16xbf16>, vector<8x99xf32> -> vector<8x99xf32>
    %cst_291 = arith.constant 2.500000e-01 : f32
    %617 = vector.broadcast %cst_291 : f32 to vector<8x99xf32>
    %618 = arith.mulf %616, %617 : vector<8x99xf32>
    %619 = vector.broadcast %9 : vector<1x99xf32> to vector<8x99xf32>
    %620 = arith.addf %618, %619 : vector<8x99xf32>
    %cst_292 = arith.constant dense<0xFF800000> : vector<8xf32>
    %621 = vector.multi_reduction <maximumf>, %620, %cst_292 [1] : vector<8x99xf32> to vector<8xf32>
    %622 = vector.shape_cast %621 : vector<8xf32> to vector<8x1xf32>
    %623 = vector.broadcast %622 : vector<8x1xf32> to vector<8x99xf32>
    %624 = arith.subf %620, %623 : vector<8x99xf32>
    %625 = math.exp %624 : vector<8x99xf32>
    %cst_293 = arith.constant dense<0.000000e+00> : vector<8xf32>
    %626 = vector.multi_reduction <add>, %625, %cst_293 [1] : vector<8x99xf32> to vector<8xf32>
    %627 = vector.shape_cast %626 : vector<8xf32> to vector<8x1xf32>
    %628 = vector.broadcast %627 : vector<8x1xf32> to vector<8x99xf32>
    %629 = arith.divf %625, %628 : vector<8x99xf32>
    %630 = arith.truncf %629 : vector<8x99xf32> to vector<8x99xbf16>
    %cst_294 = arith.constant dense<0.000000e+00> : vector<8x16xf32>
    %631 = tpu.matmul %630, %615, %cst_294 {dimension_numbers = #tpu.dot_dimension_numbers<[1], [0], [0], [1], [0, 0, 1, 1], [], []>} : vector<8x99xbf16>, vector<99x16xbf16>, vector<8x16xf32> -> vector<8x16xf32>
    %632 = vector.extract_strided_slice %572 {offsets = [0, 48], sizes = [8, 16], strides = [1, 1]} : vector<8x64xbf16> to vector<8x16xbf16>
    %633 = vector.extract_strided_slice %573 {offsets = [0, 48], sizes = [99, 16], strides = [1, 1]} : vector<99x64xbf16> to vector<99x16xbf16>
    %634 = vector.extract_strided_slice %574 {offsets = [0, 48], sizes = [99, 16], strides = [1, 1]} : vector<99x64xbf16> to vector<99x16xbf16>
    %cst_295 = arith.constant dense<0.000000e+00> : vector<8x99xf32>
    %635 = tpu.matmul %632, %633, %cst_295 {dimension_numbers = #tpu.dot_dimension_numbers<[1], [1], [0], [0], [0, 0, 1, 0], [], []>} : vector<8x16xbf16>, vector<99x16xbf16>, vector<8x99xf32> -> vector<8x99xf32>
    %cst_296 = arith.constant 2.500000e-01 : f32
    %636 = vector.broadcast %cst_296 : f32 to vector<8x99xf32>
    %637 = arith.mulf %635, %636 : vector<8x99xf32>
    %638 = vector.broadcast %9 : vector<1x99xf32> to vector<8x99xf32>
    %639 = arith.addf %637, %638 : vector<8x99xf32>
    %cst_297 = arith.constant dense<0xFF800000> : vector<8xf32>
    %640 = vector.multi_reduction <maximumf>, %639, %cst_297 [1] : vector<8x99xf32> to vector<8xf32>
    %641 = vector.shape_cast %640 : vector<8xf32> to vector<8x1xf32>
    %642 = vector.broadcast %641 : vector<8x1xf32> to vector<8x99xf32>
    %643 = arith.subf %639, %642 : vector<8x99xf32>
    %644 = math.exp %643 : vector<8x99xf32>
    %cst_298 = arith.constant dense<0.000000e+00> : vector<8xf32>
    %645 = vector.multi_reduction <add>, %644, %cst_298 [1] : vector<8x99xf32> to vector<8xf32>
    %646 = vector.shape_cast %645 : vector<8xf32> to vector<8x1xf32>
    %647 = vector.broadcast %646 : vector<8x1xf32> to vector<8x99xf32>
    %648 = arith.divf %644, %647 : vector<8x99xf32>
    %649 = arith.truncf %648 : vector<8x99xf32> to vector<8x99xbf16>
    %cst_299 = arith.constant dense<0.000000e+00> : vector<8x16xf32>
    %650 = tpu.matmul %649, %634, %cst_299 {dimension_numbers = #tpu.dot_dimension_numbers<[1], [0], [0], [1], [0, 0, 1, 1], [], []>} : vector<8x99xbf16>, vector<99x16xbf16>, vector<8x16xf32> -> vector<8x16xf32>
    %651 = tpu.concatenate %593, %612, %631, %650 in 1 : vector<8x16xf32>, vector<8x16xf32>, vector<8x16xf32>, vector<8x16xf32> -> vector<8x64xf32>
    %652 = arith.truncf %651 : vector<8x64xf32> to vector<8x64xbf16>
    %cst_300 = arith.constant dense<0.000000e+00> : vector<8x64xf32>
    %653 = tpu.matmul %652, %392, %cst_300 {dimension_numbers = #tpu.dot_dimension_numbers<[1], [0], [0], [1], [0, 0, 1, 1], [], []>} : vector<8x64xbf16>, vector<64x64xbf16>, vector<8x64xf32> -> vector<8x64xf32>
    %654 = vector.broadcast %380 : vector<1x64xf32> to vector<8x64xf32>
    %655 = arith.addf %653, %654 : vector<8x64xf32>
    %656 = arith.addf %561, %655 : vector<8x64xf32>
    %cst_301 = arith.constant dense<0.000000e+00> : vector<8xf32>
    %657 = vector.multi_reduction <add>, %656, %cst_301 [1] : vector<8x64xf32> to vector<8xf32>
    %658 = vector.shape_cast %657 : vector<8xf32> to vector<8x1xf32>
    %cst_302 = arith.constant 6.400000e+01 : f32
    %659 = vector.broadcast %cst_302 : f32 to vector<8x1xf32>
    %660 = arith.divf %658, %659 : vector<8x1xf32>
    %661 = vector.broadcast %660 : vector<8x1xf32> to vector<8x64xf32>
    %662 = arith.subf %656, %661 : vector<8x64xf32>
    %663 = arith.mulf %662, %662 : vector<8x64xf32>
    %cst_303 = arith.constant dense<0.000000e+00> : vector<8xf32>
    %664 = vector.multi_reduction <add>, %663, %cst_303 [1] : vector<8x64xf32> to vector<8xf32>
    %665 = vector.shape_cast %664 : vector<8xf32> to vector<8x1xf32>
    %cst_304 = arith.constant 6.400000e+01 : f32
    %666 = vector.broadcast %cst_304 : f32 to vector<8x1xf32>
    %667 = arith.divf %665, %666 : vector<8x1xf32>
    %668 = vector.broadcast %660 : vector<8x1xf32> to vector<8x64xf32>
    %669 = arith.subf %656, %668 : vector<8x64xf32>
    %cst_305 = arith.constant 9.99999974E-6 : f32
    %670 = vector.broadcast %cst_305 : f32 to vector<8x1xf32>
    %671 = arith.addf %667, %670 : vector<8x1xf32>
    %672 = math.rsqrt %671 : vector<8x1xf32>
    %673 = vector.broadcast %672 : vector<8x1xf32> to vector<8x64xf32>
    %674 = arith.mulf %669, %673 : vector<8x64xf32>
    %675 = vector.broadcast %388 : vector<1x64xf32> to vector<8x64xf32>
    %676 = arith.mulf %674, %675 : vector<8x64xf32>
    %677 = vector.broadcast %386 : vector<1x64xf32> to vector<8x64xf32>
    %678 = arith.addf %676, %677 : vector<8x64xf32>
    %679 = arith.addf %561, %678 : vector<8x64xf32>
    %cst_306 = arith.constant dense<0.000000e+00> : vector<8xf32>
    %680 = vector.multi_reduction <add>, %679, %cst_306 [1] : vector<8x64xf32> to vector<8xf32>
    %681 = vector.shape_cast %680 : vector<8xf32> to vector<8x1xf32>
    %cst_307 = arith.constant 6.400000e+01 : f32
    %682 = vector.broadcast %cst_307 : f32 to vector<8x1xf32>
    %683 = arith.divf %681, %682 : vector<8x1xf32>
    %684 = vector.broadcast %683 : vector<8x1xf32> to vector<8x64xf32>
    %685 = arith.subf %679, %684 : vector<8x64xf32>
    %686 = arith.mulf %685, %685 : vector<8x64xf32>
    %cst_308 = arith.constant dense<0.000000e+00> : vector<8xf32>
    %687 = vector.multi_reduction <add>, %686, %cst_308 [1] : vector<8x64xf32> to vector<8xf32>
    %688 = vector.shape_cast %687 : vector<8xf32> to vector<8x1xf32>
    %cst_309 = arith.constant 6.400000e+01 : f32
    %689 = vector.broadcast %cst_309 : f32 to vector<8x1xf32>
    %690 = arith.divf %688, %689 : vector<8x1xf32>
    %691 = vector.broadcast %683 : vector<8x1xf32> to vector<8x64xf32>
    %692 = arith.subf %679, %691 : vector<8x64xf32>
    %cst_310 = arith.constant 9.99999974E-6 : f32
    %693 = vector.broadcast %cst_310 : f32 to vector<8x1xf32>
    %694 = arith.addf %690, %693 : vector<8x1xf32>
    %695 = math.rsqrt %694 : vector<8x1xf32>
    %696 = vector.broadcast %695 : vector<8x1xf32> to vector<8x64xf32>
    %697 = arith.mulf %692, %696 : vector<8x64xf32>
    %698 = vector.broadcast %404 : vector<1x64xf32> to vector<8x64xf32>
    %699 = arith.mulf %697, %698 : vector<8x64xf32>
    %700 = vector.broadcast %402 : vector<1x64xf32> to vector<8x64xf32>
    %701 = arith.addf %699, %700 : vector<8x64xf32>
    %702 = vector.broadcast %11 : vector<8x1xf32> to vector<8x64xf32>
    %703 = arith.mulf %701, %702 : vector<8x64xf32>
    %704 = arith.truncf %703 : vector<8x64xf32> to vector<8x64xbf16>
    %cst_311 = arith.constant dense<0.000000e+00> : vector<8x128xf32>
    %705 = tpu.matmul %704, %414, %cst_311 {dimension_numbers = #tpu.dot_dimension_numbers<[1], [0], [0], [1], [0, 0, 1, 1], [], []>} : vector<8x64xbf16>, vector<64x128xbf16>, vector<8x128xf32> -> vector<8x128xf32>
    %706 = vector.broadcast %406 : vector<1x128xf32> to vector<8x128xf32>
    %707 = arith.addf %705, %706 : vector<8x128xf32>
    %cst_312 = arith.constant 0.000000e+00 : f32
    %708 = vector.broadcast %cst_312 : f32 to vector<8x128xf32>
    %709 = arith.maximumf %707, %708 : vector<8x128xf32>
    %710 = arith.truncf %709 : vector<8x128xf32> to vector<8x128xbf16>
    %cst_313 = arith.constant dense<0.000000e+00> : vector<8x64xf32>
    %711 = tpu.matmul %710, %416, %cst_313 {dimension_numbers = #tpu.dot_dimension_numbers<[1], [0], [0], [1], [0, 0, 1, 1], [], []>} : vector<8x128xbf16>, vector<128x64xbf16>, vector<8x64xf32> -> vector<8x64xf32>
    %712 = vector.broadcast %408 : vector<1x64xf32> to vector<8x64xf32>
    %713 = arith.addf %711, %712 : vector<8x64xf32>
    %714 = arith.addf %703, %713 : vector<8x64xf32>
    %cst_314 = arith.constant dense<0.000000e+00> : vector<8xf32>
    %715 = vector.multi_reduction <add>, %714, %cst_314 [1] : vector<8x64xf32> to vector<8xf32>
    %716 = vector.shape_cast %715 : vector<8xf32> to vector<8x1xf32>
    %cst_315 = arith.constant 6.400000e+01 : f32
    %717 = vector.broadcast %cst_315 : f32 to vector<8x1xf32>
    %718 = arith.divf %716, %717 : vector<8x1xf32>
    %719 = vector.broadcast %718 : vector<8x1xf32> to vector<8x64xf32>
    %720 = arith.subf %714, %719 : vector<8x64xf32>
    %721 = arith.mulf %720, %720 : vector<8x64xf32>
    %cst_316 = arith.constant dense<0.000000e+00> : vector<8xf32>
    %722 = vector.multi_reduction <add>, %721, %cst_316 [1] : vector<8x64xf32> to vector<8xf32>
    %723 = vector.shape_cast %722 : vector<8xf32> to vector<8x1xf32>
    %cst_317 = arith.constant 6.400000e+01 : f32
    %724 = vector.broadcast %cst_317 : f32 to vector<8x1xf32>
    %725 = arith.divf %723, %724 : vector<8x1xf32>
    %726 = vector.broadcast %718 : vector<8x1xf32> to vector<8x64xf32>
    %727 = arith.subf %714, %726 : vector<8x64xf32>
    %cst_318 = arith.constant 9.99999974E-6 : f32
    %728 = vector.broadcast %cst_318 : f32 to vector<8x1xf32>
    %729 = arith.addf %725, %728 : vector<8x1xf32>
    %730 = math.rsqrt %729 : vector<8x1xf32>
    %731 = vector.broadcast %730 : vector<8x1xf32> to vector<8x64xf32>
    %732 = arith.mulf %727, %731 : vector<8x64xf32>
    %733 = vector.broadcast %412 : vector<1x64xf32> to vector<8x64xf32>
    %734 = arith.mulf %732, %733 : vector<8x64xf32>
    %735 = vector.broadcast %410 : vector<1x64xf32> to vector<8x64xf32>
    %736 = arith.addf %734, %735 : vector<8x64xf32>
    %737 = vector.broadcast %11 : vector<8x1xf32> to vector<8x64xf32>
    %738 = arith.mulf %736, %737 : vector<8x64xf32>
    %739 = arith.truncf %738 : vector<8x64xf32> to vector<8x64xbf16>
    %c0_319 = arith.constant 0 : index
    %c0_320 = arith.constant 0 : index
    %740 = vector.load %arg7[%c0_319, %c0_320] : memref<64x128xbf16, #tpu.memory_space<vmem>>, vector<64x128xbf16>
    %cst_321 = arith.constant dense<0.000000e+00> : vector<8x128xf32>
    %741 = tpu.matmul %739, %740, %cst_321 {dimension_numbers = #tpu.dot_dimension_numbers<[1], [0], [0], [1], [0, 0, 1, 1], [], []>} : vector<8x64xbf16>, vector<64x128xbf16>, vector<8x128xf32> -> vector<8x128xf32>
    %742 = tpu.iota {dimensions = array<i32: 1>} : vector<8x128xi32>
    %c40_i32 = arith.constant 40 : i32
    %743 = vector.broadcast %c40_i32 : i32 to vector<8x128xi32>
    %744 = arith.cmpi slt, %742, %743 : vector<8x128xi32>
    %cst_322 = arith.constant -1.000000e+30 : f32
    %745 = vector.broadcast %cst_322 : f32 to vector<8x128xf32>
    %746 = arith.select %744, %741, %745 : vector<8x128xi1>, vector<8x128xf32>
    %cst_323 = arith.constant dense<0xFF800000> : vector<8xf32>
    %747 = vector.multi_reduction <maximumf>, %746, %cst_323 [1] : vector<8x128xf32> to vector<8xf32>
    %748 = vector.shape_cast %747 : vector<8xf32> to vector<8x1xf32>
    %749 = vector.broadcast %748 : vector<8x1xf32> to vector<8x128xf32>
    %750 = arith.subf %746, %749 : vector<8x128xf32>
    %751 = math.exp %750 : vector<8x128xf32>
    %cst_324 = arith.constant dense<0.000000e+00> : vector<8xf32>
    %752 = vector.multi_reduction <add>, %751, %cst_324 [1] : vector<8x128xf32> to vector<8xf32>
    %753 = vector.shape_cast %752 : vector<8xf32> to vector<8x1xf32>
    %754 = math.log %753 : vector<8x1xf32>
    %755 = arith.addf %748, %754 : vector<8x1xf32>
    %756 = vector.broadcast %755 : vector<8x1xf32> to vector<8x128xf32>
    %757 = arith.subf %746, %756 : vector<8x128xf32>
    %c0_325 = arith.constant 0 : index
    %c0_326 = arith.constant 0 : index
    %c0_327 = arith.constant 0 : index
    %758 = vector.load %arg34[%c0_325, %c0_326, %c0_327] : memref<1x8x128xf32, #tpu.memory_space<vmem>>, vector<1x8x128xf32>
    %759 = vector.shape_cast %758 : vector<1x8x128xf32> to vector<8x128xf32>
    %760 = vector.shape_cast %757 : vector<8x128xf32> to vector<1x8x128xf32>
    tpu.vector_store %arg34[%c0_325, %c0_326, %c0_327], %760 {strides = array<i32>} : memref<1x8x128xf32, #tpu.memory_space<vmem>>, vector<1x8x128xf32>,
    return
  }
  func.func @transform_0(%arg0: i32) -> (i32, i32, i32) {
    %c0_i32 = arith.constant 0 : i32
    %c0_i32_0 = arith.constant 0 : i32
    %c0_i32_1 = arith.constant 0 : i32
    return %arg0, %c0_i32, %c0_i32_0 : i32, i32, i32
  }
  func.func @transform_1(%arg0: i32) -> (i32, i32, i32) {
    %c0_i32 = arith.constant 0 : i32
    %c0_i32_0 = arith.constant 0 : i32
    %c0_i32_1 = arith.constant 0 : i32
    return %arg0, %c0_i32, %c0_i32_0 : i32, i32, i32
  }
  func.func @transform_2(%arg0: i32) -> (i32, i32, i32) {
    %c0_i32 = arith.constant 0 : i32
    %c0_i32_0 = arith.constant 0 : i32
    %c0_i32_1 = arith.constant 0 : i32
    return %arg0, %c0_i32, %c0_i32_0 : i32, i32, i32
  }
  func.func @transform_3(%arg0: i32) -> (i32, i32, i32) {
    %c0_i32 = arith.constant 0 : i32
    %c0_i32_0 = arith.constant 0 : i32
    %c0_i32_1 = arith.constant 0 : i32
    return %arg0, %c0_i32, %c0_i32_0 : i32, i32, i32
  }
  func.func @transform_4(%arg0: i32) -> (i32, i32, i32) {
    %c0_i32 = arith.constant 0 : i32
    %c0_i32_0 = arith.constant 0 : i32
    %c0_i32_1 = arith.constant 0 : i32
    return %arg0, %c0_i32, %c0_i32_0 : i32, i32, i32
  }
  func.func @transform_5(%arg0: i32) -> (i32, i32, i32) {
    %c0_i32 = arith.constant 0 : i32
    %c0_i32_0 = arith.constant 0 : i32
    %c0_i32_1 = arith.constant 0 : i32
    return %arg0, %c0_i32, %c0_i32_0 : i32, i32, i32
  }
  func.func @transform_6(%arg0: i32) -> (i32, i32) {
    %c0_i32 = arith.constant 0 : i32
    %c0_i32_0 = arith.constant 0 : i32
    %c0_i32_1 = arith.constant 0 : i32
    return %c0_i32, %c0_i32_0 : i32, i32
  }
  func.func @transform_7(%arg0: i32) -> (i32, i32, i32) {
    %c0_i32 = arith.constant 0 : i32
    %c0_i32_0 = arith.constant 0 : i32
    %c0_i32_1 = arith.constant 0 : i32
    %c0_i32_2 = arith.constant 0 : i32
    return %c0_i32, %c0_i32_0, %c0_i32_1 : i32, i32, i32
  }
  func.func @transform_8(%arg0: i32) -> (i32, i32, i32) {
    %c0_i32 = arith.constant 0 : i32
    %c0_i32_0 = arith.constant 0 : i32
    %c0_i32_1 = arith.constant 0 : i32
    %c0_i32_2 = arith.constant 0 : i32
    return %c0_i32, %c0_i32_0, %c0_i32_1 : i32, i32, i32
  }
  func.func @transform_9(%arg0: i32) -> (i32, i32, i32) {
    %c0_i32 = arith.constant 0 : i32
    %c0_i32_0 = arith.constant 0 : i32
    %c0_i32_1 = arith.constant 0 : i32
    %c0_i32_2 = arith.constant 0 : i32
    return %c0_i32, %c0_i32_0, %c0_i32_1 : i32, i32, i32
  }
  func.func @transform_10(%arg0: i32) -> (i32, i32, i32) {
    %c0_i32 = arith.constant 0 : i32
    %c0_i32_0 = arith.constant 0 : i32
    %c0_i32_1 = arith.constant 0 : i32
    %c0_i32_2 = arith.constant 0 : i32
    return %c0_i32, %c0_i32_0, %c0_i32_1 : i32, i32, i32
  }
  func.func @transform_11(%arg0: i32) -> (i32, i32, i32) {
    %c0_i32 = arith.constant 0 : i32
    %c0_i32_0 = arith.constant 0 : i32
    %c0_i32_1 = arith.constant 0 : i32
    %c0_i32_2 = arith.constant 0 : i32
    return %c0_i32, %c0_i32_0, %c0_i32_1 : i32, i32, i32
  }
  func.func @transform_12(%arg0: i32) -> (i32, i32, i32) {
    %c0_i32 = arith.constant 0 : i32
    %c0_i32_0 = arith.constant 0 : i32
    %c0_i32_1 = arith.constant 0 : i32
    %c0_i32_2 = arith.constant 0 : i32
    return %c0_i32, %c0_i32_0, %c0_i32_1 : i32, i32, i32
  }
  func.func @transform_13(%arg0: i32) -> (i32, i32, i32) {
    %c0_i32 = arith.constant 0 : i32
    %c0_i32_0 = arith.constant 0 : i32
    %c0_i32_1 = arith.constant 0 : i32
    %c0_i32_2 = arith.constant 0 : i32
    return %c0_i32, %c0_i32_0, %c0_i32_1 : i32, i32, i32
  }
  func.func @transform_14(%arg0: i32) -> (i32, i32, i32) {
    %c0_i32 = arith.constant 0 : i32
    %c0_i32_0 = arith.constant 0 : i32
    %c0_i32_1 = arith.constant 0 : i32
    %c0_i32_2 = arith.constant 0 : i32
    return %c0_i32, %c0_i32_0, %c0_i32_1 : i32, i32, i32
  }
  func.func @transform_15(%arg0: i32) -> (i32, i32, i32) {
    %c0_i32 = arith.constant 0 : i32
    %c0_i32_0 = arith.constant 0 : i32
    %c0_i32_1 = arith.constant 0 : i32
    %c0_i32_2 = arith.constant 0 : i32
    return %c0_i32, %c0_i32_0, %c0_i32_1 : i32, i32, i32
  }
  func.func @transform_16(%arg0: i32) -> (i32, i32, i32) {
    %c0_i32 = arith.constant 0 : i32
    %c0_i32_0 = arith.constant 0 : i32
    %c0_i32_1 = arith.constant 0 : i32
    %c0_i32_2 = arith.constant 0 : i32
    return %c0_i32, %c0_i32_0, %c0_i32_1 : i32, i32, i32
  }
  func.func @transform_17(%arg0: i32) -> (i32, i32, i32) {
    %c0_i32 = arith.constant 0 : i32
    %c0_i32_0 = arith.constant 0 : i32
    %c0_i32_1 = arith.constant 0 : i32
    %c0_i32_2 = arith.constant 0 : i32
    return %c0_i32, %c0_i32_0, %c0_i32_1 : i32, i32, i32
  }
  func.func @transform_18(%arg0: i32) -> (i32, i32, i32) {
    %c0_i32 = arith.constant 0 : i32
    %c0_i32_0 = arith.constant 0 : i32
    %c0_i32_1 = arith.constant 0 : i32
    %c0_i32_2 = arith.constant 0 : i32
    return %c0_i32, %c0_i32_0, %c0_i32_1 : i32, i32, i32
  }
  func.func @transform_19(%arg0: i32) -> (i32, i32, i32) {
    %c0_i32 = arith.constant 0 : i32
    %c0_i32_0 = arith.constant 0 : i32
    %c0_i32_1 = arith.constant 0 : i32
    %c0_i32_2 = arith.constant 0 : i32
    return %c0_i32, %c0_i32_0, %c0_i32_1 : i32, i32, i32
  }
  func.func @transform_20(%arg0: i32) -> (i32, i32, i32) {
    %c0_i32 = arith.constant 0 : i32
    %c0_i32_0 = arith.constant 0 : i32
    %c0_i32_1 = arith.constant 0 : i32
    %c0_i32_2 = arith.constant 0 : i32
    return %c0_i32, %c0_i32_0, %c0_i32_1 : i32, i32, i32
  }
  func.func @transform_21(%arg0: i32) -> (i32, i32, i32) {
    %c0_i32 = arith.constant 0 : i32
    %c0_i32_0 = arith.constant 0 : i32
    %c0_i32_1 = arith.constant 0 : i32
    %c0_i32_2 = arith.constant 0 : i32
    return %c0_i32, %c0_i32_0, %c0_i32_1 : i32, i32, i32
  }
  func.func @transform_22(%arg0: i32) -> (i32, i32, i32) {
    %c0_i32 = arith.constant 0 : i32
    %c0_i32_0 = arith.constant 0 : i32
    %c0_i32_1 = arith.constant 0 : i32
    %c0_i32_2 = arith.constant 0 : i32
    return %c0_i32, %c0_i32_0, %c0_i32_1 : i32, i32, i32
  }
  func.func @transform_23(%arg0: i32) -> (i32, i32, i32) {
    %c0_i32 = arith.constant 0 : i32
    %c0_i32_0 = arith.constant 0 : i32
    %c0_i32_1 = arith.constant 0 : i32
    %c0_i32_2 = arith.constant 0 : i32
    return %c0_i32, %c0_i32_0, %c0_i32_1 : i32, i32, i32
  }
  func.func @transform_24(%arg0: i32) -> (i32, i32, i32) {
    %c0_i32 = arith.constant 0 : i32
    %c0_i32_0 = arith.constant 0 : i32
    %c0_i32_1 = arith.constant 0 : i32
    %c0_i32_2 = arith.constant 0 : i32
    return %c0_i32, %c0_i32_0, %c0_i32_1 : i32, i32, i32
  }
  func.func @transform_25(%arg0: i32) -> (i32, i32, i32) {
    %c0_i32 = arith.constant 0 : i32
    %c0_i32_0 = arith.constant 0 : i32
    %c0_i32_1 = arith.constant 0 : i32
    %c0_i32_2 = arith.constant 0 : i32
    return %c0_i32, %c0_i32_0, %c0_i32_1 : i32, i32, i32
  }
  func.func @transform_26(%arg0: i32) -> (i32, i32, i32) {
    %c0_i32 = arith.constant 0 : i32
    %c0_i32_0 = arith.constant 0 : i32
    %c0_i32_1 = arith.constant 0 : i32
    %c0_i32_2 = arith.constant 0 : i32
    return %c0_i32, %c0_i32_0, %c0_i32_1 : i32, i32, i32
  }
  func.func @transform_27(%arg0: i32) -> (i32, i32, i32) {
    %c0_i32 = arith.constant 0 : i32
    %c0_i32_0 = arith.constant 0 : i32
    %c0_i32_1 = arith.constant 0 : i32
    %c0_i32_2 = arith.constant 0 : i32
    return %c0_i32, %c0_i32_0, %c0_i32_1 : i32, i32, i32
  }
  func.func @transform_28(%arg0: i32) -> (i32, i32, i32) {
    %c0_i32 = arith.constant 0 : i32
    %c0_i32_0 = arith.constant 0 : i32
    %c0_i32_1 = arith.constant 0 : i32
    %c0_i32_2 = arith.constant 0 : i32
    return %c0_i32, %c0_i32_0, %c0_i32_1 : i32, i32, i32
  }
  func.func @transform_29(%arg0: i32) -> (i32, i32, i32) {
    %c0_i32 = arith.constant 0 : i32
    %c0_i32_0 = arith.constant 0 : i32
    %c0_i32_1 = arith.constant 0 : i32
    %c0_i32_2 = arith.constant 0 : i32
    return %c0_i32, %c0_i32_0, %c0_i32_1 : i32, i32, i32
  }
  func.func @transform_30(%arg0: i32) -> (i32, i32, i32) {
    %c0_i32 = arith.constant 0 : i32
    %c0_i32_0 = arith.constant 0 : i32
    %c0_i32_1 = arith.constant 0 : i32
    %c0_i32_2 = arith.constant 0 : i32
    return %c0_i32, %c0_i32_0, %c0_i32_1 : i32, i32, i32
  }
  func.func @transform_31(%arg0: i32) -> (i32, i32, i32) {
    %c0_i32 = arith.constant 0 : i32
    %c0_i32_0 = arith.constant 0 : i32
    %c0_i32_1 = arith.constant 0 : i32
    %c0_i32_2 = arith.constant 0 : i32
    return %c0_i32, %c0_i32_0, %c0_i32_1 : i32, i32, i32
  }
  func.func @transform_32(%arg0: i32) -> (i32, i32, i32) {
    %c0_i32 = arith.constant 0 : i32
    %c0_i32_0 = arith.constant 0 : i32
    %c0_i32_1 = arith.constant 0 : i32
    %c0_i32_2 = arith.constant 0 : i32
    return %c0_i32, %c0_i32_0, %c0_i32_1 : i32, i32, i32
  }
  func.func @transform_33(%arg0: i32) -> (i32, i32, i32) {
    %c0_i32 = arith.constant 0 : i32
    %c0_i32_0 = arith.constant 0 : i32
    %c0_i32_1 = arith.constant 0 : i32
    return %arg0, %c0_i32, %c0_i32_0 : i32, i32, i32
  }
}

</mosaic_0001>

<llo_original>
// kernel: forward.1
$region0: #{forward.1}
  #allocation0 [shape = 'u32[]', space=smem, size = 0x4, offset = 0x4, fixed_abs, tag = 'smem constant byte address 0x4 - core index']
  #allocation1 [shape = 'u32[144,128]{1,0:T(1,128)}', space=vmem, size = 0x12000, scoped, tag = 'internal scratch']
  %s0 = inlined_call_operand.smem [shape: u32[34], index: -1, kind: input, shape index: {}]
  %s1 = sld [smem:[%s0]]
  %s2 = scalar_lea.smem %s0, 1
  %s3 = sld [smem:[%s2]]
  %s4 = scalar_lea.smem %s0, 2
  %s5 = sld [smem:[%s4]]
  %s6 = scalar_lea.smem %s0, 3
  %s7 = sld [smem:[%s6]]
  %s8 = scalar_lea.smem %s0, 4
  %s9 = sld [smem:[%s8]]
  %s10 = scalar_lea.smem %s0, 5
  %s11 = sld [smem:[%s10]]
  %s12 = scalar_lea.smem %s0, 6
  %s13 = sld [smem:[%s12]]
  %s14 = scalar_lea.smem %s0, 7
  %s15 = sld [smem:[%s14]]
  %s16 = scalar_lea.smem %s0, 8
  %s17 = sld [smem:[%s16]]
  %s18 = scalar_lea.smem %s0, 9
  %s19 = sld [smem:[%s18]]
  %s20 = scalar_lea.smem %s0, 10
  %s21 = sld [smem:[%s20]]
  %s22 = scalar_lea.smem %s0, 11
  %s23 = sld [smem:[%s22]]
  %s24 = scalar_lea.smem %s0, 12
  %s25 = sld [smem:[%s24]]
  %s26 = scalar_lea.smem %s0, 13
  %s27 = sld [smem:[%s26]]
  %s28 = scalar_lea.smem %s0, 14
  %s29 = sld [smem:[%s28]]
  %s30 = scalar_lea.smem %s0, 15
  %s31 = sld [smem:[%s30]]
  %s32 = scalar_lea.smem %s0, 16
  %s33 = sld [smem:[%s32]]
  %s34 = scalar_lea.smem %s0, 17
  %s35 = sld [smem:[%s34]]
  %s36 = scalar_lea.smem %s0, 18
  %s37 = sld [smem:[%s36]]
  %s38 = scalar_lea.smem %s0, 19
  %s39 = sld [smem:[%s38]]
  %s40 = scalar_lea.smem %s0, 20
  %s41 = sld [smem:[%s40]]
  %s42 = scalar_lea.smem %s0, 21
  %s43 = sld [smem:[%s42]]
  %s44 = scalar_lea.smem %s0, 22
  %s45 = sld [smem:[%s44]]
  %s46 = scalar_lea.smem %s0, 23
  %s47 = sld [smem:[%s46]]
  %s48 = scalar_lea.smem %s0, 24
  %s49 = sld [smem:[%s48]]
  %s50 = scalar_lea.smem %s0, 25
  %s51 = sld [smem:[%s50]]
  %s52 = scalar_lea.smem %s0, 26
  %s53 = sld [smem:[%s52]]
  %s54 = scalar_lea.smem %s0, 27
  %s55 = sld [smem:[%s54]]
  %s56 = scalar_lea.smem %s0, 28
  %s57 = sld [smem:[%s56]]
  %s58 = scalar_lea.smem %s0, 29
  %s59 = sld [smem:[%s58]]
  %s60 = scalar_lea.smem %s0, 30
  %s61 = sld [smem:[%s60]]
  %s62 = scalar_lea.smem %s0, 31
  %s63 = sld [smem:[%s62]]
  %s64 = scalar_lea.smem %s0, 32
  %s65 = sld [smem:[%s64]]
  %s66 = scalar_lea.smem %s0, 33
  %s67 = sld [smem:[%s66]]
  %s68 = sld [smem:[#allocation0]]
  $region165: #{forward.1} parent=0
    _
  %s70 = ssub.s32 1, %s68
  %s71 = scalar_select 0, %s70, %s68
  $region1: #{forward.1} parent=0
    #allocation2 [shape = 'u8[8192]{0}', space=vmem, size = 0x2000, scoped, tag = 'output window, operand 0']
    #allocation3 [shape = 's32[2]{0}', space=sflag, size = 0x8, scoped, tag = 'scoped memory for forward.1']
    %72 = vsyncpa [#allocation3], 0
    %s73 = scalar_lea.sflag [#allocation3], 1
    %74 = vsyncpa %s73, 0
    loop: start=0, step=1, limit=4
    $region2: #{forward.1} parent=1 // loop_pre_header
      _
    $region3: #{forward.1} parent=1 // loop_header
      %s76 = sphi 0, %s80
      %p77 = scmp.ge.s32.totalorder %s76, 4
      %s86 = sphi 0, %s88
      %s89 = sphi 0, %s86
      %s90 = sphi 0, %s89
      %s106 = sphi 0, %s90
      %s112 = sphi 0, %s114
      %s115 = sphi 0, %s112
      %s116 = sphi 0, %s115
      %s132 = sphi 0, %s116
      %s138 = sphi 0, %s140
      %s141 = sphi 0, %s138
      %s142 = sphi 0, %s141
      %s158 = sphi 0, %s142
      %s164 = sphi 0, %s166
      %s167 = sphi 0, %s164
      %s168 = sphi 0, %s167
      %s184 = sphi 0, %s168
      %s190 = sphi 0, %s192
      %s193 = sphi 0, %s190
      %s194 = sphi 0, %s193
      %s210 = sphi 0, %s194
      %s216 = sphi 0, %s218
      %s219 = sphi 0, %s216
      %s220 = sphi 0, %s219
      %s236 = sphi 0, %s220
      %s240 = sphi 0, %s240
      %s242 = sphi 0, %s240
      %s243 = sphi 0, %s242
      %s257 = sphi 0, %s243
      %s261 = sphi 0, %s261
      %s263 = sphi 0, %s261
      %s264 = sphi 0, %s263
      %s278 = sphi 0, %s264
      %s282 = sphi 0, %s282
      %s284 = sphi 0, %s282
      %s285 = sphi 0, %s284
      %s299 = sphi 0, %s285
      %s303 = sphi 0, %s303
      %s305 = sphi 0, %s303
      %s306 = sphi 0, %s305
      %s320 = sphi 0, %s306
      %s324 = sphi 0, %s324
      %s326 = sphi 0, %s324
      %s327 = sphi 0, %s326
      %s341 = sphi 0, %s327
      %s345 = sphi 0, %s345
      %s347 = sphi 0, %s345
      %s348 = sphi 0, %s347
      %s362 = sphi 0, %s348
      %s366 = sphi 0, %s366
      %s368 = sphi 0, %s366
      %s369 = sphi 0, %s368
      %s383 = sphi 0, %s369
      %s387 = sphi 0, %s387
      %s389 = sphi 0, %s387
      %s390 = sphi 0, %s389
      %s404 = sphi 0, %s390
      %s408 = sphi 0, %s408
      %s410 = sphi 0, %s408
      %s411 = sphi 0, %s410
      %s425 = sphi 0, %s411
      %s429 = sphi 0, %s429
      %s431 = sphi 0, %s429
      %s432 = sphi 0, %s431
      %s446 = sphi 0, %s432
      %s450 = sphi 0, %s450
      %s452 = sphi 0, %s450
      %s453 = sphi 0, %s452
      %s467 = sphi 0, %s453
      %s471 = sphi 0, %s471
      %s473 = sphi 0, %s471
      %s474 = sphi 0, %s473
      %s488 = sphi 0, %s474
      %s492 = sphi 0, %s492
      %s494 = sphi 0, %s492
      %s495 = sphi 0, %s494
      %s509 = sphi 0, %s495
      %s513 = sphi 0, %s513
      %s515 = sphi 0, %s513
      %s516 = sphi 0, %s515
      %s530 = sphi 0, %s516
      %s534 = sphi 0, %s534
      %s536 = sphi 0, %s534
      %s537 = sphi 0, %s536
      %s551 = sphi 0, %s537
      %s555 = sphi 0, %s555
      %s557 = sphi 0, %s555
      %s558 = sphi 0, %s557
      %s572 = sphi 0, %s558
      %s576 = sphi 0, %s576
      %s578 = sphi 0, %s576
      %s579 = sphi 0, %s578
      %s593 = sphi 0, %s579
      %s597 = sphi 0, %s597
      %s599 = sphi 0, %s597
      %s600 = sphi 0, %s599
      %s614 = sphi 0, %s600
      %s618 = sphi 0, %s618
      %s620 = sphi 0, %s618
      %s621 = sphi 0, %s620
      %s635 = sphi 0, %s621
      %s639 = sphi 0, %s639
      %s641 = sphi 0, %s639
      %s642 = sphi 0, %s641
      %s656 = sphi 0, %s642
      %s660 = sphi 0, %s660
      %s662 = sphi 0, %s660
      %s663 = sphi 0, %s662
      %s677 = sphi 0, %s663
      %s681 = sphi 0, %s681
      %s683 = sphi 0, %s681
      %s684 = sphi 0, %s683
      %s698 = sphi 0, %s684
      %s702 = sphi 0, %s702
      %s704 = sphi 0, %s702
      %s705 = sphi 0, %s704
      %s719 = sphi 0, %s705
      %s723 = sphi 0, %s723
      %s725 = sphi 0, %s723
      %s726 = sphi 0, %s725
      %s740 = sphi 0, %s726
      %s744 = sphi 0, %s744
      %s746 = sphi 0, %s744
      %s747 = sphi 0, %s746
      %s761 = sphi 0, %s747
      %s765 = sphi 0, %s765
      %s767 = sphi 0, %s765
      %s768 = sphi 0, %s767
      %s782 = sphi 0, %s768
      %s786 = sphi 0, %s786
      %s788 = sphi 0, %s786
      %s789 = sphi 0, %s788
      %s803 = sphi 0, %s789
      %s809 = sphi 0, %s811
      %s812 = sphi 0, %s809
      %s813 = sphi 0, %s812
      %s829 = sphi 0, %s813
    $region4: #{forward.1} parent=1 // loop_header_branch
      %79 = sbr.rel (%p77) target = $region8
    $region5: #{forward.1} parent=1 // loop_body
      %s81 = ssub.s32 %s76, 1
      %s82 = ssub.s32 %s76, 2
      %s83 = sadd.s32 %s76, 1
      %s84 = ssub.s32 %s76, %s83
      %p85 = scmp.eq.s32.totalorder %s84, 0
      %s87 = sadd.s32 %s86, 1
      %s88 = scalar_select %p85, %s86, %s87
      %p91 = pneg %p85
      %p92 = scmp.eq.s32.totalorder %s76, 1
      %p93 = por %p91, %p92
      %p94 = scmp.ne.s32.totalorder %s86, %s89
      %p95 = scmp.eq.s32.totalorder %s76, 0
      %p96 = por %p94, %p95
      %p97 = scmp.ne.s32.totalorder %s86, %s89
      %p98 = scmp.eq.s32.totalorder %s81, 1
      %p99 = por %p97, %p98
      %p100 = scmp.ne.s32.totalorder %s89, %s90
      %p101 = scmp.eq.s32.totalorder %s81, 0
      %p102 = por %p100, %p101
      %p103 = scmp.ne.s32.totalorder %s89, %s90
      %p104 = scmp.eq.s32.totalorder %s82, 1
      %p105 = por %p103, %p104
      %p107 = scmp.ne.s32.totalorder %s90, %s106
      %p108 = scmp.eq.s32.totalorder %s82, 0
      %p109 = por %p107, %p108
      %s110 = ssub.s32 %s76, %s83
      %p111 = scmp.eq.s32.totalorder %s110, 0
      %s113 = sadd.s32 %s112, 1
      %s114 = scalar_select %p111, %s112, %s113
      %p117 = pneg %p111
      %p118 = scmp.eq.s32.totalorder %s76, 1
      %p119 = por %p117, %p118
      %p120 = scmp.ne.s32.totalorder %s112, %s115
      %p121 = scmp.eq.s32.totalorder %s76, 0
      %p122 = por %p120, %p121
      %p123 = scmp.ne.s32.totalorder %s112, %s115
      %p124 = scmp.eq.s32.totalorder %s81, 1
      %p125 = por %p123, %p124
      %p126 = scmp.ne.s32.totalorder %s115, %s116
      %p127 = scmp.eq.s32.totalorder %s81, 0
      %p128 = por %p126, %p127
      %p129 = scmp.ne.s32.totalorder %s115, %s116
      %p130 = scmp.eq.s32.totalorder %s82, 1
      %p131 = por %p129, %p130
      %p133 = scmp.ne.s32.totalorder %s116, %s132
      %p134 = scmp.eq.s32.totalorder %s82, 0
      %p135 = por %p133, %p134
      %s136 = ssub.s32 %s76, %s83
      %p137 = scmp.eq.s32.totalorder %s136, 0
      %s139 = sadd.s32 %s138, 1
      %s140 = scalar_select %p137, %s138, %s139
      %p143 = pneg %p137
      %p144 = scmp.eq.s32.totalorder %s76, 1
      %p145 = por %p143, %p144
      %p146 = scmp.ne.s32.totalorder %s138, %s141
      %p147 = scmp.eq.s32.totalorder %s76, 0
      %p148 = por %p146, %p147
      %p149 = scmp.ne.s32.totalorder %s138, %s141
      %p150 = scmp.eq.s32.totalorder %s81, 1
      %p151 = por %p149, %p150
      %p152 = scmp.ne.s32.totalorder %s141, %s142
      %p153 = scmp.eq.s32.totalorder %s81, 0
      %p154 = por %p152, %p153
      %p155 = scmp.ne.s32.totalorder %s141, %s142
      %p156 = scmp.eq.s32.totalorder %s82, 1
      %p157 = por %p155, %p156
      %p159 = scmp.ne.s32.totalorder %s142, %s158
      %p160 = scmp.eq.s32.totalorder %s82, 0
      %p161 = por %p159, %p160
      %s162 = ssub.s32 %s76, %s83
      %p163 = scmp.eq.s32.totalorder %s162, 0
      %s165 = sadd.s32 %s164, 1
      %s166 = scalar_select %p163, %s164, %s165
      %p169 = pneg %p163
      %p170 = scmp.eq.s32.totalorder %s76, 1
      %p171 = por %p169, %p170
      %p172 = scmp.ne.s32.totalorder %s164, %s167
      %p173 = scmp.eq.s32.totalorder %s76, 0
      %p174 = por %p172, %p173
      %p175 = scmp.ne.s32.totalorder %s164, %s167
      %p176 = scmp.eq.s32.totalorder %s81, 1
      %p177 = por %p175, %p176
      %p178 = scmp.ne.s32.totalorder %s167, %s168
      %p179 = scmp.eq.s32.totalorder %s81, 0
      %p180 = por %p178, %p179
      %p181 = scmp.ne.s32.totalorder %s167, %s168
      %p182 = scmp.eq.s32.totalorder %s82, 1
      %p183 = por %p181, %p182
      %p185 = scmp.ne.s32.totalorder %s168, %s184
      %p186 = scmp.eq.s32.totalorder %s82, 0
      %p187 = por %p185, %p186
      %s188 = ssub.s32 %s76, %s83
      %p189 = scmp.eq.s32.totalorder %s188, 0
      %s191 = sadd.s32 %s190, 1
      %s192 = scalar_select %p189, %s190, %s191
      %p195 = pneg %p189
      %p196 = scmp.eq.s32.totalorder %s76, 1
      %p197 = por %p195, %p196
      %p198 = scmp.ne.s32.totalorder %s190, %s193
      %p199 = scmp.eq.s32.totalorder %s76, 0
      %p200 = por %p198, %p199
      %p201 = scmp.ne.s32.totalorder %s190, %s193
      %p202 = scmp.eq.s32.totalorder %s81, 1
      %p203 = por %p201, %p202
      %p204 = scmp.ne.s32.totalorder %s193, %s194
      %p205 = scmp.eq.s32.totalorder %s81, 0
      %p206 = por %p204, %p205
      %p207 = scmp.ne.s32.totalorder %s193, %s194
      %p208 = scmp.eq.s32.totalorder %s82, 1
      %p209 = por %p207, %p208
      %p211 = scmp.ne.s32.totalorder %s194, %s210
      %p212 = scmp.eq.s32.totalorder %s82, 0
      %p213 = por %p211, %p212
      %s214 = ssub.s32 %s76, %s83
      %p215 = scmp.eq.s32.totalorder %s214, 0
      %s217 = sadd.s32 %s216, 1
      %s218 = scalar_select %p215, %s216, %s217
      %p221 = pneg %p215
      %p222 = scmp.eq.s32.totalorder %s76, 1
      %p223 = por %p221, %p222
      %p224 = scmp.ne.s32.totalorder %s216, %s219
      %p225 = scmp.eq.s32.totalorder %s76, 0
      %p226 = por %p224, %p225
      %p227 = scmp.ne.s32.totalorder %s216, %s219
      %p228 = scmp.eq.s32.totalorder %s81, 1
      %p229 = por %p227, %p228
      %p230 = scmp.ne.s32.totalorder %s219, %s220
      %p231 = scmp.eq.s32.totalorder %s81, 0
      %p232 = por %p230, %p231
      %p233 = scmp.ne.s32.totalorder %s219, %s220
      %p234 = scmp.eq.s32.totalorder %s82, 1
      %p235 = por %p233, %p234
      %p237 = scmp.ne.s32.totalorder %s220, %s236
      %p238 = scmp.eq.s32.totalorder %s82, 0
      %p239 = por %p237, %p238
      %s241 = sadd.s32 %s240, 1
      %p244 = scmp.eq.s32.totalorder %s76, 1
      %p245 = scmp.ne.s32.totalorder %s240, %s242
      %p246 = scmp.eq.s32.totalorder %s76, 0
      %p247 = por %p245, %p246
      %p248 = scmp.ne.s32.totalorder %s240, %s242
      %p249 = scmp.eq.s32.totalorder %s81, 1
      %p250 = por %p248, %p249
      %p251 = scmp.ne.s32.totalorder %s242, %s243
      %p252 = scmp.eq.s32.totalorder %s81, 0
      %p253 = por %p251, %p252
      %p254 = scmp.ne.s32.totalorder %s242, %s243
      %p255 = scmp.eq.s32.totalorder %s82, 1
      %p256 = por %p254, %p255
      %p258 = scmp.ne.s32.totalorder %s243, %s257
      %p259 = scmp.eq.s32.totalorder %s82, 0
      %p260 = por %p258, %p259
      %s262 = sadd.s32 %s261, 1
      %p265 = scmp.eq.s32.totalorder %s76, 1
      %p266 = scmp.ne.s32.totalorder %s261, %s263
      %p267 = scmp.eq.s32.totalorder %s76, 0
      %p268 = por %p266, %p267
      %p269 = scmp.ne.s32.totalorder %s261, %s263
      %p270 = scmp.eq.s32.totalorder %s81, 1
      %p271 = por %p269, %p270
      %p272 = scmp.ne.s32.totalorder %s263, %s264
      %p273 = scmp.eq.s32.totalorder %s81, 0
      %p274 = por %p272, %p273
      %p275 = scmp.ne.s32.totalorder %s263, %s264
      %p276 = scmp.eq.s32.totalorder %s82, 1
      %p277 = por %p275, %p276
      %p279 = scmp.ne.s32.totalorder %s264, %s278
      %p280 = scmp.eq.s32.totalorder %s82, 0
      %p281 = por %p279, %p280
      %s283 = sadd.s32 %s282, 1
      %p286 = scmp.eq.s32.totalorder %s76, 1
      %p287 = scmp.ne.s32.totalorder %s282, %s284
      %p288 = scmp.eq.s32.totalorder %s76, 0
      %p289 = por %p287, %p288
      %p290 = scmp.ne.s32.totalorder %s282, %s284
      %p291 = scmp.eq.s32.totalorder %s81, 1
      %p292 = por %p290, %p291
      %p293 = scmp.ne.s32.totalorder %s284, %s285
      %p294 = scmp.eq.s32.totalorder %s81, 0
      %p295 = por %p293, %p294
      %p296 = scmp.ne.s32.totalorder %s284, %s285
      %p297 = scmp.eq.s32.totalorder %s82, 1
      %p298 = por %p296, %p297
      %p300 = scmp.ne.s32.totalorder %s285, %s299
      %p301 = scmp.eq.s32.totalorder %s82, 0
      %p302 = por %p300, %p301
      %s304 = sadd.s32 %s303, 1
      %p307 = scmp.eq.s32.totalorder %s76, 1
      %p308 = scmp.ne.s32.totalorder %s303, %s305
      %p309 = scmp.eq.s32.totalorder %s76, 0
      %p310 = por %p308, %p309
      %p311 = scmp.ne.s32.totalorder %s303, %s305
      %p312 = scmp.eq.s32.totalorder %s81, 1
      %p313 = por %p311, %p312
      %p314 = scmp.ne.s32.totalorder %s305, %s306
      %p315 = scmp.eq.s32.totalorder %s81, 0
      %p316 = por %p314, %p315
      %p317 = scmp.ne.s32.totalorder %s305, %s306
      %p318 = scmp.eq.s32.totalorder %s82, 1
      %p319 = por %p317, %p318
      %p321 = scmp.ne.s32.totalorder %s306, %s320
      %p322 = scmp.eq.s32.totalorder %s82, 0
      %p323 = por %p321, %p322
      %s325 = sadd.s32 %s324, 1
      %p328 = scmp.eq.s32.totalorder %s76, 1
      %p329 = scmp.ne.s32.totalorder %s324, %s326
      %p330 = scmp.eq.s32.totalorder %s76, 0
      %p331 = por %p329, %p330
      %p332 = scmp.ne.s32.totalorder %s324, %s326
      %p333 = scmp.eq.s32.totalorder %s81, 1
      %p334 = por %p332, %p333
      %p335 = scmp.ne.s32.totalorder %s326, %s327
      %p336 = scmp.eq.s32.totalorder %s81, 0
      %p337 = por %p335, %p336
      %p338 = scmp.ne.s32.totalorder %s326, %s327
      %p339 = scmp.eq.s32.totalorder %s82, 1
      %p340 = por %p338, %p339
      %p342 = scmp.ne.s32.totalorder %s327, %s341
      %p343 = scmp.eq.s32.totalorder %s82, 0
      %p344 = por %p342, %p343
      %s346 = sadd.s32 %s345, 1
      %p349 = scmp.eq.s32.totalorder %s76, 1
      %p350 = scmp.ne.s32.totalorder %s345, %s347
      %p351 = scmp.eq.s32.totalorder %s76, 0
      %p352 = por %p350, %p351
      %p353 = scmp.ne.s32.totalorder %s345, %s347
      %p354 = scmp.eq.s32.totalorder %s81, 1
      %p355 = por %p353, %p354
      %p356 = scmp.ne.s32.totalorder %s347, %s348
      %p357 = scmp.eq.s32.totalorder %s81, 0
      %p358 = por %p356, %p357
      %p359 = scmp.ne.s32.totalorder %s347, %s348
      %p360 = scmp.eq.s32.totalorder %s82, 1
      %p361 = por %p359, %p360
      %p363 = scmp.ne.s32.totalorder %s348, %s362
      %p364 = scmp.eq.s32.totalorder %s82, 0
      %p365 = por %p363, %p364
      %s367 = sadd.s32 %s366, 1
      %p370 = scmp.eq.s32.totalorder %s76, 1
      %p371 = scmp.ne.s32.totalorder %s366, %s368
      %p372 = scmp.eq.s32.totalorder %s76, 0
      %p373 = por %p371, %p372
      %p374 = scmp.ne.s32.totalorder %s366, %s368
      %p375 = scmp.eq.s32.totalorder %s81, 1
      %p376 = por %p374, %p375
      %p377 = scmp.ne.s32.totalorder %s368, %s369
      %p378 = scmp.eq.s32.totalorder %s81, 0
      %p379 = por %p377, %p378
      %p380 = scmp.ne.s32.totalorder %s368, %s369
      %p381 = scmp.eq.s32.totalorder %s82, 1
      %p382 = por %p380, %p381
      %p384 = scmp.ne.s32.totalorder %s369, %s383
      %p385 = scmp.eq.s32.totalorder %s82, 0
      %p386 = por %p384, %p385
      %s388 = sadd.s32 %s387, 1
      %p391 = scmp.eq.s32.totalorder %s76, 1
      %p392 = scmp.ne.s32.totalorder %s387, %s389
      %p393 = scmp.eq.s32.totalorder %s76, 0
      %p394 = por %p392, %p393
      %p395 = scmp.ne.s32.totalorder %s387, %s389
      %p396 = scmp.eq.s32.totalorder %s81, 1
      %p397 = por %p395, %p396
      %p398 = scmp.ne.s32.totalorder %s389, %s390
      %p399 = scmp.eq.s32.totalorder %s81, 0
      %p400 = por %p398, %p399
      %p401 = scmp.ne.s32.totalorder %s389, %s390
      %p402 = scmp.eq.s32.totalorder %s82, 1
      %p403 = por %p401, %p402
      %p405 = scmp.ne.s32.totalorder %s390, %s404
      %p406 = scmp.eq.s32.totalorder %s82, 0
      %p407 = por %p405, %p406
      %s409 = sadd.s32 %s408, 1
      %p412 = scmp.eq.s32.totalorder %s76, 1
      %p413 = scmp.ne.s32.totalorder %s408, %s410
      %p414 = scmp.eq.s32.totalorder %s76, 0
      %p415 = por %p413, %p414
      %p416 = scmp.ne.s32.totalorder %s408, %s410
      %p417 = scmp.eq.s32.totalorder %s81, 1
      %p418 = por %p416, %p417
      %p419 = scmp.ne.s32.totalorder %s410, %s411
      %p420 = scmp.eq.s32.totalorder %s81, 0
      %p421 = por %p419, %p420
      %p422 = scmp.ne.s32.totalorder %s410, %s411
      %p423 = scmp.eq.s32.totalorder %s82, 1
      %p424 = por %p422, %p423
      %p426 = scmp.ne.s32.totalorder %s411, %s425
      %p427 = scmp.eq.s32.totalorder %s82, 0
      %p428 = por %p426, %p427
      %s430 = sadd.s32 %s429, 1
      %p433 = scmp.eq.s32.totalorder %s76, 1
      %p434 = scmp.ne.s32.totalorder %s429, %s431
      %p435 = scmp.eq.s32.totalorder %s76, 0
      %p436 = por %p434, %p435
      %p437 = scmp.ne.s32.totalorder %s429, %s431
      %p438 = scmp.eq.s32.totalorder %s81, 1
      %p439 = por %p437, %p438
      %p440 = scmp.ne.s32.totalorder %s431, %s432
      %p441 = scmp.eq.s32.totalorder %s81, 0
      %p442 = por %p440, %p441
      %p443 = scmp.ne.s32.totalorder %s431, %s432
      %p444 = scmp.eq.s32.totalorder %s82, 1
      %p445 = por %p443, %p444
      %p447 = scmp.ne.s32.totalorder %s432, %s446
      %p448 = scmp.eq.s32.totalorder %s82, 0
      %p449 = por %p447, %p448
      %s451 = sadd.s32 %s450, 1
      %p454 = scmp.eq.s32.totalorder %s76, 1
      %p455 = scmp.ne.s32.totalorder %s450, %s452
      %p456 = scmp.eq.s32.totalorder %s76, 0
      %p457 = por %p455, %p456
      %p458 = scmp.ne.s32.totalorder %s450, %s452
      %p459 = scmp.eq.s32.totalorder %s81, 1
      %p460 = por %p458, %p459
      %p461 = scmp.ne.s32.totalorder %s452, %s453
      %p462 = scmp.eq.s32.totalorder %s81, 0
      %p463 = por %p461, %p462
      %p464 = scmp.ne.s32.totalorder %s452, %s453
      %p465 = scmp.eq.s32.totalorder %s82, 1
      %p466 = por %p464, %p465
      %p468 = scmp.ne.s32.totalorder %s453, %s467
      %p469 = scmp.eq.s32.totalorder %s82, 0
      %p470 = por %p468, %p469
      %s472 = sadd.s32 %s471, 1
      %p475 = scmp.eq.s32.totalorder %s76, 1
      %p476 = scmp.ne.s32.totalorder %s471, %s473
      %p477 = scmp.eq.s32.totalorder %s76, 0
      %p478 = por %p476, %p477
      %p479 = scmp.ne.s32.totalorder %s471, %s473
      %p480 = scmp.eq.s32.totalorder %s81, 1
      %p481 = por %p479, %p480
      %p482 = scmp.ne.s32.totalorder %s473, %s474
      %p483 = scmp.eq.s32.totalorder %s81, 0
      %p484 = por %p482, %p483
      %p485 = scmp.ne.s32.totalorder %s473, %s474
      %p486 = scmp.eq.s32.totalorder %s82, 1
      %p487 = por %p485, %p486
      %p489 = scmp.ne.s32.totalorder %s474, %s488
      %p490 = scmp.eq.s32.totalorder %s82, 0
      %p491 = por %p489, %p490
      %s493 = sadd.s32 %s492, 1
      %p496 = scmp.eq.s32.totalorder %s76, 1
      %p497 = scmp.ne.s32.totalorder %s492, %s494
      %p498 = scmp.eq.s32.totalorder %s76, 0
      %p499 = por %p497, %p498
      %p500 = scmp.ne.s32.totalorder %s492, %s494
      %p501 = scmp.eq.s32.totalorder %s81, 1
      %p502 = por %p500, %p501
      %p503 = scmp.ne.s32.totalorder %s494, %s495
      %p504 = scmp.eq.s32.totalorder %s81, 0
      %p505 = por %p503, %p504
      %p506 = scmp.ne.s32.totalorder %s494, %s495
      %p507 = scmp.eq.s32.totalorder %s82, 1
      %p508 = por %p506, %p507
      %p510 = scmp.ne.s32.totalorder %s495, %s509
      %p511 = scmp.eq.s32.totalorder %s82, 0
      %p512 = por %p510, %p511
      %s514 = sadd.s32 %s513, 1
      %p517 = scmp.eq.s32.totalorder %s76, 1
      %p518 = scmp.ne.s32.totalorder %s513, %s515
      %p519 = scmp.eq.s32.totalorder %s76, 0
      %p520 = por %p518, %p519
      %p521 = scmp.ne.s32.totalorder %s513, %s515
      %p522 = scmp.eq.s32.totalorder %s81, 1
      %p523 = por %p521, %p522
      %p524 = scmp.ne.s32.totalorder %s515, %s516
      %p525 = scmp.eq.s32.totalorder %s81, 0
      %p526 = por %p524, %p525
      %p527 = scmp.ne.s32.totalorder %s515, %s516
      %p528 = scmp.eq.s32.totalorder %s82, 1
      %p529 = por %p527, %p528
      %p531 = scmp.ne.s32.totalorder %s516, %s530
      %p532 = scmp.eq.s32.totalorder %s82, 0
      %p533 = por %p531, %p532
      %s535 = sadd.s32 %s534, 1
      %p538 = scmp.eq.s32.totalorder %s76, 1
      %p539 = scmp.ne.s32.totalorder %s534, %s536
      %p540 = scmp.eq.s32.totalorder %s76, 0
      %p541 = por %p539, %p540
      %p542 = scmp.ne.s32.totalorder %s534, %s536
      %p543 = scmp.eq.s32.totalorder %s81, 1
      %p544 = por %p542, %p543
      %p545 = scmp.ne.s32.totalorder %s536, %s537
      %p546 = scmp.eq.s32.totalorder %s81, 0
      %p547 = por %p545, %p546
      %p548 = scmp.ne.s32.totalorder %s536, %s537
      %p549 = scmp.eq.s32.totalorder %s82, 1
      %p550 = por %p548, %p549
      %p552 = scmp.ne.s32.totalorder %s537, %s551
      %p553 = scmp.eq.s32.totalorder %s82, 0
      %p554 = por %p552, %p553
      %s556 = sadd.s32 %s555, 1
      %p559 = scmp.eq.s32.totalorder %s76, 1
      %p560 = scmp.ne.s32.totalorder %s555, %s557
      %p561 = scmp.eq.s32.totalorder %s76, 0
      %p562 = por %p560, %p561
      %p563 = scmp.ne.s32.totalorder %s555, %s557
      %p564 = scmp.eq.s32.totalorder %s81, 1
      %p565 = por %p563, %p564
      %p566 = scmp.ne.s32.totalorder %s557, %s558
      %p567 = scmp.eq.s32.totalorder %s81, 0
      %p568 = por %p566, %p567
      %p569 = scmp.ne.s32.totalorder %s557, %s558
      %p570 = scmp.eq.s32.totalorder %s82, 1
      %p571 = por %p569, %p570
      %p573 = scmp.ne.s32.totalorder %s558, %s572
      %p574 = scmp.eq.s32.totalorder %s82, 0
      %p575 = por %p573, %p574
      %s577 = sadd.s32 %s576, 1
      %p580 = scmp.eq.s32.totalorder %s76, 1
      %p581 = scmp.ne.s32.totalorder %s576, %s578
      %p582 = scmp.eq.s32.totalorder %s76, 0
      %p583 = por %p581, %p582
      %p584 = scmp.ne.s32.totalorder %s576, %s578
      %p585 = scmp.eq.s32.totalorder %s81, 1
      %p586 = por %p584, %p585
      %p587 = scmp.ne.s32.totalorder %s578, %s579
      %p588 = scmp.eq.s32.totalorder %s81, 0
      %p589 = por %p587, %p588
      %p590 = scmp.ne.s32.totalorder %s578, %s579
      %p591 = scmp.eq.s32.totalorder %s82, 1
      %p592 = por %p590, %p591
      %p594 = scmp.ne.s32.totalorder %s579, %s593
      %p595 = scmp.eq.s32.totalorder %s82, 0
      %p596 = por %p594, %p595
      %s598 = sadd.s32 %s597, 1
      %p601 = scmp.eq.s32.totalorder %s76, 1
      %p602 = scmp.ne.s32.totalorder %s597, %s599
      %p603 = scmp.eq.s32.totalorder %s76, 0
      %p604 = por %p602, %p603
      %p605 = scmp.ne.s32.totalorder %s597, %s599
      %p606 = scmp.eq.s32.totalorder %s81, 1
      %p607 = por %p605, %p606
      %p608 = scmp.ne.s32.totalorder %s599, %s600
      %p609 = scmp.eq.s32.totalorder %s81, 0
      %p610 = por %p608, %p609
      %p611 = scmp.ne.s32.totalorder %s599, %s600
      %p612 = scmp.eq.s32.totalorder %s82, 1
      %p613 = por %p611, %p612
      %p615 = scmp.ne.s32.totalorder %s600, %s614
      %p616 = scmp.eq.s32.totalorder %s82, 0
      %p617 = por %p615, %p616
      %s619 = sadd.s32 %s618, 1
      %p622 = scmp.eq.s32.totalorder %s76, 1
      %p623 = scmp.ne.s32.totalorder %s618, %s620
      %p624 = scmp.eq.s32.totalorder %s76, 0
      %p625 = por %p623, %p624
      %p626 = scmp.ne.s32.totalorder %s618, %s620
      %p627 = scmp.eq.s32.totalorder %s81, 1
      %p628 = por %p626, %p627
      %p629 = scmp.ne.s32.totalorder %s620, %s621
      %p630 = scmp.eq.s32.totalorder %s81, 0
      %p631 = por %p629, %p630
      %p632 = scmp.ne.s32.totalorder %s620, %s621
      %p633 = scmp.eq.s32.totalorder %s82, 1
      %p634 = por %p632, %p633
      %p636 = scmp.ne.s32.totalorder %s621, %s635
      %p637 = scmp.eq.s32.totalorder %s82, 0
      %p638 = por %p636, %p637
      %s640 = sadd.s32 %s639, 1
      %p643 = scmp.eq.s32.totalorder %s76, 1
      %p644 = scmp.ne.s32.totalorder %s639, %s641
      %p645 = scmp.eq.s32.totalorder %s76, 0
      %p646 = por %p644, %p645
      %p647 = scmp.ne.s32.totalorder %s639, %s641
      %p648 = scmp.eq.s32.totalorder %s81, 1
      %p649 = por %p647, %p648
      %p650 = scmp.ne.s32.totalorder %s641, %s642
      %p651 = scmp.eq.s32.totalorder %s81, 0
      %p652 = por %p650, %p651
      %p653 = scmp.ne.s32.totalorder %s641, %s642
      %p654 = scmp.eq.s32.totalorder %s82, 1
      %p655 = por %p653, %p654
      %p657 = scmp.ne.s32.totalorder %s642, %s656
      %p658 = scmp.eq.s32.totalorder %s82, 0
      %p659 = por %p657, %p658
      %s661 = sadd.s32 %s660, 1
      %p664 = scmp.eq.s32.totalorder %s76, 1
      %p665 = scmp.ne.s32.totalorder %s660, %s662
      %p666 = scmp.eq.s32.totalorder %s76, 0
      %p667 = por %p665, %p666
      %p668 = scmp.ne.s32.totalorder %s660, %s662
      %p669 = scmp.eq.s32.totalorder %s81, 1
      %p670 = por %p668, %p669
      %p671 = scmp.ne.s32.totalorder %s662, %s663
      %p672 = scmp.eq.s32.totalorder %s81, 0
      %p673 = por %p671, %p672
      %p674 = scmp.ne.s32.totalorder %s662, %s663
      %p675 = scmp.eq.s32.totalorder %s82, 1
      %p676 = por %p674, %p675
      %p678 = scmp.ne.s32.totalorder %s663, %s677
      %p679 = scmp.eq.s32.totalorder %s82, 0
      %p680 = por %p678, %p679
      %s682 = sadd.s32 %s681, 1
      %p685 = scmp.eq.s32.totalorder %s76, 1
      %p686 = scmp.ne.s32.totalorder %s681, %s683
      %p687 = scmp.eq.s32.totalorder %s76, 0
      %p688 = por %p686, %p687
      %p689 = scmp.ne.s32.totalorder %s681, %s683
      %p690 = scmp.eq.s32.totalorder %s81, 1
      %p691 = por %p689, %p690
      %p692 = scmp.ne.s32.totalorder %s683, %s684
      %p693 = scmp.eq.s32.totalorder %s81, 0
      %p694 = por %p692, %p693
      %p695 = scmp.ne.s32.totalorder %s683, %s684
      %p696 = scmp.eq.s32.totalorder %s82, 1
      %p697 = por %p695, %p696
      %p699 = scmp.ne.s32.totalorder %s684, %s698
      %p700 = scmp.eq.s32.totalorder %s82, 0
      %p701 = por %p699, %p700
      %s703 = sadd.s32 %s702, 1
      %p706 = scmp.eq.s32.totalorder %s76, 1
      %p707 = scmp.ne.s32.totalorder %s702, %s704
      %p708 = scmp.eq.s32.totalorder %s76, 0
      %p709 = por %p707, %p708
      %p710 = scmp.ne.s32.totalorder %s702, %s704
      %p711 = scmp.eq.s32.totalorder %s81, 1
      %p712 = por %p710, %p711
      %p713 = scmp.ne.s32.totalorder %s704, %s705
      %p714 = scmp.eq.s32.totalorder %s81, 0
      %p715 = por %p713, %p714
      %p716 = scmp.ne.s32.totalorder %s704, %s705
      %p717 = scmp.eq.s32.totalorder %s82, 1
      %p718 = por %p716, %p717
      %p720 = scmp.ne.s32.totalorder %s705, %s719
      %p721 = scmp.eq.s32.totalorder %s82, 0
      %p722 = por %p720, %p721
      %s724 = sadd.s32 %s723, 1
      %p727 = scmp.eq.s32.totalorder %s76, 1
      %p728 = scmp.ne.s32.totalorder %s723, %s725
      %p729 = scmp.eq.s32.totalorder %s76, 0
      %p730 = por %p728, %p729
      %p731 = scmp.ne.s32.totalorder %s723, %s725
      %p732 = scmp.eq.s32.totalorder %s81, 1
      %p733 = por %p731, %p732
      %p734 = scmp.ne.s32.totalorder %s725, %s726
      %p735 = scmp.eq.s32.totalorder %s81, 0
      %p736 = por %p734, %p735
      %p737 = scmp.ne.s32.totalorder %s725, %s726
      %p738 = scmp.eq.s32.totalorder %s82, 1
      %p739 = por %p737, %p738
      %p741 = scmp.ne.s32.totalorder %s726, %s740
      %p742 = scmp.eq.s32.totalorder %s82, 0
      %p743 = por %p741, %p742
      %s745 = sadd.s32 %s744, 1
      %p748 = scmp.eq.s32.totalorder %s76, 1
      %p749 = scmp.ne.s32.totalorder %s744, %s746
      %p750 = scmp.eq.s32.totalorder %s76, 0
      %p751 = por %p749, %p750
      %p752 = scmp.ne.s32.totalorder %s744, %s746
      %p753 = scmp.eq.s32.totalorder %s81, 1
      %p754 = por %p752, %p753
      %p755 = scmp.ne.s32.totalorder %s746, %s747
      %p756 = scmp.eq.s32.totalorder %s81, 0
      %p757 = por %p755, %p756
      %p758 = scmp.ne.s32.totalorder %s746, %s747
      %p759 = scmp.eq.s32.totalorder %s82, 1
      %p760 = por %p758, %p759
      %p762 = scmp.ne.s32.totalorder %s747, %s761
      %p763 = scmp.eq.s32.totalorder %s82, 0
      %p764 = por %p762, %p763
      %s766 = sadd.s32 %s765, 1
      %p769 = scmp.eq.s32.totalorder %s76, 1
      %p770 = scmp.ne.s32.totalorder %s765, %s767
      %p771 = scmp.eq.s32.totalorder %s76, 0
      %p772 = por %p770, %p771
      %p773 = scmp.ne.s32.totalorder %s765, %s767
      %p774 = scmp.eq.s32.totalorder %s81, 1
      %p775 = por %p773, %p774
      %p776 = scmp.ne.s32.totalorder %s767, %s768
      %p777 = scmp.eq.s32.totalorder %s81, 0
      %p778 = por %p776, %p777
      %p779 = scmp.ne.s32.totalorder %s767, %s768
      %p780 = scmp.eq.s32.totalorder %s82, 1
      %p781 = por %p779, %p780
      %p783 = scmp.ne.s32.totalorder %s768, %s782
      %p784 = scmp.eq.s32.totalorder %s82, 0
      %p785 = por %p783, %p784
      %s787 = sadd.s32 %s786, 1
      %p790 = scmp.eq.s32.totalorder %s76, 1
      %p791 = scmp.ne.s32.totalorder %s786, %s788
      %p792 = scmp.eq.s32.totalorder %s76, 0
      %p793 = por %p791, %p792
      %p794 = scmp.ne.s32.totalorder %s786, %s788
      %p795 = scmp.eq.s32.totalorder %s81, 1
      %p796 = por %p794, %p795
      %p797 = scmp.ne.s32.totalorder %s788, %s789
      %p798 = scmp.eq.s32.totalorder %s81, 0
      %p799 = por %p797, %p798
      %p800 = scmp.ne.s32.totalorder %s788, %s789
      %p801 = scmp.eq.s32.totalorder %s82, 1
      %p802 = por %p800, %p801
      %p804 = scmp.ne.s32.totalorder %s789, %s803
      %p805 = scmp.eq.s32.totalorder %s82, 0
      %p806 = por %p804, %p805
      %s807 = ssub.s32 %s76, %s83
      %p808 = scmp.eq.s32.totalorder %s807, 0
      %s810 = sadd.s32 %s809, 1
      %s811 = scalar_select %p808, %s809, %s810
      %p814 = pneg %p808
      %p815 = scmp.eq.s32.totalorder %s76, 1
      %p816 = por %p814, %p815
      %p817 = scmp.ne.s32.totalorder %s809, %s812
      %p818 = scmp.eq.s32.totalorder %s76, 0
      %p819 = por %p817, %p818
      %p820 = scmp.ne.s32.totalorder %s809, %s812
      %p821 = scmp.eq.s32.totalorder %s81, 1
      %p822 = por %p820, %p821
      %p823 = scmp.ne.s32.totalorder %s812, %s813
      %p824 = scmp.eq.s32.totalorder %s81, 0
      %p825 = por %p823, %p824
      %p826 = scmp.ne.s32.totalorder %s812, %s813
      %p827 = scmp.eq.s32.totalorder %s82, 1
      %p828 = por %p826, %p827
      %p830 = scmp.ne.s32.totalorder %s813, %s829
      %p831 = scmp.eq.s32.totalorder %s82, 0
      %p832 = por %p830, %p831
      %p833 = scmp.le.s32.totalorder 1, %s76
      %p834 = scmp.lt.s32.totalorder %s76, 3
      %p835 = pnand %p833, %p834
      %p836 = pneg %p835
      // Predicated region
      $region9: #{forward.1} parent=5 // pred_check
        _
      $region10: #{forward.1} parent=5 // pred_check_branch
        %838 = sbr.rel (%p835) target = $region12
      $region11: #{forward.1} parent=5 // pred_region
        %s839 = ssub.s32 %s76, 1
        // Predicated region
        $region13: #{forward.1} parent=11 // pred_check
          %p840 = pneg %p253
        $region14: #{forward.1} parent=11 // pred_check_branch
          %842 = sbr.rel (%p840) target = $region16
        $region15: #{forward.1} parent=11 // pred_region
          _
        $region16: #{forward.1} parent=11 // pred_fallthru
          _
        // Predicated region
        $region17: #{forward.1} parent=11 // pred_check
          %p843 = pneg %p274
        $region18: #{forward.1} parent=11 // pred_check_branch
          %845 = sbr.rel (%p843) target = $region20
        $region19: #{forward.1} parent=11 // pred_region
          _
        $region20: #{forward.1} parent=11 // pred_fallthru
          _
        // Predicated region
        $region21: #{forward.1} parent=11 // pred_check
          %p846 = pneg %p295
        $region22: #{forward.1} parent=11 // pred_check_branch
          %848 = sbr.rel (%p846) target = $region24
        $region23: #{forward.1} parent=11 // pred_region
          _
        $region24: #{forward.1} parent=11 // pred_fallthru
          _
        // Predicated region
        $region25: #{forward.1} parent=11 // pred_check
          %p849 = pneg %p316
        $region26: #{forward.1} parent=11 // pred_check_branch
          %851 = sbr.rel (%p849) target = $region28
        $region27: #{forward.1} parent=11 // pred_region
          _
        $region28: #{forward.1} parent=11 // pred_fallthru
          _
        // Predicated region
        $region29: #{forward.1} parent=11 // pred_check
          %p852 = pneg %p337
        $region30: #{forward.1} parent=11 // pred_check_branch
          %854 = sbr.rel (%p852) target = $region32
        $region31: #{forward.1} parent=11 // pred_region
          _
        $region32: #{forward.1} parent=11 // pred_fallthru
          _
        // Predicated region
        $region33: #{forward.1} parent=11 // pred_check
          %p855 = pneg %p358
        $region34: #{forward.1} parent=11 // pred_check_branch
          %857 = sbr.rel (%p855) target = $region36
        $region35: #{forward.1} parent=11 // pred_region
          _
        $region36: #{forward.1} parent=11 // pred_fallthru
          _
        // Predicated region
        $region37: #{forward.1} parent=11 // pred_check
          %p858 = pneg %p379
        $region38: #{forward.1} parent=11 // pred_check_branch
          %860 = sbr.rel (%p858) target = $region40
        $region39: #{forward.1} parent=11 // pred_region
          _
        $region40: #{forward.1} parent=11 // pred_fallthru
          _
        // Predicated region
        $region41: #{forward.1} parent=11 // pred_check
          %p861 = pneg %p400
        $region42: #{forward.1} parent=11 // pred_check_branch
          %863 = sbr.rel (%p861) target = $region44
        $region43: #{forward.1} parent=11 // pred_region
          _
        $region44: #{forward.1} parent=11 // pred_fallthru
          _
        // Predicated region
        $region45: #{forward.1} parent=11 // pred_check
          %p864 = pneg %p421
        $region46: #{forward.1} parent=11 // pred_check_branch
          %866 = sbr.rel (%p864) target = $region48
        $region47: #{forward.1} parent=11 // pred_region
          _
        $region48: #{forward.1} parent=11 // pred_fallthru
          _
        // Predicated region
        $region49: #{forward.1} parent=11 // pred_check
          %p867 = pneg %p442
        $region50: #{forward.1} parent=11 // pred_check_branch
          %869 = sbr.rel (%p867) target = $region52
        $region51: #{forward.1} parent=11 // pred_region
          _
        $region52: #{forward.1} parent=11 // pred_fallthru
          _
        // Predicated region
        $region53: #{forward.1} parent=11 // pred_check
          %p870 = pneg %p463
        $region54: #{forward.1} parent=11 // pred_check_branch
          %872 = sbr.rel (%p870) target = $region56
        $region55: #{forward.1} parent=11 // pred_region
          _
        $region56: #{forward.1} parent=11 // pred_fallthru
          _
        // Predicated region
        $region57: #{forward.1} parent=11 // pred_check
          %p873 = pneg %p484
        $region58: #{forward.1} parent=11 // pred_check_branch
          %875 = sbr.rel (%p873) target = $region60
        $region59: #{forward.1} parent=11 // pred_region
          _
        $region60: #{forward.1} parent=11 // pred_fallthru
          _
        // Predicated region
        $region61: #{forward.1} parent=11 // pred_check
          %p876 = pneg %p505
        $region62: #{forward.1} parent=11 // pred_check_branch
          %878 = sbr.rel (%p876) target = $region64
        $region63: #{forward.1} parent=11 // pred_region
          _
        $region64: #{forward.1} parent=11 // pred_fallthru
          _
        // Predicated region
        $region65: #{forward.1} parent=11 // pred_check
          %p879 = pneg %p526
        $region66: #{forward.1} parent=11 // pred_check_branch
          %881 = sbr.rel (%p879) target = $region68
        $region67: #{forward.1} parent=11 // pred_region
          _
        $region68: #{forward.1} parent=11 // pred_fallthru
          _
        // Predicated region
        $region69: #{forward.1} parent=11 // pred_check
          %p882 = pneg %p547
        $region70: #{forward.1} parent=11 // pred_check_branch
          %884 = sbr.rel (%p882) target = $region72
        $region71: #{forward.1} parent=11 // pred_region
          _
        $region72: #{forward.1} parent=11 // pred_fallthru
          _
        // Predicated region
        $region73: #{forward.1} parent=11 // pred_check
          %p885 = pneg %p568
        $region74: #{forward.1} parent=11 // pred_check_branch
          %887 = sbr.rel (%p885) target = $region76
        $region75: #{forward.1} parent=11 // pred_region
          _
        $region76: #{forward.1} parent=11 // pred_fallthru
          _
        // Predicated region
        $region77: #{forward.1} parent=11 // pred_check
          %p888 = pneg %p589
        $region78: #{forward.1} parent=11 // pred_check_branch
          %890 = sbr.rel (%p888) target = $region80
        $region79: #{forward.1} parent=11 // pred_region
          _
        $region80: #{forward.1} parent=11 // pred_fallthru
          _
        // Predicated region
        $region81: #{forward.1} parent=11 // pred_check
          %p891 = pneg %p610
        $region82: #{forward.1} parent=11 // pred_check_branch
          %893 = sbr.rel (%p891) target = $region84
        $region83: #{forward.1} parent=11 // pred_region
          _
        $region84: #{forward.1} parent=11 // pred_fallthru
          _
        // Predicated region
        $region85: #{forward.1} parent=11 // pred_check
          %p894 = pneg %p631
        $region86: #{forward.1} parent=11 // pred_check_branch
          %896 = sbr.rel (%p894) target = $region88
        $region87: #{forward.1} parent=11 // pred_region
          _
        $region88: #{forward.1} parent=11 // pred_fallthru
          _
        // Predicated region
        $region89: #{forward.1} parent=11 // pred_check
          %p897 = pneg %p652
        $region90: #{forward.1} parent=11 // pred_check_branch
          %899 = sbr.rel (%p897) target = $region92
        $region91: #{forward.1} parent=11 // pred_region
          _
        $region92: #{forward.1} parent=11 // pred_fallthru
          _
        // Predicated region
        $region93: #{forward.1} parent=11 // pred_check
          %p900 = pneg %p673
        $region94: #{forward.1} parent=11 // pred_check_branch
          %902 = sbr.rel (%p900) target = $region96
        $region95: #{forward.1} parent=11 // pred_region
          _
        $region96: #{forward.1} parent=11 // pred_fallthru
          _
        // Predicated region
        $region97: #{forward.1} parent=11 // pred_check
          %p903 = pneg %p694
        $region98: #{forward.1} parent=11 // pred_check_branch
          %905 = sbr.rel (%p903) target = $region100
        $region99: #{forward.1} parent=11 // pred_region
          _
        $region100: #{forward.1} parent=11 // pred_fallthru
          _
        // Predicated region
        $region101: #{forward.1} parent=11 // pred_check
          %p906 = pneg %p715
        $region102: #{forward.1} parent=11 // pred_check_branch
          %908 = sbr.rel (%p906) target = $region104
        $region103: #{forward.1} parent=11 // pred_region
          _
        $region104: #{forward.1} parent=11 // pred_fallthru
          _
        // Predicated region
        $region105: #{forward.1} parent=11 // pred_check
          %p909 = pneg %p736
        $region106: #{forward.1} parent=11 // pred_check_branch
          %911 = sbr.rel (%p909) target = $region108
        $region107: #{forward.1} parent=11 // pred_region
          _
        $region108: #{forward.1} parent=11 // pred_fallthru
          _
        // Predicated region
        $region109: #{forward.1} parent=11 // pred_check
          %p912 = pneg %p757
        $region110: #{forward.1} parent=11 // pred_check_branch
          %914 = sbr.rel (%p912) target = $region112
        $region111: #{forward.1} parent=11 // pred_region
          _
        $region112: #{forward.1} parent=11 // pred_fallthru
          _
        // Predicated region
        $region113: #{forward.1} parent=11 // pred_check
          %p915 = pneg %p778
        $region114: #{forward.1} parent=11 // pred_check_branch
          %917 = sbr.rel (%p915) target = $region116
        $region115: #{forward.1} parent=11 // pred_region
          _
        $region116: #{forward.1} parent=11 // pred_fallthru
          _
        // Predicated region
        $region117: #{forward.1} parent=11 // pred_check
          %p918 = pneg %p799
        $region118: #{forward.1} parent=11 // pred_check_branch
          %920 = sbr.rel (%p918) target = $region120
        $region119: #{forward.1} parent=11 // pred_region
          _
        $region120: #{forward.1} parent=11 // pred_fallthru
          _
      $region12: #{forward.1} parent=5 // pred_fallthru
        _
      %p921 = scmp.lt.s32.totalorder %s76, 2
      // Predicated region
      $region121: #{forward.1} parent=5 // pred_check
        %p922 = pneg %p921
      $region122: #{forward.1} parent=5 // pred_check_branch
        %924 = sbr.rel (%p922) target = $region124
      $region123: #{forward.1} parent=5 // pred_region
        // Predicated region
        $region125: #{forward.1} parent=123 // pred_check
          %p925 = pneg %p96
        $region126: #{forward.1} parent=123 // pred_check_branch
          %927 = sbr.rel (%p925) target = $region128
        $region127: #{forward.1} parent=123 // pred_region
          %p928 = scmp.lt.s32.totalorder %s76, 1
          %s929 = scalar_select %p928, %s76, 1
          %s930 = smul.addr %s929, 8
          %s931 = scalar_lea.vmem %s1, %s930
        $region128: #{forward.1} parent=123 // pred_fallthru
          _
        // Predicated region
        $region129: #{forward.1} parent=123 // pred_check
          %p932 = pneg %p122
        $region130: #{forward.1} parent=123 // pred_check_branch
          %934 = sbr.rel (%p932) target = $region132
        $region131: #{forward.1} parent=123 // pred_region
          %p935 = scmp.lt.s32.totalorder %s76, 1
          %s936 = scalar_select %p935, %s76, 1
          %s937 = smul.addr %s936, 13
          %s938 = smul.addr %s937, 8
          %s939 = scalar_lea.vmem %s3, %s938
        $region132: #{forward.1} parent=123 // pred_fallthru
          _
        // Predicated region
        $region133: #{forward.1} parent=123 // pred_check
          %p940 = pneg %p148
        $region134: #{forward.1} parent=123 // pred_check_branch
          %942 = sbr.rel (%p940) target = $region136
        $region135: #{forward.1} parent=123 // pred_region
          %p943 = scmp.lt.s32.totalorder %s76, 1
          %s944 = scalar_select %p943, %s76, 1
          %s945 = smul.addr %s944, 13
          %s946 = smul.addr %s945, 8
          %s947 = scalar_lea.vmem %s5, %s946
        $region136: #{forward.1} parent=123 // pred_fallthru
          _
        // Predicated region
        $region137: #{forward.1} parent=123 // pred_check
          %p948 = pneg %p174
        $region138: #{forward.1} parent=123 // pred_check_branch
          %950 = sbr.rel (%p948) target = $region140
        $region139: #{forward.1} parent=123 // pred_region
          %p951 = scmp.lt.s32.totalorder %s76, 1
          %s952 = scalar_select %p951, %s76, 1
          %s953 = smul.addr %s952, 8
          %s954 = scalar_lea.vmem %s7, %s953
        $region140: #{forward.1} parent=123 // pred_fallthru
          _
        // Predicated region
        $region141: #{forward.1} parent=123 // pred_check
          %p955 = pneg %p200
        $region142: #{forward.1} parent=123 // pred_check_branch
          %957 = sbr.rel (%p955) target = $region144
        $region143: #{forward.1} parent=123 // pred_region
          %p958 = scmp.lt.s32.totalorder %s76, 1
          %s959 = scalar_select %p958, %s76, 1
          %s960 = scalar_lea.vmem %s9, %s959
        $region144: #{forward.1} parent=123 // pred_fallthru
          _
        // Predicated region
        $region145: #{forward.1} parent=123 // pred_check
          %p961 = pneg %p226
        $region146: #{forward.1} parent=123 // pred_check_branch
          %963 = sbr.rel (%p961) target = $region148
        $region147: #{forward.1} parent=123 // pred_region
          %p964 = scmp.lt.s32.totalorder %s76, 1
          %s965 = scalar_select %p964, %s76, 1
          %s966 = smul.addr %s965, 8
          %s967 = scalar_lea.vmem %s11, %s966
        $region148: #{forward.1} parent=123 // pred_fallthru
          _
      $region124: #{forward.1} parent=5 // pred_fallthru
        _
      %p968 = scmp.le.s32.totalorder 1, %s76
      %p969 = scmp.lt.s32.totalorder %s76, 3
      %p970 = pnand %p968, %p969
      %p971 = pneg %p970
      // Predicated region
      $region149: #{forward.1} parent=5 // pred_check
        _
      $region150: #{forward.1} parent=5 // pred_check_branch
        %973 = sbr.rel (%p970) target = $region152
      $region151: #{forward.1} parent=5 // pred_region
        %s974 = ssub.s32 %s76, 1
        %p975 = scmp.lt.s32.totalorder %s81, 1
        %s976 = scalar_select %p975, %s81, 1
        %s977 = smul.addr %s976, 8
        %s978 = scalar_lea.vmem %s1, %s977
        %p979 = pneg %p102
        %p980 = pneg %p99
        %p981 = scmp.lt.s32.totalorder %s81, 1
        %s982 = scalar_select %p981, %s81, 1
        %s983 = smul.addr %s982, 13
        %s984 = smul.addr %s983, 8
        %s985 = scalar_lea.vmem %s3, %s984
        %p986 = pneg %p128
        %p987 = pneg %p125
        %p988 = scmp.lt.s32.totalorder %s81, 1
        %s989 = scalar_select %p988, %s81, 1
        %s990 = smul.addr %s989, 13
        %s991 = smul.addr %s990, 8
        %s992 = scalar_lea.vmem %s5, %s991
        %p993 = pneg %p154
        %p994 = pneg %p151
        %p995 = scmp.lt.s32.totalorder %s81, 1
        %s996 = scalar_select %p995, %s81, 1
        %s997 = smul.addr %s996, 8
        %s998 = scalar_lea.vmem %s7, %s997
        %p999 = pneg %p180
        %p1000 = pneg %p177
        %p1001 = scmp.lt.s32.totalorder %s81, 1
        %s1002 = scalar_select %p1001, %s81, 1
        %s1003 = scalar_lea.vmem %s9, %s1002
        %p1004 = pneg %p206
        %p1005 = pneg %p203
        %p1006 = scmp.lt.s32.totalorder %s81, 1
        %s1007 = scalar_select %p1006, %s81, 1
        %s1008 = smul.addr %s1007, 8
        %s1009 = scalar_lea.vmem %s11, %s1008
        %p1010 = pneg %p232
        %p1011 = pneg %p229
        %p1012 = pneg %p253
        %p1013 = pneg %p250
        %p1014 = pneg %p274
        %p1015 = pneg %p271
        %p1016 = pneg %p295
        %p1017 = pneg %p292
        %p1018 = pneg %p316
        %p1019 = pneg %p313
        %p1020 = pneg %p337
        %p1021 = pneg %p334
        %p1022 = pneg %p358
        %p1023 = pneg %p355
        %p1024 = pneg %p379
        %p1025 = pneg %p376
        %p1026 = pneg %p400
        %p1027 = pneg %p397
        %p1028 = pneg %p421
        %p1029 = pneg %p418
        %p1030 = pneg %p442
        %p1031 = pneg %p439
        %p1032 = pneg %p463
        %p1033 = pneg %p460
        %p1034 = pneg %p484
        %p1035 = pneg %p481
        %p1036 = pneg %p505
        %p1037 = pneg %p502
        %p1038 = pneg %p526
        %p1039 = pneg %p523
        %p1040 = pneg %p547
        %p1041 = pneg %p544
        %p1042 = pneg %p568
        %p1043 = pneg %p565
        %p1044 = pneg %p589
        %p1045 = pneg %p586
        %p1046 = pneg %p610
        %p1047 = pneg %p607
        %p1048 = pneg %p631
        %p1049 = pneg %p628
        %p1050 = pneg %p652
        %p1051 = pneg %p649
        %p1052 = pneg %p673
        %p1053 = pneg %p670
        %p1054 = pneg %p694
        %p1055 = pneg %p691
        %p1056 = pneg %p715
        %p1057 = pneg %p712
        %p1058 = pneg %p736
        %p1059 = pneg %p733
        %p1060 = pneg %p757
        %p1061 = pneg %p754
        %p1062 = pneg %p778
        %p1063 = pneg %p775
        %p1064 = pneg %p799
        %p1065 = pneg %p796
        %p1066 = pneg %p825
        %p1067 = pneg %p822
        %s1068 = sand.u32 %s812, 1
        %s1069 = scalar_lea.sflag [#allocation3], %s1068
        %s1070 = sand.u32 %s812, 1
        %s1071 = smul.addr %s1070, 8
        %s1072 = scalar_lea.vmem [#allocation2], %s1071
        %p1073 = scmp.lt.s32.totalorder %s81, 1
        %s1074 = scalar_select %p1073, %s81, 1
        %s1075 = smul.addr %s1074, 8
        %s1076 = scalar_lea.vmem %s1, %s1075
        %p1077 = scmp.lt.s32.totalorder %s81, 1
        %s1078 = scalar_select %p1077, %s81, 1
        %s1079 = smul.addr %s1078, 13
        %s1080 = smul.addr %s1079, 8
        %s1081 = scalar_lea.vmem %s3, %s1080
        %p1082 = scmp.lt.s32.totalorder %s81, 1
        %s1083 = scalar_select %p1082, %s81, 1
        %s1084 = smul.addr %s1083, 13
        %s1085 = smul.addr %s1084, 8
        %s1086 = scalar_lea.vmem %s5, %s1085
        %p1087 = scmp.lt.s32.totalorder %s81, 1
        %s1088 = scalar_select %p1087, %s81, 1
        %s1089 = smul.addr %s1088, 8
        %s1090 = scalar_lea.vmem %s7, %s1089
        %p1091 = scmp.lt.s32.totalorder %s81, 1
        %s1092 = scalar_select %p1091, %s81, 1
        %s1093 = scalar_lea.vmem %s9, %s1092
        %p1094 = scmp.lt.s32.totalorder %s81, 1
        %s1095 = scalar_select %p1094, %s81, 1
        %s1096 = smul.addr %s1095, 8
        %s1097 = scalar_lea.vmem %s11, %s1096
        %v1099 = vld [vmem:[%s1076] sm:$0xff]
        %v1100 = vld [vmem:[%s1081] sm:$0xff]
        %v1101 = vld [vmem:[%s1081 + $0x8] sm:$0xff]
        %v1102 = vld [vmem:[%s1081 + $0x10] sm:$0xff]
        %v1103 = vld [vmem:[%s1081 + $0x18] sm:$0xff]
        %v1104 = vld [vmem:[%s1081 + $0x20] sm:$0xff]
        %v1105 = vld [vmem:[%s1081 + $0x28] sm:$0xff]
        %v1106 = vld [vmem:[%s1081 + $0x30] sm:$0xff]
        %v1107 = vld [vmem:[%s1081 + $0x38] sm:$0xff]
        %v1108 = vld [vmem:[%s1081 + $0x40] sm:$0xff]
        %v1109 = vld [vmem:[%s1081 + $0x48] sm:$0xff]
        %v1110 = vld [vmem:[%s1081 + $0x50] sm:$0xff]
        %v1111 = vld [vmem:[%s1081 + $0x58] sm:$0xff]
        %v1112 = vld [vmem:[%s1081 + $0x60] sm:$0x7]
        %v1113 = vld [vmem:[%s1086] sm:$0xff]
        %v1114 = vld [vmem:[%s1086 + $0x8] sm:$0xff]
        %v1115 = vld [vmem:[%s1086 + $0x10] sm:$0xff]
        %v1116 = vld [vmem:[%s1086 + $0x18] sm:$0xff]
        %v1117 = vld [vmem:[%s1086 + $0x20] sm:$0xff]
        %v1118 = vld [vmem:[%s1086 + $0x28] sm:$0xff]
        %v1119 = vld [vmem:[%s1086 + $0x30] sm:$0xff]
        %v1120 = vld [vmem:[%s1086 + $0x38] sm:$0xff]
        %v1121 = vld [vmem:[%s1086 + $0x40] sm:$0xff]
        %v1122 = vld [vmem:[%s1086 + $0x48] sm:$0xff]
        %v1123 = vld [vmem:[%s1086 + $0x50] sm:$0xff]
        %v1124 = vld [vmem:[%s1086 + $0x58] sm:$0xff]
        %v1125 = vld [vmem:[%s1086 + $0x60] sm:$0x7]
        %v1126 = vld [vmem:[%s1090] sm:$0xff]
        %v1127 = vld [vmem:[%s1093] sm:$0x1]
        %v1128 = vld [vmem:[%s1097] sm:$0xff]
        %v1129 = vadd.f32 %v1100, %v1113
        %v1130 = vadd.f32 %v1101, %v1114
        %v1131 = vadd.f32 %v1102, %v1115
        %v1132 = vadd.f32 %v1103, %v1116
        %v1133 = vadd.f32 %v1104, %v1117
        %v1134 = vadd.f32 %v1105, %v1118
        %v1135 = vadd.f32 %v1106, %v1119
        %v1136 = vadd.f32 %v1107, %v1120
        %v1137 = vadd.f32 %v1108, %v1121
        %v1138 = vadd.f32 %v1109, %v1122
        %v1139 = vadd.f32 %v1110, %v1123
        %v1140 = vadd.f32 %v1111, %v1124
        %v1141 = vadd.f32 %v1112, %v1125
        %v1142 = vpack.c.bf16 %v1130, %v1129
        %v1143 = vpack.c.bf16 %v1132, %v1131
        %v1144 = vpack.c.bf16 %v1134, %v1133
        %v1145 = vpack.c.bf16 %v1136, %v1135
        %v1146 = vpack.c.bf16 %v1138, %v1137
        %v1147 = vpack.c.bf16 %v1140, %v1139
        %v1148 = vpack.c.bf16 %v1141, %v1141
        %v1149 = vpack.c.bf16 %v1101, %v1100
        %v1150 = vpack.c.bf16 %v1103, %v1102
        %v1151 = vpack.c.bf16 %v1105, %v1104
        %v1152 = vpack.c.bf16 %v1107, %v1106
        %v1153 = vpack.c.bf16 %v1109, %v1108
        %v1154 = vpack.c.bf16 %v1111, %v1110
        %v1155 = vpack.c.bf16 %v1112, %v1112
        %v1156 = vld [vmem:[%s15] sm:$0x1]
        %v1157 = vld [vmem:[%s17] sm:$0x1]
        %v1158 = vld [vmem:[%s19] sm:$0x1]
        %v1159 = vld [vmem:[%s21] sm:$0x1]
        %v1160 = vld [vmem:[%s23] sm:$0x1]
        %v1161 = vld [vmem:[%s25] sm:$0x1]
        %v1162 = vld [vmem:[%s27] sm:$0xf]
        %v1163 = vld [vmem:[%s27 + $0x4] sm:$0xf]
        %v1164 = vld [vmem:[%s27 + $0x8] sm:$0xf]
        %v1165 = vld [vmem:[%s27 + $0xc] sm:$0xf]
        %v1166 = vld [vmem:[%s27 + $0x10] sm:$0xf]
        %v1167 = vld [vmem:[%s27 + $0x14] sm:$0xf]
        %v1168 = vld [vmem:[%s27 + $0x18] sm:$0xf]
        %v1169 = vld [vmem:[%s27 + $0x1c] sm:$0xf]
        %v1170 = vld [vmem:[%s29] sm:$0xf]
        %v1171 = vld [vmem:[%s29 + $0x4] sm:$0xf]
        %v1172 = vld [vmem:[%s29 + $0x8] sm:$0xf]
        %v1173 = vld [vmem:[%s29 + $0xc] sm:$0xf]
        %v1174 = vld [vmem:[%s29 + $0x10] sm:$0xf]
        %v1175 = vld [vmem:[%s29 + $0x14] sm:$0xf]
        %v1176 = vld [vmem:[%s29 + $0x18] sm:$0xf]
        %v1177 = vld [vmem:[%s29 + $0x1c] sm:$0xf]
        %v1178 = vld [vmem:[%s31] sm:$0xf]
        %v1179 = vld [vmem:[%s31 + $0x4] sm:$0xf]
        %v1180 = vld [vmem:[%s31 + $0x8] sm:$0xf]
        %v1181 = vld [vmem:[%s31 + $0xc] sm:$0xf]
        %v1182 = vld [vmem:[%s31 + $0x10] sm:$0xf]
        %v1183 = vld [vmem:[%s31 + $0x14] sm:$0xf]
        %v1184 = vld [vmem:[%s31 + $0x18] sm:$0xf]
        %v1185 = vld [vmem:[%s31 + $0x1c] sm:$0xf]
        %v1186 = vld [vmem:[%s33] sm:$0xf]
        %v1187 = vld [vmem:[%s33 + $0x4] sm:$0xf]
        %v1188 = vld [vmem:[%s33 + $0x8] sm:$0xf]
        %v1189 = vld [vmem:[%s33 + $0xc] sm:$0xf]
        %v1190 = vld [vmem:[%s33 + $0x10] sm:$0xf]
        %v1191 = vld [vmem:[%s33 + $0x14] sm:$0xf]
        %v1192 = vld [vmem:[%s33 + $0x18] sm:$0xf]
        %v1193 = vld [vmem:[%s33 + $0x1c] sm:$0xf]
        %v1194 = vld [vmem:[%s35] sm:$0x1]
        %v1195 = vld [vmem:[%s37] sm:$0x1]
        %v1196 = vld [vmem:[%s39] sm:$0x1]
        %v1197 = vld [vmem:[%s41] sm:$0x1]
        %v1198 = vld [vmem:[%s43] sm:$0x1]
        %v1199 = vld [vmem:[%s45] sm:$0x1]
        %v1200 = vld [vmem:[%s47] sm:$0x1]
        %v1201 = vld [vmem:[%s49] sm:$0x1]
        %v1202 = vld [vmem:[%s51] sm:$0xf]
        %v1203 = vld [vmem:[%s51 + $0x4] sm:$0xf]
        %v1204 = vld [vmem:[%s51 + $0x8] sm:$0xf]
        %v1205 = vld [vmem:[%s51 + $0xc] sm:$0xf]
        %v1206 = vld [vmem:[%s51 + $0x10] sm:$0xf]
        %v1207 = vld [vmem:[%s51 + $0x14] sm:$0xf]
        %v1208 = vld [vmem:[%s51 + $0x18] sm:$0xf]
        %v1209 = vld [vmem:[%s51 + $0x1c] sm:$0xf]
        %v1210 = vld [vmem:[%s53] sm:$0xf]
        %v1211 = vld [vmem:[%s53 + $0x4] sm:$0xf]
        %v1212 = vld [vmem:[%s53 + $0x8] sm:$0xf]
        %v1213 = vld [vmem:[%s53 + $0xc] sm:$0xf]
        %v1214 = vld [vmem:[%s53 + $0x10] sm:$0xf]
        %v1215 = vld [vmem:[%s53 + $0x14] sm:$0xf]
        %v1216 = vld [vmem:[%s53 + $0x18] sm:$0xf]
        %v1217 = vld [vmem:[%s53 + $0x1c] sm:$0xf]
        %v1218 = vld [vmem:[%s53 + $0x20] sm:$0xf]
        %v1219 = vld [vmem:[%s53 + $0x24] sm:$0xf]
        %v1220 = vld [vmem:[%s53 + $0x28] sm:$0xf]
        %v1221 = vld [vmem:[%s53 + $0x2c] sm:$0xf]
        %v1222 = vld [vmem:[%s53 + $0x30] sm:$0xf]
        %v1223 = vld [vmem:[%s53 + $0x34] sm:$0xf]
        %v1224 = vld [vmem:[%s53 + $0x38] sm:$0xf]
        %v1225 = vld [vmem:[%s53 + $0x3c] sm:$0xf]
        %v1226 = vld [vmem:[%s55] sm:$0x1]
        %v1227 = vld [vmem:[%s57] sm:$0x3]
        %v1228 = vld [vmem:[%s59] sm:$0x1]
        %v1229 = vld [vmem:[%s61] sm:$0x1]
        %v1230 = vld [vmem:[%s63] sm:$0xf]
        %v1231 = vld [vmem:[%s63 + $0x4] sm:$0xf]
        %v1232 = vld [vmem:[%s63 + $0x8] sm:$0xf]
        %v1233 = vld [vmem:[%s63 + $0xc] sm:$0xf]
        %v1234 = vld [vmem:[%s63 + $0x10] sm:$0xf]
        %v1235 = vld [vmem:[%s63 + $0x14] sm:$0xf]
        %v1236 = vld [vmem:[%s63 + $0x18] sm:$0xf]
        %v1237 = vld [vmem:[%s63 + $0x1c] sm:$0xf]
        %v1238 = vld [vmem:[%s65] sm:$0xff]
        %v1239 = vld [vmem:[%s65 + $0x8] sm:$0xff]
        %v1240 = vld [vmem:[%s65 + $0x10] sm:$0xff]
        %v1241 = vld [vmem:[%s65 + $0x18] sm:$0xff]
        %v1242 = vld [vmem:[%s65 + $0x20] sm:$0xff]
        %v1243 = vld [vmem:[%s65 + $0x28] sm:$0xff]
        %v1244 = vld [vmem:[%s65 + $0x30] sm:$0xff]
        %v1245 = vld [vmem:[%s65 + $0x38] sm:$0xff]
        %v1246 = vpack.c.bf16 %v1099, %v1099
        %v1248 = vlaneseq
        %v1249 = vshrl.u32 %v1248, 7
        %v1250 = vsub.s32 0, %v1249
        %v1251 = vrot.slane %v1227, %v1250
        %v1252 = vlaneseq
        %v1253 = vshrl.u32 %v1252, 7
        %v1254 = vsub.s32 1, %v1253
        %v1255 = vrot.slane %v1227, %v1254
        %v1266 = vunpack.c.l.b16 %v1238
        %v1267 = vunpack.c.h.b16 %v1238
        %v1268 = vunpack.c.l.b16 %v1239
        %v1269 = vunpack.c.h.b16 %v1239
        %v1270 = vunpack.c.l.b16 %v1240
        %v1271 = vunpack.c.h.b16 %v1240
        %v1272 = vunpack.c.l.b16 %v1241
        %v1273 = vunpack.c.h.b16 %v1241
        %v1274 = vunpack.c.l.b16 %v1242
        %v1275 = vunpack.c.h.b16 %v1242
        %v1276 = vunpack.c.l.b16 %v1243
        %v1277 = vunpack.c.h.b16 %v1243
        %v1278 = vunpack.c.l.b16 %v1244
        %v1279 = vunpack.c.h.b16 %v1244
        %v1280 = vunpack.c.l.b16 %v1245
        %v1281 = vunpack.c.h.b16 %v1245
        %v1282 = vpack.c.b16 %v1268, %v1266
        %v1283 = vpack.c.b16 %v1269, %v1267
        %v1284 = vpack.c.b16 %v1272, %v1270
        %v1285 = vpack.c.b16 %v1273, %v1271
        %v1286 = vpack.c.b16 %v1276, %v1274
        %v1287 = vpack.c.b16 %v1277, %v1275
        %v1288 = vpack.c.b16 %v1280, %v1278
        %v1289 = vpack.c.b16 %v1281, %v1279
        %vm1298 = vcmask 523264
        %v1300 = vsel %vm1298, %v1246, 0
        %1302 = vmatprep.subr.bf16.mxu0 %v1283
        %1303 = vmatpush1.bf16.msra.mxu0 %v1282
        %1304 = vmatprep.subr.bf16.mxu0 %v1285
        %1305 = vmatpush1.bf16.msra.mxu0 %v1284
        %1306 = vmatprep.subr.bf16.mxu0 %v1287
        %1307 = vmatpush1.bf16.msra.mxu0 %v1286
        %1308 = vmatprep.subr.bf16.mxu0 %v1289
        %1309 = vmatpush1.bf16.msra.mxu0 %v1288
        %1310 = vmatprep.subr.bf16.mxu0 0
        %1311 = vmatpush1.bf16.msra.mxu0 0
        %1312 = vmatprep.subr.bf16.mxu0 0
        %1313 = vmatpush1.bf16.msra.mxu0 0
        %1314 = vmatprep.subr.bf16.mxu0 0
        %1315 = vmatpush1.bf16.msra.mxu0 0
        %1316 = vmatprep.subr.bf16.mxu0 0
        %1317 = vmatpush1.bf16.msra.mxu0 0
        %1318 = vmatprep.subr.bf16.mxu0 0
        %1319 = vmatpush1.bf16.msra.mxu0 0
        %1320 = vmatprep.subr.bf16.mxu0 0
        %1321 = vmatpush1.bf16.msra.mxu0 0
        %1322 = vmatprep.subr.bf16.mxu0 0
        %1323 = vmatpush1.bf16.msra.mxu0 0
        %1324 = vmatprep.subr.bf16.mxu0 0
        %1325 = vmatpush1.bf16.msra.mxu0 0
        %1326 = vmatprep.subr.bf16.mxu0 0
        %1327 = vmatpush1.bf16.msra.mxu0 0
        %1328 = vmatprep.subr.bf16.mxu0 0
        %1329 = vmatpush1.bf16.msra.mxu0 0
        %1330 = vmatprep.subr.bf16.mxu0 0
        %1331 = vmatpush1.bf16.msra.mxu0 0
        %1332 = vmatprep.subr.bf16.mxu0 0
        %1333 = vmatpush1.bf16.msra.mxu0 0
        %1334 = vmatprep.mubr.bf16.mxu0 0
        %1335 = vmatmul.mubr.bf16.gmra.mrb[0].mxu0 %v1300
        %v1336 = vpop.f32.mrb[0].mxu0
        %v1337 = vadd.f32 %v1251, %v1336
        %v1338 = vpop.f32.mrb[0].mxu0
        %v1339 = vadd.f32 %v1255, %v1338
        %v1340 = vpop.f32.mrb[0].mxu0
        %v1341 = vpop.f32.mrb[0].mxu0
        %1342 = vdwg.mxu0
        %v1343 = vpack.c.bf16 %v1337, %v1337
        %v1344 = vpack.c.bf16 %v1339, %v1339
        %1346 = vrot.lane.b32.xlu0 %v1343, 64
        %v1347 = vpop.permute.xlu0 %1346
        %vm1348 = vcmask 130048
        %v1350 = vsel %vm1348, %v1343, 0
        %v1353 = vsel %vm1348, %v1347, 0
        %1355 = vmatprep.subr.bf16.mxu0 0
        %1356 = vmatpush1.bf16.xpose.msra.mxu0 %v1353
        %1357 = vmatprep.subr.bf16.mxu0 0
        %1358 = vmatpush1.bf16.xpose.msra.mxu0 0
        %1359 = vmatprep.subr.bf16.mxu0 0
        %1360 = vmatpush1.bf16.xpose.msra.mxu0 0
        %1361 = vmatprep.subr.bf16.mxu0 0
        %1362 = vmatpush1.bf16.xpose.msra.mxu0 0
        %1363 = vmatprep.subr.bf16.mxu0 0
        %1364 = vmatpush1.bf16.xpose.msra.mxu0 0
        %1365 = vmatprep.subr.bf16.mxu0 0
        %1366 = vmatpush1.bf16.xpose.msra.mxu0 0
        %1367 = vmatprep.subr.bf16.mxu0 0
        %1368 = vmatpush1.bf16.xpose.msra.mxu0 0
        %1369 = vmatprep.subr.bf16.mxu0 0
        %1370 = vmatpush1.bf16.xpose.msra.mxu0 0
        %1371 = vmatprep.subr.bf16.mxu0 0
        %1372 = vmatpush1.bf16.xpose.msra.mxu0 0
        %1373 = vmatprep.subr.bf16.mxu0 0
        %1374 = vmatpush1.bf16.xpose.msra.mxu0 0
        %1375 = vmatprep.subr.bf16.mxu0 0
        %1376 = vmatpush1.bf16.xpose.msra.mxu0 0
        %1377 = vmatprep.subr.bf16.mxu0 0
        %1378 = vmatpush1.bf16.xpose.msra.mxu0 0
        %1379 = vmatprep.subr.bf16.mxu0 0
        %1380 = vmatpush1.bf16.xpose.msra.mxu0 0
        %1381 = vmatprep.subr.bf16.mxu0 0
        %1382 = vmatpush1.bf16.xpose.msra.mxu0 0
        %1383 = vmatprep.subr.bf16.mxu0 0
        %1384 = vmatpush1.bf16.xpose.msra.mxu0 0
        %1385 = vmatprep.subr.bf16.mxu0 0
        %1386 = vmatpush1.bf16.xpose.msra.mxu0 0
        %1387 = vmatprep.mubr.bf16.mxu0 0
        %1388 = vmatmul.mubr.bf16.gmra.mrb[0].mxu0 %v1350
        %v1389 = vpop.f32.mrb[0].mxu0
        %v1390 = vadd.f32 0.0, %v1389
        %v1391 = vpop.f32.mrb[0].mxu0
        %v1392 = vpop.f32.mrb[0].mxu0
        %v1393 = vpop.f32.mrb[0].mxu0
        %1394 = vdwg.mxu0
        %v1395 = vmul.f32 %v1390, 0.25
        %v1396 = vadd.f32 %v1395, %v1126
        %vm1397 = vcmask 64512
        %v1398 = vsel %vm1397, %v1396, -inf
        %1399 = vmax.xlane.f32.xlu0 %v1398
        %v1400 = vpop.xlane.xlu0 %1399
        %v1401 = vsub.f32 %v1396, %v1400
        %v1402 = vmul.f32 %v1401, 1.442695
        %v1403 = vpow.pop %v1402
        %v1404 = vsel %vm1397, %v1403, 0.0
        %1405 = vadd.xlane.f32.xlu0 %v1404
        %v1406 = vpop.xlane.xlu0 %1405
        %v1407 = vrcp.pop %v1406
        %v1408 = vmul.f32 %v1403, %v1407
        %v1409 = vpack.c.bf16 %v1408, %v1408
        %v1411 = vsel %vm1397, %v1409, 0
        %vm1413 = vcmask 1043456
        %v1415 = vsel %vm1413, %v1344, 0
        %1417 = vmatprep.subr.bf16.mxu0 0
        %1418 = vmatpush1.bf16.msra.mxu0 %v1415
        %1419 = vmatprep.subr.bf16.mxu0 0
        %1420 = vmatpush1.bf16.msra.mxu0 0
        %1421 = vmatprep.subr.bf16.mxu0 0
        %1422 = vmatpush1.bf16.msra.mxu0 0
        %1423 = vmatprep.subr.bf16.mxu0 0
        %1424 = vmatpush1.bf16.msra.mxu0 0
        %1425 = vmatprep.subr.bf16.mxu0 0
        %1426 = vmatpush1.bf16.msra.mxu0 0
        %1427 = vmatprep.subr.bf16.mxu0 0
        %1428 = vmatpush1.bf16.msra.mxu0 0
        %1429 = vmatprep.subr.bf16.mxu0 0
        %1430 = vmatpush1.bf16.msra.mxu0 0
        %1431 = vmatprep.subr.bf16.mxu0 0
        %1432 = vmatpush1.bf16.msra.mxu0 0
        %1433 = vmatprep.subr.bf16.mxu0 0
        %1434 = vmatpush1.bf16.msra.mxu0 0
        %1435 = vmatprep.subr.bf16.mxu0 0
        %1436 = vmatpush1.bf16.msra.mxu0 0
        %1437 = vmatprep.subr.bf16.mxu0 0
        %1438 = vmatpush1.bf16.msra.mxu0 0
        %1439 = vmatprep.subr.bf16.mxu0 0
        %1440 = vmatpush1.bf16.msra.mxu0 0
        %1441 = vmatprep.subr.bf16.mxu0 0
        %1442 = vmatpush1.bf16.msra.mxu0 0
        %1443 = vmatprep.subr.bf16.mxu0 0
        %1444 = vmatpush1.bf16.msra.mxu0 0
        %1445 = vmatprep.subr.bf16.mxu0 0
        %1446 = vmatpush1.bf16.msra.mxu0 0
        %1447 = vmatprep.subr.bf16.mxu0 0
        %1448 = vmatpush1.bf16.msra.mxu0 0
        %1449 = vmatprep.mubr.bf16.mxu0 0
        %1450 = vmatmul.mubr.bf16.gmra.mrb[0].mxu0 %v1411
        %v1451 = vpop.f32.mrb[0].mxu0
        %v1452 = vadd.f32 0.0, %v1451
        %v1453 = vpop.f32.mrb[0].mxu0
        %v1454 = vpop.f32.mrb[0].mxu0
        %v1455 = vpop.f32.mrb[0].mxu0
        %1456 = vdwg.mxu0
        %1457 = vrot.lane.b32.xlu0 %v1343, 112
        %v1458 = vpop.permute.xlu0 %1457
        %1459 = vrot.lane.b32.xlu0 %v1343, 48
        %v1460 = vpop.permute.xlu0 %1459
        %v1462 = vsel %vm1348, %v1458, 0
        %v1465 = vsel %vm1348, %v1460, 0
        %1467 = vmatprep.subr.bf16.mxu0 0
        %1468 = vmatpush1.bf16.xpose.msra.mxu0 %v1465
        %1469 = vmatprep.subr.bf16.mxu0 0
        %1470 = vmatpush1.bf16.xpose.msra.mxu0 0
        %1471 = vmatprep.subr.bf16.mxu0 0
        %1472 = vmatpush1.bf16.xpose.msra.mxu0 0
        %1473 = vmatprep.subr.bf16.mxu0 0
        %1474 = vmatpush1.bf16.xpose.msra.mxu0 0
        %1475 = vmatprep.subr.bf16.mxu0 0
        %1476 = vmatpush1.bf16.xpose.msra.mxu0 0
        %1477 = vmatprep.subr.bf16.mxu0 0
        %1478 = vmatpush1.bf16.xpose.msra.mxu0 0
        %1479 = vmatprep.subr.bf16.mxu0 0
        %1480 = vmatpush1.bf16.xpose.msra.mxu0 0
        %1481 = vmatprep.subr.bf16.mxu0 0
        %1482 = vmatpush1.bf16.xpose.msra.mxu0 0
        %1483 = vmatprep.subr.bf16.mxu0 0
        %1484 = vmatpush1.bf16.xpose.msra.mxu0 0
        %1485 = vmatprep.subr.bf16.mxu0 0
        %1486 = vmatpush1.bf16.xpose.msra.mxu0 0
        %1487 = vmatprep.subr.bf16.mxu0 0
        %1488 = vmatpush1.bf16.xpose.msra.mxu0 0
        %1489 = vmatprep.subr.bf16.mxu0 0
        %1490 = vmatpush1.bf16.xpose.msra.mxu0 0
        %1491 = vmatprep.subr.bf16.mxu0 0
        %1492 = vmatpush1.bf16.xpose.msra.mxu0 0
        %1493 = vmatprep.subr.bf16.mxu0 0
        %1494 = vmatpush1.bf16.xpose.msra.mxu0 0
        %1495 = vmatprep.subr.bf16.mxu0 0
        %1496 = vmatpush1.bf16.xpose.msra.mxu0 0
        %1497 = vmatprep.subr.bf16.mxu0 0
        %1498 = vmatpush1.bf16.xpose.msra.mxu0 0
        %1499 = vmatprep.mubr.bf16.mxu0 0
        %1500 = vmatmul.mubr.bf16.gmra.mrb[0].mxu0 %v1462
        %v1501 = vpop.f32.mrb[0].mxu0
        %v1502 = vadd.f32 0.0, %v1501
        %v1503 = vpop.f32.mrb[0].mxu0
        %v1504 = vpop.f32.mrb[0].mxu0
        %v1505 = vpop.f32.mrb[0].mxu0
        %1506 = vdwg.mxu0
        %v1507 = vmul.f32 %v1502, 0.25
        %v1508 = vadd.f32 %v1507, %v1126
        %v1509 = vsel %vm1397, %v1508, -inf
        %1510 = vmax.xlane.f32.xlu0 %v1509
        %v1511 = vpop.xlane.xlu0 %1510
        %v1512 = vsub.f32 %v1508, %v1511
        %v1513 = vmul.f32 %v1512, 1.442695
        %v1514 = vpow.pop %v1513
        %v1515 = vsel %vm1397, %v1514, 0.0
        %1516 = vadd.xlane.f32.xlu0 %v1515
        %v1517 = vpop.xlane.xlu0 %1516
        %v1518 = vrcp.pop %v1517
        %v1519 = vmul.f32 %v1514, %v1518
        %v1520 = vpack.c.bf16 %v1519, %v1519
        %1522 = vrot.lane.b32.xlu0 %v1344, 112
        %v1523 = vpop.permute.xlu0 %1522
        %v1525 = vsel %vm1397, %v1520, 0
        %v1528 = vsel %vm1413, %v1523, 0
        %1530 = vmatprep.subr.bf16.mxu0 0
        %1531 = vmatpush1.bf16.msra.mxu0 %v1528
        %1532 = vmatprep.subr.bf16.mxu0 0
        %1533 = vmatpush1.bf16.msra.mxu0 0
        %1534 = vmatprep.subr.bf16.mxu0 0
        %1535 = vmatpush1.bf16.msra.mxu0 0
        %1536 = vmatprep.subr.bf16.mxu0 0
        %1537 = vmatpush1.bf16.msra.mxu0 0
        %1538 = vmatprep.subr.bf16.mxu0 0
        %1539 = vmatpush1.bf16.msra.mxu0 0
        %1540 = vmatprep.subr.bf16.mxu0 0
        %1541 = vmatpush1.bf16.msra.mxu0 0
        %1542 = vmatprep.subr.bf16.mxu0 0
        %1543 = vmatpush1.bf16.msra.mxu0 0
        %1544 = vmatprep.subr.bf16.mxu0 0
        %1545 = vmatpush1.bf16.msra.mxu0 0
        %1546 = vmatprep.subr.bf16.mxu0 0
        %1547 = vmatpush1.bf16.msra.mxu0 0
        %1548 = vmatprep.subr.bf16.mxu0 0
        %1549 = vmatpush1.bf16.msra.mxu0 0
        %1550 = vmatprep.subr.bf16.mxu0 0
        %1551 = vmatpush1.bf16.msra.mxu0 0
        %1552 = vmatprep.subr.bf16.mxu0 0
        %1553 = vmatpush1.bf16.msra.mxu0 0
        %1554 = vmatprep.subr.bf16.mxu0 0
        %1555 = vmatpush1.bf16.msra.mxu0 0
        %1556 = vmatprep.subr.bf16.mxu0 0
        %1557 = vmatpush1.bf16.msra.mxu0 0
        %1558 = vmatprep.subr.bf16.mxu0 0
        %1559 = vmatpush1.bf16.msra.mxu0 0
        %1560 = vmatprep.subr.bf16.mxu0 0
        %1561 = vmatpush1.bf16.msra.mxu0 0
        %1562 = vmatprep.mubr.bf16.mxu0 0
        %1563 = vmatmul.mubr.bf16.gmra.mrb[0].mxu0 %v1525
        %v1564 = vpop.f32.mrb[0].mxu0
        %v1565 = vadd.f32 0.0, %v1564
        %v1566 = vpop.f32.mrb[0].mxu0
        %v1567 = vpop.f32.mrb[0].mxu0
        %v1568 = vpop.f32.mrb[0].mxu0
        %1569 = vdwg.mxu0
        %1570 = vrot.lane.b32.xlu0 %v1343, 96
        %v1571 = vpop.permute.xlu0 %1570
        %1572 = vrot.lane.b32.xlu0 %v1343, 32
        %v1573 = vpop.permute.xlu0 %1572
        %v1575 = vsel %vm1348, %v1571, 0
        %v1578 = vsel %vm1348, %v1573, 0
        %1580 = vmatprep.subr.bf16.mxu0 0
        %1581 = vmatpush1.bf16.xpose.msra.mxu0 %v1578
        %1582 = vmatprep.subr.bf16.mxu0 0
        %1583 = vmatpush1.bf16.xpose.msra.mxu0 0
        %1584 = vmatprep.subr.bf16.mxu0 0
        %1585 = vmatpush1.bf16.xpose.msra.mxu0 0
        %1586 = vmatprep.subr.bf16.mxu0 0
        %1587 = vmatpush1.bf16.xpose.msra.mxu0 0
        %1588 = vmatprep.subr.bf16.mxu0 0
        %1589 = vmatpush1.bf16.xpose.msra.mxu0 0
        %1590 = vmatprep.subr.bf16.mxu0 0
        %1591 = vmatpush1.bf16.xpose.msra.mxu0 0
        %1592 = vmatprep.subr.bf16.mxu0 0
        %1593 = vmatpush1.bf16.xpose.msra.mxu0 0
        %1594 = vmatprep.subr.bf16.mxu0 0
        %1595 = vmatpush1.bf16.xpose.msra.mxu0 0
        %1596 = vmatprep.subr.bf16.mxu0 0
        %1597 = vmatpush1.bf16.xpose.msra.mxu0 0
        %1598 = vmatprep.subr.bf16.mxu0 0
        %1599 = vmatpush1.bf16.xpose.msra.mxu0 0
        %1600 = vmatprep.subr.bf16.mxu0 0
        %1601 = vmatpush1.bf16.xpose.msra.mxu0 0
        %1602 = vmatprep.subr.bf16.mxu0 0
        %1603 = vmatpush1.bf16.xpose.msra.mxu0 0
        %1604 = vmatprep.subr.bf16.mxu0 0
        %1605 = vmatpush1.bf16.xpose.msra.mxu0 0
        %1606 = vmatprep.subr.bf16.mxu0 0
        %1607 = vmatpush1.bf16.xpose.msra.mxu0 0
        %1608 = vmatprep.subr.bf16.mxu0 0
        %1609 = vmatpush1.bf16.xpose.msra.mxu0 0
        %1610 = vmatprep.subr.bf16.mxu0 0
        %1611 = vmatpush1.bf16.xpose.msra.mxu0 0
        %1612 = vmatprep.mubr.bf16.mxu0 0
        %1613 = vmatmul.mubr.bf16.gmra.mrb[0].mxu0 %v1575
        %v1614 = vpop.f32.mrb[0].mxu0
        %v1615 = vadd.f32 0.0, %v1614
        %v1616 = vpop.f32.mrb[0].mxu0
        %v1617 = vpop.f32.mrb[0].mxu0
        %v1618 = vpop.f32.mrb[0].mxu0
        %1619 = vdwg.mxu0
        %v1620 = vmul.f32 %v1615, 0.25
        %v1621 = vadd.f32 %v1620, %v1126
        %v1622 = vsel %vm1397, %v1621, -inf
        %1623 = vmax.xlane.f32.xlu0 %v1622
        %v1624 = vpop.xlane.xlu0 %1623
        %v1625 = vsub.f32 %v1621, %v1624
        %v1626 = vmul.f32 %v1625, 1.442695
        %v1627 = vpow.pop %v1626
        %v1628 = vsel %vm1397, %v1627, 0.0
        %1629 = vadd.xlane.f32.xlu0 %v1628
        %v1630 = vpop.xlane.xlu0 %1629
        %v1631 = vrcp.pop %v1630
        %v1632 = vmul.f32 %v1627, %v1631
        %v1633 = vpack.c.bf16 %v1632, %v1632
        %1634 = vrot.lane.b32.xlu0 %v1344, 96
        %v1635 = vpop.permute.xlu0 %1634
        %v1637 = vsel %vm1397, %v1633, 0
        %v1640 = vsel %vm1413, %v1635, 0
        %1642 = vmatprep.subr.bf16.mxu0 0
        %1643 = vmatpush1.bf16.msra.mxu0 %v1640
        %1644 = vmatprep.subr.bf16.mxu0 0
        %1645 = vmatpush1.bf16.msra.mxu0 0
        %1646 = vmatprep.subr.bf16.mxu0 0
        %1647 = vmatpush1.bf16.msra.mxu0 0
        %1648 = vmatprep.subr.bf16.mxu0 0
        %1649 = vmatpush1.bf16.msra.mxu0 0
        %1650 = vmatprep.subr.bf16.mxu0 0
        %1651 = vmatpush1.bf16.msra.mxu0 0
        %1652 = vmatprep.subr.bf16.mxu0 0
        %1653 = vmatpush1.bf16.msra.mxu0 0
        %1654 = vmatprep.subr.bf16.mxu0 0
        %1655 = vmatpush1.bf16.msra.mxu0 0
        %1656 = vmatprep.subr.bf16.mxu0 0
        %1657 = vmatpush1.bf16.msra.mxu0 0
        %1658 = vmatprep.subr.bf16.mxu0 0
        %1659 = vmatpush1.bf16.msra.mxu0 0
        %1660 = vmatprep.subr.bf16.mxu0 0
        %1661 = vmatpush1.bf16.msra.mxu0 0
        %1662 = vmatprep.subr.bf16.mxu0 0
        %1663 = vmatpush1.bf16.msra.mxu0 0
        %1664 = vmatprep.subr.bf16.mxu0 0
        %1665 = vmatpush1.bf16.msra.mxu0 0
        %1666 = vmatprep.subr.bf16.mxu0 0
        %1667 = vmatpush1.bf16.msra.mxu0 0
        %1668 = vmatprep.subr.bf16.mxu0 0
        %1669 = vmatpush1.bf16.msra.mxu0 0
        %1670 = vmatprep.subr.bf16.mxu0 0
        %1671 = vmatpush1.bf16.msra.mxu0 0
        %1672 = vmatprep.subr.bf16.mxu0 0
        %1673 = vmatpush1.bf16.msra.mxu0 0
        %1674 = vmatprep.mubr.bf16.mxu0 0
        %1675 = vmatmul.mubr.bf16.gmra.mrb[0].mxu0 %v1637
        %v1676 = vpop.f32.mrb[0].mxu0
        %v1677 = vadd.f32 0.0, %v1676
        %v1678 = vpop.f32.mrb[0].mxu0
        %v1679 = vpop.f32.mrb[0].mxu0
        %v1680 = vpop.f32.mrb[0].mxu0
        %1681 = vdwg.mxu0
        %1682 = vrot.lane.b32.xlu0 %v1343, 80
        %v1683 = vpop.permute.xlu0 %1682
        %1684 = vrot.lane.b32.xlu0 %v1343, 16
        %v1685 = vpop.permute.xlu0 %1684
        %v1687 = vsel %vm1348, %v1683, 0
        %v1690 = vsel %vm1348, %v1685, 0
        %1692 = vmatprep.subr.bf16.mxu0 0
        %1693 = vmatpush1.bf16.xpose.msra.mxu0 %v1690
        %1694 = vmatprep.subr.bf16.mxu0 0
        %1695 = vmatpush1.bf16.xpose.msra.mxu0 0
        %1696 = vmatprep.subr.bf16.mxu0 0
        %1697 = vmatpush1.bf16.xpose.msra.mxu0 0
        %1698 = vmatprep.subr.bf16.mxu0 0
        %1699 = vmatpush1.bf16.xpose.msra.mxu0 0
        %1700 = vmatprep.subr.bf16.mxu0 0
        %1701 = vmatpush1.bf16.xpose.msra.mxu0 0
        %1702 = vmatprep.subr.bf16.mxu0 0
        %1703 = vmatpush1.bf16.xpose.msra.mxu0 0
        %1704 = vmatprep.subr.bf16.mxu0 0
        %1705 = vmatpush1.bf16.xpose.msra.mxu0 0
        %1706 = vmatprep.subr.bf16.mxu0 0
        %1707 = vmatpush1.bf16.xpose.msra.mxu0 0
        %1708 = vmatprep.subr.bf16.mxu0 0
        %1709 = vmatpush1.bf16.xpose.msra.mxu0 0
        %1710 = vmatprep.subr.bf16.mxu0 0
        %1711 = vmatpush1.bf16.xpose.msra.mxu0 0
        %1712 = vmatprep.subr.bf16.mxu0 0
        %1713 = vmatpush1.bf16.xpose.msra.mxu0 0
        %1714 = vmatprep.subr.bf16.mxu0 0
        %1715 = vmatpush1.bf16.xpose.msra.mxu0 0
        %1716 = vmatprep.subr.bf16.mxu0 0
        %1717 = vmatpush1.bf16.xpose.msra.mxu0 0
        %1718 = vmatprep.subr.bf16.mxu0 0
        %1719 = vmatpush1.bf16.xpose.msra.mxu0 0
        %1720 = vmatprep.subr.bf16.mxu0 0
        %1721 = vmatpush1.bf16.xpose.msra.mxu0 0
        %1722 = vmatprep.subr.bf16.mxu0 0
        %1723 = vmatpush1.bf16.xpose.msra.mxu0 0
        %1724 = vmatprep.mubr.bf16.mxu0 0
        %1725 = vmatmul.mubr.bf16.gmra.mrb[0].mxu0 %v1687
        %v1726 = vpop.f32.mrb[0].mxu0
        %v1727 = vadd.f32 0.0, %v1726
        %v1728 = vpop.f32.mrb[0].mxu0
        %v1729 = vpop.f32.mrb[0].mxu0
        %v1730 = vpop.f32.mrb[0].mxu0
        %1731 = vdwg.mxu0
        %v1732 = vmul.f32 %v1727, 0.25
        %v1733 = vadd.f32 %v1732, %v1126
        %v1734 = vsel %vm1397, %v1733, -inf
        %1735 = vmax.xlane.f32.xlu0 %v1734
        %v1736 = vpop.xlane.xlu0 %1735
        %v1737 = vsub.f32 %v1733, %v1736
        %v1738 = vmul.f32 %v1737, 1.442695
        %v1739 = vpow.pop %v1738
        %v1740 = vsel %vm1397, %v1739, 0.0
        %1741 = vadd.xlane.f32.xlu0 %v1740
        %v1742 = vpop.xlane.xlu0 %1741
        %v1743 = vrcp.pop %v1742
        %v1744 = vmul.f32 %v1739, %v1743
        %v1745 = vpack.c.bf16 %v1744, %v1744
        %1746 = vrot.lane.b32.xlu0 %v1344, 80
        %v1747 = vpop.permute.xlu0 %1746
        %v1749 = vsel %vm1397, %v1745, 0
        %v1752 = vsel %vm1413, %v1747, 0
        %1754 = vmatprep.subr.bf16.mxu0 0
        %1755 = vmatpush1.bf16.msra.mxu0 %v1752
        %1756 = vmatprep.subr.bf16.mxu0 0
        %1757 = vmatpush1.bf16.msra.mxu0 0
        %1758 = vmatprep.subr.bf16.mxu0 0
        %1759 = vmatpush1.bf16.msra.mxu0 0
        %1760 = vmatprep.subr.bf16.mxu0 0
        %1761 = vmatpush1.bf16.msra.mxu0 0
        %1762 = vmatprep.subr.bf16.mxu0 0
        %1763 = vmatpush1.bf16.msra.mxu0 0
        %1764 = vmatprep.subr.bf16.mxu0 0
        %1765 = vmatpush1.bf16.msra.mxu0 0
        %1766 = vmatprep.subr.bf16.mxu0 0
        %1767 = vmatpush1.bf16.msra.mxu0 0
        %1768 = vmatprep.subr.bf16.mxu0 0
        %1769 = vmatpush1.bf16.msra.mxu0 0
        %1770 = vmatprep.subr.bf16.mxu0 0
        %1771 = vmatpush1.bf16.msra.mxu0 0
        %1772 = vmatprep.subr.bf16.mxu0 0
        %1773 = vmatpush1.bf16.msra.mxu0 0
        %1774 = vmatprep.subr.bf16.mxu0 0
        %1775 = vmatpush1.bf16.msra.mxu0 0
        %1776 = vmatprep.subr.bf16.mxu0 0
        %1777 = vmatpush1.bf16.msra.mxu0 0
        %1778 = vmatprep.subr.bf16.mxu0 0
        %1779 = vmatpush1.bf16.msra.mxu0 0
        %1780 = vmatprep.subr.bf16.mxu0 0
        %1781 = vmatpush1.bf16.msra.mxu0 0
        %1782 = vmatprep.subr.bf16.mxu0 0
        %1783 = vmatpush1.bf16.msra.mxu0 0
        %1784 = vmatprep.subr.bf16.mxu0 0
        %1785 = vmatpush1.bf16.msra.mxu0 0
        %1786 = vmatprep.mubr.bf16.mxu0 0
        %1787 = vmatmul.mubr.bf16.gmra.mrb[0].mxu0 %v1749
        %v1788 = vpop.f32.mrb[0].mxu0
        %v1789 = vadd.f32 0.0, %v1788
        %v1790 = vpop.f32.mrb[0].mxu0
        %v1791 = vpop.f32.mrb[0].mxu0
        %v1792 = vpop.f32.mrb[0].mxu0
        %1793 = vdwg.mxu0
        %1795 = vrot.lane.b32.xlu0 %v1565, 16
        %v1796 = vpop.permute.xlu0 %1795
        %1799 = vrot.lane.b32.xlu0 %v1677, 32
        %v1800 = vpop.permute.xlu0 %1799
        %1803 = vrot.lane.b32.xlu0 %v1789, 48
        %v1804 = vpop.permute.xlu0 %1803
        %v1806 = vsel %vm1348, %v1452, %v1796
        %vm1807 = vcmask 261120
        %v1808 = vsel %vm1807, %v1806, %v1800
        %vm1809 = vcmask 392192
        %v1810 = vsel %vm1809, %v1808, %v1804
        %v1811 = vpack.c.bf16 %v1810, %v1810
        %v1813 = vlaneseq
        %v1814 = vshrl.u32 %v1813, 7
        %v1815 = vsub.s32 0, %v1814
        %v1816 = vrot.slane %v1226, %v1815
        %v1826 = vunpack.c.l.b16 %v1230
        %v1827 = vunpack.c.l.b16 %v1231
        %v1828 = vunpack.c.l.b16 %v1232
        %v1829 = vunpack.c.l.b16 %v1233
        %v1830 = vunpack.c.l.b16 %v1234
        %v1831 = vunpack.c.l.b16 %v1235
        %v1832 = vunpack.c.l.b16 %v1236
        %v1833 = vunpack.c.l.b16 %v1237
        %v1834 = vpack.c.b16 %v1827, %v1826
        %v1835 = vpack.c.b16 %v1829, %v1828
        %v1836 = vpack.c.b16 %v1831, %v1830
        %v1837 = vpack.c.b16 %v1833, %v1832
        %v1843 = vsel %vm1298, %v1811, 0
        %1845 = vmatprep.subr.bf16.mxu0 0
        %1846 = vmatpush1.bf16.msra.mxu0 %v1834
        %1847 = vmatprep.subr.bf16.mxu0 0
        %1848 = vmatpush1.bf16.msra.mxu0 %v1835
        %1849 = vmatprep.subr.bf16.mxu0 0
        %1850 = vmatpush1.bf16.msra.mxu0 %v1836
        %1851 = vmatprep.subr.bf16.mxu0 0
        %1852 = vmatpush1.bf16.msra.mxu0 %v1837
        %1853 = vmatprep.subr.bf16.mxu0 0
        %1854 = vmatpush1.bf16.msra.mxu0 0
        %1855 = vmatprep.subr.bf16.mxu0 0
        %1856 = vmatpush1.bf16.msra.mxu0 0
        %1857 = vmatprep.subr.bf16.mxu0 0
        %1858 = vmatpush1.bf16.msra.mxu0 0
        %1859 = vmatprep.subr.bf16.mxu0 0
        %1860 = vmatpush1.bf16.msra.mxu0 0
        %1861 = vmatprep.subr.bf16.mxu0 0
        %1862 = vmatpush1.bf16.msra.mxu0 0
        %1863 = vmatprep.subr.bf16.mxu0 0
        %1864 = vmatpush1.bf16.msra.mxu0 0
        %1865 = vmatprep.subr.bf16.mxu0 0
        %1866 = vmatpush1.bf16.msra.mxu0 0
        %1867 = vmatprep.subr.bf16.mxu0 0
        %1868 = vmatpush1.bf16.msra.mxu0 0
        %1869 = vmatprep.subr.bf16.mxu0 0
        %1870 = vmatpush1.bf16.msra.mxu0 0
        %1871 = vmatprep.subr.bf16.mxu0 0
        %1872 = vmatpush1.bf16.msra.mxu0 0
        %1873 = vmatprep.subr.bf16.mxu0 0
        %1874 = vmatpush1.bf16.msra.mxu0 0
        %1875 = vmatprep.subr.bf16.mxu0 0
        %1876 = vmatpush1.bf16.msra.mxu0 0
        %1877 = vmatprep.mubr.bf16.mxu0 0
        %1878 = vmatmul.mubr.bf16.gmra.mrb[0].mxu0 %v1843
        %v1879 = vpop.f32.mrb[0].mxu0
        %v1880 = vadd.f32 %v1816, %v1879
        %v1881 = vpop.f32.mrb[0].mxu0
        %v1882 = vpop.f32.mrb[0].mxu0
        %v1883 = vpop.f32.mrb[0].mxu0
        %1884 = vdwg.mxu0
        %v1885 = vadd.f32 %v1099, %v1880
        %v1886 = vsel %vm1298, %v1885, 0.0
        %1887 = vadd.xlane.f32.xlu0 %v1886
        %v1888 = vpop.xlane.xlu0 %1887
        %v1889 = vrcp.pop 64.0
        %v1890 = vmul.f32 %v1888, %v1889
        %v1891 = vsub.f32 %v1885, %v1890
        %v1892 = vmul.f32 %v1891, %v1891
        %v1893 = vsel %vm1298, %v1892, 0.0
        %1894 = vadd.xlane.f32.xlu0 %v1893
        %v1895 = vpop.xlane.xlu0 %1894
        %v1896 = vmul.f32 %v1895, %v1889
        %v1897 = vadd.f32 %v1896, 1e-05
        %v1898 = vrsqrt.pop %v1897
        %v1899 = vmul.f32 %v1891, %v1898
        %v1901 = vlaneseq
        %v1902 = vshrl.u32 %v1901, 7
        %v1903 = vsub.s32 0, %v1902
        %v1904 = vrot.slane %v1229, %v1903
        %v1906 = vmul.f32 %v1899, %v1904
        %v1908 = vlaneseq
        %v1909 = vshrl.u32 %v1908, 7
        %v1910 = vsub.s32 0, %v1909
        %v1911 = vrot.slane %v1228, %v1910
        %v1913 = vadd.f32 %v1906, %v1911
        %v1914 = vadd.f32 %v1099, %v1913
        %v1915 = vsel %vm1298, %v1914, 0.0
        %1916 = vadd.xlane.f32.xlu0 %v1915
        %v1917 = vpop.xlane.xlu0 %1916
        %v1918 = vmul.f32 %v1917, %v1889
        %v1919 = vsub.f32 %v1914, %v1918
        %v1920 = vmul.f32 %v1919, %v1919
        %v1921 = vsel %vm1298, %v1920, 0.0
        %1922 = vadd.xlane.f32.xlu0 %v1921
        %v1923 = vpop.xlane.xlu0 %1922
        %v1924 = vmul.f32 %v1923, %v1889
        %v1925 = vadd.f32 %v1924, 1e-05
        %v1926 = vrsqrt.pop %v1925
        %v1927 = vmul.f32 %v1919, %v1926
        %v1929 = vlaneseq
        %v1930 = vshrl.u32 %v1929, 7
        %v1931 = vsub.s32 0, %v1930
        %v1932 = vrot.slane %v1195, %v1931
        %v1934 = vmul.f32 %v1927, %v1932
        %v1936 = vlaneseq
        %v1937 = vshrl.u32 %v1936, 7
        %v1938 = vsub.s32 0, %v1937
        %v1939 = vrot.slane %v1194, %v1938
        %v1941 = vadd.f32 %v1934, %v1939
        %1943 = vset.pattern.permute.xlu0 0
        %1944 = vperm.xlu0 %1943, %v1128
        %v1945 = vpop.permute.xlu0 %1944
        %v1947 = vmul.f32 %v1941, %v1945
        %v1948 = vpack.c.bf16 %v1947, %v1947
        %v1950 = vlaneseq
        %v1951 = vshrl.u32 %v1950, 7
        %v1952 = vsub.s32 0, %v1951
        %v1953 = vrot.slane %v1158, %v1952
        %v1963 = vunpack.c.l.b16 %v1178
        %v1964 = vunpack.c.l.b16 %v1179
        %v1965 = vunpack.c.l.b16 %v1180
        %v1966 = vunpack.c.l.b16 %v1181
        %v1967 = vunpack.c.l.b16 %v1182
        %v1968 = vunpack.c.l.b16 %v1183
        %v1969 = vunpack.c.l.b16 %v1184
        %v1970 = vunpack.c.l.b16 %v1185
        %v1971 = vpack.c.b16 %v1964, %v1963
        %v1972 = vpack.c.b16 %v1966, %v1965
        %v1973 = vpack.c.b16 %v1968, %v1967
        %v1974 = vpack.c.b16 %v1970, %v1969
        %v1980 = vsel %vm1298, %v1948, 0
        %1982 = vmatprep.subr.bf16.mxu0 0
        %1983 = vmatpush1.bf16.msra.mxu0 %v1971
        %1984 = vmatprep.subr.bf16.mxu0 0
        %1985 = vmatpush1.bf16.msra.mxu0 %v1972
        %1986 = vmatprep.subr.bf16.mxu0 0
        %1987 = vmatpush1.bf16.msra.mxu0 %v1973
        %1988 = vmatprep.subr.bf16.mxu0 0
        %1989 = vmatpush1.bf16.msra.mxu0 %v1974
        %1990 = vmatprep.subr.bf16.mxu0 0
        %1991 = vmatpush1.bf16.msra.mxu0 0
        %1992 = vmatprep.subr.bf16.mxu0 0
        %1993 = vmatpush1.bf16.msra.mxu0 0
        %1994 = vmatprep.subr.bf16.mxu0 0
        %1995 = vmatpush1.bf16.msra.mxu0 0
        %1996 = vmatprep.subr.bf16.mxu0 0
        %1997 = vmatpush1.bf16.msra.mxu0 0
        %1998 = vmatprep.subr.bf16.mxu0 0
        %1999 = vmatpush1.bf16.msra.mxu0 0
        %2000 = vmatprep.subr.bf16.mxu0 0
        %2001 = vmatpush1.bf16.msra.mxu0 0
        %2002 = vmatprep.subr.bf16.mxu0 0
        %2003 = vmatpush1.bf16.msra.mxu0 0
        %2004 = vmatprep.subr.bf16.mxu0 0
        %2005 = vmatpush1.bf16.msra.mxu0 0
        %2006 = vmatprep.subr.bf16.mxu0 0
        %2007 = vmatpush1.bf16.msra.mxu0 0
        %2008 = vmatprep.subr.bf16.mxu0 0
        %2009 = vmatpush1.bf16.msra.mxu0 0
        %2010 = vmatprep.subr.bf16.mxu0 0
        %2011 = vmatpush1.bf16.msra.mxu0 0
        %2012 = vmatprep.subr.bf16.mxu0 0
        %2013 = vmatpush1.bf16.msra.mxu0 0
        %2014 = vmatprep.mubr.bf16.mxu0 0
        %2015 = vmatmul.mubr.bf16.gmra.mrb[0].mxu0 %v1980
        %v2016 = vpop.f32.mrb[0].mxu0
        %v2017 = vadd.f32 %v1953, %v2016
        %v2018 = vpop.f32.mrb[0].mxu0
        %v2019 = vpop.f32.mrb[0].mxu0
        %v2020 = vpop.f32.mrb[0].mxu0
        %2021 = vdwg.mxu0
        %v2023 = vlaneseq
        %v2024 = vshrl.u32 %v2023, 7
        %v2025 = vsub.s32 0, %v2024
        %v2026 = vrot.slane %v1156, %v2025
        %v2036 = vunpack.c.l.b16 %v1162
        %v2037 = vunpack.c.l.b16 %v1163
        %v2038 = vunpack.c.l.b16 %v1164
        %v2039 = vunpack.c.l.b16 %v1165
        %v2040 = vunpack.c.l.b16 %v1166
        %v2041 = vunpack.c.l.b16 %v1167
        %v2042 = vunpack.c.l.b16 %v1168
        %v2043 = vunpack.c.l.b16 %v1169
        %v2044 = vpack.c.b16 %v2037, %v2036
        %v2045 = vpack.c.b16 %v2039, %v2038
        %v2046 = vpack.c.b16 %v2041, %v2040
        %v2047 = vpack.c.b16 %v2043, %v2042
        %v2053 = vsel %vm1298, %v1142, 0
        %v2056 = vsel %vm1298, %v1143, 0
        %v2059 = vsel %vm1298, %v1144, 0
        %v2062 = vsel %vm1298, %v1145, 0
        %v2065 = vsel %vm1298, %v1146, 0
        %v2068 = vsel %vm1298, %v1147, 0
        %v2071 = vsel %vm1298, %v1148, 0
        %2073 = vmatprep.subr.bf16.mxu0 0
        %2074 = vmatpush1.bf16.msra.mxu0 %v2044
        %2075 = vmatprep.subr.bf16.mxu0 0
        %2076 = vmatpush1.bf16.msra.mxu0 %v2045
        %2077 = vmatprep.subr.bf16.mxu0 0
        %2078 = vmatpush1.bf16.msra.mxu0 %v2046
        %2079 = vmatprep.subr.bf16.mxu0 0
        %2080 = vmatpush1.bf16.msra.mxu0 %v2047
        %2081 = vmatprep.subr.bf16.mxu0 0
        %2082 = vmatpush1.bf16.msra.mxu0 0
        %2083 = vmatprep.subr.bf16.mxu0 0
        %2084 = vmatpush1.bf16.msra.mxu0 0
        %2085 = vmatprep.subr.bf16.mxu0 0
        %2086 = vmatpush1.bf16.msra.mxu0 0
        %2087 = vmatprep.subr.bf16.mxu0 0
        %2088 = vmatpush1.bf16.msra.mxu0 0
        %2089 = vmatprep.subr.bf16.mxu0 0
        %2090 = vmatpush1.bf16.msra.mxu0 0
        %2091 = vmatprep.subr.bf16.mxu0 0
        %2092 = vmatpush1.bf16.msra.mxu0 0
        %2093 = vmatprep.subr.bf16.mxu0 0
        %2094 = vmatpush1.bf16.msra.mxu0 0
        %2095 = vmatprep.subr.bf16.mxu0 0
        %2096 = vmatpush1.bf16.msra.mxu0 0
        %2097 = vmatprep.subr.bf16.mxu0 0
        %2098 = vmatpush1.bf16.msra.mxu0 0
        %2099 = vmatprep.subr.bf16.mxu0 0
        %2100 = vmatpush1.bf16.msra.mxu0 0
        %2101 = vmatprep.subr.bf16.mxu0 0
        %2102 = vmatpush1.bf16.msra.mxu0 0
        %2103 = vmatprep.subr.bf16.mxu0 0
        %2104 = vmatpush1.bf16.msra.mxu0 0
        %2105 = vmatprep.mubr.bf16.mxu0 0
        %2106 = vmatmul.mubr.bf16.gmra.mrb[0].mxu0 %v2053
        %v2107 = vpop.f32.mrb[0].mxu0
        %v2108 = vadd.f32 %v2026, %v2107
        %v2109 = vpop.f32.mrb[0].mxu0
        %v2110 = vpop.f32.mrb[0].mxu0
        %v2111 = vadd.f32 %v2026, %v2110
        %v2112 = vpop.f32.mrb[0].mxu0
        %2113 = vmatprep.mubr.bf16.mxu0 0
        %2114 = vmatmul.mubr.bf16.gmra.mrb[0].mxu0 %v2056
        %v2115 = vpop.f32.mrb[0].mxu0
        %v2116 = vadd.f32 %v2026, %v2115
        %v2117 = vpop.f32.mrb[0].mxu0
        %v2118 = vpop.f32.mrb[0].mxu0
        %v2119 = vadd.f32 %v2026, %v2118
        %v2120 = vpop.f32.mrb[0].mxu0
        %2121 = vmatprep.mubr.bf16.mxu0 0
        %2122 = vmatmul.mubr.bf16.gmra.mrb[0].mxu0 %v2059
        %v2123 = vpop.f32.mrb[0].mxu0
        %v2124 = vadd.f32 %v2026, %v2123
        %v2125 = vpop.f32.mrb[0].mxu0
        %v2126 = vpop.f32.mrb[0].mxu0
        %v2127 = vadd.f32 %v2026, %v2126
        %v2128 = vpop.f32.mrb[0].mxu0
        %2129 = vmatprep.mubr.bf16.mxu0 0
        %2130 = vmatmul.mubr.bf16.gmra.mrb[0].mxu0 %v2062
        %v2131 = vpop.f32.mrb[0].mxu0
        %v2132 = vadd.f32 %v2026, %v2131
        %v2133 = vpop.f32.mrb[0].mxu0
        %v2134 = vpop.f32.mrb[0].mxu0
        %v2135 = vadd.f32 %v2026, %v2134
        %v2136 = vpop.f32.mrb[0].mxu0
        %2137 = vmatprep.mubr.bf16.mxu0 0
        %2138 = vmatmul.mubr.bf16.gmra.mrb[0].mxu0 %v2065
        %v2139 = vpop.f32.mrb[0].mxu0
        %v2140 = vadd.f32 %v2026, %v2139
        %v2141 = vpop.f32.mrb[0].mxu0
        %v2142 = vpop.f32.mrb[0].mxu0
        %v2143 = vadd.f32 %v2026, %v2142
        %v2144 = vpop.f32.mrb[0].mxu0
        %2145 = vmatprep.mubr.bf16.mxu0 0
        %2146 = vmatmul.mubr.bf16.gmra.mrb[0].mxu0 %v2068
        %v2147 = vpop.f32.mrb[0].mxu0
        %v2148 = vadd.f32 %v2026, %v2147
        %v2149 = vpop.f32.mrb[0].mxu0
        %v2150 = vpop.f32.mrb[0].mxu0
        %v2151 = vadd.f32 %v2026, %v2150
        %v2152 = vpop.f32.mrb[0].mxu0
        %2153 = vmatprep.mubr.bf16.mxu0 0
        %2154 = vmatmul.mubr.bf16.gmra.mrb[0].mxu0 %v2071
        %v2155 = vpop.f32.mrb[0].mxu0
        %v2156 = vadd.f32 %v2026, %v2155
        %v2157 = vpop.f32.mrb[0].mxu0
        %v2158 = vpop.f32.mrb[0].mxu0
        %v2159 = vpop.f32.mrb[0].mxu0
        %2160 = vdwg.mxu0
        %v2162 = vlaneseq
        %v2163 = vshrl.u32 %v2162, 7
        %v2164 = vsub.s32 0, %v2163
        %v2165 = vrot.slane %v1159, %v2164
        %v2175 = vunpack.c.l.b16 %v1186
        %v2176 = vunpack.c.l.b16 %v1187
        %v2177 = vunpack.c.l.b16 %v1188
        %v2178 = vunpack.c.l.b16 %v1189
        %v2179 = vunpack.c.l.b16 %v1190
        %v2180 = vunpack.c.l.b16 %v1191
        %v2181 = vunpack.c.l.b16 %v1192
        %v2182 = vunpack.c.l.b16 %v1193
        %v2183 = vpack.c.b16 %v2176, %v2175
        %v2184 = vpack.c.b16 %v2178, %v2177
        %v2185 = vpack.c.b16 %v2180, %v2179
        %v2186 = vpack.c.b16 %v2182, %v2181
        %v2192 = vsel %vm1298, %v1149, 0
        %v2195 = vsel %vm1298, %v1150, 0
        %v2198 = vsel %vm1298, %v1151, 0
        %v2201 = vsel %vm1298, %v1152, 0
        %v2204 = vsel %vm1298, %v1153, 0
        %v2207 = vsel %vm1298, %v1154, 0
        %v2210 = vsel %vm1298, %v1155, 0
        %2212 = vmatprep.subr.bf16.mxu0 0
        %2213 = vmatpush1.bf16.msra.mxu0 %v2183
        %2214 = vmatprep.subr.bf16.mxu0 0
        %2215 = vmatpush1.bf16.msra.mxu0 %v2184
        %2216 = vmatprep.subr.bf16.mxu0 0
        %2217 = vmatpush1.bf16.msra.mxu0 %v2185
        %2218 = vmatprep.subr.bf16.mxu0 0
        %2219 = vmatpush1.bf16.msra.mxu0 %v2186
        %2220 = vmatprep.subr.bf16.mxu0 0
        %2221 = vmatpush1.bf16.msra.mxu0 0
        %2222 = vmatprep.subr.bf16.mxu0 0
        %2223 = vmatpush1.bf16.msra.mxu0 0
        %2224 = vmatprep.subr.bf16.mxu0 0
        %2225 = vmatpush1.bf16.msra.mxu0 0
        %2226 = vmatprep.subr.bf16.mxu0 0
        %2227 = vmatpush1.bf16.msra.mxu0 0
        %2228 = vmatprep.subr.bf16.mxu0 0
        %2229 = vmatpush1.bf16.msra.mxu0 0
        %2230 = vmatprep.subr.bf16.mxu0 0
        %2231 = vmatpush1.bf16.msra.mxu0 0
        %2232 = vmatprep.subr.bf16.mxu0 0
        %2233 = vmatpush1.bf16.msra.mxu0 0
        %2234 = vmatprep.subr.bf16.mxu0 0
        %2235 = vmatpush1.bf16.msra.mxu0 0
        %2236 = vmatprep.subr.bf16.mxu0 0
        %2237 = vmatpush1.bf16.msra.mxu0 0
        %2238 = vmatprep.subr.bf16.mxu0 0
        %2239 = vmatpush1.bf16.msra.mxu0 0
        %2240 = vmatprep.subr.bf16.mxu0 0
        %2241 = vmatpush1.bf16.msra.mxu0 0
        %2242 = vmatprep.subr.bf16.mxu0 0
        %2243 = vmatpush1.bf16.msra.mxu0 0
        %2244 = vmatprep.mubr.bf16.mxu0 0
        %2245 = vmatmul.mubr.bf16.gmra.mrb[0].mxu0 %v2192
        %v2246 = vpop.f32.mrb[0].mxu0
        %v2247 = vadd.f32 %v2165, %v2246
        %v2248 = vpop.f32.mrb[0].mxu0
        %v2249 = vpop.f32.mrb[0].mxu0
        %v2250 = vadd.f32 %v2165, %v2249
        %v2251 = vpop.f32.mrb[0].mxu0
        %2252 = vmatprep.mubr.bf16.mxu0 0
        %2253 = vmatmul.mubr.bf16.gmra.mrb[0].mxu0 %v2195
        %v2254 = vpop.f32.mrb[0].mxu0
        %v2255 = vadd.f32 %v2165, %v2254
        %v2256 = vpop.f32.mrb[0].mxu0
        %v2257 = vpop.f32.mrb[0].mxu0
        %v2258 = vadd.f32 %v2165, %v2257
        %v2259 = vpop.f32.mrb[0].mxu0
        %2260 = vmatprep.mubr.bf16.mxu0 0
        %2261 = vmatmul.mubr.bf16.gmra.mrb[0].mxu0 %v2198
        %v2262 = vpop.f32.mrb[0].mxu0
        %v2263 = vadd.f32 %v2165, %v2262
        %v2264 = vpop.f32.mrb[0].mxu0
        %v2265 = vpop.f32.mrb[0].mxu0
        %v2266 = vadd.f32 %v2165, %v2265
        %v2267 = vpop.f32.mrb[0].mxu0
        %2268 = vmatprep.mubr.bf16.mxu0 0
        %2269 = vmatmul.mubr.bf16.gmra.mrb[0].mxu0 %v2201
        %v2270 = vpop.f32.mrb[0].mxu0
        %v2271 = vadd.f32 %v2165, %v2270
        %v2272 = vpop.f32.mrb[0].mxu0
        %v2273 = vpop.f32.mrb[0].mxu0
        %v2274 = vadd.f32 %v2165, %v2273
        %v2275 = vpop.f32.mrb[0].mxu0
        %2276 = vmatprep.mubr.bf16.mxu0 0
        %2277 = vmatmul.mubr.bf16.gmra.mrb[0].mxu0 %v2204
        %v2278 = vpop.f32.mrb[0].mxu0
        %v2279 = vadd.f32 %v2165, %v2278
        %v2280 = vpop.f32.mrb[0].mxu0
        %v2281 = vpop.f32.mrb[0].mxu0
        %v2282 = vadd.f32 %v2165, %v2281
        %v2283 = vpop.f32.mrb[0].mxu0
        %2284 = vmatprep.mubr.bf16.mxu0 0
        %2285 = vmatmul.mubr.bf16.gmra.mrb[0].mxu0 %v2207
        %v2286 = vpop.f32.mrb[0].mxu0
        %v2287 = vadd.f32 %v2165, %v2286
        %v2288 = vpop.f32.mrb[0].mxu0
        %v2289 = vpop.f32.mrb[0].mxu0
        %v2290 = vadd.f32 %v2165, %v2289
        %v2291 = vpop.f32.mrb[0].mxu0
        %2292 = vmatprep.mubr.bf16.mxu0 0
        %2293 = vmatmul.mubr.bf16.gmra.mrb[0].mxu0 %v2210
        %v2294 = vpop.f32.mrb[0].mxu0
        %v2295 = vadd.f32 %v2165, %v2294
        %v2296 = vpop.f32.mrb[0].mxu0
        %v2297 = vpop.f32.mrb[0].mxu0
        %v2298 = vpop.f32.mrb[0].mxu0
        %2299 = vdwg.mxu0
        %v2300 = vpack.c.bf16 %v2017, %v2017
        %v2301 = vpack.c.bf16 %v2111, %v2108
        %v2302 = vpack.c.bf16 %v2119, %v2116
        %v2303 = vpack.c.bf16 %v2127, %v2124
        %v2304 = vpack.c.bf16 %v2135, %v2132
        %v2305 = vpack.c.bf16 %v2143, %v2140
        %v2306 = vpack.c.bf16 %v2151, %v2148
        %v2307 = vpack.c.bf16 %v2156, %v2156
        %v2308 = vpack.c.bf16 %v2250, %v2247
        %v2309 = vpack.c.bf16 %v2258, %v2255
        %v2310 = vpack.c.bf16 %v2266, %v2263
        %v2311 = vpack.c.bf16 %v2274, %v2271
        %v2312 = vpack.c.bf16 %v2282, %v2279
        %v2313 = vpack.c.bf16 %v2290, %v2287
        %v2314 = vpack.c.bf16 %v2295, %v2295
        %v2316 = vsel %vm1348, %v2300, 0
        %v2319 = vsel %vm1348, %v2301, 0
        %v2322 = vsel %vm1348, %v2302, 0
        %v2325 = vsel %vm1348, %v2303, 0
        %v2328 = vsel %vm1348, %v2304, 0
        %v2331 = vsel %vm1348, %v2305, 0
        %v2334 = vsel %vm1348, %v2306, 0
        %v2337 = vsel %vm1348, %v2307, 0
        %2339 = vmatprep.subr.bf16.mxu0 0
        %2340 = vmatpush1.bf16.xpose.msra.mxu0 %v2319
        %2341 = vmatprep.subr.bf16.mxu0 0
        %2342 = vmatpush1.bf16.xpose.msra.mxu0 %v2322
        %2343 = vmatprep.subr.bf16.mxu0 0
        %2344 = vmatpush1.bf16.xpose.msra.mxu0 %v2325
        %2345 = vmatprep.subr.bf16.mxu0 0
        %2346 = vmatpush1.bf16.xpose.msra.mxu0 %v2328
        %2347 = vmatprep.subr.bf16.mxu0 0
        %2348 = vmatpush1.bf16.xpose.msra.mxu0 %v2331
        %2349 = vmatprep.subr.bf16.mxu0 0
        %2350 = vmatpush1.bf16.xpose.msra.mxu0 %v2334
        %2351 = vmatprep.subr.bf16.mxu0 0
        %2352 = vmatpush1.bf16.xpose.msra.mxu0 %v2337
        %2353 = vmatprep.subr.bf16.mxu0 0
        %2354 = vmatpush1.bf16.xpose.msra.mxu0 0
        %2355 = vmatprep.subr.bf16.mxu0 0
        %2356 = vmatpush1.bf16.xpose.msra.mxu0 0
        %2357 = vmatprep.subr.bf16.mxu0 0
        %2358 = vmatpush1.bf16.xpose.msra.mxu0 0
        %2359 = vmatprep.subr.bf16.mxu0 0
        %2360 = vmatpush1.bf16.xpose.msra.mxu0 0
        %2361 = vmatprep.subr.bf16.mxu0 0
        %2362 = vmatpush1.bf16.xpose.msra.mxu0 0
        %2363 = vmatprep.subr.bf16.mxu0 0
        %2364 = vmatpush1.bf16.xpose.msra.mxu0 0
        %2365 = vmatprep.subr.bf16.mxu0 0
        %2366 = vmatpush1.bf16.xpose.msra.mxu0 0
        %2367 = vmatprep.subr.bf16.mxu0 0
        %2368 = vmatpush1.bf16.xpose.msra.mxu0 0
        %2369 = vmatprep.subr.bf16.mxu0 0
        %2370 = vmatpush1.bf16.xpose.msra.mxu0 0
        %2371 = vmatprep.mubr.bf16.mxu0 0
        %2372 = vmatmul.mubr.bf16.gmra.mrb[0].mxu0 %v2316
        %v2373 = vpop.f32.mrb[0].mxu0
        %v2374 = vadd.f32 0.0, %v2373
        %v2375 = vpop.f32.mrb[0].mxu0
        %v2376 = vpop.f32.mrb[0].mxu0
        %v2377 = vpop.f32.mrb[0].mxu0
        %2378 = vdwg.mxu0
        %v2379 = vmul.f32 %v2374, 0.25
        %v2381 = vlaneseq
        %v2382 = vshrl.u32 %v2381, 7
        %v2383 = vsub.s32 0, %v2382
        %v2384 = vrot.slane %v1127, %v2383
        %v2386 = vadd.f32 %v2379, %v2384
        %vm2387 = vcmask 809984
        %v2388 = vsel %vm2387, %v2386, -inf
        %2389 = vmax.xlane.f32.xlu0 %v2388
        %v2390 = vpop.xlane.xlu0 %2389
        %v2391 = vsub.f32 %v2386, %v2390
        %v2392 = vmul.f32 %v2391, 1.442695
        %v2393 = vpow.pop %v2392
        %v2394 = vsel %vm2387, %v2393, 0.0
        %2395 = vadd.xlane.f32.xlu0 %v2394
        %v2396 = vpop.xlane.xlu0 %2395
        %v2397 = vrcp.pop %v2396
        %v2398 = vmul.f32 %v2393, %v2397
        %v2399 = vpack.c.bf16 %v2398, %v2398
        %v2401 = vsel %vm2387, %v2399, 0
        %vm2403 = vcmask 1040384
        %vm2404 = vcmask 1041408
        %v2405 = vsel %vm2403, 4294967295, 65535
        %v2406 = vsel %vm2404, %v2405, 0
        %v2408 = vand.u32 %v2314, %v2406
        %2410 = vmatprep.subr.bf16.mxu0 0
        %2411 = vmatpush1.bf16.msra.mxu0 %v2308
        %2412 = vmatprep.subr.bf16.mxu0 0
        %2413 = vmatpush1.bf16.msra.mxu0 %v2309
        %2414 = vmatprep.subr.bf16.mxu0 0
        %2415 = vmatpush1.bf16.msra.mxu0 %v2310
        %2416 = vmatprep.subr.bf16.mxu0 0
        %2417 = vmatpush1.bf16.msra.mxu0 %v2311
        %2418 = vmatprep.subr.bf16.mxu0 0
        %2419 = vmatpush1.bf16.msra.mxu0 %v2312
        %2420 = vmatprep.subr.bf16.mxu0 0
        %2421 = vmatpush1.bf16.msra.mxu0 %v2313
        %2422 = vmatprep.subr.bf16.mxu0 0
        %2423 = vmatpush1.bf16.msra.mxu0 %v2408
        %2424 = vmatprep.subr.bf16.mxu0 0
        %2425 = vmatpush1.bf16.msra.mxu0 0
        %2426 = vmatprep.subr.bf16.mxu0 0
        %2427 = vmatpush1.bf16.msra.mxu0 0
        %2428 = vmatprep.subr.bf16.mxu0 0
        %2429 = vmatpush1.bf16.msra.mxu0 0
        %2430 = vmatprep.subr.bf16.mxu0 0
        %2431 = vmatpush1.bf16.msra.mxu0 0
        %2432 = vmatprep.subr.bf16.mxu0 0
        %2433 = vmatpush1.bf16.msra.mxu0 0
        %2434 = vmatprep.subr.bf16.mxu0 0
        %2435 = vmatpush1.bf16.msra.mxu0 0
        %2436 = vmatprep.subr.bf16.mxu0 0
        %2437 = vmatpush1.bf16.msra.mxu0 0
        %2438 = vmatprep.subr.bf16.mxu0 0
        %2439 = vmatpush1.bf16.msra.mxu0 0
        %2440 = vmatprep.subr.bf16.mxu0 0
        %2441 = vmatpush1.bf16.msra.mxu0 0
        %2442 = vmatprep.mubr.bf16.mxu0 0
        %2443 = vmatmul.mubr.bf16.gmra.mrb[0].mxu0 %v2401
        %v2444 = vpop.f32.mrb[0].mxu0
        %v2445 = vadd.f32 0.0, %v2444
        %v2446 = vpop.f32.mrb[0].mxu0
        %v2447 = vpop.f32.mrb[0].mxu0
        %v2448 = vpop.f32.mrb[0].mxu0
        %2449 = vdwg.mxu0
        %2451 = vrot.lane.b32.xlu0 %v2300, 112
        %v2452 = vpop.permute.xlu0 %2451
        %2460 = vrot.lane.b32.xlu0 %v2301, 112
        %v2461 = vpop.permute.xlu0 %2460
        %2462 = vrot.lane.b32.xlu0 %v2302, 112
        %v2463 = vpop.permute.xlu0 %2462
        %2464 = vrot.lane.b32.xlu0 %v2303, 112
        %v2465 = vpop.permute.xlu0 %2464
        %2466 = vrot.lane.b32.xlu0 %v2304, 112
        %v2467 = vpop.permute.xlu0 %2466
        %2468 = vrot.lane.b32.xlu0 %v2305, 112
        %v2469 = vpop.permute.xlu0 %2468
        %2470 = vrot.lane.b32.xlu0 %v2306, 112
        %v2471 = vpop.permute.xlu0 %2470
        %2472 = vrot.lane.b32.xlu0 %v2307, 112
        %v2473 = vpop.permute.xlu0 %2472
        %v2475 = vsel %vm1348, %v2452, 0
        %v2478 = vsel %vm1348, %v2461, 0
        %v2481 = vsel %vm1348, %v2463, 0
        %v2484 = vsel %vm1348, %v2465, 0
        %v2487 = vsel %vm1348, %v2467, 0
        %v2490 = vsel %vm1348, %v2469, 0
        %v2493 = vsel %vm1348, %v2471, 0
        %v2496 = vsel %vm1348, %v2473, 0
        %2498 = vmatprep.subr.bf16.mxu0 0
        %2499 = vmatpush1.bf16.xpose.msra.mxu0 %v2478
        %2500 = vmatprep.subr.bf16.mxu0 0
        %2501 = vmatpush1.bf16.xpose.msra.mxu0 %v2481
        %2502 = vmatprep.subr.bf16.mxu0 0
        %2503 = vmatpush1.bf16.xpose.msra.mxu0 %v2484
        %2504 = vmatprep.subr.bf16.mxu0 0
        %2505 = vmatpush1.bf16.xpose.msra.mxu0 %v2487
        %2506 = vmatprep.subr.bf16.mxu0 0
        %2507 = vmatpush1.bf16.xpose.msra.mxu0 %v2490
        %2508 = vmatprep.subr.bf16.mxu0 0
        %2509 = vmatpush1.bf16.xpose.msra.mxu0 %v2493
        %2510 = vmatprep.subr.bf16.mxu0 0
        %2511 = vmatpush1.bf16.xpose.msra.mxu0 %v2496
        %2512 = vmatprep.subr.bf16.mxu0 0
        %2513 = vmatpush1.bf16.xpose.msra.mxu0 0
        %2514 = vmatprep.subr.bf16.mxu0 0
        %2515 = vmatpush1.bf16.xpose.msra.mxu0 0
        %2516 = vmatprep.subr.bf16.mxu0 0
        %2517 = vmatpush1.bf16.xpose.msra.mxu0 0
        %2518 = vmatprep.subr.bf16.mxu0 0
        %2519 = vmatpush1.bf16.xpose.msra.mxu0 0
        %2520 = vmatprep.subr.bf16.mxu0 0
        %2521 = vmatpush1.bf16.xpose.msra.mxu0 0
        %2522 = vmatprep.subr.bf16.mxu0 0
        %2523 = vmatpush1.bf16.xpose.msra.mxu0 0
        %2524 = vmatprep.subr.bf16.mxu0 0
        %2525 = vmatpush1.bf16.xpose.msra.mxu0 0
        %2526 = vmatprep.subr.bf16.mxu0 0
        %2527 = vmatpush1.bf16.xpose.msra.mxu0 0
        %2528 = vmatprep.subr.bf16.mxu0 0
        %2529 = vmatpush1.bf16.xpose.msra.mxu0 0
        %2530 = vmatprep.mubr.bf16.mxu0 0
        %2531 = vmatmul.mubr.bf16.gmra.mrb[0].mxu0 %v2475
        %v2532 = vpop.f32.mrb[0].mxu0
        %v2533 = vadd.f32 0.0, %v2532
        %v2534 = vpop.f32.mrb[0].mxu0
        %v2535 = vpop.f32.mrb[0].mxu0
        %v2536 = vpop.f32.mrb[0].mxu0
        %2537 = vdwg.mxu0
        %v2538 = vmul.f32 %v2533, 0.25
        %v2539 = vadd.f32 %v2538, %v2384
        %v2540 = vsel %vm2387, %v2539, -inf
        %2541 = vmax.xlane.f32.xlu0 %v2540
        %v2542 = vpop.xlane.xlu0 %2541
        %v2543 = vsub.f32 %v2539, %v2542
        %v2544 = vmul.f32 %v2543, 1.442695
        %v2545 = vpow.pop %v2544
        %v2546 = vsel %vm2387, %v2545, 0.0
        %2547 = vadd.xlane.f32.xlu0 %v2546
        %v2548 = vpop.xlane.xlu0 %2547
        %v2549 = vrcp.pop %v2548
        %v2550 = vmul.f32 %v2545, %v2549
        %v2551 = vpack.c.bf16 %v2550, %v2550
        %2559 = vrot.lane.b32.xlu0 %v2308, 112
        %v2560 = vpop.permute.xlu0 %2559
        %2561 = vrot.lane.b32.xlu0 %v2309, 112
        %v2562 = vpop.permute.xlu0 %2561
        %2563 = vrot.lane.b32.xlu0 %v2310, 112
        %v2564 = vpop.permute.xlu0 %2563
        %2565 = vrot.lane.b32.xlu0 %v2311, 112
        %v2566 = vpop.permute.xlu0 %2565
        %2567 = vrot.lane.b32.xlu0 %v2312, 112
        %v2568 = vpop.permute.xlu0 %2567
        %2569 = vrot.lane.b32.xlu0 %v2313, 112
        %v2570 = vpop.permute.xlu0 %2569
        %2571 = vrot.lane.b32.xlu0 %v2314, 112
        %v2572 = vpop.permute.xlu0 %2571
        %v2580 = vsel %vm2387, %v2551, 0
        %v2583 = vand.u32 %v2572, %v2406
        %2585 = vmatprep.subr.bf16.mxu0 0
        %2586 = vmatpush1.bf16.msra.mxu0 %v2560
        %2587 = vmatprep.subr.bf16.mxu0 0
        %2588 = vmatpush1.bf16.msra.mxu0 %v2562
        %2589 = vmatprep.subr.bf16.mxu0 0
        %2590 = vmatpush1.bf16.msra.mxu0 %v2564
        %2591 = vmatprep.subr.bf16.mxu0 0
        %2592 = vmatpush1.bf16.msra.mxu0 %v2566
        %2593 = vmatprep.subr.bf16.mxu0 0
        %2594 = vmatpush1.bf16.msra.mxu0 %v2568
        %2595 = vmatprep.subr.bf16.mxu0 0
        %2596 = vmatpush1.bf16.msra.mxu0 %v2570
        %2597 = vmatprep.subr.bf16.mxu0 0
        %2598 = vmatpush1.bf16.msra.mxu0 %v2583
        %2599 = vmatprep.subr.bf16.mxu0 0
        %2600 = vmatpush1.bf16.msra.mxu0 0
        %2601 = vmatprep.subr.bf16.mxu0 0
        %2602 = vmatpush1.bf16.msra.mxu0 0
        %2603 = vmatprep.subr.bf16.mxu0 0
        %2604 = vmatpush1.bf16.msra.mxu0 0
        %2605 = vmatprep.subr.bf16.mxu0 0
        %2606 = vmatpush1.bf16.msra.mxu0 0
        %2607 = vmatprep.subr.bf16.mxu0 0
        %2608 = vmatpush1.bf16.msra.mxu0 0
        %2609 = vmatprep.subr.bf16.mxu0 0
        %2610 = vmatpush1.bf16.msra.mxu0 0
        %2611 = vmatprep.subr.bf16.mxu0 0
        %2612 = vmatpush1.bf16.msra.mxu0 0
        %2613 = vmatprep.subr.bf16.mxu0 0
        %2614 = vmatpush1.bf16.msra.mxu0 0
        %2615 = vmatprep.subr.bf16.mxu0 0
        %2616 = vmatpush1.bf16.msra.mxu0 0
        %2617 = vmatprep.mubr.bf16.mxu0 0
        %2618 = vmatmul.mubr.bf16.gmra.mrb[0].mxu0 %v2580
        %v2619 = vpop.f32.mrb[0].mxu0
        %v2620 = vadd.f32 0.0, %v2619
        %v2621 = vpop.f32.mrb[0].mxu0
        %v2622 = vpop.f32.mrb[0].mxu0
        %v2623 = vpop.f32.mrb[0].mxu0
        %2624 = vdwg.mxu0
        %2625 = vrot.lane.b32.xlu0 %v2300, 96
        %v2626 = vpop.permute.xlu0 %2625
        %2627 = vrot.lane.b32.xlu0 %v2301, 96
        %v2628 = vpop.permute.xlu0 %2627
        %2629 = vrot.lane.b32.xlu0 %v2302, 96
        %v2630 = vpop.permute.xlu0 %2629
        %2631 = vrot.lane.b32.xlu0 %v2303, 96
        %v2632 = vpop.permute.xlu0 %2631
        %2633 = vrot.lane.b32.xlu0 %v2304, 96
        %v2634 = vpop.permute.xlu0 %2633
        %2635 = vrot.lane.b32.xlu0 %v2305, 96
        %v2636 = vpop.permute.xlu0 %2635
        %2637 = vrot.lane.b32.xlu0 %v2306, 96
        %v2638 = vpop.permute.xlu0 %2637
        %2639 = vrot.lane.b32.xlu0 %v2307, 96
        %v2640 = vpop.permute.xlu0 %2639
        %v2642 = vsel %vm1348, %v2626, 0
        %v2645 = vsel %vm1348, %v2628, 0
        %v2648 = vsel %vm1348, %v2630, 0
        %v2651 = vsel %vm1348, %v2632, 0
        %v2654 = vsel %vm1348, %v2634, 0
        %v2657 = vsel %vm1348, %v2636, 0
        %v2660 = vsel %vm1348, %v2638, 0
        %v2663 = vsel %vm1348, %v2640, 0
        %2665 = vmatprep.subr.bf16.mxu0 0
        %2666 = vmatpush1.bf16.xpose.msra.mxu0 %v2645
        %2667 = vmatprep.subr.bf16.mxu0 0
        %2668 = vmatpush1.bf16.xpose.msra.mxu0 %v2648
        %2669 = vmatprep.subr.bf16.mxu0 0
        %2670 = vmatpush1.bf16.xpose.msra.mxu0 %v2651
        %2671 = vmatprep.subr.bf16.mxu0 0
        %2672 = vmatpush1.bf16.xpose.msra.mxu0 %v2654
        %2673 = vmatprep.subr.bf16.mxu0 0
        %2674 = vmatpush1.bf16.xpose.msra.mxu0 %v2657
        %2675 = vmatprep.subr.bf16.mxu0 0
        %2676 = vmatpush1.bf16.xpose.msra.mxu0 %v2660
        %2677 = vmatprep.subr.bf16.mxu0 0
        %2678 = vmatpush1.bf16.xpose.msra.mxu0 %v2663
        %2679 = vmatprep.subr.bf16.mxu0 0
        %2680 = vmatpush1.bf16.xpose.msra.mxu0 0
        %2681 = vmatprep.subr.bf16.mxu0 0
        %2682 = vmatpush1.bf16.xpose.msra.mxu0 0
        %2683 = vmatprep.subr.bf16.mxu0 0
        %2684 = vmatpush1.bf16.xpose.msra.mxu0 0
        %2685 = vmatprep.subr.bf16.mxu0 0
        %2686 = vmatpush1.bf16.xpose.msra.mxu0 0
        %2687 = vmatprep.subr.bf16.mxu0 0
        %2688 = vmatpush1.bf16.xpose.msra.mxu0 0
        %2689 = vmatprep.subr.bf16.mxu0 0
        %2690 = vmatpush1.bf16.xpose.msra.mxu0 0
        %2691 = vmatprep.subr.bf16.mxu0 0
        %2692 = vmatpush1.bf16.xpose.msra.mxu0 0
        %2693 = vmatprep.subr.bf16.mxu0 0
        %2694 = vmatpush1.bf16.xpose.msra.mxu0 0
        %2695 = vmatprep.subr.bf16.mxu0 0
        %2696 = vmatpush1.bf16.xpose.msra.mxu0 0
        %2697 = vmatprep.mubr.bf16.mxu0 0
        %2698 = vmatmul.mubr.bf16.gmra.mrb[0].mxu0 %v2642
        %v2699 = vpop.f32.mrb[0].mxu0
        %v2700 = vadd.f32 0.0, %v2699
        %v2701 = vpop.f32.mrb[0].mxu0
        %v2702 = vpop.f32.mrb[0].mxu0
        %v2703 = vpop.f32.mrb[0].mxu0
        %2704 = vdwg.mxu0
        %v2705 = vmul.f32 %v2700, 0.25
        %v2706 = vadd.f32 %v2705, %v2384
        %v2707 = vsel %vm2387, %v2706, -inf
        %2708 = vmax.xlane.f32.xlu0 %v2707
        %v2709 = vpop.xlane.xlu0 %2708
        %v2710 = vsub.f32 %v2706, %v2709
        %v2711 = vmul.f32 %v2710, 1.442695
        %v2712 = vpow.pop %v2711
        %v2713 = vsel %vm2387, %v2712, 0.0
        %2714 = vadd.xlane.f32.xlu0 %v2713
        %v2715 = vpop.xlane.xlu0 %2714
        %v2716 = vrcp.pop %v2715
        %v2717 = vmul.f32 %v2712, %v2716
        %v2718 = vpack.c.bf16 %v2717, %v2717
        %2719 = vrot.lane.b32.xlu0 %v2308, 96
        %v2720 = vpop.permute.xlu0 %2719
        %2721 = vrot.lane.b32.xlu0 %v2309, 96
        %v2722 = vpop.permute.xlu0 %2721
        %2723 = vrot.lane.b32.xlu0 %v2310, 96
        %v2724 = vpop.permute.xlu0 %2723
        %2725 = vrot.lane.b32.xlu0 %v2311, 96
        %v2726 = vpop.permute.xlu0 %2725
        %2727 = vrot.lane.b32.xlu0 %v2312, 96
        %v2728 = vpop.permute.xlu0 %2727
        %2729 = vrot.lane.b32.xlu0 %v2313, 96
        %v2730 = vpop.permute.xlu0 %2729
        %2731 = vrot.lane.b32.xlu0 %v2314, 96
        %v2732 = vpop.permute.xlu0 %2731
        %v2740 = vsel %vm2387, %v2718, 0
        %v2743 = vand.u32 %v2732, %v2406
        %2745 = vmatprep.subr.bf16.mxu0 0
        %2746 = vmatpush1.bf16.msra.mxu0 %v2720
        %2747 = vmatprep.subr.bf16.mxu0 0
        %2748 = vmatpush1.bf16.msra.mxu0 %v2722
        %2749 = vmatprep.subr.bf16.mxu0 0
        %2750 = vmatpush1.bf16.msra.mxu0 %v2724
        %2751 = vmatprep.subr.bf16.mxu0 0
        %2752 = vmatpush1.bf16.msra.mxu0 %v2726
        %2753 = vmatprep.subr.bf16.mxu0 0
        %2754 = vmatpush1.bf16.msra.mxu0 %v2728
        %2755 = vmatprep.subr.bf16.mxu0 0
        %2756 = vmatpush1.bf16.msra.mxu0 %v2730
        %2757 = vmatprep.subr.bf16.mxu0 0
        %2758 = vmatpush1.bf16.msra.mxu0 %v2743
        %2759 = vmatprep.subr.bf16.mxu0 0
        %2760 = vmatpush1.bf16.msra.mxu0 0
        %2761 = vmatprep.subr.bf16.mxu0 0
        %2762 = vmatpush1.bf16.msra.mxu0 0
        %2763 = vmatprep.subr.bf16.mxu0 0
        %2764 = vmatpush1.bf16.msra.mxu0 0
        %2765 = vmatprep.subr.bf16.mxu0 0
        %2766 = vmatpush1.bf16.msra.mxu0 0
        %2767 = vmatprep.subr.bf16.mxu0 0
        %2768 = vmatpush1.bf16.msra.mxu0 0
        %2769 = vmatprep.subr.bf16.mxu0 0
        %2770 = vmatpush1.bf16.msra.mxu0 0
        %2771 = vmatprep.subr.bf16.mxu0 0
        %2772 = vmatpush1.bf16.msra.mxu0 0
        %2773 = vmatprep.subr.bf16.mxu0 0
        %2774 = vmatpush1.bf16.msra.mxu0 0
        %2775 = vmatprep.subr.bf16.mxu0 0
        %2776 = vmatpush1.bf16.msra.mxu0 0
        %2777 = vmatprep.mubr.bf16.mxu0 0
        %2778 = vmatmul.mubr.bf16.gmra.mrb[0].mxu0 %v2740
        %v2779 = vpop.f32.mrb[0].mxu0
        %v2780 = vadd.f32 0.0, %v2779
        %v2781 = vpop.f32.mrb[0].mxu0
        %v2782 = vpop.f32.mrb[0].mxu0
        %v2783 = vpop.f32.mrb[0].mxu0
        %2784 = vdwg.mxu0
        %2785 = vrot.lane.b32.xlu0 %v2300, 80
        %v2786 = vpop.permute.xlu0 %2785
        %2787 = vrot.lane.b32.xlu0 %v2301, 80
        %v2788 = vpop.permute.xlu0 %2787
        %2789 = vrot.lane.b32.xlu0 %v2302, 80
        %v2790 = vpop.permute.xlu0 %2789
        %2791 = vrot.lane.b32.xlu0 %v2303, 80
        %v2792 = vpop.permute.xlu0 %2791
        %2793 = vrot.lane.b32.xlu0 %v2304, 80
        %v2794 = vpop.permute.xlu0 %2793
        %2795 = vrot.lane.b32.xlu0 %v2305, 80
        %v2796 = vpop.permute.xlu0 %2795
        %2797 = vrot.lane.b32.xlu0 %v2306, 80
        %v2798 = vpop.permute.xlu0 %2797
        %2799 = vrot.lane.b32.xlu0 %v2307, 80
        %v2800 = vpop.permute.xlu0 %2799
        %v2802 = vsel %vm1348, %v2786, 0
        %v2805 = vsel %vm1348, %v2788, 0
        %v2808 = vsel %vm1348, %v2790, 0
        %v2811 = vsel %vm1348, %v2792, 0
        %v2814 = vsel %vm1348, %v2794, 0
        %v2817 = vsel %vm1348, %v2796, 0
        %v2820 = vsel %vm1348, %v2798, 0
        %v2823 = vsel %vm1348, %v2800, 0
        %2825 = vmatprep.subr.bf16.mxu0 0
        %2826 = vmatpush1.bf16.xpose.msra.mxu0 %v2805
        %2827 = vmatprep.subr.bf16.mxu0 0
        %2828 = vmatpush1.bf16.xpose.msra.mxu0 %v2808
        %2829 = vmatprep.subr.bf16.mxu0 0
        %2830 = vmatpush1.bf16.xpose.msra.mxu0 %v2811
        %2831 = vmatprep.subr.bf16.mxu0 0
        %2832 = vmatpush1.bf16.xpose.msra.mxu0 %v2814
        %2833 = vmatprep.subr.bf16.mxu0 0
        %2834 = vmatpush1.bf16.xpose.msra.mxu0 %v2817
        %2835 = vmatprep.subr.bf16.mxu0 0
        %2836 = vmatpush1.bf16.xpose.msra.mxu0 %v2820
        %2837 = vmatprep.subr.bf16.mxu0 0
        %2838 = vmatpush1.bf16.xpose.msra.mxu0 %v2823
        %2839 = vmatprep.subr.bf16.mxu0 0
        %2840 = vmatpush1.bf16.xpose.msra.mxu0 0
        %2841 = vmatprep.subr.bf16.mxu0 0
        %2842 = vmatpush1.bf16.xpose.msra.mxu0 0
        %2843 = vmatprep.subr.bf16.mxu0 0
        %2844 = vmatpush1.bf16.xpose.msra.mxu0 0
        %2845 = vmatprep.subr.bf16.mxu0 0
        %2846 = vmatpush1.bf16.xpose.msra.mxu0 0
        %2847 = vmatprep.subr.bf16.mxu0 0
        %2848 = vmatpush1.bf16.xpose.msra.mxu0 0
        %2849 = vmatprep.subr.bf16.mxu0 0
        %2850 = vmatpush1.bf16.xpose.msra.mxu0 0
        %2851 = vmatprep.subr.bf16.mxu0 0
        %2852 = vmatpush1.bf16.xpose.msra.mxu0 0
        %2853 = vmatprep.subr.bf16.mxu0 0
        %2854 = vmatpush1.bf16.xpose.msra.mxu0 0
        %2855 = vmatprep.subr.bf16.mxu0 0
        %2856 = vmatpush1.bf16.xpose.msra.mxu0 0
        %2857 = vmatprep.mubr.bf16.mxu0 0
        %2858 = vmatmul.mubr.bf16.gmra.mrb[0].mxu0 %v2802
        %v2859 = vpop.f32.mrb[0].mxu0
        %v2860 = vadd.f32 0.0, %v2859
        %v2861 = vpop.f32.mrb[0].mxu0
        %v2862 = vpop.f32.mrb[0].mxu0
        %v2863 = vpop.f32.mrb[0].mxu0
        %2864 = vdwg.mxu0
        %v2865 = vmul.f32 %v2860, 0.25
        %v2866 = vadd.f32 %v2865, %v2384
        %v2867 = vsel %vm2387, %v2866, -inf
        %2868 = vmax.xlane.f32.xlu0 %v2867
        %v2869 = vpop.xlane.xlu0 %2868
        %v2870 = vsub.f32 %v2866, %v2869
        %v2871 = vmul.f32 %v2870, 1.442695
        %v2872 = vpow.pop %v2871
        %v2873 = vsel %vm2387, %v2872, 0.0
        %2874 = vadd.xlane.f32.xlu0 %v2873
        %v2875 = vpop.xlane.xlu0 %2874
        %v2876 = vrcp.pop %v2875
        %v2877 = vmul.f32 %v2872, %v2876
        %v2878 = vpack.c.bf16 %v2877, %v2877
        %2879 = vrot.lane.b32.xlu0 %v2308, 80
        %v2880 = vpop.permute.xlu0 %2879
        %2881 = vrot.lane.b32.xlu0 %v2309, 80
        %v2882 = vpop.permute.xlu0 %2881
        %2883 = vrot.lane.b32.xlu0 %v2310, 80
        %v2884 = vpop.permute.xlu0 %2883
        %2885 = vrot.lane.b32.xlu0 %v2311, 80
        %v2886 = vpop.permute.xlu0 %2885
        %2887 = vrot.lane.b32.xlu0 %v2312, 80
        %v2888 = vpop.permute.xlu0 %2887
        %2889 = vrot.lane.b32.xlu0 %v2313, 80
        %v2890 = vpop.permute.xlu0 %2889
        %2891 = vrot.lane.b32.xlu0 %v2314, 80
        %v2892 = vpop.permute.xlu0 %2891
        %v2900 = vsel %vm2387, %v2878, 0
        %v2903 = vand.u32 %v2892, %v2406
        %2905 = vmatprep.subr.bf16.mxu0 0
        %2906 = vmatpush1.bf16.msra.mxu0 %v2880
        %2907 = vmatprep.subr.bf16.mxu0 0
        %2908 = vmatpush1.bf16.msra.mxu0 %v2882
        %2909 = vmatprep.subr.bf16.mxu0 0
        %2910 = vmatpush1.bf16.msra.mxu0 %v2884
        %2911 = vmatprep.subr.bf16.mxu0 0
        %2912 = vmatpush1.bf16.msra.mxu0 %v2886
        %2913 = vmatprep.subr.bf16.mxu0 0
        %2914 = vmatpush1.bf16.msra.mxu0 %v2888
        %2915 = vmatprep.subr.bf16.mxu0 0
        %2916 = vmatpush1.bf16.msra.mxu0 %v2890
        %2917 = vmatprep.subr.bf16.mxu0 0
        %2918 = vmatpush1.bf16.msra.mxu0 %v2903
        %2919 = vmatprep.subr.bf16.mxu0 0
        %2920 = vmatpush1.bf16.msra.mxu0 0
        %2921 = vmatprep.subr.bf16.mxu0 0
        %2922 = vmatpush1.bf16.msra.mxu0 0
        %2923 = vmatprep.subr.bf16.mxu0 0
        %2924 = vmatpush1.bf16.msra.mxu0 0
        %2925 = vmatprep.subr.bf16.mxu0 0
        %2926 = vmatpush1.bf16.msra.mxu0 0
        %2927 = vmatprep.subr.bf16.mxu0 0
        %2928 = vmatpush1.bf16.msra.mxu0 0
        %2929 = vmatprep.subr.bf16.mxu0 0
        %2930 = vmatpush1.bf16.msra.mxu0 0
        %2931 = vmatprep.subr.bf16.mxu0 0
        %2932 = vmatpush1.bf16.msra.mxu0 0
        %2933 = vmatprep.subr.bf16.mxu0 0
        %2934 = vmatpush1.bf16.msra.mxu0 0
        %2935 = vmatprep.subr.bf16.mxu0 0
        %2936 = vmatpush1.bf16.msra.mxu0 0
        %2937 = vmatprep.mubr.bf16.mxu0 0
        %2938 = vmatmul.mubr.bf16.gmra.mrb[0].mxu0 %v2900
        %v2939 = vpop.f32.mrb[0].mxu0
        %v2940 = vadd.f32 0.0, %v2939
        %v2941 = vpop.f32.mrb[0].mxu0
        %v2942 = vpop.f32.mrb[0].mxu0
        %v2943 = vpop.f32.mrb[0].mxu0
        %2944 = vdwg.mxu0
        %2946 = vrot.lane.b32.xlu0 %v2620, 16
        %v2947 = vpop.permute.xlu0 %2946
        %2950 = vrot.lane.b32.xlu0 %v2780, 32
        %v2951 = vpop.permute.xlu0 %2950
        %2954 = vrot.lane.b32.xlu0 %v2940, 48
        %v2955 = vpop.permute.xlu0 %2954
        %v2957 = vsel %vm1348, %v2445, %v2947
        %v2958 = vsel %vm1807, %v2957, %v2951
        %v2959 = vsel %vm1809, %v2958, %v2955
        %v2960 = vpack.c.bf16 %v2959, %v2959
        %v2962 = vlaneseq
        %v2963 = vshrl.u32 %v2962, 7
        %v2964 = vsub.s32 0, %v2963
        %v2965 = vrot.slane %v1157, %v2964
        %v2975 = vunpack.c.l.b16 %v1170
        %v2976 = vunpack.c.l.b16 %v1171
        %v2977 = vunpack.c.l.b16 %v1172
        %v2978 = vunpack.c.l.b16 %v1173
        %v2979 = vunpack.c.l.b16 %v1174
        %v2980 = vunpack.c.l.b16 %v1175
        %v2981 = vunpack.c.l.b16 %v1176
        %v2982 = vunpack.c.l.b16 %v1177
        %v2983 = vpack.c.b16 %v2976, %v2975
        %v2984 = vpack.c.b16 %v2978, %v2977
        %v2985 = vpack.c.b16 %v2980, %v2979
        %v2986 = vpack.c.b16 %v2982, %v2981
        %v2992 = vsel %vm1298, %v2960, 0
        %2994 = vmatprep.subr.bf16.mxu0 0
        %2995 = vmatpush1.bf16.msra.mxu0 %v2983
        %2996 = vmatprep.subr.bf16.mxu0 0
        %2997 = vmatpush1.bf16.msra.mxu0 %v2984
        %2998 = vmatprep.subr.bf16.mxu0 0
        %2999 = vmatpush1.bf16.msra.mxu0 %v2985
        %3000 = vmatprep.subr.bf16.mxu0 0
        %3001 = vmatpush1.bf16.msra.mxu0 %v2986
        %3002 = vmatprep.subr.bf16.mxu0 0
        %3003 = vmatpush1.bf16.msra.mxu0 0
        %3004 = vmatprep.subr.bf16.mxu0 0
        %3005 = vmatpush1.bf16.msra.mxu0 0
        %3006 = vmatprep.subr.bf16.mxu0 0
        %3007 = vmatpush1.bf16.msra.mxu0 0
        %3008 = vmatprep.subr.bf16.mxu0 0
        %3009 = vmatpush1.bf16.msra.mxu0 0
        %3010 = vmatprep.subr.bf16.mxu0 0
        %3011 = vmatpush1.bf16.msra.mxu0 0
        %3012 = vmatprep.subr.bf16.mxu0 0
        %3013 = vmatpush1.bf16.msra.mxu0 0
        %3014 = vmatprep.subr.bf16.mxu0 0
        %3015 = vmatpush1.bf16.msra.mxu0 0
        %3016 = vmatprep.subr.bf16.mxu0 0
        %3017 = vmatpush1.bf16.msra.mxu0 0
        %3018 = vmatprep.subr.bf16.mxu0 0
        %3019 = vmatpush1.bf16.msra.mxu0 0
        %3020 = vmatprep.subr.bf16.mxu0 0
        %3021 = vmatpush1.bf16.msra.mxu0 0
        %3022 = vmatprep.subr.bf16.mxu0 0
        %3023 = vmatpush1.bf16.msra.mxu0 0
        %3024 = vmatprep.subr.bf16.mxu0 0
        %3025 = vmatpush1.bf16.msra.mxu0 0
        %3026 = vmatprep.mubr.bf16.mxu0 0
        %3027 = vmatmul.mubr.bf16.gmra.mrb[0].mxu0 %v2992
        %v3028 = vpop.f32.mrb[0].mxu0
        %v3029 = vadd.f32 %v2965, %v3028
        %v3030 = vpop.f32.mrb[0].mxu0
        %v3031 = vpop.f32.mrb[0].mxu0
        %v3032 = vpop.f32.mrb[0].mxu0
        %3033 = vdwg.mxu0
        %v3034 = vadd.f32 %v1947, %v3029
        %v3035 = vsel %vm1298, %v3034, 0.0
        %3036 = vadd.xlane.f32.xlu0 %v3035
        %v3037 = vpop.xlane.xlu0 %3036
        %v3038 = vmul.f32 %v3037, %v1889
        %v3039 = vsub.f32 %v3034, %v3038
        %v3040 = vmul.f32 %v3039, %v3039
        %v3041 = vsel %vm1298, %v3040, 0.0
        %3042 = vadd.xlane.f32.xlu0 %v3041
        %v3043 = vpop.xlane.xlu0 %3042
        %v3044 = vmul.f32 %v3043, %v1889
        %v3045 = vadd.f32 %v3044, 1e-05
        %v3046 = vrsqrt.pop %v3045
        %v3047 = vmul.f32 %v3039, %v3046
        %v3049 = vlaneseq
        %v3050 = vshrl.u32 %v3049, 7
        %v3051 = vsub.s32 0, %v3050
        %v3052 = vrot.slane %v1161, %v3051
        %v3054 = vmul.f32 %v3047, %v3052
        %v3056 = vlaneseq
        %v3057 = vshrl.u32 %v3056, 7
        %v3058 = vsub.s32 0, %v3057
        %v3059 = vrot.slane %v1160, %v3058
        %v3061 = vadd.f32 %v3054, %v3059
        %v3062 = vadd.f32 %v1947, %v3061
        %v3063 = vsel %vm1298, %v3062, 0.0
        %3064 = vadd.xlane.f32.xlu0 %v3063
        %v3065 = vpop.xlane.xlu0 %3064
        %v3066 = vmul.f32 %v3065, %v1889
        %v3067 = vsub.f32 %v3062, %v3066
        %v3068 = vmul.f32 %v3067, %v3067
        %v3069 = vsel %vm1298, %v3068, 0.0
        %3070 = vadd.xlane.f32.xlu0 %v3069
        %v3071 = vpop.xlane.xlu0 %3070
        %v3072 = vmul.f32 %v3071, %v1889
        %v3073 = vadd.f32 %v3072, 1e-05
        %v3074 = vrsqrt.pop %v3073
        %v3075 = vmul.f32 %v3067, %v3074
        %v3077 = vlaneseq
        %v3078 = vshrl.u32 %v3077, 7
        %v3079 = vsub.s32 0, %v3078
        %v3080 = vrot.slane %v1197, %v3079
        %v3082 = vmul.f32 %v3075, %v3080
        %v3084 = vlaneseq
        %v3085 = vshrl.u32 %v3084, 7
        %v3086 = vsub.s32 0, %v3085
        %v3087 = vrot.slane %v1196, %v3086
        %v3089 = vadd.f32 %v3082, %v3087
        %v3090 = vmul.f32 %v3089, %v1945
        %v3091 = vpack.c.bf16 %v3090, %v3090
        %v3093 = vlaneseq
        %v3094 = vshrl.u32 %v3093, 7
        %v3095 = vsub.s32 0, %v3094
        %v3096 = vrot.slane %v1198, %v3095
        %v3106 = vunpack.c.l.b16 %v1202
        %v3107 = vunpack.c.l.b16 %v1203
        %v3108 = vunpack.c.l.b16 %v1204
        %v3109 = vunpack.c.l.b16 %v1205
        %v3110 = vunpack.c.l.b16 %v1206
        %v3111 = vunpack.c.l.b16 %v1207
        %v3112 = vunpack.c.l.b16 %v1208
        %v3113 = vunpack.c.l.b16 %v1209
        %v3114 = vpack.c.b16 %v3107, %v3106
        %v3115 = vpack.c.b16 %v3109, %v3108
        %v3116 = vpack.c.b16 %v3111, %v3110
        %v3117 = vpack.c.b16 %v3113, %v3112
        %v3123 = vsel %vm1298, %v3091, 0
        %3125 = vmatprep.subr.bf16.mxu0 0
        %3126 = vmatpush1.bf16.msra.mxu0 %v3114
        %3127 = vmatprep.subr.bf16.mxu0 0
        %3128 = vmatpush1.bf16.msra.mxu0 %v3115
        %3129 = vmatprep.subr.bf16.mxu0 0
        %3130 = vmatpush1.bf16.msra.mxu0 %v3116
        %3131 = vmatprep.subr.bf16.mxu0 0
        %3132 = vmatpush1.bf16.msra.mxu0 %v3117
        %3133 = vmatprep.subr.bf16.mxu0 0
        %3134 = vmatpush1.bf16.msra.mxu0 0
        %3135 = vmatprep.subr.bf16.mxu0 0
        %3136 = vmatpush1.bf16.msra.mxu0 0
        %3137 = vmatprep.subr.bf16.mxu0 0
        %3138 = vmatpush1.bf16.msra.mxu0 0
        %3139 = vmatprep.subr.bf16.mxu0 0
        %3140 = vmatpush1.bf16.msra.mxu0 0
        %3141 = vmatprep.subr.bf16.mxu0 0
        %3142 = vmatpush1.bf16.msra.mxu0 0
        %3143 = vmatprep.subr.bf16.mxu0 0
        %3144 = vmatpush1.bf16.msra.mxu0 0
        %3145 = vmatprep.subr.bf16.mxu0 0
        %3146 = vmatpush1.bf16.msra.mxu0 0
        %3147 = vmatprep.subr.bf16.mxu0 0
        %3148 = vmatpush1.bf16.msra.mxu0 0
        %3149 = vmatprep.subr.bf16.mxu0 0
        %3150 = vmatpush1.bf16.msra.mxu0 0
        %3151 = vmatprep.subr.bf16.mxu0 0
        %3152 = vmatpush1.bf16.msra.mxu0 0
        %3153 = vmatprep.subr.bf16.mxu0 0
        %3154 = vmatpush1.bf16.msra.mxu0 0
        %3155 = vmatprep.subr.bf16.mxu0 0
        %3156 = vmatpush1.bf16.msra.mxu0 0
        %3157 = vmatprep.mubr.bf16.mxu0 0
        %3158 = vmatmul.mubr.bf16.gmra.mrb[0].mxu0 %v3123
        %v3159 = vpop.f32.mrb[0].mxu0
        %v3160 = vadd.f32 %v3096, %v3159
        %v3161 = vpop.f32.mrb[0].mxu0
        %v3162 = vpop.f32.mrb[0].mxu0
        %v3163 = vpop.f32.mrb[0].mxu0
        %3164 = vdwg.mxu0
        %v3165 = vmax.f32 %v3160, 0.0
        %v3166 = vpack.c.bf16 %v3165, %v3165
        %v3168 = vlaneseq
        %v3169 = vshrl.u32 %v3168, 7
        %v3170 = vsub.s32 0, %v3169
        %v3171 = vrot.slane %v1199, %v3170
        %v3189 = vunpack.c.l.b16 %v1210
        %v3190 = vunpack.c.l.b16 %v1211
        %v3191 = vunpack.c.l.b16 %v1212
        %v3192 = vunpack.c.l.b16 %v1213
        %v3193 = vunpack.c.l.b16 %v1214
        %v3194 = vunpack.c.l.b16 %v1215
        %v3195 = vunpack.c.l.b16 %v1216
        %v3196 = vunpack.c.l.b16 %v1217
        %v3197 = vunpack.c.l.b16 %v1218
        %v3198 = vunpack.c.l.b16 %v1219
        %v3199 = vunpack.c.l.b16 %v1220
        %v3200 = vunpack.c.l.b16 %v1221
        %v3201 = vunpack.c.l.b16 %v1222
        %v3202 = vunpack.c.l.b16 %v1223
        %v3203 = vunpack.c.l.b16 %v1224
        %v3204 = vunpack.c.l.b16 %v1225
        %v3205 = vpack.c.b16 %v3190, %v3189
        %v3206 = vpack.c.b16 %v3192, %v3191
        %v3207 = vpack.c.b16 %v3194, %v3193
        %v3208 = vpack.c.b16 %v3196, %v3195
        %v3209 = vpack.c.b16 %v3198, %v3197
        %v3210 = vpack.c.b16 %v3200, %v3199
        %v3211 = vpack.c.b16 %v3202, %v3201
        %v3212 = vpack.c.b16 %v3204, %v3203
        %3221 = vmatprep.subr.bf16.mxu0 0
        %3222 = vmatpush1.bf16.msra.mxu0 %v3205
        %3223 = vmatprep.subr.bf16.mxu0 0
        %3224 = vmatpush1.bf16.msra.mxu0 %v3206
        %3225 = vmatprep.subr.bf16.mxu0 0
        %3226 = vmatpush1.bf16.msra.mxu0 %v3207
        %3227 = vmatprep.subr.bf16.mxu0 0
        %3228 = vmatpush1.bf16.msra.mxu0 %v3208
        %3229 = vmatprep.subr.bf16.mxu0 0
        %3230 = vmatpush1.bf16.msra.mxu0 %v3209
        %3231 = vmatprep.subr.bf16.mxu0 0
        %3232 = vmatpush1.bf16.msra.mxu0 %v3210
        %3233 = vmatprep.subr.bf16.mxu0 0
        %3234 = vmatpush1.bf16.msra.mxu0 %v3211
        %3235 = vmatprep.subr.bf16.mxu0 0
        %3236 = vmatpush1.bf16.msra.mxu0 %v3212
        %3237 = vmatprep.subr.bf16.mxu0 0
        %3238 = vmatpush1.bf16.msra.mxu0 0
        %3239 = vmatprep.subr.bf16.mxu0 0
        %3240 = vmatpush1.bf16.msra.mxu0 0
        %3241 = vmatprep.subr.bf16.mxu0 0
        %3242 = vmatpush1.bf16.msra.mxu0 0
        %3243 = vmatprep.subr.bf16.mxu0 0
        %3244 = vmatpush1.bf16.msra.mxu0 0
        %3245 = vmatprep.subr.bf16.mxu0 0
        %3246 = vmatpush1.bf16.msra.mxu0 0
        %3247 = vmatprep.subr.bf16.mxu0 0
        %3248 = vmatpush1.bf16.msra.mxu0 0
        %3249 = vmatprep.subr.bf16.mxu0 0
        %3250 = vmatpush1.bf16.msra.mxu0 0
        %3251 = vmatprep.subr.bf16.mxu0 0
        %3252 = vmatpush1.bf16.msra.mxu0 0
        %3253 = vmatprep.mubr.bf16.mxu0 0
        %3254 = vmatmul.mubr.bf16.gmra.mrb[0].mxu0 %v3166
        %v3255 = vpop.f32.mrb[0].mxu0
        %v3256 = vadd.f32 %v3171, %v3255
        %v3257 = vpop.f32.mrb[0].mxu0
        %v3258 = vpop.f32.mrb[0].mxu0
        %v3259 = vpop.f32.mrb[0].mxu0
        %3260 = vdwg.mxu0
        %v3261 = vadd.f32 %v3090, %v3256
        %v3262 = vsel %vm1298, %v3261, 0.0
        %3263 = vadd.xlane.f32.xlu0 %v3262
        %v3264 = vpop.xlane.xlu0 %3263
        %v3265 = vmul.f32 %v3264, %v1889
        %v3266 = vsub.f32 %v3261, %v3265
        %v3267 = vmul.f32 %v3266, %v3266
        %v3268 = vsel %vm1298, %v3267, 0.0
        %3269 = vadd.xlane.f32.xlu0 %v3268
        %v3270 = vpop.xlane.xlu0 %3269
        %v3271 = vmul.f32 %v3270, %v1889
        %v3272 = vadd.f32 %v3271, 1e-05
        %v3273 = vrsqrt.pop %v3272
        %v3274 = vmul.f32 %v3266, %v3273
        %v3276 = vlaneseq
        %v3277 = vshrl.u32 %v3276, 7
        %v3278 = vsub.s32 0, %v3277
        %v3279 = vrot.slane %v1201, %v3278
        %v3281 = vmul.f32 %v3274, %v3279
        %v3283 = vlaneseq
        %v3284 = vshrl.u32 %v3283, 7
        %v3285 = vsub.s32 0, %v3284
        %v3286 = vrot.slane %v1200, %v3285
        %v3288 = vadd.f32 %v3281, %v3286
        %v3289 = vmul.f32 %v3288, %v1945
        %s3290 = scalar_lea.vmem %s15, 1
        %v3291 = vld [vmem:[%s3290] sm:$0x1]
        %s3292 = scalar_lea.vmem %s17, 1
        %v3293 = vld [vmem:[%s3292] sm:$0x1]
        %s3294 = scalar_lea.vmem %s19, 1
        %v3295 = vld [vmem:[%s3294] sm:$0x1]
        %s3296 = scalar_lea.vmem %s21, 1
        %v3297 = vld [vmem:[%s3296] sm:$0x1]
        %s3298 = scalar_lea.vmem %s23, 1
        %v3299 = vld [vmem:[%s3298] sm:$0x1]
        %s3300 = scalar_lea.vmem %s25, 1
        %v3301 = vld [vmem:[%s3300] sm:$0x1]
        %s3302 = scalar_lea.vmem %s27, 32
        %v3303 = vld [vmem:[%s3302] sm:$0xf]
        %v3304 = vld [vmem:[%s3302 + $0x4] sm:$0xf]
        %v3305 = vld [vmem:[%s3302 + $0x8] sm:$0xf]
        %v3306 = vld [vmem:[%s3302 + $0xc] sm:$0xf]
        %v3307 = vld [vmem:[%s3302 + $0x10] sm:$0xf]
        %v3308 = vld [vmem:[%s3302 + $0x14] sm:$0xf]
        %v3309 = vld [vmem:[%s3302 + $0x18] sm:$0xf]
        %v3310 = vld [vmem:[%s3302 + $0x1c] sm:$0xf]
        %s3311 = scalar_lea.vmem %s29, 32
        %v3312 = vld [vmem:[%s3311] sm:$0xf]
        %v3313 = vld [vmem:[%s3311 + $0x4] sm:$0xf]
        %v3314 = vld [vmem:[%s3311 + $0x8] sm:$0xf]
        %v3315 = vld [vmem:[%s3311 + $0xc] sm:$0xf]
        %v3316 = vld [vmem:[%s3311 + $0x10] sm:$0xf]
        %v3317 = vld [vmem:[%s3311 + $0x14] sm:$0xf]
        %v3318 = vld [vmem:[%s3311 + $0x18] sm:$0xf]
        %v3319 = vld [vmem:[%s3311 + $0x1c] sm:$0xf]
        %s3320 = scalar_lea.vmem %s31, 32
        %v3321 = vld [vmem:[%s3320] sm:$0xf]
        %v3322 = vld [vmem:[%s3320 + $0x4] sm:$0xf]
        %v3323 = vld [vmem:[%s3320 + $0x8] sm:$0xf]
        %v3324 = vld [vmem:[%s3320 + $0xc] sm:$0xf]
        %v3325 = vld [vmem:[%s3320 + $0x10] sm:$0xf]
        %v3326 = vld [vmem:[%s3320 + $0x14] sm:$0xf]
        %v3327 = vld [vmem:[%s3320 + $0x18] sm:$0xf]
        %v3328 = vld [vmem:[%s3320 + $0x1c] sm:$0xf]
        %s3329 = scalar_lea.vmem %s33, 32
        %v3330 = vld [vmem:[%s3329] sm:$0xf]
        %v3331 = vld [vmem:[%s3329 + $0x4] sm:$0xf]
        %v3332 = vld [vmem:[%s3329 + $0x8] sm:$0xf]
        %v3333 = vld [vmem:[%s3329 + $0xc] sm:$0xf]
        %v3334 = vld [vmem:[%s3329 + $0x10] sm:$0xf]
        %v3335 = vld [vmem:[%s3329 + $0x14] sm:$0xf]
        %v3336 = vld [vmem:[%s3329 + $0x18] sm:$0xf]
        %v3337 = vld [vmem:[%s3329 + $0x1c] sm:$0xf]
        %s3338 = scalar_lea.vmem %s35, 1
        %v3339 = vld [vmem:[%s3338] sm:$0x1]
        %s3340 = scalar_lea.vmem %s37, 1
        %v3341 = vld [vmem:[%s3340] sm:$0x1]
        %s3342 = scalar_lea.vmem %s39, 1
        %v3343 = vld [vmem:[%s3342] sm:$0x1]
        %s3344 = scalar_lea.vmem %s41, 1
        %v3345 = vld [vmem:[%s3344] sm:$0x1]
        %s3346 = scalar_lea.vmem %s43, 1
        %v3347 = vld [vmem:[%s3346] sm:$0x1]
        %s3348 = scalar_lea.vmem %s45, 1
        %v3349 = vld [vmem:[%s3348] sm:$0x1]
        %s3350 = scalar_lea.vmem %s47, 1
        %v3351 = vld [vmem:[%s3350] sm:$0x1]
        %s3352 = scalar_lea.vmem %s49, 1
        %v3353 = vld [vmem:[%s3352] sm:$0x1]
        %s3354 = scalar_lea.vmem %s51, 32
        %v3355 = vld [vmem:[%s3354] sm:$0xf]
        %v3356 = vld [vmem:[%s3354 + $0x4] sm:$0xf]
        %v3357 = vld [vmem:[%s3354 + $0x8] sm:$0xf]
        %v3358 = vld [vmem:[%s3354 + $0xc] sm:$0xf]
        %v3359 = vld [vmem:[%s3354 + $0x10] sm:$0xf]
        %v3360 = vld [vmem:[%s3354 + $0x14] sm:$0xf]
        %v3361 = vld [vmem:[%s3354 + $0x18] sm:$0xf]
        %v3362 = vld [vmem:[%s3354 + $0x1c] sm:$0xf]
        %s3363 = scalar_lea.vmem %s53, 64
        %v3364 = vld [vmem:[%s3363] sm:$0xf]
        %v3365 = vld [vmem:[%s3363 + $0x4] sm:$0xf]
        %v3366 = vld [vmem:[%s3363 + $0x8] sm:$0xf]
        %v3367 = vld [vmem:[%s3363 + $0xc] sm:$0xf]
        %v3368 = vld [vmem:[%s3363 + $0x10] sm:$0xf]
        %v3369 = vld [vmem:[%s3363 + $0x14] sm:$0xf]
        %v3370 = vld [vmem:[%s3363 + $0x18] sm:$0xf]
        %v3371 = vld [vmem:[%s3363 + $0x1c] sm:$0xf]
        %v3372 = vld [vmem:[%s3363 + $0x20] sm:$0xf]
        %v3373 = vld [vmem:[%s3363 + $0x24] sm:$0xf]
        %v3374 = vld [vmem:[%s3363 + $0x28] sm:$0xf]
        %v3375 = vld [vmem:[%s3363 + $0x2c] sm:$0xf]
        %v3376 = vld [vmem:[%s3363 + $0x30] sm:$0xf]
        %v3377 = vld [vmem:[%s3363 + $0x34] sm:$0xf]
        %v3378 = vld [vmem:[%s3363 + $0x38] sm:$0xf]
        %v3379 = vld [vmem:[%s3363 + $0x3c] sm:$0xf]
        %s3380 = scalar_lea.vmem %s55, 1
        %v3381 = vld [vmem:[%s3380] sm:$0x1]
        %s3382 = scalar_lea.vmem %s57, 2
        %v3383 = vld [vmem:[%s3382] sm:$0x3]
        %s3384 = scalar_lea.vmem %s59, 1
        %v3385 = vld [vmem:[%s3384] sm:$0x1]
        %s3386 = scalar_lea.vmem %s61, 1
        %v3387 = vld [vmem:[%s3386] sm:$0x1]
        %s3388 = scalar_lea.vmem %s63, 32
        %v3389 = vld [vmem:[%s3388] sm:$0xf]
        %v3390 = vld [vmem:[%s3388 + $0x4] sm:$0xf]
        %v3391 = vld [vmem:[%s3388 + $0x8] sm:$0xf]
        %v3392 = vld [vmem:[%s3388 + $0xc] sm:$0xf]
        %v3393 = vld [vmem:[%s3388 + $0x10] sm:$0xf]
        %v3394 = vld [vmem:[%s3388 + $0x14] sm:$0xf]
        %v3395 = vld [vmem:[%s3388 + $0x18] sm:$0xf]
        %v3396 = vld [vmem:[%s3388 + $0x1c] sm:$0xf]
        %s3397 = scalar_lea.vmem %s65, 64
        %v3398 = vld [vmem:[%s3397] sm:$0xff]
        %v3399 = vld [vmem:[%s3397 + $0x8] sm:$0xff]
        %v3400 = vld [vmem:[%s3397 + $0x10] sm:$0xff]
        %v3401 = vld [vmem:[%s3397 + $0x18] sm:$0xff]
        %v3402 = vld [vmem:[%s3397 + $0x20] sm:$0xff]
        %v3403 = vld [vmem:[%s3397 + $0x28] sm:$0xff]
        %v3404 = vld [vmem:[%s3397 + $0x30] sm:$0xff]
        %v3405 = vld [vmem:[%s3397 + $0x38] sm:$0xff]
        %v3406 = vpack.c.bf16 %v3289, %v3289
        %v3408 = vlaneseq
        %v3409 = vshrl.u32 %v3408, 7
        %v3410 = vsub.s32 0, %v3409
        %v3411 = vrot.slane %v3383, %v3410
        %v3412 = vlaneseq
        %v3413 = vshrl.u32 %v3412, 7
        %v3414 = vsub.s32 1, %v3413
        %v3415 = vrot.slane %v3383, %v3414
        %v3426 = vunpack.c.l.b16 %v3398
        %v3427 = vunpack.c.h.b16 %v3398
        %v3428 = vunpack.c.l.b16 %v3399
        %v3429 = vunpack.c.h.b16 %v3399
        %v3430 = vunpack.c.l.b16 %v3400
        %v3431 = vunpack.c.h.b16 %v3400
        %v3432 = vunpack.c.l.b16 %v3401
        %v3433 = vunpack.c.h.b16 %v3401
        %v3434 = vunpack.c.l.b16 %v3402
        %v3435 = vunpack.c.h.b16 %v3402
        %v3436 = vunpack.c.l.b16 %v3403
        %v3437 = vunpack.c.h.b16 %v3403
        %v3438 = vunpack.c.l.b16 %v3404
        %v3439 = vunpack.c.h.b16 %v3404
        %v3440 = vunpack.c.l.b16 %v3405
        %v3441 = vunpack.c.h.b16 %v3405
        %v3442 = vpack.c.b16 %v3428, %v3426
        %v3443 = vpack.c.b16 %v3429, %v3427
        %v3444 = vpack.c.b16 %v3432, %v3430
        %v3445 = vpack.c.b16 %v3433, %v3431
        %v3446 = vpack.c.b16 %v3436, %v3434
        %v3447 = vpack.c.b16 %v3437, %v3435
        %v3448 = vpack.c.b16 %v3440, %v3438
        %v3449 = vpack.c.b16 %v3441, %v3439
        %v3459 = vsel %vm1298, %v3406, 0
        %3461 = vmatprep.subr.bf16.mxu0 %v3443
        %3462 = vmatpush1.bf16.msra.mxu0 %v3442
        %3463 = vmatprep.subr.bf16.mxu0 %v3445
        %3464 = vmatpush1.bf16.msra.mxu0 %v3444
        %3465 = vmatprep.subr.bf16.mxu0 %v3447
        %3466 = vmatpush1.bf16.msra.mxu0 %v3446
        %3467 = vmatprep.subr.bf16.mxu0 %v3449
        %3468 = vmatpush1.bf16.msra.mxu0 %v3448
        %3469 = vmatprep.subr.bf16.mxu0 0
        %3470 = vmatpush1.bf16.msra.mxu0 0
        %3471 = vmatprep.subr.bf16.mxu0 0
        %3472 = vmatpush1.bf16.msra.mxu0 0
        %3473 = vmatprep.subr.bf16.mxu0 0
        %3474 = vmatpush1.bf16.msra.mxu0 0
        %3475 = vmatprep.subr.bf16.mxu0 0
        %3476 = vmatpush1.bf16.msra.mxu0 0
        %3477 = vmatprep.subr.bf16.mxu0 0
        %3478 = vmatpush1.bf16.msra.mxu0 0
        %3479 = vmatprep.subr.bf16.mxu0 0
        %3480 = vmatpush1.bf16.msra.mxu0 0
        %3481 = vmatprep.subr.bf16.mxu0 0
        %3482 = vmatpush1.bf16.msra.mxu0 0
        %3483 = vmatprep.subr.bf16.mxu0 0
        %3484 = vmatpush1.bf16.msra.mxu0 0
        %3485 = vmatprep.subr.bf16.mxu0 0
        %3486 = vmatpush1.bf16.msra.mxu0 0
        %3487 = vmatprep.subr.bf16.mxu0 0
        %3488 = vmatpush1.bf16.msra.mxu0 0
        %3489 = vmatprep.subr.bf16.mxu0 0
        %3490 = vmatpush1.bf16.msra.mxu0 0
        %3491 = vmatprep.subr.bf16.mxu0 0
        %3492 = vmatpush1.bf16.msra.mxu0 0
        %3493 = vmatprep.mubr.bf16.mxu0 0
        %3494 = vmatmul.mubr.bf16.gmra.mrb[0].mxu0 %v3459
        %v3495 = vpop.f32.mrb[0].mxu0
        %v3496 = vadd.f32 %v3411, %v3495
        %v3497 = vpop.f32.mrb[0].mxu0
        %v3498 = vadd.f32 %v3415, %v3497
        %v3499 = vpop.f32.mrb[0].mxu0
        %v3500 = vpop.f32.mrb[0].mxu0
        %3501 = vdwg.mxu0
        %v3502 = vpack.c.bf16 %v3496, %v3496
        %v3503 = vpack.c.bf16 %v3498, %v3498
        %3505 = vrot.lane.b32.xlu0 %v3502, 64
        %v3506 = vpop.permute.xlu0 %3505
        %v3508 = vsel %vm1348, %v3502, 0
        %v3511 = vsel %vm1348, %v3506, 0
        %3513 = vmatprep.subr.bf16.mxu0 0
        %3514 = vmatpush1.bf16.xpose.msra.mxu0 %v3511
        %3515 = vmatprep.subr.bf16.mxu0 0
        %3516 = vmatpush1.bf16.xpose.msra.mxu0 0
        %3517 = vmatprep.subr.bf16.mxu0 0
        %3518 = vmatpush1.bf16.xpose.msra.mxu0 0
        %3519 = vmatprep.subr.bf16.mxu0 0
        %3520 = vmatpush1.bf16.xpose.msra.mxu0 0
        %3521 = vmatprep.subr.bf16.mxu0 0
        %3522 = vmatpush1.bf16.xpose.msra.mxu0 0
        %3523 = vmatprep.subr.bf16.mxu0 0
        %3524 = vmatpush1.bf16.xpose.msra.mxu0 0
        %3525 = vmatprep.subr.bf16.mxu0 0
        %3526 = vmatpush1.bf16.xpose.msra.mxu0 0
        %3527 = vmatprep.subr.bf16.mxu0 0
        %3528 = vmatpush1.bf16.xpose.msra.mxu0 0
        %3529 = vmatprep.subr.bf16.mxu0 0
        %3530 = vmatpush1.bf16.xpose.msra.mxu0 0
        %3531 = vmatprep.subr.bf16.mxu0 0
        %3532 = vmatpush1.bf16.xpose.msra.mxu0 0
        %3533 = vmatprep.subr.bf16.mxu0 0
        %3534 = vmatpush1.bf16.xpose.msra.mxu0 0
        %3535 = vmatprep.subr.bf16.mxu0 0
        %3536 = vmatpush1.bf16.xpose.msra.mxu0 0
        %3537 = vmatprep.subr.bf16.mxu0 0
        %3538 = vmatpush1.bf16.xpose.msra.mxu0 0
        %3539 = vmatprep.subr.bf16.mxu0 0
        %3540 = vmatpush1.bf16.xpose.msra.mxu0 0
        %3541 = vmatprep.subr.bf16.mxu0 0
        %3542 = vmatpush1.bf16.xpose.msra.mxu0 0
        %3543 = vmatprep.subr.bf16.mxu0 0
        %3544 = vmatpush1.bf16.xpose.msra.mxu0 0
        %3545 = vmatprep.mubr.bf16.mxu0 0
        %3546 = vmatmul.mubr.bf16.gmra.mrb[0].mxu0 %v3508
        %v3547 = vpop.f32.mrb[0].mxu0
        %v3548 = vadd.f32 0.0, %v3547
        %v3549 = vpop.f32.mrb[0].mxu0
        %v3550 = vpop.f32.mrb[0].mxu0
        %v3551 = vpop.f32.mrb[0].mxu0
        %3552 = vdwg.mxu0
        %v3553 = vmul.f32 %v3548, 0.25
        %v3554 = vadd.f32 %v3553, %v1126
        %v3555 = vsel %vm1397, %v3554, -inf
        %3556 = vmax.xlane.f32.xlu0 %v3555
        %v3557 = vpop.xlane.xlu0 %3556
        %v3558 = vsub.f32 %v3554, %v3557
        %v3559 = vmul.f32 %v3558, 1.442695
        %v3560 = vpow.pop %v3559
        %v3561 = vsel %vm1397, %v3560, 0.0
        %3562 = vadd.xlane.f32.xlu0 %v3561
        %v3563 = vpop.xlane.xlu0 %3562
        %v3564 = vrcp.pop %v3563
        %v3565 = vmul.f32 %v3560, %v3564
        %v3566 = vpack.c.bf16 %v3565, %v3565
        %v3568 = vsel %vm1397, %v3566, 0
        %v3571 = vsel %vm1413, %v3503, 0
        %3573 = vmatprep.subr.bf16.mxu0 0
        %3574 = vmatpush1.bf16.msra.mxu0 %v3571
        %3575 = vmatprep.subr.bf16.mxu0 0
        %3576 = vmatpush1.bf16.msra.mxu0 0
        %3577 = vmatprep.subr.bf16.mxu0 0
        %3578 = vmatpush1.bf16.msra.mxu0 0
        %3579 = vmatprep.subr.bf16.mxu0 0
        %3580 = vmatpush1.bf16.msra.mxu0 0
        %3581 = vmatprep.subr.bf16.mxu0 0
        %3582 = vmatpush1.bf16.msra.mxu0 0
        %3583 = vmatprep.subr.bf16.mxu0 0
        %3584 = vmatpush1.bf16.msra.mxu0 0
        %3585 = vmatprep.subr.bf16.mxu0 0
        %3586 = vmatpush1.bf16.msra.mxu0 0
        %3587 = vmatprep.subr.bf16.mxu0 0
        %3588 = vmatpush1.bf16.msra.mxu0 0
        %3589 = vmatprep.subr.bf16.mxu0 0
        %3590 = vmatpush1.bf16.msra.mxu0 0
        %3591 = vmatprep.subr.bf16.mxu0 0
        %3592 = vmatpush1.bf16.msra.mxu0 0
        %3593 = vmatprep.subr.bf16.mxu0 0
        %3594 = vmatpush1.bf16.msra.mxu0 0
        %3595 = vmatprep.subr.bf16.mxu0 0
        %3596 = vmatpush1.bf16.msra.mxu0 0
        %3597 = vmatprep.subr.bf16.mxu0 0
        %3598 = vmatpush1.bf16.msra.mxu0 0
        %3599 = vmatprep.subr.bf16.mxu0 0
        %3600 = vmatpush1.bf16.msra.mxu0 0
        %3601 = vmatprep.subr.bf16.mxu0 0
        %3602 = vmatpush1.bf16.msra.mxu0 0
        %3603 = vmatprep.subr.bf16.mxu0 0
        %3604 = vmatpush1.bf16.msra.mxu0 0
        %3605 = vmatprep.mubr.bf16.mxu0 0
        %3606 = vmatmul.mubr.bf16.gmra.mrb[0].mxu0 %v3568
        %v3607 = vpop.f32.mrb[0].mxu0
        %v3608 = vadd.f32 0.0, %v3607
        %v3609 = vpop.f32.mrb[0].mxu0
        %v3610 = vpop.f32.mrb[0].mxu0
        %v3611 = vpop.f32.mrb[0].mxu0
        %3612 = vdwg.mxu0
        %3613 = vrot.lane.b32.xlu0 %v3502, 112
        %v3614 = vpop.permute.xlu0 %3613
        %3615 = vrot.lane.b32.xlu0 %v3502, 48
        %v3616 = vpop.permute.xlu0 %3615
        %v3618 = vsel %vm1348, %v3614, 0
        %v3621 = vsel %vm1348, %v3616, 0
        %3623 = vmatprep.subr.bf16.mxu0 0
        %3624 = vmatpush1.bf16.xpose.msra.mxu0 %v3621
        %3625 = vmatprep.subr.bf16.mxu0 0
        %3626 = vmatpush1.bf16.xpose.msra.mxu0 0
        %3627 = vmatprep.subr.bf16.mxu0 0
        %3628 = vmatpush1.bf16.xpose.msra.mxu0 0
        %3629 = vmatprep.subr.bf16.mxu0 0
        %3630 = vmatpush1.bf16.xpose.msra.mxu0 0
        %3631 = vmatprep.subr.bf16.mxu0 0
        %3632 = vmatpush1.bf16.xpose.msra.mxu0 0
        %3633 = vmatprep.subr.bf16.mxu0 0
        %3634 = vmatpush1.bf16.xpose.msra.mxu0 0
        %3635 = vmatprep.subr.bf16.mxu0 0
        %3636 = vmatpush1.bf16.xpose.msra.mxu0 0
        %3637 = vmatprep.subr.bf16.mxu0 0
        %3638 = vmatpush1.bf16.xpose.msra.mxu0 0
        %3639 = vmatprep.subr.bf16.mxu0 0
        %3640 = vmatpush1.bf16.xpose.msra.mxu0 0
        %3641 = vmatprep.subr.bf16.mxu0 0
        %3642 = vmatpush1.bf16.xpose.msra.mxu0 0
        %3643 = vmatprep.subr.bf16.mxu0 0
        %3644 = vmatpush1.bf16.xpose.msra.mxu0 0
        %3645 = vmatprep.subr.bf16.mxu0 0
        %3646 = vmatpush1.bf16.xpose.msra.mxu0 0
        %3647 = vmatprep.subr.bf16.mxu0 0
        %3648 = vmatpush1.bf16.xpose.msra.mxu0 0
        %3649 = vmatprep.subr.bf16.mxu0 0
        %3650 = vmatpush1.bf16.xpose.msra.mxu0 0
        %3651 = vmatprep.subr.bf16.mxu0 0
        %3652 = vmatpush1.bf16.xpose.msra.mxu0 0
        %3653 = vmatprep.subr.bf16.mxu0 0
        %3654 = vmatpush1.bf16.xpose.msra.mxu0 0
        %3655 = vmatprep.mubr.bf16.mxu0 0
        %3656 = vmatmul.mubr.bf16.gmra.mrb[0].mxu0 %v3618
        %v3657 = vpop.f32.mrb[0].mxu0
        %v3658 = vadd.f32 0.0, %v3657
        %v3659 = vpop.f32.mrb[0].mxu0
        %v3660 = vpop.f32.mrb[0].mxu0
        %v3661 = vpop.f32.mrb[0].mxu0
        %3662 = vdwg.mxu0
        %v3663 = vmul.f32 %v3658, 0.25
        %v3664 = vadd.f32 %v3663, %v1126
        %v3665 = vsel %vm1397, %v3664, -inf
        %3666 = vmax.xlane.f32.xlu0 %v3665
        %v3667 = vpop.xlane.xlu0 %3666
        %v3668 = vsub.f32 %v3664, %v3667
        %v3669 = vmul.f32 %v3668, 1.442695
        %v3670 = vpow.pop %v3669
        %v3671 = vsel %vm1397, %v3670, 0.0
        %3672 = vadd.xlane.f32.xlu0 %v3671
        %v3673 = vpop.xlane.xlu0 %3672
        %v3674 = vrcp.pop %v3673
        %v3675 = vmul.f32 %v3670, %v3674
        %v3676 = vpack.c.bf16 %v3675, %v3675
        %3678 = vrot.lane.b32.xlu0 %v3503, 112
        %v3679 = vpop.permute.xlu0 %3678
        %v3681 = vsel %vm1397, %v3676, 0
        %v3684 = vsel %vm1413, %v3679, 0
        %3686 = vmatprep.subr.bf16.mxu0 0
        %3687 = vmatpush1.bf16.msra.mxu0 %v3684
        %3688 = vmatprep.subr.bf16.mxu0 0
        %3689 = vmatpush1.bf16.msra.mxu0 0
        %3690 = vmatprep.subr.bf16.mxu0 0
        %3691 = vmatpush1.bf16.msra.mxu0 0
        %3692 = vmatprep.subr.bf16.mxu0 0
        %3693 = vmatpush1.bf16.msra.mxu0 0
        %3694 = vmatprep.subr.bf16.mxu0 0
        %3695 = vmatpush1.bf16.msra.mxu0 0
        %3696 = vmatprep.subr.bf16.mxu0 0
        %3697 = vmatpush1.bf16.msra.mxu0 0
        %3698 = vmatprep.subr.bf16.mxu0 0
        %3699 = vmatpush1.bf16.msra.mxu0 0
        %3700 = vmatprep.subr.bf16.mxu0 0
        %3701 = vmatpush1.bf16.msra.mxu0 0
        %3702 = vmatprep.subr.bf16.mxu0 0
        %3703 = vmatpush1.bf16.msra.mxu0 0
        %3704 = vmatprep.subr.bf16.mxu0 0
        %3705 = vmatpush1.bf16.msra.mxu0 0
        %3706 = vmatprep.subr.bf16.mxu0 0
        %3707 = vmatpush1.bf16.msra.mxu0 0
        %3708 = vmatprep.subr.bf16.mxu0 0
        %3709 = vmatpush1.bf16.msra.mxu0 0
        %3710 = vmatprep.subr.bf16.mxu0 0
        %3711 = vmatpush1.bf16.msra.mxu0 0
        %3712 = vmatprep.subr.bf16.mxu0 0
        %3713 = vmatpush1.bf16.msra.mxu0 0
        %3714 = vmatprep.subr.bf16.mxu0 0
        %3715 = vmatpush1.bf16.msra.mxu0 0
        %3716 = vmatprep.subr.bf16.mxu0 0
        %3717 = vmatpush1.bf16.msra.mxu0 0
        %3718 = vmatprep.mubr.bf16.mxu0 0
        %3719 = vmatmul.mubr.bf16.gmra.mrb[0].mxu0 %v3681
        %v3720 = vpop.f32.mrb[0].mxu0
        %v3721 = vadd.f32 0.0, %v3720
        %v3722 = vpop.f32.mrb[0].mxu0
        %v3723 = vpop.f32.mrb[0].mxu0
        %v3724 = vpop.f32.mrb[0].mxu0
        %3725 = vdwg.mxu0
        %3726 = vrot.lane.b32.xlu0 %v3502, 96
        %v3727 = vpop.permute.xlu0 %3726
        %3728 = vrot.lane.b32.xlu0 %v3502, 32
        %v3729 = vpop.permute.xlu0 %3728
        %v3731 = vsel %vm1348, %v3727, 0
        %v3734 = vsel %vm1348, %v3729, 0
        %3736 = vmatprep.subr.bf16.mxu0 0
        %3737 = vmatpush1.bf16.xpose.msra.mxu0 %v3734
        %3738 = vmatprep.subr.bf16.mxu0 0
        %3739 = vmatpush1.bf16.xpose.msra.mxu0 0
        %3740 = vmatprep.subr.bf16.mxu0 0
        %3741 = vmatpush1.bf16.xpose.msra.mxu0 0
        %3742 = vmatprep.subr.bf16.mxu0 0
        %3743 = vmatpush1.bf16.xpose.msra.mxu0 0
        %3744 = vmatprep.subr.bf16.mxu0 0
        %3745 = vmatpush1.bf16.xpose.msra.mxu0 0
        %3746 = vmatprep.subr.bf16.mxu0 0
        %3747 = vmatpush1.bf16.xpose.msra.mxu0 0
        %3748 = vmatprep.subr.bf16.mxu0 0
        %3749 = vmatpush1.bf16.xpose.msra.mxu0 0
        %3750 = vmatprep.subr.bf16.mxu0 0
        %3751 = vmatpush1.bf16.xpose.msra.mxu0 0
        %3752 = vmatprep.subr.bf16.mxu0 0
        %3753 = vmatpush1.bf16.xpose.msra.mxu0 0
        %3754 = vmatprep.subr.bf16.mxu0 0
        %3755 = vmatpush1.bf16.xpose.msra.mxu0 0
        %3756 = vmatprep.subr.bf16.mxu0 0
        %3757 = vmatpush1.bf16.xpose.msra.mxu0 0
        %3758 = vmatprep.subr.bf16.mxu0 0
        %3759 = vmatpush1.bf16.xpose.msra.mxu0 0
        %3760 = vmatprep.subr.bf16.mxu0 0
        %3761 = vmatpush1.bf16.xpose.msra.mxu0 0
        %3762 = vmatprep.subr.bf16.mxu0 0
        %3763 = vmatpush1.bf16.xpose.msra.mxu0 0
        %3764 = vmatprep.subr.bf16.mxu0 0
        %3765 = vmatpush1.bf16.xpose.msra.mxu0 0
        %3766 = vmatprep.subr.bf16.mxu0 0
        %3767 = vmatpush1.bf16.xpose.msra.mxu0 0
        %3768 = vmatprep.mubr.bf16.mxu0 0
        %3769 = vmatmul.mubr.bf16.gmra.mrb[0].mxu0 %v3731
        %v3770 = vpop.f32.mrb[0].mxu0
        %v3771 = vadd.f32 0.0, %v3770
        %v3772 = vpop.f32.mrb[0].mxu0
        %v3773 = vpop.f32.mrb[0].mxu0
        %v3774 = vpop.f32.mrb[0].mxu0
        %3775 = vdwg.mxu0
        %v3776 = vmul.f32 %v3771, 0.25
        %v3777 = vadd.f32 %v3776, %v1126
        %v3778 = vsel %vm1397, %v3777, -inf
        %3779 = vmax.xlane.f32.xlu0 %v3778
        %v3780 = vpop.xlane.xlu0 %3779
        %v3781 = vsub.f32 %v3777, %v3780
        %v3782 = vmul.f32 %v3781, 1.442695
        %v3783 = vpow.pop %v3782
        %v3784 = vsel %vm1397, %v3783, 0.0
        %3785 = vadd.xlane.f32.xlu0 %v3784
        %v3786 = vpop.xlane.xlu0 %3785
        %v3787 = vrcp.pop %v3786
        %v3788 = vmul.f32 %v3783, %v3787
        %v3789 = vpack.c.bf16 %v3788, %v3788
        %3790 = vrot.lane.b32.xlu0 %v3503, 96
        %v3791 = vpop.permute.xlu0 %3790
        %v3793 = vsel %vm1397, %v3789, 0
        %v3796 = vsel %vm1413, %v3791, 0
        %3798 = vmatprep.subr.bf16.mxu0 0
        %3799 = vmatpush1.bf16.msra.mxu0 %v3796
        %3800 = vmatprep.subr.bf16.mxu0 0
        %3801 = vmatpush1.bf16.msra.mxu0 0
        %3802 = vmatprep.subr.bf16.mxu0 0
        %3803 = vmatpush1.bf16.msra.mxu0 0
        %3804 = vmatprep.subr.bf16.mxu0 0
        %3805 = vmatpush1.bf16.msra.mxu0 0
        %3806 = vmatprep.subr.bf16.mxu0 0
        %3807 = vmatpush1.bf16.msra.mxu0 0
        %3808 = vmatprep.subr.bf16.mxu0 0
        %3809 = vmatpush1.bf16.msra.mxu0 0
        %3810 = vmatprep.subr.bf16.mxu0 0
        %3811 = vmatpush1.bf16.msra.mxu0 0
        %3812 = vmatprep.subr.bf16.mxu0 0
        %3813 = vmatpush1.bf16.msra.mxu0 0
        %3814 = vmatprep.subr.bf16.mxu0 0
        %3815 = vmatpush1.bf16.msra.mxu0 0
        %3816 = vmatprep.subr.bf16.mxu0 0
        %3817 = vmatpush1.bf16.msra.mxu0 0
        %3818 = vmatprep.subr.bf16.mxu0 0
        %3819 = vmatpush1.bf16.msra.mxu0 0
        %3820 = vmatprep.subr.bf16.mxu0 0
        %3821 = vmatpush1.bf16.msra.mxu0 0
        %3822 = vmatprep.subr.bf16.mxu0 0
        %3823 = vmatpush1.bf16.msra.mxu0 0
        %3824 = vmatprep.subr.bf16.mxu0 0
        %3825 = vmatpush1.bf16.msra.mxu0 0
        %3826 = vmatprep.subr.bf16.mxu0 0
        %3827 = vmatpush1.bf16.msra.mxu0 0
        %3828 = vmatprep.subr.bf16.mxu0 0
        %3829 = vmatpush1.bf16.msra.mxu0 0
        %3830 = vmatprep.mubr.bf16.mxu0 0
        %3831 = vmatmul.mubr.bf16.gmra.mrb[0].mxu0 %v3793
        %v3832 = vpop.f32.mrb[0].mxu0
        %v3833 = vadd.f32 0.0, %v3832
        %v3834 = vpop.f32.mrb[0].mxu0
        %v3835 = vpop.f32.mrb[0].mxu0
        %v3836 = vpop.f32.mrb[0].mxu0
        %3837 = vdwg.mxu0
        %3838 = vrot.lane.b32.xlu0 %v3502, 80
        %v3839 = vpop.permute.xlu0 %3838
        %3840 = vrot.lane.b32.xlu0 %v3502, 16
        %v3841 = vpop.permute.xlu0 %3840
        %v3843 = vsel %vm1348, %v3839, 0
        %v3846 = vsel %vm1348, %v3841, 0
        %3848 = vmatprep.subr.bf16.mxu0 0
        %3849 = vmatpush1.bf16.xpose.msra.mxu0 %v3846
        %3850 = vmatprep.subr.bf16.mxu0 0
        %3851 = vmatpush1.bf16.xpose.msra.mxu0 0
        %3852 = vmatprep.subr.bf16.mxu0 0
        %3853 = vmatpush1.bf16.xpose.msra.mxu0 0
        %3854 = vmatprep.subr.bf16.mxu0 0
        %3855 = vmatpush1.bf16.xpose.msra.mxu0 0
        %3856 = vmatprep.subr.bf16.mxu0 0
        %3857 = vmatpush1.bf16.xpose.msra.mxu0 0
        %3858 = vmatprep.subr.bf16.mxu0 0
        %3859 = vmatpush1.bf16.xpose.msra.mxu0 0
        %3860 = vmatprep.subr.bf16.mxu0 0
        %3861 = vmatpush1.bf16.xpose.msra.mxu0 0
        %3862 = vmatprep.subr.bf16.mxu0 0
        %3863 = vmatpush1.bf16.xpose.msra.mxu0 0
        %3864 = vmatprep.subr.bf16.mxu0 0
        %3865 = vmatpush1.bf16.xpose.msra.mxu0 0
        %3866 = vmatprep.subr.bf16.mxu0 0
        %3867 = vmatpush1.bf16.xpose.msra.mxu0 0
        %3868 = vmatprep.subr.bf16.mxu0 0
        %3869 = vmatpush1.bf16.xpose.msra.mxu0 0
        %3870 = vmatprep.subr.bf16.mxu0 0
        %3871 = vmatpush1.bf16.xpose.msra.mxu0 0
        %3872 = vmatprep.subr.bf16.mxu0 0
        %3873 = vmatpush1.bf16.xpose.msra.mxu0 0
        %3874 = vmatprep.subr.bf16.mxu0 0
        %3875 = vmatpush1.bf16.xpose.msra.mxu0 0
        %3876 = vmatprep.subr.bf16.mxu0 0
        %3877 = vmatpush1.bf16.xpose.msra.mxu0 0
        %3878 = vmatprep.subr.bf16.mxu0 0
        %3879 = vmatpush1.bf16.xpose.msra.mxu0 0
        %3880 = vmatprep.mubr.bf16.mxu0 0
        %3881 = vmatmul.mubr.bf16.gmra.mrb[0].mxu0 %v3843
        %v3882 = vpop.f32.mrb[0].mxu0
        %v3883 = vadd.f32 0.0, %v3882
        %v3884 = vpop.f32.mrb[0].mxu0
        %v3885 = vpop.f32.mrb[0].mxu0
        %v3886 = vpop.f32.mrb[0].mxu0
        %3887 = vdwg.mxu0
        %v3888 = vmul.f32 %v3883, 0.25
        %v3889 = vadd.f32 %v3888, %v1126
        %v3890 = vsel %vm1397, %v3889, -inf
        %3891 = vmax.xlane.f32.xlu0 %v3890
        %v3892 = vpop.xlane.xlu0 %3891
        %v3893 = vsub.f32 %v3889, %v3892
        %v3894 = vmul.f32 %v3893, 1.442695
        %v3895 = vpow.pop %v3894
        %v3896 = vsel %vm1397, %v3895, 0.0
        %3897 = vadd.xlane.f32.xlu0 %v3896
        %v3898 = vpop.xlane.xlu0 %3897
        %v3899 = vrcp.pop %v3898
        %v3900 = vmul.f32 %v3895, %v3899
        %v3901 = vpack.c.bf16 %v3900, %v3900
        %3902 = vrot.lane.b32.xlu0 %v3503, 80
        %v3903 = vpop.permute.xlu0 %3902
        %v3905 = vsel %vm1397, %v3901, 0
        %v3908 = vsel %vm1413, %v3903, 0
        %3910 = vmatprep.subr.bf16.mxu0 0
        %3911 = vmatpush1.bf16.msra.mxu0 %v3908
        %3912 = vmatprep.subr.bf16.mxu0 0
        %3913 = vmatpush1.bf16.msra.mxu0 0
        %3914 = vmatprep.subr.bf16.mxu0 0
        %3915 = vmatpush1.bf16.msra.mxu0 0
        %3916 = vmatprep.subr.bf16.mxu0 0
        %3917 = vmatpush1.bf16.msra.mxu0 0
        %3918 = vmatprep.subr.bf16.mxu0 0
        %3919 = vmatpush1.bf16.msra.mxu0 0
        %3920 = vmatprep.subr.bf16.mxu0 0
        %3921 = vmatpush1.bf16.msra.mxu0 0
        %3922 = vmatprep.subr.bf16.mxu0 0
        %3923 = vmatpush1.bf16.msra.mxu0 0
        %3924 = vmatprep.subr.bf16.mxu0 0
        %3925 = vmatpush1.bf16.msra.mxu0 0
        %3926 = vmatprep.subr.bf16.mxu0 0
        %3927 = vmatpush1.bf16.msra.mxu0 0
        %3928 = vmatprep.subr.bf16.mxu0 0
        %3929 = vmatpush1.bf16.msra.mxu0 0
        %3930 = vmatprep.subr.bf16.mxu0 0
        %3931 = vmatpush1.bf16.msra.mxu0 0
        %3932 = vmatprep.subr.bf16.mxu0 0
        %3933 = vmatpush1.bf16.msra.mxu0 0
        %3934 = vmatprep.subr.bf16.mxu0 0
        %3935 = vmatpush1.bf16.msra.mxu0 0
        %3936 = vmatprep.subr.bf16.mxu0 0
        %3937 = vmatpush1.bf16.msra.mxu0 0
        %3938 = vmatprep.subr.bf16.mxu0 0
        %3939 = vmatpush1.bf16.msra.mxu0 0
        %3940 = vmatprep.subr.bf16.mxu0 0
        %3941 = vmatpush1.bf16.msra.mxu0 0
        %3942 = vmatprep.mubr.bf16.mxu0 0
        %3943 = vmatmul.mubr.bf16.gmra.mrb[0].mxu0 %v3905
        %v3944 = vpop.f32.mrb[0].mxu0
        %v3945 = vadd.f32 0.0, %v3944
        %v3946 = vpop.f32.mrb[0].mxu0
        %v3947 = vpop.f32.mrb[0].mxu0
        %v3948 = vpop.f32.mrb[0].mxu0
        %3949 = vdwg.mxu0
        %3951 = vrot.lane.b32.xlu0 %v3721, 16
        %v3952 = vpop.permute.xlu0 %3951
        %3955 = vrot.lane.b32.xlu0 %v3833, 32
        %v3956 = vpop.permute.xlu0 %3955
        %3959 = vrot.lane.b32.xlu0 %v3945, 48
        %v3960 = vpop.permute.xlu0 %3959
        %v3962 = vsel %vm1348, %v3608, %v3952
        %v3963 = vsel %vm1807, %v3962, %v3956
        %v3964 = vsel %vm1809, %v3963, %v3960
        %v3965 = vpack.c.bf16 %v3964, %v3964
        %v3967 = vlaneseq
        %v3968 = vshrl.u32 %v3967, 7
        %v3969 = vsub.s32 0, %v3968
        %v3970 = vrot.slane %v3381, %v3969
        %v3980 = vunpack.c.l.b16 %v3389
        %v3981 = vunpack.c.l.b16 %v3390
        %v3982 = vunpack.c.l.b16 %v3391
        %v3983 = vunpack.c.l.b16 %v3392
        %v3984 = vunpack.c.l.b16 %v3393
        %v3985 = vunpack.c.l.b16 %v3394
        %v3986 = vunpack.c.l.b16 %v3395
        %v3987 = vunpack.c.l.b16 %v3396
        %v3988 = vpack.c.b16 %v3981, %v3980
        %v3989 = vpack.c.b16 %v3983, %v3982
        %v3990 = vpack.c.b16 %v3985, %v3984
        %v3991 = vpack.c.b16 %v3987, %v3986
        %v3997 = vsel %vm1298, %v3965, 0
        %3999 = vmatprep.subr.bf16.mxu0 0
        %4000 = vmatpush1.bf16.msra.mxu0 %v3988
        %4001 = vmatprep.subr.bf16.mxu0 0
        %4002 = vmatpush1.bf16.msra.mxu0 %v3989
        %4003 = vmatprep.subr.bf16.mxu0 0
        %4004 = vmatpush1.bf16.msra.mxu0 %v3990
        %4005 = vmatprep.subr.bf16.mxu0 0
        %4006 = vmatpush1.bf16.msra.mxu0 %v3991
        %4007 = vmatprep.subr.bf16.mxu0 0
        %4008 = vmatpush1.bf16.msra.mxu0 0
        %4009 = vmatprep.subr.bf16.mxu0 0
        %4010 = vmatpush1.bf16.msra.mxu0 0
        %4011 = vmatprep.subr.bf16.mxu0 0
        %4012 = vmatpush1.bf16.msra.mxu0 0
        %4013 = vmatprep.subr.bf16.mxu0 0
        %4014 = vmatpush1.bf16.msra.mxu0 0
        %4015 = vmatprep.subr.bf16.mxu0 0
        %4016 = vmatpush1.bf16.msra.mxu0 0
        %4017 = vmatprep.subr.bf16.mxu0 0
        %4018 = vmatpush1.bf16.msra.mxu0 0
        %4019 = vmatprep.subr.bf16.mxu0 0
        %4020 = vmatpush1.bf16.msra.mxu0 0
        %4021 = vmatprep.subr.bf16.mxu0 0
        %4022 = vmatpush1.bf16.msra.mxu0 0
        %4023 = vmatprep.subr.bf16.mxu0 0
        %4024 = vmatpush1.bf16.msra.mxu0 0
        %4025 = vmatprep.subr.bf16.mxu0 0
        %4026 = vmatpush1.bf16.msra.mxu0 0
        %4027 = vmatprep.subr.bf16.mxu0 0
        %4028 = vmatpush1.bf16.msra.mxu0 0
        %4029 = vmatprep.subr.bf16.mxu0 0
        %4030 = vmatpush1.bf16.msra.mxu0 0
        %4031 = vmatprep.mubr.bf16.mxu0 0
        %4032 = vmatmul.mubr.bf16.gmra.mrb[0].mxu0 %v3997
        %v4033 = vpop.f32.mrb[0].mxu0
        %v4034 = vadd.f32 %v3970, %v4033
        %v4035 = vpop.f32.mrb[0].mxu0
        %v4036 = vpop.f32.mrb[0].mxu0
        %v4037 = vpop.f32.mrb[0].mxu0
        %4038 = vdwg.mxu0
        %v4039 = vadd.f32 %v3289, %v4034
        %v4040 = vsel %vm1298, %v4039, 0.0
        %4041 = vadd.xlane.f32.xlu0 %v4040
        %v4042 = vpop.xlane.xlu0 %4041
        %v4043 = vmul.f32 %v4042, %v1889
        %v4044 = vsub.f32 %v4039, %v4043
        %v4045 = vmul.f32 %v4044, %v4044
        %v4046 = vsel %vm1298, %v4045, 0.0
        %4047 = vadd.xlane.f32.xlu0 %v4046
        %v4048 = vpop.xlane.xlu0 %4047
        %v4049 = vmul.f32 %v4048, %v1889
        %v4050 = vadd.f32 %v4049, 1e-05
        %v4051 = vrsqrt.pop %v4050
        %v4052 = vmul.f32 %v4044, %v4051
        %v4054 = vlaneseq
        %v4055 = vshrl.u32 %v4054, 7
        %v4056 = vsub.s32 0, %v4055
        %v4057 = vrot.slane %v3387, %v4056
        %v4059 = vmul.f32 %v4052, %v4057
        %v4061 = vlaneseq
        %v4062 = vshrl.u32 %v4061, 7
        %v4063 = vsub.s32 0, %v4062
        %v4064 = vrot.slane %v3385, %v4063
        %v4066 = vadd.f32 %v4059, %v4064
        %v4067 = vadd.f32 %v3289, %v4066
        %v4068 = vsel %vm1298, %v4067, 0.0
        %4069 = vadd.xlane.f32.xlu0 %v4068
        %v4070 = vpop.xlane.xlu0 %4069
        %v4071 = vmul.f32 %v4070, %v1889
        %v4072 = vsub.f32 %v4067, %v4071
        %v4073 = vmul.f32 %v4072, %v4072
        %v4074 = vsel %vm1298, %v4073, 0.0
        %4075 = vadd.xlane.f32.xlu0 %v4074
        %v4076 = vpop.xlane.xlu0 %4075
        %v4077 = vmul.f32 %v4076, %v1889
        %v4078 = vadd.f32 %v4077, 1e-05
        %v4079 = vrsqrt.pop %v4078
        %v4080 = vmul.f32 %v4072, %v4079
        %v4082 = vlaneseq
        %v4083 = vshrl.u32 %v4082, 7
        %v4084 = vsub.s32 0, %v4083
        %v4085 = vrot.slane %v3341, %v4084
        %v4087 = vmul.f32 %v4080, %v4085
        %v4089 = vlaneseq
        %v4090 = vshrl.u32 %v4089, 7
        %v4091 = vsub.s32 0, %v4090
        %v4092 = vrot.slane %v3339, %v4091
        %v4094 = vadd.f32 %v4087, %v4092
        %v4095 = vmul.f32 %v4094, %v1945
        %v4096 = vpack.c.bf16 %v4095, %v4095
        %v4098 = vlaneseq
        %v4099 = vshrl.u32 %v4098, 7
        %v4100 = vsub.s32 0, %v4099
        %v4101 = vrot.slane %v3295, %v4100
        %v4111 = vunpack.c.l.b16 %v3321
        %v4112 = vunpack.c.l.b16 %v3322
        %v4113 = vunpack.c.l.b16 %v3323
        %v4114 = vunpack.c.l.b16 %v3324
        %v4115 = vunpack.c.l.b16 %v3325
        %v4116 = vunpack.c.l.b16 %v3326
        %v4117 = vunpack.c.l.b16 %v3327
        %v4118 = vunpack.c.l.b16 %v3328
        %v4119 = vpack.c.b16 %v4112, %v4111
        %v4120 = vpack.c.b16 %v4114, %v4113
        %v4121 = vpack.c.b16 %v4116, %v4115
        %v4122 = vpack.c.b16 %v4118, %v4117
        %v4128 = vsel %vm1298, %v4096, 0
        %4130 = vmatprep.subr.bf16.mxu0 0
        %4131 = vmatpush1.bf16.msra.mxu0 %v4119
        %4132 = vmatprep.subr.bf16.mxu0 0
        %4133 = vmatpush1.bf16.msra.mxu0 %v4120
        %4134 = vmatprep.subr.bf16.mxu0 0
        %4135 = vmatpush1.bf16.msra.mxu0 %v4121
        %4136 = vmatprep.subr.bf16.mxu0 0
        %4137 = vmatpush1.bf16.msra.mxu0 %v4122
        %4138 = vmatprep.subr.bf16.mxu0 0
        %4139 = vmatpush1.bf16.msra.mxu0 0
        %4140 = vmatprep.subr.bf16.mxu0 0
        %4141 = vmatpush1.bf16.msra.mxu0 0
        %4142 = vmatprep.subr.bf16.mxu0 0
        %4143 = vmatpush1.bf16.msra.mxu0 0
        %4144 = vmatprep.subr.bf16.mxu0 0
        %4145 = vmatpush1.bf16.msra.mxu0 0
        %4146 = vmatprep.subr.bf16.mxu0 0
        %4147 = vmatpush1.bf16.msra.mxu0 0
        %4148 = vmatprep.subr.bf16.mxu0 0
        %4149 = vmatpush1.bf16.msra.mxu0 0
        %4150 = vmatprep.subr.bf16.mxu0 0
        %4151 = vmatpush1.bf16.msra.mxu0 0
        %4152 = vmatprep.subr.bf16.mxu0 0
        %4153 = vmatpush1.bf16.msra.mxu0 0
        %4154 = vmatprep.subr.bf16.mxu0 0
        %4155 = vmatpush1.bf16.msra.mxu0 0
        %4156 = vmatprep.subr.bf16.mxu0 0
        %4157 = vmatpush1.bf16.msra.mxu0 0
        %4158 = vmatprep.subr.bf16.mxu0 0
        %4159 = vmatpush1.bf16.msra.mxu0 0
        %4160 = vmatprep.subr.bf16.mxu0 0
        %4161 = vmatpush1.bf16.msra.mxu0 0
        %4162 = vmatprep.mubr.bf16.mxu0 0
        %4163 = vmatmul.mubr.bf16.gmra.mrb[0].mxu0 %v4128
        %v4164 = vpop.f32.mrb[0].mxu0
        %v4165 = vadd.f32 %v4101, %v4164
        %v4166 = vpop.f32.mrb[0].mxu0
        %v4167 = vpop.f32.mrb[0].mxu0
        %v4168 = vpop.f32.mrb[0].mxu0
        %4169 = vdwg.mxu0
        %v4171 = vlaneseq
        %v4172 = vshrl.u32 %v4171, 7
        %v4173 = vsub.s32 0, %v4172
        %v4174 = vrot.slane %v3291, %v4173
        %v4184 = vunpack.c.l.b16 %v3303
        %v4185 = vunpack.c.l.b16 %v3304
        %v4186 = vunpack.c.l.b16 %v3305
        %v4187 = vunpack.c.l.b16 %v3306
        %v4188 = vunpack.c.l.b16 %v3307
        %v4189 = vunpack.c.l.b16 %v3308
        %v4190 = vunpack.c.l.b16 %v3309
        %v4191 = vunpack.c.l.b16 %v3310
        %v4192 = vpack.c.b16 %v4185, %v4184
        %v4193 = vpack.c.b16 %v4187, %v4186
        %v4194 = vpack.c.b16 %v4189, %v4188
        %v4195 = vpack.c.b16 %v4191, %v4190
        %4200 = vmatprep.subr.bf16.mxu0 0
        %4201 = vmatpush1.bf16.msra.mxu0 %v4192
        %4202 = vmatprep.subr.bf16.mxu0 0
        %4203 = vmatpush1.bf16.msra.mxu0 %v4193
        %4204 = vmatprep.subr.bf16.mxu0 0
        %4205 = vmatpush1.bf16.msra.mxu0 %v4194
        %4206 = vmatprep.subr.bf16.mxu0 0
        %4207 = vmatpush1.bf16.msra.mxu0 %v4195
        %4208 = vmatprep.subr.bf16.mxu0 0
        %4209 = vmatpush1.bf16.msra.mxu0 0
        %4210 = vmatprep.subr.bf16.mxu0 0
        %4211 = vmatpush1.bf16.msra.mxu0 0
        %4212 = vmatprep.subr.bf16.mxu0 0
        %4213 = vmatpush1.bf16.msra.mxu0 0
        %4214 = vmatprep.subr.bf16.mxu0 0
        %4215 = vmatpush1.bf16.msra.mxu0 0
        %4216 = vmatprep.subr.bf16.mxu0 0
        %4217 = vmatpush1.bf16.msra.mxu0 0
        %4218 = vmatprep.subr.bf16.mxu0 0
        %4219 = vmatpush1.bf16.msra.mxu0 0
        %4220 = vmatprep.subr.bf16.mxu0 0
        %4221 = vmatpush1.bf16.msra.mxu0 0
        %4222 = vmatprep.subr.bf16.mxu0 0
        %4223 = vmatpush1.bf16.msra.mxu0 0
        %4224 = vmatprep.subr.bf16.mxu0 0
        %4225 = vmatpush1.bf16.msra.mxu0 0
        %4226 = vmatprep.subr.bf16.mxu0 0
        %4227 = vmatpush1.bf16.msra.mxu0 0
        %4228 = vmatprep.subr.bf16.mxu0 0
        %4229 = vmatpush1.bf16.msra.mxu0 0
        %4230 = vmatprep.subr.bf16.mxu0 0
        %4231 = vmatpush1.bf16.msra.mxu0 0
        %4232 = vmatprep.mubr.bf16.mxu0 0
        %4233 = vmatmul.mubr.bf16.gmra.mrb[0].mxu0 %v2053
        %v4234 = vpop.f32.mrb[0].mxu0
        %v4235 = vadd.f32 %v4174, %v4234
        %v4236 = vpop.f32.mrb[0].mxu0
        %v4237 = vpop.f32.mrb[0].mxu0
        %v4238 = vadd.f32 %v4174, %v4237
        %v4239 = vpop.f32.mrb[0].mxu0
        %4240 = vmatprep.mubr.bf16.mxu0 0
        %4241 = vmatmul.mubr.bf16.gmra.mrb[0].mxu0 %v2056
        %v4242 = vpop.f32.mrb[0].mxu0
        %v4243 = vadd.f32 %v4174, %v4242
        %v4244 = vpop.f32.mrb[0].mxu0
        %v4245 = vpop.f32.mrb[0].mxu0
        %v4246 = vadd.f32 %v4174, %v4245
        %v4247 = vpop.f32.mrb[0].mxu0
        %4248 = vmatprep.mubr.bf16.mxu0 0
        %4249 = vmatmul.mubr.bf16.gmra.mrb[0].mxu0 %v2059
        %v4250 = vpop.f32.mrb[0].mxu0
        %v4251 = vadd.f32 %v4174, %v4250
        %v4252 = vpop.f32.mrb[0].mxu0
        %v4253 = vpop.f32.mrb[0].mxu0
        %v4254 = vadd.f32 %v4174, %v4253
        %v4255 = vpop.f32.mrb[0].mxu0
        %4256 = vmatprep.mubr.bf16.mxu0 0
        %4257 = vmatmul.mubr.bf16.gmra.mrb[0].mxu0 %v2062
        %v4258 = vpop.f32.mrb[0].mxu0
        %v4259 = vadd.f32 %v4174, %v4258
        %v4260 = vpop.f32.mrb[0].mxu0
        %v4261 = vpop.f32.mrb[0].mxu0
        %v4262 = vadd.f32 %v4174, %v4261
        %v4263 = vpop.f32.mrb[0].mxu0
        %4264 = vmatprep.mubr.bf16.mxu0 0
        %4265 = vmatmul.mubr.bf16.gmra.mrb[0].mxu0 %v2065
        %v4266 = vpop.f32.mrb[0].mxu0
        %v4267 = vadd.f32 %v4174, %v4266
        %v4268 = vpop.f32.mrb[0].mxu0
        %v4269 = vpop.f32.mrb[0].mxu0
        %v4270 = vadd.f32 %v4174, %v4269
        %v4271 = vpop.f32.mrb[0].mxu0
        %4272 = vmatprep.mubr.bf16.mxu0 0
        %4273 = vmatmul.mubr.bf16.gmra.mrb[0].mxu0 %v2068
        %v4274 = vpop.f32.mrb[0].mxu0
        %v4275 = vadd.f32 %v4174, %v4274
        %v4276 = vpop.f32.mrb[0].mxu0
        %v4277 = vpop.f32.mrb[0].mxu0
        %v4278 = vadd.f32 %v4174, %v4277
        %v4279 = vpop.f32.mrb[0].mxu0
        %4280 = vmatprep.mubr.bf16.mxu0 0
        %4281 = vmatmul.mubr.bf16.gmra.mrb[0].mxu0 %v2071
        %v4282 = vpop.f32.mrb[0].mxu0
        %v4283 = vadd.f32 %v4174, %v4282
        %v4284 = vpop.f32.mrb[0].mxu0
        %v4285 = vpop.f32.mrb[0].mxu0
        %v4286 = vpop.f32.mrb[0].mxu0
        %4287 = vdwg.mxu0
        %v4289 = vlaneseq
        %v4290 = vshrl.u32 %v4289, 7
        %v4291 = vsub.s32 0, %v4290
        %v4292 = vrot.slane %v3297, %v4291
        %v4302 = vunpack.c.l.b16 %v3330
        %v4303 = vunpack.c.l.b16 %v3331
        %v4304 = vunpack.c.l.b16 %v3332
        %v4305 = vunpack.c.l.b16 %v3333
        %v4306 = vunpack.c.l.b16 %v3334
        %v4307 = vunpack.c.l.b16 %v3335
        %v4308 = vunpack.c.l.b16 %v3336
        %v4309 = vunpack.c.l.b16 %v3337
        %v4310 = vpack.c.b16 %v4303, %v4302
        %v4311 = vpack.c.b16 %v4305, %v4304
        %v4312 = vpack.c.b16 %v4307, %v4306
        %v4313 = vpack.c.b16 %v4309, %v4308
        %4318 = vmatprep.subr.bf16.mxu0 0
        %4319 = vmatpush1.bf16.msra.mxu0 %v4310
        %4320 = vmatprep.subr.bf16.mxu0 0
        %4321 = vmatpush1.bf16.msra.mxu0 %v4311
        %4322 = vmatprep.subr.bf16.mxu0 0
        %4323 = vmatpush1.bf16.msra.mxu0 %v4312
        %4324 = vmatprep.subr.bf16.mxu0 0
        %4325 = vmatpush1.bf16.msra.mxu0 %v4313
        %4326 = vmatprep.subr.bf16.mxu0 0
        %4327 = vmatpush1.bf16.msra.mxu0 0
        %4328 = vmatprep.subr.bf16.mxu0 0
        %4329 = vmatpush1.bf16.msra.mxu0 0
        %4330 = vmatprep.subr.bf16.mxu0 0
        %4331 = vmatpush1.bf16.msra.mxu0 0
        %4332 = vmatprep.subr.bf16.mxu0 0
        %4333 = vmatpush1.bf16.msra.mxu0 0
        %4334 = vmatprep.subr.bf16.mxu0 0
        %4335 = vmatpush1.bf16.msra.mxu0 0
        %4336 = vmatprep.subr.bf16.mxu0 0
        %4337 = vmatpush1.bf16.msra.mxu0 0
        %4338 = vmatprep.subr.bf16.mxu0 0
        %4339 = vmatpush1.bf16.msra.mxu0 0
        %4340 = vmatprep.subr.bf16.mxu0 0
        %4341 = vmatpush1.bf16.msra.mxu0 0
        %4342 = vmatprep.subr.bf16.mxu0 0
        %4343 = vmatpush1.bf16.msra.mxu0 0
        %4344 = vmatprep.subr.bf16.mxu0 0
        %4345 = vmatpush1.bf16.msra.mxu0 0
        %4346 = vmatprep.subr.bf16.mxu0 0
        %4347 = vmatpush1.bf16.msra.mxu0 0
        %4348 = vmatprep.subr.bf16.mxu0 0
        %4349 = vmatpush1.bf16.msra.mxu0 0
        %4350 = vmatprep.mubr.bf16.mxu0 0
        %4351 = vmatmul.mubr.bf16.gmra.mrb[0].mxu0 %v2192
        %v4352 = vpop.f32.mrb[0].mxu0
        %v4353 = vadd.f32 %v4292, %v4352
        %v4354 = vpop.f32.mrb[0].mxu0
        %v4355 = vpop.f32.mrb[0].mxu0
        %v4356 = vadd.f32 %v4292, %v4355
        %v4357 = vpop.f32.mrb[0].mxu0
        %4358 = vmatprep.mubr.bf16.mxu0 0
        %4359 = vmatmul.mubr.bf16.gmra.mrb[0].mxu0 %v2195
        %v4360 = vpop.f32.mrb[0].mxu0
        %v4361 = vadd.f32 %v4292, %v4360
        %v4362 = vpop.f32.mrb[0].mxu0
        %v4363 = vpop.f32.mrb[0].mxu0
        %v4364 = vadd.f32 %v4292, %v4363
        %v4365 = vpop.f32.mrb[0].mxu0
        %4366 = vmatprep.mubr.bf16.mxu0 0
        %4367 = vmatmul.mubr.bf16.gmra.mrb[0].mxu0 %v2198
        %v4368 = vpop.f32.mrb[0].mxu0
        %v4369 = vadd.f32 %v4292, %v4368
        %v4370 = vpop.f32.mrb[0].mxu0
        %v4371 = vpop.f32.mrb[0].mxu0
        %v4372 = vadd.f32 %v4292, %v4371
        %v4373 = vpop.f32.mrb[0].mxu0
        %4374 = vmatprep.mubr.bf16.mxu0 0
        %4375 = vmatmul.mubr.bf16.gmra.mrb[0].mxu0 %v2201
        %v4376 = vpop.f32.mrb[0].mxu0
        %v4377 = vadd.f32 %v4292, %v4376
        %v4378 = vpop.f32.mrb[0].mxu0
        %v4379 = vpop.f32.mrb[0].mxu0
        %v4380 = vadd.f32 %v4292, %v4379
        %v4381 = vpop.f32.mrb[0].mxu0
        %4382 = vmatprep.mubr.bf16.mxu0 0
        %4383 = vmatmul.mubr.bf16.gmra.mrb[0].mxu0 %v2204
        %v4384 = vpop.f32.mrb[0].mxu0
        %v4385 = vadd.f32 %v4292, %v4384
        %v4386 = vpop.f32.mrb[0].mxu0
        %v4387 = vpop.f32.mrb[0].mxu0
        %v4388 = vadd.f32 %v4292, %v4387
        %v4389 = vpop.f32.mrb[0].mxu0
        %4390 = vmatprep.mubr.bf16.mxu0 0
        %4391 = vmatmul.mubr.bf16.gmra.mrb[0].mxu0 %v2207
        %v4392 = vpop.f32.mrb[0].mxu0
        %v4393 = vadd.f32 %v4292, %v4392
        %v4394 = vpop.f32.mrb[0].mxu0
        %v4395 = vpop.f32.mrb[0].mxu0
        %v4396 = vadd.f32 %v4292, %v4395
        %v4397 = vpop.f32.mrb[0].mxu0
        %4398 = vmatprep.mubr.bf16.mxu0 0
        %4399 = vmatmul.mubr.bf16.gmra.mrb[0].mxu0 %v2210
        %v4400 = vpop.f32.mrb[0].mxu0
        %v4401 = vadd.f32 %v4292, %v4400
        %v4402 = vpop.f32.mrb[0].mxu0
        %v4403 = vpop.f32.mrb[0].mxu0
        %v4404 = vpop.f32.mrb[0].mxu0
        %4405 = vdwg.mxu0
        %v4406 = vpack.c.bf16 %v4165, %v4165
        %v4407 = vpack.c.bf16 %v4238, %v4235
        %v4408 = vpack.c.bf16 %v4246, %v4243
        %v4409 = vpack.c.bf16 %v4254, %v4251
        %v4410 = vpack.c.bf16 %v4262, %v4259
        %v4411 = vpack.c.bf16 %v4270, %v4267
        %v4412 = vpack.c.bf16 %v4278, %v4275
        %v4413 = vpack.c.bf16 %v4283, %v4283
        %v4414 = vpack.c.bf16 %v4356, %v4353
        %v4415 = vpack.c.bf16 %v4364, %v4361
        %v4416 = vpack.c.bf16 %v4372, %v4369
        %v4417 = vpack.c.bf16 %v4380, %v4377
        %v4418 = vpack.c.bf16 %v4388, %v4385
        %v4419 = vpack.c.bf16 %v4396, %v4393
        %v4420 = vpack.c.bf16 %v4401, %v4401
        %v4422 = vsel %vm1348, %v4406, 0
        %v4425 = vsel %vm1348, %v4407, 0
        %v4428 = vsel %vm1348, %v4408, 0
        %v4431 = vsel %vm1348, %v4409, 0
        %v4434 = vsel %vm1348, %v4410, 0
        %v4437 = vsel %vm1348, %v4411, 0
        %v4440 = vsel %vm1348, %v4412, 0
        %v4443 = vsel %vm1348, %v4413, 0
        %4445 = vmatprep.subr.bf16.mxu0 0
        %4446 = vmatpush1.bf16.xpose.msra.mxu0 %v4425
        %4447 = vmatprep.subr.bf16.mxu0 0
        %4448 = vmatpush1.bf16.xpose.msra.mxu0 %v4428
        %4449 = vmatprep.subr.bf16.mxu0 0
        %4450 = vmatpush1.bf16.xpose.msra.mxu0 %v4431
        %4451 = vmatprep.subr.bf16.mxu0 0
        %4452 = vmatpush1.bf16.xpose.msra.mxu0 %v4434
        %4453 = vmatprep.subr.bf16.mxu0 0
        %4454 = vmatpush1.bf16.xpose.msra.mxu0 %v4437
        %4455 = vmatprep.subr.bf16.mxu0 0
        %4456 = vmatpush1.bf16.xpose.msra.mxu0 %v4440
        %4457 = vmatprep.subr.bf16.mxu0 0
        %4458 = vmatpush1.bf16.xpose.msra.mxu0 %v4443
        %4459 = vmatprep.subr.bf16.mxu0 0
        %4460 = vmatpush1.bf16.xpose.msra.mxu0 0
        %4461 = vmatprep.subr.bf16.mxu0 0
        %4462 = vmatpush1.bf16.xpose.msra.mxu0 0
        %4463 = vmatprep.subr.bf16.mxu0 0
        %4464 = vmatpush1.bf16.xpose.msra.mxu0 0
        %4465 = vmatprep.subr.bf16.mxu0 0
        %4466 = vmatpush1.bf16.xpose.msra.mxu0 0
        %4467 = vmatprep.subr.bf16.mxu0 0
        %4468 = vmatpush1.bf16.xpose.msra.mxu0 0
        %4469 = vmatprep.subr.bf16.mxu0 0
        %4470 = vmatpush1.bf16.xpose.msra.mxu0 0
        %4471 = vmatprep.subr.bf16.mxu0 0
        %4472 = vmatpush1.bf16.xpose.msra.mxu0 0
        %4473 = vmatprep.subr.bf16.mxu0 0
        %4474 = vmatpush1.bf16.xpose.msra.mxu0 0
        %4475 = vmatprep.subr.bf16.mxu0 0
        %4476 = vmatpush1.bf16.xpose.msra.mxu0 0
        %4477 = vmatprep.mubr.bf16.mxu0 0
        %4478 = vmatmul.mubr.bf16.gmra.mrb[0].mxu0 %v4422
        %v4479 = vpop.f32.mrb[0].mxu0
        %v4480 = vadd.f32 0.0, %v4479
        %v4481 = vpop.f32.mrb[0].mxu0
        %v4482 = vpop.f32.mrb[0].mxu0
        %v4483 = vpop.f32.mrb[0].mxu0
        %4484 = vdwg.mxu0
        %v4485 = vmul.f32 %v4480, 0.25
        %v4486 = vadd.f32 %v4485, %v2384
        %v4487 = vsel %vm2387, %v4486, -inf
        %4488 = vmax.xlane.f32.xlu0 %v4487
        %v4489 = vpop.xlane.xlu0 %4488
        %v4490 = vsub.f32 %v4486, %v4489
        %v4491 = vmul.f32 %v4490, 1.442695
        %v4492 = vpow.pop %v4491
        %v4493 = vsel %vm2387, %v4492, 0.0
        %4494 = vadd.xlane.f32.xlu0 %v4493
        %v4495 = vpop.xlane.xlu0 %4494
        %v4496 = vrcp.pop %v4495
        %v4497 = vmul.f32 %v4492, %v4496
        %v4498 = vpack.c.bf16 %v4497, %v4497
        %v4500 = vsel %vm2387, %v4498, 0
        %v4503 = vand.u32 %v4420, %v2406
        %4505 = vmatprep.subr.bf16.mxu0 0
        %4506 = vmatpush1.bf16.msra.mxu0 %v4414
        %4507 = vmatprep.subr.bf16.mxu0 0
        %4508 = vmatpush1.bf16.msra.mxu0 %v4415
        %4509 = vmatprep.subr.bf16.mxu0 0
        %4510 = vmatpush1.bf16.msra.mxu0 %v4416
        %4511 = vmatprep.subr.bf16.mxu0 0
        %4512 = vmatpush1.bf16.msra.mxu0 %v4417
        %4513 = vmatprep.subr.bf16.mxu0 0
        %4514 = vmatpush1.bf16.msra.mxu0 %v4418
        %4515 = vmatprep.subr.bf16.mxu0 0
        %4516 = vmatpush1.bf16.msra.mxu0 %v4419
        %4517 = vmatprep.subr.bf16.mxu0 0
        %4518 = vmatpush1.bf16.msra.mxu0 %v4503
        %4519 = vmatprep.subr.bf16.mxu0 0
        %4520 = vmatpush1.bf16.msra.mxu0 0
        %4521 = vmatprep.subr.bf16.mxu0 0
        %4522 = vmatpush1.bf16.msra.mxu0 0
        %4523 = vmatprep.subr.bf16.mxu0 0
        %4524 = vmatpush1.bf16.msra.mxu0 0
        %4525 = vmatprep.subr.bf16.mxu0 0
        %4526 = vmatpush1.bf16.msra.mxu0 0
        %4527 = vmatprep.subr.bf16.mxu0 0
        %4528 = vmatpush1.bf16.msra.mxu0 0
        %4529 = vmatprep.subr.bf16.mxu0 0
        %4530 = vmatpush1.bf16.msra.mxu0 0
        %4531 = vmatprep.subr.bf16.mxu0 0
        %4532 = vmatpush1.bf16.msra.mxu0 0
        %4533 = vmatprep.subr.bf16.mxu0 0
        %4534 = vmatpush1.bf16.msra.mxu0 0
        %4535 = vmatprep.subr.bf16.mxu0 0
        %4536 = vmatpush1.bf16.msra.mxu0 0
        %4537 = vmatprep.mubr.bf16.mxu0 0
        %4538 = vmatmul.mubr.bf16.gmra.mrb[0].mxu0 %v4500
        %v4539 = vpop.f32.mrb[0].mxu0
        %v4540 = vadd.f32 0.0, %v4539
        %v4541 = vpop.f32.mrb[0].mxu0
        %v4542 = vpop.f32.mrb[0].mxu0
        %v4543 = vpop.f32.mrb[0].mxu0
        %4544 = vdwg.mxu0
        %4546 = vrot.lane.b32.xlu0 %v4406, 112
        %v4547 = vpop.permute.xlu0 %4546
        %4555 = vrot.lane.b32.xlu0 %v4407, 112
        %v4556 = vpop.permute.xlu0 %4555
        %4557 = vrot.lane.b32.xlu0 %v4408, 112
        %v4558 = vpop.permute.xlu0 %4557
        %4559 = vrot.lane.b32.xlu0 %v4409, 112
        %v4560 = vpop.permute.xlu0 %4559
        %4561 = vrot.lane.b32.xlu0 %v4410, 112
        %v4562 = vpop.permute.xlu0 %4561
        %4563 = vrot.lane.b32.xlu0 %v4411, 112
        %v4564 = vpop.permute.xlu0 %4563
        %4565 = vrot.lane.b32.xlu0 %v4412, 112
        %v4566 = vpop.permute.xlu0 %4565
        %4567 = vrot.lane.b32.xlu0 %v4413, 112
        %v4568 = vpop.permute.xlu0 %4567
        %v4570 = vsel %vm1348, %v4547, 0
        %v4573 = vsel %vm1348, %v4556, 0
        %v4576 = vsel %vm1348, %v4558, 0
        %v4579 = vsel %vm1348, %v4560, 0
        %v4582 = vsel %vm1348, %v4562, 0
        %v4585 = vsel %vm1348, %v4564, 0
        %v4588 = vsel %vm1348, %v4566, 0
        %v4591 = vsel %vm1348, %v4568, 0
        %4593 = vmatprep.subr.bf16.mxu0 0
        %4594 = vmatpush1.bf16.xpose.msra.mxu0 %v4573
        %4595 = vmatprep.subr.bf16.mxu0 0
        %4596 = vmatpush1.bf16.xpose.msra.mxu0 %v4576
        %4597 = vmatprep.subr.bf16.mxu0 0
        %4598 = vmatpush1.bf16.xpose.msra.mxu0 %v4579
        %4599 = vmatprep.subr.bf16.mxu0 0
        %4600 = vmatpush1.bf16.xpose.msra.mxu0 %v4582
        %4601 = vmatprep.subr.bf16.mxu0 0
        %4602 = vmatpush1.bf16.xpose.msra.mxu0 %v4585
        %4603 = vmatprep.subr.bf16.mxu0 0
        %4604 = vmatpush1.bf16.xpose.msra.mxu0 %v4588
        %4605 = vmatprep.subr.bf16.mxu0 0
        %4606 = vmatpush1.bf16.xpose.msra.mxu0 %v4591
        %4607 = vmatprep.subr.bf16.mxu0 0
        %4608 = vmatpush1.bf16.xpose.msra.mxu0 0
        %4609 = vmatprep.subr.bf16.mxu0 0
        %4610 = vmatpush1.bf16.xpose.msra.mxu0 0
        %4611 = vmatprep.subr.bf16.mxu0 0
        %4612 = vmatpush1.bf16.xpose.msra.mxu0 0
        %4613 = vmatprep.subr.bf16.mxu0 0
        %4614 = vmatpush1.bf16.xpose.msra.mxu0 0
        %4615 = vmatprep.subr.bf16.mxu0 0
        %4616 = vmatpush1.bf16.xpose.msra.mxu0 0
        %4617 = vmatprep.subr.bf16.mxu0 0
        %4618 = vmatpush1.bf16.xpose.msra.mxu0 0
        %4619 = vmatprep.subr.bf16.mxu0 0
        %4620 = vmatpush1.bf16.xpose.msra.mxu0 0
        %4621 = vmatprep.subr.bf16.mxu0 0
        %4622 = vmatpush1.bf16.xpose.msra.mxu0 0
        %4623 = vmatprep.subr.bf16.mxu0 0
        %4624 = vmatpush1.bf16.xpose.msra.mxu0 0
        %4625 = vmatprep.mubr.bf16.mxu0 0
        %4626 = vmatmul.mubr.bf16.gmra.mrb[0].mxu0 %v4570
        %v4627 = vpop.f32.mrb[0].mxu0
        %v4628 = vadd.f32 0.0, %v4627
        %v4629 = vpop.f32.mrb[0].mxu0
        %v4630 = vpop.f32.mrb[0].mxu0
        %v4631 = vpop.f32.mrb[0].mxu0
        %4632 = vdwg.mxu0
        %v4633 = vmul.f32 %v4628, 0.25
        %v4634 = vadd.f32 %v4633, %v2384
        %v4635 = vsel %vm2387, %v4634, -inf
        %4636 = vmax.xlane.f32.xlu0 %v4635
        %v4637 = vpop.xlane.xlu0 %4636
        %v4638 = vsub.f32 %v4634, %v4637
        %v4639 = vmul.f32 %v4638, 1.442695
        %v4640 = vpow.pop %v4639
        %v4641 = vsel %vm2387, %v4640, 0.0
        %4642 = vadd.xlane.f32.xlu0 %v4641
        %v4643 = vpop.xlane.xlu0 %4642
        %v4644 = vrcp.pop %v4643
        %v4645 = vmul.f32 %v4640, %v4644
        %v4646 = vpack.c.bf16 %v4645, %v4645
        %4654 = vrot.lane.b32.xlu0 %v4414, 112
        %v4655 = vpop.permute.xlu0 %4654
        %4656 = vrot.lane.b32.xlu0 %v4415, 112
        %v4657 = vpop.permute.xlu0 %4656
        %4658 = vrot.lane.b32.xlu0 %v4416, 112
        %v4659 = vpop.permute.xlu0 %4658
        %4660 = vrot.lane.b32.xlu0 %v4417, 112
        %v4661 = vpop.permute.xlu0 %4660
        %4662 = vrot.lane.b32.xlu0 %v4418, 112
        %v4663 = vpop.permute.xlu0 %4662
        %4664 = vrot.lane.b32.xlu0 %v4419, 112
        %v4665 = vpop.permute.xlu0 %4664
        %4666 = vrot.lane.b32.xlu0 %v4420, 112
        %v4667 = vpop.permute.xlu0 %4666
        %v4675 = vsel %vm2387, %v4646, 0
        %v4678 = vand.u32 %v4667, %v2406
        %4680 = vmatprep.subr.bf16.mxu0 0
        %4681 = vmatpush1.bf16.msra.mxu0 %v4655
        %4682 = vmatprep.subr.bf16.mxu0 0
        %4683 = vmatpush1.bf16.msra.mxu0 %v4657
        %4684 = vmatprep.subr.bf16.mxu0 0
        %4685 = vmatpush1.bf16.msra.mxu0 %v4659
        %4686 = vmatprep.subr.bf16.mxu0 0
        %4687 = vmatpush1.bf16.msra.mxu0 %v4661
        %4688 = vmatprep.subr.bf16.mxu0 0
        %4689 = vmatpush1.bf16.msra.mxu0 %v4663
        %4690 = vmatprep.subr.bf16.mxu0 0
        %4691 = vmatpush1.bf16.msra.mxu0 %v4665
        %4692 = vmatprep.subr.bf16.mxu0 0
        %4693 = vmatpush1.bf16.msra.mxu0 %v4678
        %4694 = vmatprep.subr.bf16.mxu0 0
        %4695 = vmatpush1.bf16.msra.mxu0 0
        %4696 = vmatprep.subr.bf16.mxu0 0
        %4697 = vmatpush1.bf16.msra.mxu0 0
        %4698 = vmatprep.subr.bf16.mxu0 0
        %4699 = vmatpush1.bf16.msra.mxu0 0
        %4700 = vmatprep.subr.bf16.mxu0 0
        %4701 = vmatpush1.bf16.msra.mxu0 0
        %4702 = vmatprep.subr.bf16.mxu0 0
        %4703 = vmatpush1.bf16.msra.mxu0 0
        %4704 = vmatprep.subr.bf16.mxu0 0
        %4705 = vmatpush1.bf16.msra.mxu0 0
        %4706 = vmatprep.subr.bf16.mxu0 0
        %4707 = vmatpush1.bf16.msra.mxu0 0
        %4708 = vmatprep.subr.bf16.mxu0 0
        %4709 = vmatpush1.bf16.msra.mxu0 0
        %4710 = vmatprep.subr.bf16.mxu0 0
        %4711 = vmatpush1.bf16.msra.mxu0 0
        %4712 = vmatprep.mubr.bf16.mxu0 0
        %4713 = vmatmul.mubr.bf16.gmra.mrb[0].mxu0 %v4675
        %v4714 = vpop.f32.mrb[0].mxu0
        %v4715 = vadd.f32 0.0, %v4714
        %v4716 = vpop.f32.mrb[0].mxu0
        %v4717 = vpop.f32.mrb[0].mxu0
        %v4718 = vpop.f32.mrb[0].mxu0
        %4719 = vdwg.mxu0
        %4720 = vrot.lane.b32.xlu0 %v4406, 96
        %v4721 = vpop.permute.xlu0 %4720
        %4722 = vrot.lane.b32.xlu0 %v4407, 96
        %v4723 = vpop.permute.xlu0 %4722
        %4724 = vrot.lane.b32.xlu0 %v4408, 96
        %v4725 = vpop.permute.xlu0 %4724
        %4726 = vrot.lane.b32.xlu0 %v4409, 96
        %v4727 = vpop.permute.xlu0 %4726
        %4728 = vrot.lane.b32.xlu0 %v4410, 96
        %v4729 = vpop.permute.xlu0 %4728
        %4730 = vrot.lane.b32.xlu0 %v4411, 96
        %v4731 = vpop.permute.xlu0 %4730
        %4732 = vrot.lane.b32.xlu0 %v4412, 96
        %v4733 = vpop.permute.xlu0 %4732
        %4734 = vrot.lane.b32.xlu0 %v4413, 96
        %v4735 = vpop.permute.xlu0 %4734
        %v4737 = vsel %vm1348, %v4721, 0
        %v4740 = vsel %vm1348, %v4723, 0
        %v4743 = vsel %vm1348, %v4725, 0
        %v4746 = vsel %vm1348, %v4727, 0
        %v4749 = vsel %vm1348, %v4729, 0
        %v4752 = vsel %vm1348, %v4731, 0
        %v4755 = vsel %vm1348, %v4733, 0
        %v4758 = vsel %vm1348, %v4735, 0
        %4760 = vmatprep.subr.bf16.mxu0 0
        %4761 = vmatpush1.bf16.xpose.msra.mxu0 %v4740
        %4762 = vmatprep.subr.bf16.mxu0 0
        %4763 = vmatpush1.bf16.xpose.msra.mxu0 %v4743
        %4764 = vmatprep.subr.bf16.mxu0 0
        %4765 = vmatpush1.bf16.xpose.msra.mxu0 %v4746
        %4766 = vmatprep.subr.bf16.mxu0 0
        %4767 = vmatpush1.bf16.xpose.msra.mxu0 %v4749
        %4768 = vmatprep.subr.bf16.mxu0 0
        %4769 = vmatpush1.bf16.xpose.msra.mxu0 %v4752
        %4770 = vmatprep.subr.bf16.mxu0 0
        %4771 = vmatpush1.bf16.xpose.msra.mxu0 %v4755
        %4772 = vmatprep.subr.bf16.mxu0 0
        %4773 = vmatpush1.bf16.xpose.msra.mxu0 %v4758
        %4774 = vmatprep.subr.bf16.mxu0 0
        %4775 = vmatpush1.bf16.xpose.msra.mxu0 0
        %4776 = vmatprep.subr.bf16.mxu0 0
        %4777 = vmatpush1.bf16.xpose.msra.mxu0 0
        %4778 = vmatprep.subr.bf16.mxu0 0
        %4779 = vmatpush1.bf16.xpose.msra.mxu0 0
        %4780 = vmatprep.subr.bf16.mxu0 0
        %4781 = vmatpush1.bf16.xpose.msra.mxu0 0
        %4782 = vmatprep.subr.bf16.mxu0 0
        %4783 = vmatpush1.bf16.xpose.msra.mxu0 0
        %4784 = vmatprep.subr.bf16.mxu0 0
        %4785 = vmatpush1.bf16.xpose.msra.mxu0 0
        %4786 = vmatprep.subr.bf16.mxu0 0
        %4787 = vmatpush1.bf16.xpose.msra.mxu0 0
        %4788 = vmatprep.subr.bf16.mxu0 0
        %4789 = vmatpush1.bf16.xpose.msra.mxu0 0
        %4790 = vmatprep.subr.bf16.mxu0 0
        %4791 = vmatpush1.bf16.xpose.msra.mxu0 0
        %4792 = vmatprep.mubr.bf16.mxu0 0
        %4793 = vmatmul.mubr.bf16.gmra.mrb[0].mxu0 %v4737
        %v4794 = vpop.f32.mrb[0].mxu0
        %v4795 = vadd.f32 0.0, %v4794
        %v4796 = vpop.f32.mrb[0].mxu0
        %v4797 = vpop.f32.mrb[0].mxu0
        %v4798 = vpop.f32.mrb[0].mxu0
        %4799 = vdwg.mxu0
        %v4800 = vmul.f32 %v4795, 0.25
        %v4801 = vadd.f32 %v4800, %v2384
        %v4802 = vsel %vm2387, %v4801, -inf
        %4803 = vmax.xlane.f32.xlu0 %v4802
        %v4804 = vpop.xlane.xlu0 %4803
        %v4805 = vsub.f32 %v4801, %v4804
        %v4806 = vmul.f32 %v4805, 1.442695
        %v4807 = vpow.pop %v4806
        %v4808 = vsel %vm2387, %v4807, 0.0
        %4809 = vadd.xlane.f32.xlu0 %v4808
        %v4810 = vpop.xlane.xlu0 %4809
        %v4811 = vrcp.pop %v4810
        %v4812 = vmul.f32 %v4807, %v4811
        %v4813 = vpack.c.bf16 %v4812, %v4812
        %4814 = vrot.lane.b32.xlu0 %v4414, 96
        %v4815 = vpop.permute.xlu0 %4814
        %4816 = vrot.lane.b32.xlu0 %v4415, 96
        %v4817 = vpop.permute.xlu0 %4816
        %4818 = vrot.lane.b32.xlu0 %v4416, 96
        %v4819 = vpop.permute.xlu0 %4818
        %4820 = vrot.lane.b32.xlu0 %v4417, 96
        %v4821 = vpop.permute.xlu0 %4820
        %4822 = vrot.lane.b32.xlu0 %v4418, 96
        %v4823 = vpop.permute.xlu0 %4822
        %4824 = vrot.lane.b32.xlu0 %v4419, 96
        %v4825 = vpop.permute.xlu0 %4824
        %4826 = vrot.lane.b32.xlu0 %v4420, 96
        %v4827 = vpop.permute.xlu0 %4826
        %v4835 = vsel %vm2387, %v4813, 0
        %v4838 = vand.u32 %v4827, %v2406
        %4840 = vmatprep.subr.bf16.mxu0 0
        %4841 = vmatpush1.bf16.msra.mxu0 %v4815
        %4842 = vmatprep.subr.bf16.mxu0 0
        %4843 = vmatpush1.bf16.msra.mxu0 %v4817
        %4844 = vmatprep.subr.bf16.mxu0 0
        %4845 = vmatpush1.bf16.msra.mxu0 %v4819
        %4846 = vmatprep.subr.bf16.mxu0 0
        %4847 = vmatpush1.bf16.msra.mxu0 %v4821
        %4848 = vmatprep.subr.bf16.mxu0 0
        %4849 = vmatpush1.bf16.msra.mxu0 %v4823
        %4850 = vmatprep.subr.bf16.mxu0 0
        %4851 = vmatpush1.bf16.msra.mxu0 %v4825
        %4852 = vmatprep.subr.bf16.mxu0 0
        %4853 = vmatpush1.bf16.msra.mxu0 %v4838
        %4854 = vmatprep.subr.bf16.mxu0 0
        %4855 = vmatpush1.bf16.msra.mxu0 0
        %4856 = vmatprep.subr.bf16.mxu0 0
        %4857 = vmatpush1.bf16.msra.mxu0 0
        %4858 = vmatprep.subr.bf16.mxu0 0
        %4859 = vmatpush1.bf16.msra.mxu0 0
        %4860 = vmatprep.subr.bf16.mxu0 0
        %4861 = vmatpush1.bf16.msra.mxu0 0
        %4862 = vmatprep.subr.bf16.mxu0 0
        %4863 = vmatpush1.bf16.msra.mxu0 0
        %4864 = vmatprep.subr.bf16.mxu0 0
        %4865 = vmatpush1.bf16.msra.mxu0 0
        %4866 = vmatprep.subr.bf16.mxu0 0
        %4867 = vmatpush1.bf16.msra.mxu0 0
        %4868 = vmatprep.subr.bf16.mxu0 0
        %4869 = vmatpush1.bf16.msra.mxu0 0
        %4870 = vmatprep.subr.bf16.mxu0 0
        %4871 = vmatpush1.bf16.msra.mxu0 0
        %4872 = vmatprep.mubr.bf16.mxu0 0
        %4873 = vmatmul.mubr.bf16.gmra.mrb[0].mxu0 %v4835
        %v4874 = vpop.f32.mrb[0].mxu0
        %v4875 = vadd.f32 0.0, %v4874
        %v4876 = vpop.f32.mrb[0].mxu0
        %v4877 = vpop.f32.mrb[0].mxu0
        %v4878 = vpop.f32.mrb[0].mxu0
        %4879 = vdwg.mxu0
        %4880 = vrot.lane.b32.xlu0 %v4406, 80
        %v4881 = vpop.permute.xlu0 %4880
        %4882 = vrot.lane.b32.xlu0 %v4407, 80
        %v4883 = vpop.permute.xlu0 %4882
        %4884 = vrot.lane.b32.xlu0 %v4408, 80
        %v4885 = vpop.permute.xlu0 %4884
        %4886 = vrot.lane.b32.xlu0 %v4409, 80
        %v4887 = vpop.permute.xlu0 %4886
        %4888 = vrot.lane.b32.xlu0 %v4410, 80
        %v4889 = vpop.permute.xlu0 %4888
        %4890 = vrot.lane.b32.xlu0 %v4411, 80
        %v4891 = vpop.permute.xlu0 %4890
        %4892 = vrot.lane.b32.xlu0 %v4412, 80
        %v4893 = vpop.permute.xlu0 %4892
        %4894 = vrot.lane.b32.xlu0 %v4413, 80
        %v4895 = vpop.permute.xlu0 %4894
        %v4897 = vsel %vm1348, %v4881, 0
        %v4900 = vsel %vm1348, %v4883, 0
        %v4903 = vsel %vm1348, %v4885, 0
        %v4906 = vsel %vm1348, %v4887, 0
        %v4909 = vsel %vm1348, %v4889, 0
        %v4912 = vsel %vm1348, %v4891, 0
        %v4915 = vsel %vm1348, %v4893, 0
        %v4918 = vsel %vm1348, %v4895, 0
        %4920 = vmatprep.subr.bf16.mxu0 0
        %4921 = vmatpush1.bf16.xpose.msra.mxu0 %v4900
        %4922 = vmatprep.subr.bf16.mxu0 0
        %4923 = vmatpush1.bf16.xpose.msra.mxu0 %v4903
        %4924 = vmatprep.subr.bf16.mxu0 0
        %4925 = vmatpush1.bf16.xpose.msra.mxu0 %v4906
        %4926 = vmatprep.subr.bf16.mxu0 0
        %4927 = vmatpush1.bf16.xpose.msra.mxu0 %v4909
        %4928 = vmatprep.subr.bf16.mxu0 0
        %4929 = vmatpush1.bf16.xpose.msra.mxu0 %v4912
        %4930 = vmatprep.subr.bf16.mxu0 0
        %4931 = vmatpush1.bf16.xpose.msra.mxu0 %v4915
        %4932 = vmatprep.subr.bf16.mxu0 0
        %4933 = vmatpush1.bf16.xpose.msra.mxu0 %v4918
        %4934 = vmatprep.subr.bf16.mxu0 0
        %4935 = vmatpush1.bf16.xpose.msra.mxu0 0
        %4936 = vmatprep.subr.bf16.mxu0 0
        %4937 = vmatpush1.bf16.xpose.msra.mxu0 0
        %4938 = vmatprep.subr.bf16.mxu0 0
        %4939 = vmatpush1.bf16.xpose.msra.mxu0 0
        %4940 = vmatprep.subr.bf16.mxu0 0
        %4941 = vmatpush1.bf16.xpose.msra.mxu0 0
        %4942 = vmatprep.subr.bf16.mxu0 0
        %4943 = vmatpush1.bf16.xpose.msra.mxu0 0
        %4944 = vmatprep.subr.bf16.mxu0 0
        %4945 = vmatpush1.bf16.xpose.msra.mxu0 0
        %4946 = vmatprep.subr.bf16.mxu0 0
        %4947 = vmatpush1.bf16.xpose.msra.mxu0 0
        %4948 = vmatprep.subr.bf16.mxu0 0
        %4949 = vmatpush1.bf16.xpose.msra.mxu0 0
        %4950 = vmatprep.subr.bf16.mxu0 0
        %4951 = vmatpush1.bf16.xpose.msra.mxu0 0
        %4952 = vmatprep.mubr.bf16.mxu0 0
        %4953 = vmatmul.mubr.bf16.gmra.mrb[0].mxu0 %v4897
        %v4954 = vpop.f32.mrb[0].mxu0
        %v4955 = vadd.f32 0.0, %v4954
        %v4956 = vpop.f32.mrb[0].mxu0
        %v4957 = vpop.f32.mrb[0].mxu0
        %v4958 = vpop.f32.mrb[0].mxu0
        %4959 = vdwg.mxu0
        %v4960 = vmul.f32 %v4955, 0.25
        %v4961 = vadd.f32 %v4960, %v2384
        %v4962 = vsel %vm2387, %v4961, -inf
        %4963 = vmax.xlane.f32.xlu0 %v4962
        %v4964 = vpop.xlane.xlu0 %4963
        %v4965 = vsub.f32 %v4961, %v4964
        %v4966 = vmul.f32 %v4965, 1.442695
        %v4967 = vpow.pop %v4966
        %v4968 = vsel %vm2387, %v4967, 0.0
        %4969 = vadd.xlane.f32.xlu0 %v4968
        %v4970 = vpop.xlane.xlu0 %4969
        %v4971 = vrcp.pop %v4970
        %v4972 = vmul.f32 %v4967, %v4971
        %v4973 = vpack.c.bf16 %v4972, %v4972
        %4974 = vrot.lane.b32.xlu0 %v4414, 80
        %v4975 = vpop.permute.xlu0 %4974
        %4976 = vrot.lane.b32.xlu0 %v4415, 80
        %v4977 = vpop.permute.xlu0 %4976
        %4978 = vrot.lane.b32.xlu0 %v4416, 80
        %v4979 = vpop.permute.xlu0 %4978
        %4980 = vrot.lane.b32.xlu0 %v4417, 80
        %v4981 = vpop.permute.xlu0 %4980
        %4982 = vrot.lane.b32.xlu0 %v4418, 80
        %v4983 = vpop.permute.xlu0 %4982
        %4984 = vrot.lane.b32.xlu0 %v4419, 80
        %v4985 = vpop.permute.xlu0 %4984
        %4986 = vrot.lane.b32.xlu0 %v4420, 80
        %v4987 = vpop.permute.xlu0 %4986
        %v4995 = vsel %vm2387, %v4973, 0
        %v4998 = vand.u32 %v4987, %v2406
        %5000 = vmatprep.subr.bf16.mxu0 0
        %5001 = vmatpush1.bf16.msra.mxu0 %v4975
        %5002 = vmatprep.subr.bf16.mxu0 0
        %5003 = vmatpush1.bf16.msra.mxu0 %v4977
        %5004 = vmatprep.subr.bf16.mxu0 0
        %5005 = vmatpush1.bf16.msra.mxu0 %v4979
        %5006 = vmatprep.subr.bf16.mxu0 0
        %5007 = vmatpush1.bf16.msra.mxu0 %v4981
        %5008 = vmatprep.subr.bf16.mxu0 0
        %5009 = vmatpush1.bf16.msra.mxu0 %v4983
        %5010 = vmatprep.subr.bf16.mxu0 0
        %5011 = vmatpush1.bf16.msra.mxu0 %v4985
        %5012 = vmatprep.subr.bf16.mxu0 0
        %5013 = vmatpush1.bf16.msra.mxu0 %v4998
        %5014 = vmatprep.subr.bf16.mxu0 0
        %5015 = vmatpush1.bf16.msra.mxu0 0
        %5016 = vmatprep.subr.bf16.mxu0 0
        %5017 = vmatpush1.bf16.msra.mxu0 0
        %5018 = vmatprep.subr.bf16.mxu0 0
        %5019 = vmatpush1.bf16.msra.mxu0 0
        %5020 = vmatprep.subr.bf16.mxu0 0
        %5021 = vmatpush1.bf16.msra.mxu0 0
        %5022 = vmatprep.subr.bf16.mxu0 0
        %5023 = vmatpush1.bf16.msra.mxu0 0
        %5024 = vmatprep.subr.bf16.mxu0 0
        %5025 = vmatpush1.bf16.msra.mxu0 0
        %5026 = vmatprep.subr.bf16.mxu0 0
        %5027 = vmatpush1.bf16.msra.mxu0 0
        %5028 = vmatprep.subr.bf16.mxu0 0
        %5029 = vmatpush1.bf16.msra.mxu0 0
        %5030 = vmatprep.subr.bf16.mxu0 0
        %5031 = vmatpush1.bf16.msra.mxu0 0
        %5032 = vmatprep.mubr.bf16.mxu0 0
        %5033 = vmatmul.mubr.bf16.gmra.mrb[0].mxu0 %v4995
        %v5034 = vpop.f32.mrb[0].mxu0
        %v5035 = vadd.f32 0.0, %v5034
        %v5036 = vpop.f32.mrb[0].mxu0
        %v5037 = vpop.f32.mrb[0].mxu0
        %v5038 = vpop.f32.mrb[0].mxu0
        %5039 = vdwg.mxu0
        %5041 = vrot.lane.b32.xlu0 %v4715, 16
        %v5042 = vpop.permute.xlu0 %5041
        %5045 = vrot.lane.b32.xlu0 %v4875, 32
        %v5046 = vpop.permute.xlu0 %5045
        %5049 = vrot.lane.b32.xlu0 %v5035, 48
        %v5050 = vpop.permute.xlu0 %5049
        %v5052 = vsel %vm1348, %v4540, %v5042
        %v5053 = vsel %vm1807, %v5052, %v5046
        %v5054 = vsel %vm1809, %v5053, %v5050
        %v5055 = vpack.c.bf16 %v5054, %v5054
        %v5057 = vlaneseq
        %v5058 = vshrl.u32 %v5057, 7
        %v5059 = vsub.s32 0, %v5058
        %v5060 = vrot.slane %v3293, %v5059
        %v5070 = vunpack.c.l.b16 %v3312
        %v5071 = vunpack.c.l.b16 %v3313
        %v5072 = vunpack.c.l.b16 %v3314
        %v5073 = vunpack.c.l.b16 %v3315
        %v5074 = vunpack.c.l.b16 %v3316
        %v5075 = vunpack.c.l.b16 %v3317
        %v5076 = vunpack.c.l.b16 %v3318
        %v5077 = vunpack.c.l.b16 %v3319
        %v5078 = vpack.c.b16 %v5071, %v5070
        %v5079 = vpack.c.b16 %v5073, %v5072
        %v5080 = vpack.c.b16 %v5075, %v5074
        %v5081 = vpack.c.b16 %v5077, %v5076
        %v5087 = vsel %vm1298, %v5055, 0
        %5089 = vmatprep.subr.bf16.mxu0 0
        %5090 = vmatpush1.bf16.msra.mxu0 %v5078
        %5091 = vmatprep.subr.bf16.mxu0 0
        %5092 = vmatpush1.bf16.msra.mxu0 %v5079
        %5093 = vmatprep.subr.bf16.mxu0 0
        %5094 = vmatpush1.bf16.msra.mxu0 %v5080
        %5095 = vmatprep.subr.bf16.mxu0 0
        %5096 = vmatpush1.bf16.msra.mxu0 %v5081
        %5097 = vmatprep.subr.bf16.mxu0 0
        %5098 = vmatpush1.bf16.msra.mxu0 0
        %5099 = vmatprep.subr.bf16.mxu0 0
        %5100 = vmatpush1.bf16.msra.mxu0 0
        %5101 = vmatprep.subr.bf16.mxu0 0
        %5102 = vmatpush1.bf16.msra.mxu0 0
        %5103 = vmatprep.subr.bf16.mxu0 0
        %5104 = vmatpush1.bf16.msra.mxu0 0
        %5105 = vmatprep.subr.bf16.mxu0 0
        %5106 = vmatpush1.bf16.msra.mxu0 0
        %5107 = vmatprep.subr.bf16.mxu0 0
        %5108 = vmatpush1.bf16.msra.mxu0 0
        %5109 = vmatprep.subr.bf16.mxu0 0
        %5110 = vmatpush1.bf16.msra.mxu0 0
        %5111 = vmatprep.subr.bf16.mxu0 0
        %5112 = vmatpush1.bf16.msra.mxu0 0
        %5113 = vmatprep.subr.bf16.mxu0 0
        %5114 = vmatpush1.bf16.msra.mxu0 0
        %5115 = vmatprep.subr.bf16.mxu0 0
        %5116 = vmatpush1.bf16.msra.mxu0 0
        %5117 = vmatprep.subr.bf16.mxu0 0
        %5118 = vmatpush1.bf16.msra.mxu0 0
        %5119 = vmatprep.subr.bf16.mxu0 0
        %5120 = vmatpush1.bf16.msra.mxu0 0
        %5121 = vmatprep.mubr.bf16.mxu0 0
        %5122 = vmatmul.mubr.bf16.gmra.mrb[0].mxu0 %v5087
        %v5123 = vpop.f32.mrb[0].mxu0
        %v5124 = vadd.f32 %v5060, %v5123
        %v5125 = vpop.f32.mrb[0].mxu0
        %v5126 = vpop.f32.mrb[0].mxu0
        %v5127 = vpop.f32.mrb[0].mxu0
        %5128 = vdwg.mxu0
        %v5129 = vadd.f32 %v4095, %v5124
        %v5130 = vsel %vm1298, %v5129, 0.0
        %5131 = vadd.xlane.f32.xlu0 %v5130
        %v5132 = vpop.xlane.xlu0 %5131
        %v5133 = vmul.f32 %v5132, %v1889
        %v5134 = vsub.f32 %v5129, %v5133
        %v5135 = vmul.f32 %v5134, %v5134
        %v5136 = vsel %vm1298, %v5135, 0.0
        %5137 = vadd.xlane.f32.xlu0 %v5136
        %v5138 = vpop.xlane.xlu0 %5137
        %v5139 = vmul.f32 %v5138, %v1889
        %v5140 = vadd.f32 %v5139, 1e-05
        %v5141 = vrsqrt.pop %v5140
        %v5142 = vmul.f32 %v5134, %v5141
        %v5144 = vlaneseq
        %v5145 = vshrl.u32 %v5144, 7
        %v5146 = vsub.s32 0, %v5145
        %v5147 = vrot.slane %v3301, %v5146
        %v5149 = vmul.f32 %v5142, %v5147
        %v5151 = vlaneseq
        %v5152 = vshrl.u32 %v5151, 7
        %v5153 = vsub.s32 0, %v5152
        %v5154 = vrot.slane %v3299, %v5153
        %v5156 = vadd.f32 %v5149, %v5154
        %v5157 = vadd.f32 %v4095, %v5156
        %v5158 = vsel %vm1298, %v5157, 0.0
        %5159 = vadd.xlane.f32.xlu0 %v5158
        %v5160 = vpop.xlane.xlu0 %5159
        %v5161 = vmul.f32 %v5160, %v1889
        %v5162 = vsub.f32 %v5157, %v5161
        %v5163 = vmul.f32 %v5162, %v5162
        %v5164 = vsel %vm1298, %v5163, 0.0
        %5165 = vadd.xlane.f32.xlu0 %v5164
        %v5166 = vpop.xlane.xlu0 %5165
        %v5167 = vmul.f32 %v5166, %v1889
        %v5168 = vadd.f32 %v5167, 1e-05
        %v5169 = vrsqrt.pop %v5168
        %v5170 = vmul.f32 %v5162, %v5169
        %v5172 = vlaneseq
        %v5173 = vshrl.u32 %v5172, 7
        %v5174 = vsub.s32 0, %v5173
        %v5175 = vrot.slane %v3345, %v5174
        %v5177 = vmul.f32 %v5170, %v5175
        %v5179 = vlaneseq
        %v5180 = vshrl.u32 %v5179, 7
        %v5181 = vsub.s32 0, %v5180
        %v5182 = vrot.slane %v3343, %v5181
        %v5184 = vadd.f32 %v5177, %v5182
        %v5185 = vmul.f32 %v5184, %v1945
        %v5186 = vpack.c.bf16 %v5185, %v5185
        %v5188 = vlaneseq
        %v5189 = vshrl.u32 %v5188, 7
        %v5190 = vsub.s32 0, %v5189
        %v5191 = vrot.slane %v3347, %v5190
        %v5201 = vunpack.c.l.b16 %v3355
        %v5202 = vunpack.c.l.b16 %v3356
        %v5203 = vunpack.c.l.b16 %v3357
        %v5204 = vunpack.c.l.b16 %v3358
        %v5205 = vunpack.c.l.b16 %v3359
        %v5206 = vunpack.c.l.b16 %v3360
        %v5207 = vunpack.c.l.b16 %v3361
        %v5208 = vunpack.c.l.b16 %v3362
        %v5209 = vpack.c.b16 %v5202, %v5201
        %v5210 = vpack.c.b16 %v5204, %v5203
        %v5211 = vpack.c.b16 %v5206, %v5205
        %v5212 = vpack.c.b16 %v5208, %v5207
        %v5218 = vsel %vm1298, %v5186, 0
        %5220 = vmatprep.subr.bf16.mxu0 0
        %5221 = vmatpush1.bf16.msra.mxu0 %v5209
        %5222 = vmatprep.subr.bf16.mxu0 0
        %5223 = vmatpush1.bf16.msra.mxu0 %v5210
        %5224 = vmatprep.subr.bf16.mxu0 0
        %5225 = vmatpush1.bf16.msra.mxu0 %v5211
        %5226 = vmatprep.subr.bf16.mxu0 0
        %5227 = vmatpush1.bf16.msra.mxu0 %v5212
        %5228 = vmatprep.subr.bf16.mxu0 0
        %5229 = vmatpush1.bf16.msra.mxu0 0
        %5230 = vmatprep.subr.bf16.mxu0 0
        %5231 = vmatpush1.bf16.msra.mxu0 0
        %5232 = vmatprep.subr.bf16.mxu0 0
        %5233 = vmatpush1.bf16.msra.mxu0 0
        %5234 = vmatprep.subr.bf16.mxu0 0
        %5235 = vmatpush1.bf16.msra.mxu0 0
        %5236 = vmatprep.subr.bf16.mxu0 0
        %5237 = vmatpush1.bf16.msra.mxu0 0
        %5238 = vmatprep.subr.bf16.mxu0 0
        %5239 = vmatpush1.bf16.msra.mxu0 0
        %5240 = vmatprep.subr.bf16.mxu0 0
        %5241 = vmatpush1.bf16.msra.mxu0 0
        %5242 = vmatprep.subr.bf16.mxu0 0
        %5243 = vmatpush1.bf16.msra.mxu0 0
        %5244 = vmatprep.subr.bf16.mxu0 0
        %5245 = vmatpush1.bf16.msra.mxu0 0
        %5246 = vmatprep.subr.bf16.mxu0 0
        %5247 = vmatpush1.bf16.msra.mxu0 0
        %5248 = vmatprep.subr.bf16.mxu0 0
        %5249 = vmatpush1.bf16.msra.mxu0 0
        %5250 = vmatprep.subr.bf16.mxu0 0
        %5251 = vmatpush1.bf16.msra.mxu0 0
        %5252 = vmatprep.mubr.bf16.mxu0 0
        %5253 = vmatmul.mubr.bf16.gmra.mrb[0].mxu0 %v5218
        %v5254 = vpop.f32.mrb[0].mxu0
        %v5255 = vadd.f32 %v5191, %v5254
        %v5256 = vpop.f32.mrb[0].mxu0
        %v5257 = vpop.f32.mrb[0].mxu0
        %v5258 = vpop.f32.mrb[0].mxu0
        %5259 = vdwg.mxu0
        %v5260 = vmax.f32 %v5255, 0.0
        %v5261 = vpack.c.bf16 %v5260, %v5260
        %v5263 = vlaneseq
        %v5264 = vshrl.u32 %v5263, 7
        %v5265 = vsub.s32 0, %v5264
        %v5266 = vrot.slane %v3349, %v5265
        %v5284 = vunpack.c.l.b16 %v3364
        %v5285 = vunpack.c.l.b16 %v3365
        %v5286 = vunpack.c.l.b16 %v3366
        %v5287 = vunpack.c.l.b16 %v3367
        %v5288 = vunpack.c.l.b16 %v3368
        %v5289 = vunpack.c.l.b16 %v3369
        %v5290 = vunpack.c.l.b16 %v3370
        %v5291 = vunpack.c.l.b16 %v3371
        %v5292 = vunpack.c.l.b16 %v3372
        %v5293 = vunpack.c.l.b16 %v3373
        %v5294 = vunpack.c.l.b16 %v3374
        %v5295 = vunpack.c.l.b16 %v3375
        %v5296 = vunpack.c.l.b16 %v3376
        %v5297 = vunpack.c.l.b16 %v3377
        %v5298 = vunpack.c.l.b16 %v3378
        %v5299 = vunpack.c.l.b16 %v3379
        %v5300 = vpack.c.b16 %v5285, %v5284
        %v5301 = vpack.c.b16 %v5287, %v5286
        %v5302 = vpack.c.b16 %v5289, %v5288
        %v5303 = vpack.c.b16 %v5291, %v5290
        %v5304 = vpack.c.b16 %v5293, %v5292
        %v5305 = vpack.c.b16 %v5295, %v5294
        %v5306 = vpack.c.b16 %v5297, %v5296
        %v5307 = vpack.c.b16 %v5299, %v5298
        %5316 = vmatprep.subr.bf16.mxu0 0
        %5317 = vmatpush1.bf16.msra.mxu0 %v5300
        %5318 = vmatprep.subr.bf16.mxu0 0
        %5319 = vmatpush1.bf16.msra.mxu0 %v5301
        %5320 = vmatprep.subr.bf16.mxu0 0
        %5321 = vmatpush1.bf16.msra.mxu0 %v5302
        %5322 = vmatprep.subr.bf16.mxu0 0
        %5323 = vmatpush1.bf16.msra.mxu0 %v5303
        %5324 = vmatprep.subr.bf16.mxu0 0
        %5325 = vmatpush1.bf16.msra.mxu0 %v5304
        %5326 = vmatprep.subr.bf16.mxu0 0
        %5327 = vmatpush1.bf16.msra.mxu0 %v5305
        %5328 = vmatprep.subr.bf16.mxu0 0
        %5329 = vmatpush1.bf16.msra.mxu0 %v5306
        %5330 = vmatprep.subr.bf16.mxu0 0
        %5331 = vmatpush1.bf16.msra.mxu0 %v5307
        %5332 = vmatprep.subr.bf16.mxu0 0
        %5333 = vmatpush1.bf16.msra.mxu0 0
        %5334 = vmatprep.subr.bf16.mxu0 0
        %5335 = vmatpush1.bf16.msra.mxu0 0
        %5336 = vmatprep.subr.bf16.mxu0 0
        %5337 = vmatpush1.bf16.msra.mxu0 0
        %5338 = vmatprep.subr.bf16.mxu0 0
        %5339 = vmatpush1.bf16.msra.mxu0 0
        %5340 = vmatprep.subr.bf16.mxu0 0
        %5341 = vmatpush1.bf16.msra.mxu0 0
        %5342 = vmatprep.subr.bf16.mxu0 0
        %5343 = vmatpush1.bf16.msra.mxu0 0
        %5344 = vmatprep.subr.bf16.mxu0 0
        %5345 = vmatpush1.bf16.msra.mxu0 0
        %5346 = vmatprep.subr.bf16.mxu0 0
        %5347 = vmatpush1.bf16.msra.mxu0 0
        %5348 = vmatprep.mubr.bf16.mxu0 0
        %5349 = vmatmul.mubr.bf16.gmra.mrb[0].mxu0 %v5261
        %v5350 = vpop.f32.mrb[0].mxu0
        %v5351 = vadd.f32 %v5266, %v5350
        %v5352 = vpop.f32.mrb[0].mxu0
        %v5353 = vpop.f32.mrb[0].mxu0
        %v5354 = vpop.f32.mrb[0].mxu0
        %5355 = vdwg.mxu0
        %v5356 = vadd.f32 %v5185, %v5351
        %v5357 = vsel %vm1298, %v5356, 0.0
        %5358 = vadd.xlane.f32.xlu0 %v5357
        %v5359 = vpop.xlane.xlu0 %5358
        %v5360 = vmul.f32 %v5359, %v1889
        %v5361 = vsub.f32 %v5356, %v5360
        %v5362 = vmul.f32 %v5361, %v5361
        %v5363 = vsel %vm1298, %v5362, 0.0
        %5364 = vadd.xlane.f32.xlu0 %v5363
        %v5365 = vpop.xlane.xlu0 %5364
        %v5366 = vmul.f32 %v5365, %v1889
        %v5367 = vadd.f32 %v5366, 1e-05
        %v5368 = vrsqrt.pop %v5367
        %v5369 = vmul.f32 %v5361, %v5368
        %v5371 = vlaneseq
        %v5372 = vshrl.u32 %v5371, 7
        %v5373 = vsub.s32 0, %v5372
        %v5374 = vrot.slane %v3353, %v5373
        %v5376 = vmul.f32 %v5369, %v5374
        %v5378 = vlaneseq
        %v5379 = vshrl.u32 %v5378, 7
        %v5380 = vsub.s32 0, %v5379
        %v5381 = vrot.slane %v3351, %v5380
        %v5383 = vadd.f32 %v5376, %v5381
        %v5384 = vmul.f32 %v5383, %v1945
        %v5385 = vpack.c.bf16 %v5384, %v5384
        %v5386 = vld [vmem:[%s13] sm:$0xf]
        %v5387 = vld [vmem:[%s13 + $0x4] sm:$0xf]
        %v5388 = vld [vmem:[%s13 + $0x8] sm:$0xf]
        %v5389 = vld [vmem:[%s13 + $0xc] sm:$0xf]
        %v5390 = vld [vmem:[%s13 + $0x10] sm:$0xf]
        %v5391 = vld [vmem:[%s13 + $0x14] sm:$0xf]
        %v5392 = vld [vmem:[%s13 + $0x18] sm:$0xf]
        %v5393 = vld [vmem:[%s13 + $0x1c] sm:$0xf]
        %v5402 = vunpack.c.l.b16 %v5386
        %v5403 = vunpack.c.l.b16 %v5387
        %v5404 = vunpack.c.l.b16 %v5388
        %v5405 = vunpack.c.l.b16 %v5389
        %v5406 = vunpack.c.l.b16 %v5390
        %v5407 = vunpack.c.l.b16 %v5391
        %v5408 = vunpack.c.l.b16 %v5392
        %v5409 = vunpack.c.l.b16 %v5393
        %v5410 = vpack.c.b16 %v5403, %v5402
        %v5411 = vpack.c.b16 %v5405, %v5404
        %v5412 = vpack.c.b16 %v5407, %v5406
        %v5413 = vpack.c.b16 %v5409, %v5408
        %v5419 = vsel %vm1298, %v5385, 0
        %5421 = vmatprep.subr.bf16.mxu0 0
        %5422 = vmatpush1.bf16.msra.mxu0 %v5410
        %5423 = vmatprep.subr.bf16.mxu0 0
        %5424 = vmatpush1.bf16.msra.mxu0 %v5411
        %5425 = vmatprep.subr.bf16.mxu0 0
        %5426 = vmatpush1.bf16.msra.mxu0 %v5412
        %5427 = vmatprep.subr.bf16.mxu0 0
        %5428 = vmatpush1.bf16.msra.mxu0 %v5413
        %5429 = vmatprep.subr.bf16.mxu0 0
        %5430 = vmatpush1.bf16.msra.mxu0 0
        %5431 = vmatprep.subr.bf16.mxu0 0
        %5432 = vmatpush1.bf16.msra.mxu0 0
        %5433 = vmatprep.subr.bf16.mxu0 0
        %5434 = vmatpush1.bf16.msra.mxu0 0
        %5435 = vmatprep.subr.bf16.mxu0 0
        %5436 = vmatpush1.bf16.msra.mxu0 0
        %5437 = vmatprep.subr.bf16.mxu0 0
        %5438 = vmatpush1.bf16.msra.mxu0 0
        %5439 = vmatprep.subr.bf16.mxu0 0
        %5440 = vmatpush1.bf16.msra.mxu0 0
        %5441 = vmatprep.subr.bf16.mxu0 0
        %5442 = vmatpush1.bf16.msra.mxu0 0
        %5443 = vmatprep.subr.bf16.mxu0 0
        %5444 = vmatpush1.bf16.msra.mxu0 0
        %5445 = vmatprep.subr.bf16.mxu0 0
        %5446 = vmatpush1.bf16.msra.mxu0 0
        %5447 = vmatprep.subr.bf16.mxu0 0
        %5448 = vmatpush1.bf16.msra.mxu0 0
        %5449 = vmatprep.subr.bf16.mxu0 0
        %5450 = vmatpush1.bf16.msra.mxu0 0
        %5451 = vmatprep.subr.bf16.mxu0 0
        %5452 = vmatpush1.bf16.msra.mxu0 0
        %5453 = vmatprep.mubr.bf16.mxu0 0
        %5454 = vmatmul.mubr.bf16.gmra.mrb[0].mxu0 %v5419
        %v5455 = vpop.f32.mrb[0].mxu0
        %v5456 = vadd.f32 0.0, %v5455
        %v5457 = vpop.f32.mrb[0].mxu0
        %v5458 = vpop.f32.mrb[0].mxu0
        %v5459 = vpop.f32.mrb[0].mxu0
        %5460 = vdwg.mxu0
        %v5461 = vlaneseq
        %v5462 = vand.u32 %v5461, 127
        %vm5463 = vcmp.lt.s32.totalorder %v5462, 40
        %v5464 = vsel %vm5463, %v5456, -1e+30
        %5465 = vmax.xlane.f32.xlu0 %v5464
        %v5466 = vpop.xlane.xlu0 %5465
        %v5467 = vsub.f32 %v5464, %v5466
        %v5468 = vmul.f32 %v5467, 1.442695
        %v5469 = vpow.pop %v5468
        %5470 = vadd.xlane.f32.xlu0 %v5469
        %v5471 = vpop.xlane.xlu0 %5470
        %v5472 = vlog2.pop %v5471
        %v5473 = vmul.f32 %v5472, 0.6931472
        %v5474 = vadd.f32 %v5466, %v5473
        %v5475 = vsub.f32 %v5464, %v5474
        %5476 = vst [vmem:[%s1072] sm:$0xff] %v5475
        %s5477 = sand.u32 %s812, 1
        %s5478 = scalar_lea.sflag [#allocation3], %s5477
        %s5479 = sand.u32 %s812, 1
        %s5480 = smul.addr %s5479, 8
        %s5481 = scalar_lea.vmem [#allocation2], %s5480
        // Predicated region
        $region153: #{forward.1} parent=151 // pred_check
          %p5482 = pneg %p822
        $region154: #{forward.1} parent=151 // pred_check_branch
          %5484 = sbr.rel (%p5482) target = $region156
        $region155: #{forward.1} parent=151 // pred_region
          %s5486 = ssub.s32 128, 128
          %5487 = vsyncadd %s5478, %s5486
          %s5488 = smul.addr %s81, 128
          %s5489 = scalar_lea.hbm %s67, %s5488
          %s5491 = sshll.u32 %s5481, 4
          %s5492 = int_to_ptr.vmem [resolvable:$true] %s5491
          %5494 = dma.vmem_to_hbm [thread:$0]  %s5492, 128, %s5489, %s5478
        $region156: #{forward.1} parent=151 // pred_fallthru
          _
      $region152: #{forward.1} parent=5 // pred_fallthru
        _
      %p5495 = scmp.le.s32.totalorder 2, %s76
      // Predicated region
      $region157: #{forward.1} parent=5 // pred_check
        %p5496 = pneg %p5495
      $region158: #{forward.1} parent=5 // pred_check_branch
        %5498 = sbr.rel (%p5496) target = $region160
      $region159: #{forward.1} parent=5 // pred_region
        %s5499 = ssub.s32 %s76, 2
        // Predicated region
        $region161: #{forward.1} parent=159 // pred_check
          %p5500 = pneg %p828
        $region162: #{forward.1} parent=159 // pred_check_branch
          %5502 = sbr.rel (%p5500) target = $region164
        $region163: #{forward.1} parent=159 // pred_region
          %s5503 = sand.u32 %s813, 1
          %s5504 = scalar_lea.sflag [#allocation3], %s5503
          %s5505 = sand.u32 %s813, 1
          %s5506 = smul.addr %s5505, 8
          %s5507 = scalar_lea.vmem [#allocation2], %s5506
          %5508 = dma.done %s5504, 128
        $region164: #{forward.1} parent=159 // pred_fallthru
          _
      $region160: #{forward.1} parent=5 // pred_fallthru
        _
    $region6: #{forward.1} parent=1 // loop_footer
      %s80 = sadd.s32 1, %s76
    $region7: #{forward.1} parent=1 // loop_footer_branch
      %75 = sbr.rel target = $region3
    $region8: #{forward.1} parent=1 // loop_exit
      _
    %5509 = vsyncpa [#allocation3], 1
    %s5510 = scalar_lea.sflag [#allocation3], 1
    %5511 = vsyncpa %s5510, 1

</llo_original>
